<compile_context>
chip_gen: v7x
topology: tpu7x:2x2x1
jax: 0.10.0
libtpu: 0.0.40
codegen_flags: <defaults>
</compile_context>

<pallas_src>
import functools

import jax
import jax.numpy as jnp
from jax.experimental import pallas as pl
from jax.experimental.pallas import tpu as pltpu


# ----------------------------------------------------------------------------
# Fused (matmul -> bias -> ReLU -> max over column groups) kernel.
# Used for every encoder stage (conv + relu + maxpool folded into one matmul).
# ----------------------------------------------------------------------------
def _matmul_relu_groupmax_kernel(x_ref, e_ref, b_ref, o_ref, *, n_groups, cout):
    """x_ref: (TM, K)   e_ref: (K, n_groups*cout)   b_ref: (1, n_groups*cout)
    o_ref: (TM, cout).  One wide MXU matmul, fused bias + ReLU, then max over
    the n_groups column groups (= conv positions inside one pooling window)."""
    y = jnp.dot(x_ref[...], e_ref[...], preferred_element_type=jnp.float32)
    y = jnp.maximum(y + b_ref[...], 0.0)
    acc = y[:, 0:cout]
    for g in range(1, n_groups):                      # static, unrolled (<= 24)
        acc = jnp.maximum(acc, y[:, g * cout:(g + 1) * cout])
    o_ref[...] = acc.astype(o_ref.dtype)


def _matmul_relu_groupmax(x2d, e, b_tiled, *, n_groups, cout, out_dtype):
    m, kdim = x2d.shape
    ncols = e.shape[1]
    # Row tile: single block for small problems, 256-row blocks otherwise.
    if m <= 512:
        tm = max(8, ((m + 7) // 8) * 8)
    else:
        tm = 256
    mp = ((m + tm - 1) // tm) * tm
    if mp != m:
        x2d = jnp.pad(x2d, ((0, mp - m), (0, 0)))     # pad rows; results sliced off
    kernel = functools.partial(_matmul_relu_groupmax_kernel,
                               n_groups=n_groups, cout=cout)
    out = pl.pallas_call(
        kernel,
        out_shape=jax.ShapeDtypeStruct((mp, cout), out_dtype),
        grid=(mp // tm,),
        in_specs=[
            pl.BlockSpec((tm, kdim), lambda i: (i, 0)),
            pl.BlockSpec((kdim, ncols), lambda i: (0, 0)),   # resident weight
            pl.BlockSpec((1, ncols), lambda i: (0, 0)),      # resident bias
        ],
        out_specs=pl.BlockSpec((tm, cout), lambda i: (i, 0)),
        compiler_params=pltpu.CompilerParams(
            dimension_semantics=("parallel",),   # independent row blocks (v7x 2xTC)
        ),
    )(x2d, e, b_tiled)
    return out[:m] if mp != m else out


# ----------------------------------------------------------------------------
# Encoder stage: Conv2d(k, stride 1, pad 0) -> ReLU -> MaxPool(p)  (floor mode)
# ----------------------------------------------------------------------------
def _pack_encoder_stage(w_oihw, b, pool):
    """Pre-pack a Conv2d(+pool) layer (done once).  Returns (E, b_tiled, meta) with
    E[(dy*S+dx)*Cin + c, (py*P+px)*Cout + o] = W[dy-py, dx-px, c, o] (0 elsewhere),
    so that   pooled_out = groupmax(relu(patches @ E + b_tiled))."""
    cout, cin, kh, kw = w_oihw.shape
    p = pool
    s = p + kh - 1                                     # pooling-window patch size
    w_hwio = jnp.transpose(w_oihw, (2, 3, 1, 0))       # (KH, KW, Cin, Cout)
    cols = []
    for py in range(p):
        for px in range(p):
            blk = jnp.zeros((s, s, cin, cout), jnp.float32)
            blk = blk.at[py:py + kh, px:px + kw, :, :].set(w_hwio)
            cols.append(blk.reshape(s * s * cin, cout))
    e = jnp.concatenate(cols, axis=1).astype(jnp.bfloat16)   # (S*S*Cin, P*P*Cout)
    b_tiled = jnp.tile(b, p * p).reshape(1, p * p * cout).astype(jnp.float32)
    meta = dict(k=kh, p=p, s=s, cin=cin, cout=cout)
    return e, b_tiled, meta


def _encoder_stage(x, packed_stage, *, out_dtype=jnp.bfloat16):
    """x: (N, H, W, Cin).  One fused Conv2d -> ReLU -> MaxPool stage."""
    e, b_tiled, meta = packed_stage
    k, p, s, cin, cout = meta["k"], meta["p"], meta["s"], meta["cin"], meta["cout"]
    n, h, w, _ = x.shape
    oh, ow = h - k + 1, w - k + 1
    ph, pw = oh // p, ow // p                          # PyTorch floor-mode pooling
    # Pooling-window patches: patch[n, ph, pw, (dy*S+dx)*Cin + c]
    #   = x[n, P*ph + dy, P*pw + dx, c].   Wrapper-side layout plumbing (tiny).
    if ph == 1 and pw == 1 and s == h and s == w:
        patches = x.reshape(n, s * s * cin)
    else:
        pieces = []
        for dy in range(s):
            for dx in range(s):
                pieces.append(x[:, dy:dy + p * ph:p, dx:dx + p * pw:p, :])
        patches = jnp.concatenate(pieces, axis=-1).reshape(n * ph * pw, s * s * cin)
    patches = patches.astype(jnp.bfloat16)
    out = _matmul_relu_groupmax(patches, e, b_tiled, n_groups=p * p,
                                cout=cout, out_dtype=out_dtype)
    return out.reshape(n, ph, pw, cout)


# ----------------------------------------------------------------------------
# Decoder: 3 x [ConvTranspose2d -> ReLU -> MaxPool] on a 1x1 spatial code,
# fully fused into one kernel (each stage is a (N,32)x(32,K*K*32) matmul).
# ----------------------------------------------------------------------------
def _pack_decoder_stage(w_iohw, b):
    """ConvTranspose2d(stride 1, pad 0) on a 1x1 input, then ReLU + full MaxPool:
    out[n, o] = max_{ky,kx} relu(sum_c x[n, c] * W[c, o, ky, kx] + b[o])."""
    cin, cout, kh, kw = w_iohw.shape
    wf = jnp.transpose(w_iohw, (0, 2, 3, 1)).reshape(cin, kh * kw * cout)
    bt = jnp.tile(b, kh * kw).reshape(1, kh * kw * cout).astype(jnp.float32)
    return wf.astype(jnp.bfloat16), bt, cout


def _decoder_kernel(x_ref, w1_ref, b1_ref, w2_ref, b2_ref, w3_ref, b3_ref,
                    o_ref, *, cout):
    """Entire decoder in one kernel: three tiny matmuls, each followed by
    bias + ReLU and a max over the K*K spatial positions (the full MaxPool)."""
    h = x_ref[...]
    acc = None
    for w_ref, b_ref in ((w1_ref, b1_ref), (w2_ref, b2_ref), (w3_ref, b3_ref)):
        y = jnp.dot(h, w_ref[...], preferred_element_type=jnp.float32)
        y = jnp.maximum(y + b_ref[...], 0.0)
        n_groups = w_ref.shape[1] // cout
        acc = y[:, 0:cout]
        for g in range(1, n_groups):
            acc = jnp.maximum(acc, y[:, g * cout:(g + 1) * cout])
        h = acc.astype(jnp.bfloat16)
    o_ref[...] = acc.astype(o_ref.dtype)


def _decoder(h, packed_dec):
    """h: (N, C) encoder code.  Returns (N, C) float32."""
    (w1, b1, c1), (w2, b2, c2), (w3, b3, c3) = packed_dec
    assert c1 == c2 == c3
    n = h.shape[0]
    kernel = functools.partial(_decoder_kernel, cout=c3)
    return pl.pallas_call(                      # no grid: everything fits in VMEM
        kernel,
        out_shape=jax.ShapeDtypeStruct((n, c3), jnp.float32),
    )(h.astype(jnp.bfloat16), w1, b1, w2, b2, w3, b3)


# ----------------------------------------------------------------------------
# Parameters (deterministic, PyTorch-like uniform fan-in init) + packing
# ----------------------------------------------------------------------------
def init_params(key, in_channels):
    def conv_init(k, cout, cin, ks):
        kw_, kb_ = jax.random.split(k)
        bound = 1.0 / (cin * ks * ks) ** 0.5
        w = jax.random.uniform(kw_, (cout, cin, ks, ks), jnp.float32, -bound, bound)
        b = jax.random.uniform(kb_, (cout,), jnp.float32, -bound, bound)
        return w, b

    def convt_init(k, cin, cout, ks):
        kw_, kb_ = jax.random.split(k)
        bound = 1.0 / (cin * ks * ks) ** 0.5
        w = jax.random.uniform(kw_, (cin, cout, ks, ks), jnp.float32, -bound, bound)
        b = jax.random.uniform(kb_, (cout,), jnp.float32, -bound, bound)
        return w, b

    ks = jax.random.split(key, 6)
    return {
        "enc1": conv_init(ks[0], 32, in_channels, 5),
        "enc2": conv_init(ks[1], 32, 32, 4),
        "enc3": conv_init(ks[2], 32, 32, 4),
        "dec1": convt_init(ks[3], 32, 32, 5),
        "dec2": convt_init(ks[4], 32, 32, 4),
        "dec3": convt_init(ks[5], 32, 32, 4),
    }


def pack_params(params):
    """One-time weight repack (pooled-conv matrices, flattened deconv matrices)."""
    return {
        "enc": [
            _pack_encoder_stage(*params["enc1"], pool=5),
            _pack_encoder_stage(*params["enc2"], pool=4),
            _pack_encoder_stage(*params["enc3"], pool=4),
        ],
        "dec": [
            _pack_decoder_stage(*params["dec1"]),
            _pack_decoder_stage(*params["dec2"]),
            _pack_decoder_stage(*params["dec3"]),
        ],
    }


# ----------------------------------------------------------------------------
# Forward pass (matches ConvAutoencoder.forward)
# ----------------------------------------------------------------------------
def conv_autoencoder_forward(x_nchw, packed):
    x = jnp.transpose(x_nchw, (0, 2, 3, 1)).astype(jnp.bfloat16)   # NCHW -> NHWC
    for stage in packed["enc"]:                      # 3 fused conv+relu+pool stages
        x = _encoder_stage(x, stage)
    n, ph, pw, c = x.shape
    assert ph == 1 and pw == 1, "decoder fusion assumes a 1x1 encoder code"
    y = _decoder(x.reshape(n, c), packed["dec"])     # fully fused decoder
    return y.reshape(n, c, 1, 1)                     # NHWC with 1x1 spatial == NCHW
    # TODO(synk): torchsummary `summary(...)` call in __init__ is print-only and
    # has no forward-pass equivalent; the unused hidden_dim=1024 is likewise ignored.


if __name__ == "__main__":
    key = jax.random.PRNGKey(0)
    k_params, k_x = jax.random.split(key)

    N, C, H, W = 2, 3, 160, 160        # stacked 5/4/4 pools need spatial >= 159
    params = init_params(k_params, C)
    packed = pack_params(params)       # one-time repack, outside the jit'd hot path
    x = jax.random.normal(k_x, (N, C, H, W), jnp.float32)

    fwd = jax.jit(lambda inp: conv_autoencoder_forward(inp, packed))
    y = fwd(x)
    jax.block_until_ready(y)

    assert y.shape == (N, 32, 1, 1), y.shape
    assert bool(jnp.all(jnp.isfinite(y)))
    print("KERNEL_OK")
</pallas_src>

<mosaic_0001>
module attributes {stable_mosaic.version = 11 : i64} {
  func.func @_matmul_relu_groupmax_kernel(%arg0: i32, %arg1: memref<256x243xbf16, #tpu.memory_space<vmem>>, %arg2: memref<243x800xbf16, #tpu.memory_space<vmem>>, %arg3: memref<1x800xf32, #tpu.memory_space<vmem>>, %arg4: memref<256x32xbf16, #tpu.memory_space<vmem>>) attributes {dimension_semantics = [#tpu.dimension_semantics<parallel>], iteration_bounds = array<i64: 8>, scalar_prefetch = 0 : i64, scratch_operands = 0 : i64, tpu.core_type = #tpu.core_type<tc>, window_params = [{transform_indices = @transform_0, window_bounds = array<i64: 256, 243>}, {pipeline_mode = #tpu.pipeline_mode<synchronous>, transform_indices = @transform_1, window_bounds = array<i64: 243, 800>}, {pipeline_mode = #tpu.pipeline_mode<synchronous>, transform_indices = @transform_2, window_bounds = array<i64: 1, 800>}, {transform_indices = @transform_3, window_bounds = array<i64: 256, 32>}]} {
    %c0 = arith.constant 0 : index
    %c0_0 = arith.constant 0 : index
    %0 = vector.load %arg1[%c0, %c0_0] : memref<256x243xbf16, #tpu.memory_space<vmem>>, vector<256x243xbf16>
    %c0_1 = arith.constant 0 : index
    %c0_2 = arith.constant 0 : index
    %1 = vector.load %arg2[%c0_1, %c0_2] : memref<243x800xbf16, #tpu.memory_space<vmem>>, vector<243x800xbf16>
    %cst = arith.constant dense<0.000000e+00> : vector<256x800xf32>
    %2 = tpu.matmul %0, %1, %cst {dimension_numbers = #tpu.dot_dimension_numbers<[1], [0], [0], [1], [0, 0, 1, 1], [], []>} : vector<256x243xbf16>, vector<243x800xbf16>, vector<256x800xf32> -> vector<256x800xf32>
    %c0_3 = arith.constant 0 : index
    %c0_4 = arith.constant 0 : index
    %3 = vector.load %arg3[%c0_3, %c0_4] : memref<1x800xf32, #tpu.memory_space<vmem>>, vector<1x800xf32>
    %4 = vector.broadcast %3 : vector<1x800xf32> to vector<256x800xf32>
    %5 = arith.addf %2, %4 : vector<256x800xf32>
    %cst_5 = arith.constant 0.000000e+00 : f32
    %6 = vector.broadcast %cst_5 : f32 to vector<256x800xf32>
    %7 = arith.maximumf %5, %6 : vector<256x800xf32>
    %8 = vector.extract_strided_slice %7 {offsets = [0, 0], sizes = [256, 32], strides = [1, 1]} : vector<256x800xf32> to vector<256x32xf32>
    %9 = vector.extract_strided_slice %7 {offsets = [0, 32], sizes = [256, 32], strides = [1, 1]} : vector<256x800xf32> to vector<256x32xf32>
    %10 = arith.maximumf %8, %9 : vector<256x32xf32>
    %11 = vector.extract_strided_slice %7 {offsets = [0, 64], sizes = [256, 32], strides = [1, 1]} : vector<256x800xf32> to vector<256x32xf32>
    %12 = arith.maximumf %10, %11 : vector<256x32xf32>
    %13 = vector.extract_strided_slice %7 {offsets = [0, 96], sizes = [256, 32], strides = [1, 1]} : vector<256x800xf32> to vector<256x32xf32>
    %14 = arith.maximumf %12, %13 : vector<256x32xf32>
    %15 = vector.extract_strided_slice %7 {offsets = [0, 128], sizes = [256, 32], strides = [1, 1]} : vector<256x800xf32> to vector<256x32xf32>
    %16 = arith.maximumf %14, %15 : vector<256x32xf32>
    %17 = vector.extract_strided_slice %7 {offsets = [0, 160], sizes = [256, 32], strides = [1, 1]} : vector<256x800xf32> to vector<256x32xf32>
    %18 = arith.maximumf %16, %17 : vector<256x32xf32>
    %19 = vector.extract_strided_slice %7 {offsets = [0, 192], sizes = [256, 32], strides = [1, 1]} : vector<256x800xf32> to vector<256x32xf32>
    %20 = arith.maximumf %18, %19 : vector<256x32xf32>
    %21 = vector.extract_strided_slice %7 {offsets = [0, 224], sizes = [256, 32], strides = [1, 1]} : vector<256x800xf32> to vector<256x32xf32>
    %22 = arith.maximumf %20, %21 : vector<256x32xf32>
    %23 = vector.extract_strided_slice %7 {offsets = [0, 256], sizes = [256, 32], strides = [1, 1]} : vector<256x800xf32> to vector<256x32xf32>
    %24 = arith.maximumf %22, %23 : vector<256x32xf32>
    %25 = vector.extract_strided_slice %7 {offsets = [0, 288], sizes = [256, 32], strides = [1, 1]} : vector<256x800xf32> to vector<256x32xf32>
    %26 = arith.maximumf %24, %25 : vector<256x32xf32>
    %27 = vector.extract_strided_slice %7 {offsets = [0, 320], sizes = [256, 32], strides = [1, 1]} : vector<256x800xf32> to vector<256x32xf32>
    %28 = arith.maximumf %26, %27 : vector<256x32xf32>
    %29 = vector.extract_strided_slice %7 {offsets = [0, 352], sizes = [256, 32], strides = [1, 1]} : vector<256x800xf32> to vector<256x32xf32>
    %30 = arith.maximumf %28, %29 : vector<256x32xf32>
    %31 = vector.extract_strided_slice %7 {offsets = [0, 384], sizes = [256, 32], strides = [1, 1]} : vector<256x800xf32> to vector<256x32xf32>
    %32 = arith.maximumf %30, %31 : vector<256x32xf32>
    %33 = vector.extract_strided_slice %7 {offsets = [0, 416], sizes = [256, 32], strides = [1, 1]} : vector<256x800xf32> to vector<256x32xf32>
    %34 = arith.maximumf %32, %33 : vector<256x32xf32>
    %35 = vector.extract_strided_slice %7 {offsets = [0, 448], sizes = [256, 32], strides = [1, 1]} : vector<256x800xf32> to vector<256x32xf32>
    %36 = arith.maximumf %34, %35 : vector<256x32xf32>
    %37 = vector.extract_strided_slice %7 {offsets = [0, 480], sizes = [256, 32], strides = [1, 1]} : vector<256x800xf32> to vector<256x32xf32>
    %38 = arith.maximumf %36, %37 : vector<256x32xf32>
    %39 = vector.extract_strided_slice %7 {offsets = [0, 512], sizes = [256, 32], strides = [1, 1]} : vector<256x800xf32> to vector<256x32xf32>
    %40 = arith.maximumf %38, %39 : vector<256x32xf32>
    %41 = vector.extract_strided_slice %7 {offsets = [0, 544], sizes = [256, 32], strides = [1, 1]} : vector<256x800xf32> to vector<256x32xf32>
    %42 = arith.maximumf %40, %41 : vector<256x32xf32>
    %43 = vector.extract_strided_slice %7 {offsets = [0, 576], sizes = [256, 32], strides = [1, 1]} : vector<256x800xf32> to vector<256x32xf32>
    %44 = arith.maximumf %42, %43 : vector<256x32xf32>
    %45 = vector.extract_strided_slice %7 {offsets = [0, 608], sizes = [256, 32], strides = [1, 1]} : vector<256x800xf32> to vector<256x32xf32>
    %46 = arith.maximumf %44, %45 : vector<256x32xf32>
    %47 = vector.extract_strided_slice %7 {offsets = [0, 640], sizes = [256, 32], strides = [1, 1]} : vector<256x800xf32> to vector<256x32xf32>
    %48 = arith.maximumf %46, %47 : vector<256x32xf32>
    %49 = vector.extract_strided_slice %7 {offsets = [0, 672], sizes = [256, 32], strides = [1, 1]} : vector<256x800xf32> to vector<256x32xf32>
    %50 = arith.maximumf %48, %49 : vector<256x32xf32>
    %51 = vector.extract_strided_slice %7 {offsets = [0, 704], sizes = [256, 32], strides = [1, 1]} : vector<256x800xf32> to vector<256x32xf32>
    %52 = arith.maximumf %50, %51 : vector<256x32xf32>
    %53 = vector.extract_strided_slice %7 {offsets = [0, 736], sizes = [256, 32], strides = [1, 1]} : vector<256x800xf32> to vector<256x32xf32>
    %54 = arith.maximumf %52, %53 : vector<256x32xf32>
    %55 = vector.extract_strided_slice %7 {offsets = [0, 768], sizes = [256, 32], strides = [1, 1]} : vector<256x800xf32> to vector<256x32xf32>
    %56 = arith.maximumf %54, %55 : vector<256x32xf32>
    %57 = arith.truncf %56 : vector<256x32xf32> to vector<256x32xbf16>
    %c0_6 = arith.constant 0 : index
    %c0_7 = arith.constant 0 : index
    %58 = vector.load %arg4[%c0_6, %c0_7] : memref<256x32xbf16, #tpu.memory_space<vmem>>, vector<256x32xbf16>
    tpu.vector_store %arg4[%c0_6, %c0_7], %57 {strides = array<i32>} : memref<256x32xbf16, #tpu.memory_space<vmem>>, vector<256x32xbf16>,
    return
  }
  func.func @transform_0(%arg0: i32) -> (i32, i32) {
    %c0_i32 = arith.constant 0 : i32
    %c0_i32_0 = arith.constant 0 : i32
    return %arg0, %c0_i32 : i32, i32
  }
  func.func @transform_1(%arg0: i32) -> (i32, i32) {
    %c0_i32 = arith.constant 0 : i32
    %c0_i32_0 = arith.constant 0 : i32
    %c0_i32_1 = arith.constant 0 : i32
    return %c0_i32, %c0_i32_0 : i32, i32
  }
  func.func @transform_2(%arg0: i32) -> (i32, i32) {
    %c0_i32 = arith.constant 0 : i32
    %c0_i32_0 = arith.constant 0 : i32
    %c0_i32_1 = arith.constant 0 : i32
    return %c0_i32, %c0_i32_0 : i32, i32
  }
  func.func @transform_3(%arg0: i32) -> (i32, i32) {
    %c0_i32 = arith.constant 0 : i32
    %c0_i32_0 = arith.constant 0 : i32
    return %arg0, %c0_i32 : i32, i32
  }
}

module attributes {stable_mosaic.version = 11 : i64} {
  func.func @_matmul_relu_groupmax_kernel(%arg0: i32, %arg1: memref<104x1568xbf16, #tpu.memory_space<vmem>>, %arg2: memref<1568x512xbf16, #tpu.memory_space<vmem>>, %arg3: memref<1x512xf32, #tpu.memory_space<vmem>>, %arg4: memref<104x32xbf16, #tpu.memory_space<vmem>>) attributes {dimension_semantics = [#tpu.dimension_semantics<parallel>], iteration_bounds = array<i64: 1>, scalar_prefetch = 0 : i64, scratch_operands = 0 : i64, tpu.core_type = #tpu.core_type<tc>, window_params = [{transform_indices = @transform_0, window_bounds = array<i64: 104, 1568>}, {pipeline_mode = #tpu.pipeline_mode<synchronous>, transform_indices = @transform_1, window_bounds = array<i64: 1568, 512>}, {pipeline_mode = #tpu.pipeline_mode<synchronous>, transform_indices = @transform_2, window_bounds = array<i64: 1, 512>}, {transform_indices = @transform_3, window_bounds = array<i64: 104, 32>}]} {
    %c0 = arith.constant 0 : index
    %c0_0 = arith.constant 0 : index
    %0 = vector.load %arg1[%c0, %c0_0] : memref<104x1568xbf16, #tpu.memory_space<vmem>>, vector<104x1568xbf16>
    %c0_1 = arith.constant 0 : index
    %c0_2 = arith.constant 0 : index
    %1 = vector.load %arg2[%c0_1, %c0_2] : memref<1568x512xbf16, #tpu.memory_space<vmem>>, vector<1568x512xbf16>
    %cst = arith.constant dense<0.000000e+00> : vector<104x512xf32>
    %2 = tpu.matmul %0, %1, %cst {dimension_numbers = #tpu.dot_dimension_numbers<[1], [0], [0], [1], [0, 0, 1, 1], [], []>} : vector<104x1568xbf16>, vector<1568x512xbf16>, vector<104x512xf32> -> vector<104x512xf32>
    %c0_3 = arith.constant 0 : index
    %c0_4 = arith.constant 0 : index
    %3 = vector.load %arg3[%c0_3, %c0_4] : memref<1x512xf32, #tpu.memory_space<vmem>>, vector<1x512xf32>
    %4 = vector.broadcast %3 : vector<1x512xf32> to vector<104x512xf32>
    %5 = arith.addf %2, %4 : vector<104x512xf32>
    %cst_5 = arith.constant 0.000000e+00 : f32
    %6 = vector.broadcast %cst_5 : f32 to vector<104x512xf32>
    %7 = arith.maximumf %5, %6 : vector<104x512xf32>
    %8 = vector.extract_strided_slice %7 {offsets = [0, 0], sizes = [104, 32], strides = [1, 1]} : vector<104x512xf32> to vector<104x32xf32>
    %9 = vector.extract_strided_slice %7 {offsets = [0, 32], sizes = [104, 32], strides = [1, 1]} : vector<104x512xf32> to vector<104x32xf32>
    %10 = arith.maximumf %8, %9 : vector<104x32xf32>
    %11 = vector.extract_strided_slice %7 {offsets = [0, 64], sizes = [104, 32], strides = [1, 1]} : vector<104x512xf32> to vector<104x32xf32>
    %12 = arith.maximumf %10, %11 : vector<104x32xf32>
    %13 = vector.extract_strided_slice %7 {offsets = [0, 96], sizes = [104, 32], strides = [1, 1]} : vector<104x512xf32> to vector<104x32xf32>
    %14 = arith.maximumf %12, %13 : vector<104x32xf32>
    %15 = vector.extract_strided_slice %7 {offsets = [0, 128], sizes = [104, 32], strides = [1, 1]} : vector<104x512xf32> to vector<104x32xf32>
    %16 = arith.maximumf %14, %15 : vector<104x32xf32>
    %17 = vector.extract_strided_slice %7 {offsets = [0, 160], sizes = [104, 32], strides = [1, 1]} : vector<104x512xf32> to vector<104x32xf32>
    %18 = arith.maximumf %16, %17 : vector<104x32xf32>
    %19 = vector.extract_strided_slice %7 {offsets = [0, 192], sizes = [104, 32], strides = [1, 1]} : vector<104x512xf32> to vector<104x32xf32>
    %20 = arith.maximumf %18, %19 : vector<104x32xf32>
    %21 = vector.extract_strided_slice %7 {offsets = [0, 224], sizes = [104, 32], strides = [1, 1]} : vector<104x512xf32> to vector<104x32xf32>
    %22 = arith.maximumf %20, %21 : vector<104x32xf32>
    %23 = vector.extract_strided_slice %7 {offsets = [0, 256], sizes = [104, 32], strides = [1, 1]} : vector<104x512xf32> to vector<104x32xf32>
    %24 = arith.maximumf %22, %23 : vector<104x32xf32>
    %25 = vector.extract_strided_slice %7 {offsets = [0, 288], sizes = [104, 32], strides = [1, 1]} : vector<104x512xf32> to vector<104x32xf32>
    %26 = arith.maximumf %24, %25 : vector<104x32xf32>
    %27 = vector.extract_strided_slice %7 {offsets = [0, 320], sizes = [104, 32], strides = [1, 1]} : vector<104x512xf32> to vector<104x32xf32>
    %28 = arith.maximumf %26, %27 : vector<104x32xf32>
    %29 = vector.extract_strided_slice %7 {offsets = [0, 352], sizes = [104, 32], strides = [1, 1]} : vector<104x512xf32> to vector<104x32xf32>
    %30 = arith.maximumf %28, %29 : vector<104x32xf32>
    %31 = vector.extract_strided_slice %7 {offsets = [0, 384], sizes = [104, 32], strides = [1, 1]} : vector<104x512xf32> to vector<104x32xf32>
    %32 = arith.maximumf %30, %31 : vector<104x32xf32>
    %33 = vector.extract_strided_slice %7 {offsets = [0, 416], sizes = [104, 32], strides = [1, 1]} : vector<104x512xf32> to vector<104x32xf32>
    %34 = arith.maximumf %32, %33 : vector<104x32xf32>
    %35 = vector.extract_strided_slice %7 {offsets = [0, 448], sizes = [104, 32], strides = [1, 1]} : vector<104x512xf32> to vector<104x32xf32>
    %36 = arith.maximumf %34, %35 : vector<104x32xf32>
    %37 = vector.extract_strided_slice %7 {offsets = [0, 480], sizes = [104, 32], strides = [1, 1]} : vector<104x512xf32> to vector<104x32xf32>
    %38 = arith.maximumf %36, %37 : vector<104x32xf32>
    %39 = arith.truncf %38 : vector<104x32xf32> to vector<104x32xbf16>
    %c0_6 = arith.constant 0 : index
    %c0_7 = arith.constant 0 : index
    %40 = vector.load %arg4[%c0_6, %c0_7] : memref<104x32xbf16, #tpu.memory_space<vmem>>, vector<104x32xbf16>
    tpu.vector_store %arg4[%c0_6, %c0_7], %39 {strides = array<i32>} : memref<104x32xbf16, #tpu.memory_space<vmem>>, vector<104x32xbf16>,
    return
  }
  func.func @transform_0(%arg0: i32) -> (i32, i32) {
    %c0_i32 = arith.constant 0 : i32
    %c0_i32_0 = arith.constant 0 : i32
    return %arg0, %c0_i32 : i32, i32
  }
  func.func @transform_1(%arg0: i32) -> (i32, i32) {
    %c0_i32 = arith.constant 0 : i32
    %c0_i32_0 = arith.constant 0 : i32
    %c0_i32_1 = arith.constant 0 : i32
    return %c0_i32, %c0_i32_0 : i32, i32
  }
  func.func @transform_2(%arg0: i32) -> (i32, i32) {
    %c0_i32 = arith.constant 0 : i32
    %c0_i32_0 = arith.constant 0 : i32
    %c0_i32_1 = arith.constant 0 : i32
    return %c0_i32, %c0_i32_0 : i32, i32
  }
  func.func @transform_3(%arg0: i32) -> (i32, i32) {
    %c0_i32 = arith.constant 0 : i32
    %c0_i32_0 = arith.constant 0 : i32
    return %arg0, %c0_i32 : i32, i32
  }
}

module attributes {stable_mosaic.version = 11 : i64} {
  func.func @_matmul_relu_groupmax_kernel(%arg0: i32, %arg1: memref<8x1568xbf16, #tpu.memory_space<vmem>>, %arg2: memref<1568x512xbf16, #tpu.memory_space<vmem>>, %arg3: memref<1x512xf32, #tpu.memory_space<vmem>>, %arg4: memref<8x32xbf16, #tpu.memory_space<vmem>>) attributes {dimension_semantics = [#tpu.dimension_semantics<parallel>], iteration_bounds = array<i64: 1>, scalar_prefetch = 0 : i64, scratch_operands = 0 : i64, tpu.core_type = #tpu.core_type<tc>, window_params = [{transform_indices = @transform_0, window_bounds = array<i64: 8, 1568>}, {pipeline_mode = #tpu.pipeline_mode<synchronous>, transform_indices = @transform_1, window_bounds = array<i64: 1568, 512>}, {pipeline_mode = #tpu.pipeline_mode<synchronous>, transform_indices = @transform_2, window_bounds = array<i64: 1, 512>}, {transform_indices = @transform_3, window_bounds = array<i64: 8, 32>}]} {
    %c0 = arith.constant 0 : index
    %c0_0 = arith.constant 0 : index
    %0 = vector.load %arg1[%c0, %c0_0] : memref<8x1568xbf16, #tpu.memory_space<vmem>>, vector<8x1568xbf16>
    %c0_1 = arith.constant 0 : index
    %c0_2 = arith.constant 0 : index
    %1 = vector.load %arg2[%c0_1, %c0_2] : memref<1568x512xbf16, #tpu.memory_space<vmem>>, vector<1568x512xbf16>
    %cst = arith.constant dense<0.000000e+00> : vector<8x512xf32>
    %2 = tpu.matmul %0, %1, %cst {dimension_numbers = #tpu.dot_dimension_numbers<[1], [0], [0], [1], [0, 0, 1, 1], [], []>} : vector<8x1568xbf16>, vector<1568x512xbf16>, vector<8x512xf32> -> vector<8x512xf32>
    %c0_3 = arith.constant 0 : index
    %c0_4 = arith.constant 0 : index
    %3 = vector.load %arg3[%c0_3, %c0_4] : memref<1x512xf32, #tpu.memory_space<vmem>>, vector<1x512xf32>
    %4 = vector.broadcast %3 : vector<1x512xf32> to vector<8x512xf32>
    %5 = arith.addf %2, %4 : vector<8x512xf32>
    %cst_5 = arith.constant 0.000000e+00 : f32
    %6 = vector.broadcast %cst_5 : f32 to vector<8x512xf32>
    %7 = arith.maximumf %5, %6 : vector<8x512xf32>
    %8 = vector.extract_strided_slice %7 {offsets = [0, 0], sizes = [8, 32], strides = [1, 1]} : vector<8x512xf32> to vector<8x32xf32>
    %9 = vector.extract_strided_slice %7 {offsets = [0, 32], sizes = [8, 32], strides = [1, 1]} : vector<8x512xf32> to vector<8x32xf32>
    %10 = arith.maximumf %8, %9 : vector<8x32xf32>
    %11 = vector.extract_strided_slice %7 {offsets = [0, 64], sizes = [8, 32], strides = [1, 1]} : vector<8x512xf32> to vector<8x32xf32>
    %12 = arith.maximumf %10, %11 : vector<8x32xf32>
    %13 = vector.extract_strided_slice %7 {offsets = [0, 96], sizes = [8, 32], strides = [1, 1]} : vector<8x512xf32> to vector<8x32xf32>
    %14 = arith.maximumf %12, %13 : vector<8x32xf32>
    %15 = vector.extract_strided_slice %7 {offsets = [0, 128], sizes = [8, 32], strides = [1, 1]} : vector<8x512xf32> to vector<8x32xf32>
    %16 = arith.maximumf %14, %15 : vector<8x32xf32>
    %17 = vector.extract_strided_slice %7 {offsets = [0, 160], sizes = [8, 32], strides = [1, 1]} : vector<8x512xf32> to vector<8x32xf32>
    %18 = arith.maximumf %16, %17 : vector<8x32xf32>
    %19 = vector.extract_strided_slice %7 {offsets = [0, 192], sizes = [8, 32], strides = [1, 1]} : vector<8x512xf32> to vector<8x32xf32>
    %20 = arith.maximumf %18, %19 : vector<8x32xf32>
    %21 = vector.extract_strided_slice %7 {offsets = [0, 224], sizes = [8, 32], strides = [1, 1]} : vector<8x512xf32> to vector<8x32xf32>
    %22 = arith.maximumf %20, %21 : vector<8x32xf32>
    %23 = vector.extract_strided_slice %7 {offsets = [0, 256], sizes = [8, 32], strides = [1, 1]} : vector<8x512xf32> to vector<8x32xf32>
    %24 = arith.maximumf %22, %23 : vector<8x32xf32>
    %25 = vector.extract_strided_slice %7 {offsets = [0, 288], sizes = [8, 32], strides = [1, 1]} : vector<8x512xf32> to vector<8x32xf32>
    %26 = arith.maximumf %24, %25 : vector<8x32xf32>
    %27 = vector.extract_strided_slice %7 {offsets = [0, 320], sizes = [8, 32], strides = [1, 1]} : vector<8x512xf32> to vector<8x32xf32>
    %28 = arith.maximumf %26, %27 : vector<8x32xf32>
    %29 = vector.extract_strided_slice %7 {offsets = [0, 352], sizes = [8, 32], strides = [1, 1]} : vector<8x512xf32> to vector<8x32xf32>
    %30 = arith.maximumf %28, %29 : vector<8x32xf32>
    %31 = vector.extract_strided_slice %7 {offsets = [0, 384], sizes = [8, 32], strides = [1, 1]} : vector<8x512xf32> to vector<8x32xf32>
    %32 = arith.maximumf %30, %31 : vector<8x32xf32>
    %33 = vector.extract_strided_slice %7 {offsets = [0, 416], sizes = [8, 32], strides = [1, 1]} : vector<8x512xf32> to vector<8x32xf32>
    %34 = arith.maximumf %32, %33 : vector<8x32xf32>
    %35 = vector.extract_strided_slice %7 {offsets = [0, 448], sizes = [8, 32], strides = [1, 1]} : vector<8x512xf32> to vector<8x32xf32>
    %36 = arith.maximumf %34, %35 : vector<8x32xf32>
    %37 = vector.extract_strided_slice %7 {offsets = [0, 480], sizes = [8, 32], strides = [1, 1]} : vector<8x512xf32> to vector<8x32xf32>
    %38 = arith.maximumf %36, %37 : vector<8x32xf32>
    %39 = arith.truncf %38 : vector<8x32xf32> to vector<8x32xbf16>
    %c0_6 = arith.constant 0 : index
    %c0_7 = arith.constant 0 : index
    %40 = vector.load %arg4[%c0_6, %c0_7] : memref<8x32xbf16, #tpu.memory_space<vmem>>, vector<8x32xbf16>
    tpu.vector_store %arg4[%c0_6, %c0_7], %39 {strides = array<i32>} : memref<8x32xbf16, #tpu.memory_space<vmem>>, vector<8x32xbf16>,
    return
  }
  func.func @transform_0(%arg0: i32) -> (i32, i32) {
    %c0_i32 = arith.constant 0 : i32
    %c0_i32_0 = arith.constant 0 : i32
    return %arg0, %c0_i32 : i32, i32
  }
  func.func @transform_1(%arg0: i32) -> (i32, i32) {
    %c0_i32 = arith.constant 0 : i32
    %c0_i32_0 = arith.constant 0 : i32
    %c0_i32_1 = arith.constant 0 : i32
    return %c0_i32, %c0_i32_0 : i32, i32
  }
  func.func @transform_2(%arg0: i32) -> (i32, i32) {
    %c0_i32 = arith.constant 0 : i32
    %c0_i32_0 = arith.constant 0 : i32
    %c0_i32_1 = arith.constant 0 : i32
    return %c0_i32, %c0_i32_0 : i32, i32
  }
  func.func @transform_3(%arg0: i32) -> (i32, i32) {
    %c0_i32 = arith.constant 0 : i32
    %c0_i32_0 = arith.constant 0 : i32
    return %arg0, %c0_i32 : i32, i32
  }
}

module attributes {stable_mosaic.version = 11 : i64} {
  func.func @_decoder_kernel(%arg0: memref<2x32xbf16, #tpu.memory_space<vmem>>, %arg1: memref<32x800xbf16, #tpu.memory_space<vmem>>, %arg2: memref<1x800xf32, #tpu.memory_space<vmem>>, %arg3: memref<32x512xbf16, #tpu.memory_space<vmem>>, %arg4: memref<1x512xf32, #tpu.memory_space<vmem>>, %arg5: memref<32x512xbf16, #tpu.memory_space<vmem>>, %arg6: memref<1x512xf32, #tpu.memory_space<vmem>>, %arg7: memref<2x32xf32, #tpu.memory_space<vmem>>) attributes {dimension_semantics = [], scalar_prefetch = 0 : i64, scratch_operands = 0 : i64, tpu.core_type = #tpu.core_type<tc>} {
    %c0 = arith.constant 0 : index
    %c0_0 = arith.constant 0 : index
    %0 = vector.load %arg0[%c0, %c0_0] : memref<2x32xbf16, #tpu.memory_space<vmem>>, vector<2x32xbf16>
    %c0_1 = arith.constant 0 : index
    %c0_2 = arith.constant 0 : index
    %1 = vector.load %arg1[%c0_1, %c0_2] : memref<32x800xbf16, #tpu.memory_space<vmem>>, vector<32x800xbf16>
    %cst = arith.constant dense<0.000000e+00> : vector<2x800xf32>
    %2 = tpu.matmul %0, %1, %cst {dimension_numbers = #tpu.dot_dimension_numbers<[1], [0], [0], [1], [0, 0, 1, 1], [], []>} : vector<2x32xbf16>, vector<32x800xbf16>, vector<2x800xf32> -> vector<2x800xf32>
    %c0_3 = arith.constant 0 : index
    %c0_4 = arith.constant 0 : index
    %3 = vector.load %arg2[%c0_3, %c0_4] : memref<1x800xf32, #tpu.memory_space<vmem>>, vector<1x800xf32>
    %4 = vector.broadcast %3 : vector<1x800xf32> to vector<2x800xf32>
    %5 = arith.addf %2, %4 : vector<2x800xf32>
    %cst_5 = arith.constant 0.000000e+00 : f32
    %6 = vector.broadcast %cst_5 : f32 to vector<2x800xf32>
    %7 = arith.maximumf %5, %6 : vector<2x800xf32>
    %8 = vector.extract_strided_slice %7 {offsets = [0, 0], sizes = [2, 32], strides = [1, 1]} : vector<2x800xf32> to vector<2x32xf32>
    %9 = vector.extract_strided_slice %7 {offsets = [0, 32], sizes = [2, 32], strides = [1, 1]} : vector<2x800xf32> to vector<2x32xf32>
    %10 = arith.maximumf %8, %9 : vector<2x32xf32>
    %11 = vector.extract_strided_slice %7 {offsets = [0, 64], sizes = [2, 32], strides = [1, 1]} : vector<2x800xf32> to vector<2x32xf32>
    %12 = arith.maximumf %10, %11 : vector<2x32xf32>
    %13 = vector.extract_strided_slice %7 {offsets = [0, 96], sizes = [2, 32], strides = [1, 1]} : vector<2x800xf32> to vector<2x32xf32>
    %14 = arith.maximumf %12, %13 : vector<2x32xf32>
    %15 = vector.extract_strided_slice %7 {offsets = [0, 128], sizes = [2, 32], strides = [1, 1]} : vector<2x800xf32> to vector<2x32xf32>
    %16 = arith.maximumf %14, %15 : vector<2x32xf32>
    %17 = vector.extract_strided_slice %7 {offsets = [0, 160], sizes = [2, 32], strides = [1, 1]} : vector<2x800xf32> to vector<2x32xf32>
    %18 = arith.maximumf %16, %17 : vector<2x32xf32>
    %19 = vector.extract_strided_slice %7 {offsets = [0, 192], sizes = [2, 32], strides = [1, 1]} : vector<2x800xf32> to vector<2x32xf32>
    %20 = arith.maximumf %18, %19 : vector<2x32xf32>
    %21 = vector.extract_strided_slice %7 {offsets = [0, 224], sizes = [2, 32], strides = [1, 1]} : vector<2x800xf32> to vector<2x32xf32>
    %22 = arith.maximumf %20, %21 : vector<2x32xf32>
    %23 = vector.extract_strided_slice %7 {offsets = [0, 256], sizes = [2, 32], strides = [1, 1]} : vector<2x800xf32> to vector<2x32xf32>
    %24 = arith.maximumf %22, %23 : vector<2x32xf32>
    %25 = vector.extract_strided_slice %7 {offsets = [0, 288], sizes = [2, 32], strides = [1, 1]} : vector<2x800xf32> to vector<2x32xf32>
    %26 = arith.maximumf %24, %25 : vector<2x32xf32>
    %27 = vector.extract_strided_slice %7 {offsets = [0, 320], sizes = [2, 32], strides = [1, 1]} : vector<2x800xf32> to vector<2x32xf32>
    %28 = arith.maximumf %26, %27 : vector<2x32xf32>
    %29 = vector.extract_strided_slice %7 {offsets = [0, 352], sizes = [2, 32], strides = [1, 1]} : vector<2x800xf32> to vector<2x32xf32>
    %30 = arith.maximumf %28, %29 : vector<2x32xf32>
    %31 = vector.extract_strided_slice %7 {offsets = [0, 384], sizes = [2, 32], strides = [1, 1]} : vector<2x800xf32> to vector<2x32xf32>
    %32 = arith.maximumf %30, %31 : vector<2x32xf32>
    %33 = vector.extract_strided_slice %7 {offsets = [0, 416], sizes = [2, 32], strides = [1, 1]} : vector<2x800xf32> to vector<2x32xf32>
    %34 = arith.maximumf %32, %33 : vector<2x32xf32>
    %35 = vector.extract_strided_slice %7 {offsets = [0, 448], sizes = [2, 32], strides = [1, 1]} : vector<2x800xf32> to vector<2x32xf32>
    %36 = arith.maximumf %34, %35 : vector<2x32xf32>
    %37 = vector.extract_strided_slice %7 {offsets = [0, 480], sizes = [2, 32], strides = [1, 1]} : vector<2x800xf32> to vector<2x32xf32>
    %38 = arith.maximumf %36, %37 : vector<2x32xf32>
    %39 = vector.extract_strided_slice %7 {offsets = [0, 512], sizes = [2, 32], strides = [1, 1]} : vector<2x800xf32> to vector<2x32xf32>
    %40 = arith.maximumf %38, %39 : vector<2x32xf32>
    %41 = vector.extract_strided_slice %7 {offsets = [0, 544], sizes = [2, 32], strides = [1, 1]} : vector<2x800xf32> to vector<2x32xf32>
    %42 = arith.maximumf %40, %41 : vector<2x32xf32>
    %43 = vector.extract_strided_slice %7 {offsets = [0, 576], sizes = [2, 32], strides = [1, 1]} : vector<2x800xf32> to vector<2x32xf32>
    %44 = arith.maximumf %42, %43 : vector<2x32xf32>
    %45 = vector.extract_strided_slice %7 {offsets = [0, 608], sizes = [2, 32], strides = [1, 1]} : vector<2x800xf32> to vector<2x32xf32>
    %46 = arith.maximumf %44, %45 : vector<2x32xf32>
    %47 = vector.extract_strided_slice %7 {offsets = [0, 640], sizes = [2, 32], strides = [1, 1]} : vector<2x800xf32> to vector<2x32xf32>
    %48 = arith.maximumf %46, %47 : vector<2x32xf32>
    %49 = vector.extract_strided_slice %7 {offsets = [0, 672], sizes = [2, 32], strides = [1, 1]} : vector<2x800xf32> to vector<2x32xf32>
    %50 = arith.maximumf %48, %49 : vector<2x32xf32>
    %51 = vector.extract_strided_slice %7 {offsets = [0, 704], sizes = [2, 32], strides = [1, 1]} : vector<2x800xf32> to vector<2x32xf32>
    %52 = arith.maximumf %50, %51 : vector<2x32xf32>
    %53 = vector.extract_strided_slice %7 {offsets = [0, 736], sizes = [2, 32], strides = [1, 1]} : vector<2x800xf32> to vector<2x32xf32>
    %54 = arith.maximumf %52, %53 : vector<2x32xf32>
    %55 = vector.extract_strided_slice %7 {offsets = [0, 768], sizes = [2, 32], strides = [1, 1]} : vector<2x800xf32> to vector<2x32xf32>
    %56 = arith.maximumf %54, %55 : vector<2x32xf32>
    %57 = arith.truncf %56 : vector<2x32xf32> to vector<2x32xbf16>
    %c0_6 = arith.constant 0 : index
    %c0_7 = arith.constant 0 : index
    %58 = vector.load %arg3[%c0_6, %c0_7] : memref<32x512xbf16, #tpu.memory_space<vmem>>, vector<32x512xbf16>
    %cst_8 = arith.constant dense<0.000000e+00> : vector<2x512xf32>
    %59 = tpu.matmul %57, %58, %cst_8 {dimension_numbers = #tpu.dot_dimension_numbers<[1], [0], [0], [1], [0, 0, 1, 1], [], []>} : vector<2x32xbf16>, vector<32x512xbf16>, vector<2x512xf32> -> vector<2x512xf32>
    %c0_9 = arith.constant 0 : index
    %c0_10 = arith.constant 0 : index
    %60 = vector.load %arg4[%c0_9, %c0_10] : memref<1x512xf32, #tpu.memory_space<vmem>>, vector<1x512xf32>
    %61 = vector.broadcast %60 : vector<1x512xf32> to vector<2x512xf32>
    %62 = arith.addf %59, %61 : vector<2x512xf32>
    %cst_11 = arith.constant 0.000000e+00 : f32
    %63 = vector.broadcast %cst_11 : f32 to vector<2x512xf32>
    %64 = arith.maximumf %62, %63 : vector<2x512xf32>
    %65 = vector.extract_strided_slice %64 {offsets = [0, 0], sizes = [2, 32], strides = [1, 1]} : vector<2x512xf32> to vector<2x32xf32>
    %66 = vector.extract_strided_slice %64 {offsets = [0, 32], sizes = [2, 32], strides = [1, 1]} : vector<2x512xf32> to vector<2x32xf32>
    %67 = arith.maximumf %65, %66 : vector<2x32xf32>
    %68 = vector.extract_strided_slice %64 {offsets = [0, 64], sizes = [2, 32], strides = [1, 1]} : vector<2x512xf32> to vector<2x32xf32>
    %69 = arith.maximumf %67, %68 : vector<2x32xf32>
    %70 = vector.extract_strided_slice %64 {offsets = [0, 96], sizes = [2, 32], strides = [1, 1]} : vector<2x512xf32> to vector<2x32xf32>
    %71 = arith.maximumf %69, %70 : vector<2x32xf32>
    %72 = vector.extract_strided_slice %64 {offsets = [0, 128], sizes = [2, 32], strides = [1, 1]} : vector<2x512xf32> to vector<2x32xf32>
    %73 = arith.maximumf %71, %72 : vector<2x32xf32>
    %74 = vector.extract_strided_slice %64 {offsets = [0, 160], sizes = [2, 32], strides = [1, 1]} : vector<2x512xf32> to vector<2x32xf32>
    %75 = arith.maximumf %73, %74 : vector<2x32xf32>
    %76 = vector.extract_strided_slice %64 {offsets = [0, 192], sizes = [2, 32], strides = [1, 1]} : vector<2x512xf32> to vector<2x32xf32>
    %77 = arith.maximumf %75, %76 : vector<2x32xf32>
    %78 = vector.extract_strided_slice %64 {offsets = [0, 224], sizes = [2, 32], strides = [1, 1]} : vector<2x512xf32> to vector<2x32xf32>
    %79 = arith.maximumf %77, %78 : vector<2x32xf32>
    %80 = vector.extract_strided_slice %64 {offsets = [0, 256], sizes = [2, 32], strides = [1, 1]} : vector<2x512xf32> to vector<2x32xf32>
    %81 = arith.maximumf %79, %80 : vector<2x32xf32>
    %82 = vector.extract_strided_slice %64 {offsets = [0, 288], sizes = [2, 32], strides = [1, 1]} : vector<2x512xf32> to vector<2x32xf32>
    %83 = arith.maximumf %81, %82 : vector<2x32xf32>
    %84 = vector.extract_strided_slice %64 {offsets = [0, 320], sizes = [2, 32], strides = [1, 1]} : vector<2x512xf32> to vector<2x32xf32>
    %85 = arith.maximumf %83, %84 : vector<2x32xf32>
    %86 = vector.extract_strided_slice %64 {offsets = [0, 352], sizes = [2, 32], strides = [1, 1]} : vector<2x512xf32> to vector<2x32xf32>
    %87 = arith.maximumf %85, %86 : vector<2x32xf32>
    %88 = vector.extract_strided_slice %64 {offsets = [0, 384], sizes = [2, 32], strides = [1, 1]} : vector<2x512xf32> to vector<2x32xf32>
    %89 = arith.maximumf %87, %88 : vector<2x32xf32>
    %90 = vector.extract_strided_slice %64 {offsets = [0, 416], sizes = [2, 32], strides = [1, 1]} : vector<2x512xf32> to vector<2x32xf32>
    %91 = arith.maximumf %89, %90 : vector<2x32xf32>
    %92 = vector.extract_strided_slice %64 {offsets = [0, 448], sizes = [2, 32], strides = [1, 1]} : vector<2x512xf32> to vector<2x32xf32>
    %93 = arith.maximumf %91, %92 : vector<2x32xf32>
    %94 = vector.extract_strided_slice %64 {offsets = [0, 480], sizes = [2, 32], strides = [1, 1]} : vector<2x512xf32> to vector<2x32xf32>
    %95 = arith.maximumf %93, %94 : vector<2x32xf32>
    %96 = arith.truncf %95 : vector<2x32xf32> to vector<2x32xbf16>
    %c0_12 = arith.constant 0 : index
    %c0_13 = arith.constant 0 : index
    %97 = vector.load %arg5[%c0_12, %c0_13] : memref<32x512xbf16, #tpu.memory_space<vmem>>, vector<32x512xbf16>
    %cst_14 = arith.constant dense<0.000000e+00> : vector<2x512xf32>
    %98 = tpu.matmul %96, %97, %cst_14 {dimension_numbers = #tpu.dot_dimension_numbers<[1], [0], [0], [1], [0, 0, 1, 1], [], []>} : vector<2x32xbf16>, vector<32x512xbf16>, vector<2x512xf32> -> vector<2x512xf32>
    %c0_15 = arith.constant 0 : index
    %c0_16 = arith.constant 0 : index
    %99 = vector.load %arg6[%c0_15, %c0_16] : memref<1x512xf32, #tpu.memory_space<vmem>>, vector<1x512xf32>
    %100 = vector.broadcast %99 : vector<1x512xf32> to vector<2x512xf32>
    %101 = arith.addf %98, %100 : vector<2x512xf32>
    %cst_17 = arith.constant 0.000000e+00 : f32
    %102 = vector.broadcast %cst_17 : f32 to vector<2x512xf32>
    %103 = arith.maximumf %101, %102 : vector<2x512xf32>
    %104 = vector.extract_strided_slice %103 {offsets = [0, 0], sizes = [2, 32], strides = [1, 1]} : vector<2x512xf32> to vector<2x32xf32>
    %105 = vector.extract_strided_slice %103 {offsets = [0, 32], sizes = [2, 32], strides = [1, 1]} : vector<2x512xf32> to vector<2x32xf32>
    %106 = arith.maximumf %104, %105 : vector<2x32xf32>
    %107 = vector.extract_strided_slice %103 {offsets = [0, 64], sizes = [2, 32], strides = [1, 1]} : vector<2x512xf32> to vector<2x32xf32>
    %108 = arith.maximumf %106, %107 : vector<2x32xf32>
    %109 = vector.extract_strided_slice %103 {offsets = [0, 96], sizes = [2, 32], strides = [1, 1]} : vector<2x512xf32> to vector<2x32xf32>
    %110 = arith.maximumf %108, %109 : vector<2x32xf32>
    %111 = vector.extract_strided_slice %103 {offsets = [0, 128], sizes = [2, 32], strides = [1, 1]} : vector<2x512xf32> to vector<2x32xf32>
    %112 = arith.maximumf %110, %111 : vector<2x32xf32>
    %113 = vector.extract_strided_slice %103 {offsets = [0, 160], sizes = [2, 32], strides = [1, 1]} : vector<2x512xf32> to vector<2x32xf32>
    %114 = arith.maximumf %112, %113 : vector<2x32xf32>
    %115 = vector.extract_strided_slice %103 {offsets = [0, 192], sizes = [2, 32], strides = [1, 1]} : vector<2x512xf32> to vector<2x32xf32>
    %116 = arith.maximumf %114, %115 : vector<2x32xf32>
    %117 = vector.extract_strided_slice %103 {offsets = [0, 224], sizes = [2, 32], strides = [1, 1]} : vector<2x512xf32> to vector<2x32xf32>
    %118 = arith.maximumf %116, %117 : vector<2x32xf32>
    %119 = vector.extract_strided_slice %103 {offsets = [0, 256], sizes = [2, 32], strides = [1, 1]} : vector<2x512xf32> to vector<2x32xf32>
    %120 = arith.maximumf %118, %119 : vector<2x32xf32>
    %121 = vector.extract_strided_slice %103 {offsets = [0, 288], sizes = [2, 32], strides = [1, 1]} : vector<2x512xf32> to vector<2x32xf32>
    %122 = arith.maximumf %120, %121 : vector<2x32xf32>
    %123 = vector.extract_strided_slice %103 {offsets = [0, 320], sizes = [2, 32], strides = [1, 1]} : vector<2x512xf32> to vector<2x32xf32>
    %124 = arith.maximumf %122, %123 : vector<2x32xf32>
    %125 = vector.extract_strided_slice %103 {offsets = [0, 352], sizes = [2, 32], strides = [1, 1]} : vector<2x512xf32> to vector<2x32xf32>
    %126 = arith.maximumf %124, %125 : vector<2x32xf32>
    %127 = vector.extract_strided_slice %103 {offsets = [0, 384], sizes = [2, 32], strides = [1, 1]} : vector<2x512xf32> to vector<2x32xf32>
    %128 = arith.maximumf %126, %127 : vector<2x32xf32>
    %129 = vector.extract_strided_slice %103 {offsets = [0, 416], sizes = [2, 32], strides = [1, 1]} : vector<2x512xf32> to vector<2x32xf32>
    %130 = arith.maximumf %128, %129 : vector<2x32xf32>
    %131 = vector.extract_strided_slice %103 {offsets = [0, 448], sizes = [2, 32], strides = [1, 1]} : vector<2x512xf32> to vector<2x32xf32>
    %132 = arith.maximumf %130, %131 : vector<2x32xf32>
    %133 = vector.extract_strided_slice %103 {offsets = [0, 480], sizes = [2, 32], strides = [1, 1]} : vector<2x512xf32> to vector<2x32xf32>
    %134 = arith.maximumf %132, %133 : vector<2x32xf32>
    %c0_18 = arith.constant 0 : index
    %c0_19 = arith.constant 0 : index
    %135 = vector.load %arg7[%c0_18, %c0_19] : memref<2x32xf32, #tpu.memory_space<vmem>>, vector<2x32xf32>
    tpu.vector_store %arg7[%c0_18, %c0_19], %134 {strides = array<i32>} : memref<2x32xf32, #tpu.memory_space<vmem>>, vector<2x32xf32>,
    return
  }
}

</mosaic_0001>

<llo_original>
// kernel: _lambda_.4
$region0: #{_lambda_.4}
  #allocation0 [shape = 'u32[]', space=smem, size = 0x4, offset = 0x4, fixed_abs, tag = 'smem constant byte address 0x4 - core index']
  #allocation1 [shape = 'u32[144,128]{1,0:T(1,128)}', space=vmem, size = 0x12000, scoped, tag = 'internal scratch']
  %s0 = inlined_call_operand.vmem [shape: bf16[2048,243], index: 0, kind: input, shape index: {}]
  %s1 = inlined_call_operand.vmem [shape: bf16[243,800], index: 1, kind: input, shape index: {}]
  %s2 = inlined_call_operand.vmem [shape: f32[1,800], index: 2, kind: input, shape index: {}]
  %s3 = inlined_call_operand.vmem [shape: bf16[2048,32], index: 3, kind: output, shape index: {}]
  %s4 = sld [smem:[#allocation0]]
  $region45: #{_lambda_.4} parent=0
    _
  %s6 = ssub.s32 1, %s4
  %s7 = scalar_select 0, %s6, %s4
  loop: start=0, step=1, limit=10
  $region2: #{_lambda_.4} parent=0 // loop_pre_header
    _
  $region3: #{_lambda_.4} parent=0 // loop_header
    %s9 = sphi 0, %s13
    %p10 = scmp.ge.s32.totalorder %s9, 10
    %s19 = sphi 0, %s21
    %s22 = sphi 0, %s19
    %s23 = sphi 0, %s22
    %s39 = sphi 0, %s23
    %s43 = sphi 0, %s43
    %s45 = sphi 0, %s43
    %s46 = sphi 0, %s45
    %s60 = sphi 0, %s46
    %s64 = sphi 0, %s64
    %s66 = sphi 0, %s64
    %s67 = sphi 0, %s66
    %s81 = sphi 0, %s67
    %s87 = sphi 0, %s89
    %s90 = sphi 0, %s87
    %s91 = sphi 0, %s90
    %s107 = sphi 0, %s91
  $region4: #{_lambda_.4} parent=0 // loop_header_branch
    %12 = sbr.rel (%p10) target = $region8
  $region5: #{_lambda_.4} parent=0 // loop_body
    %s14 = ssub.s32 %s9, 1
    %s15 = ssub.s32 %s9, 2
    %s16 = sadd.s32 %s9, 1
    %s17 = ssub.s32 %s9, %s16
    %p18 = scmp.eq.s32.totalorder %s17, 0
    %s20 = sadd.s32 %s19, 1
    %s21 = scalar_select %p18, %s19, %s20
    %p24 = pneg %p18
    %p25 = scmp.eq.s32.totalorder %s9, 7
    %p26 = por %p24, %p25
    %p27 = scmp.ne.s32.totalorder %s19, %s22
    %p28 = scmp.eq.s32.totalorder %s9, 0
    %p29 = por %p27, %p28
    %p30 = scmp.ne.s32.totalorder %s19, %s22
    %p31 = scmp.eq.s32.totalorder %s14, 7
    %p32 = por %p30, %p31
    %p33 = scmp.ne.s32.totalorder %s22, %s23
    %p34 = scmp.eq.s32.totalorder %s14, 0
    %p35 = por %p33, %p34
    %p36 = scmp.ne.s32.totalorder %s22, %s23
    %p37 = scmp.eq.s32.totalorder %s15, 7
    %p38 = por %p36, %p37
    %p40 = scmp.ne.s32.totalorder %s23, %s39
    %p41 = scmp.eq.s32.totalorder %s15, 0
    %p42 = por %p40, %p41
    %s44 = sadd.s32 %s43, 1
    %p47 = scmp.eq.s32.totalorder %s9, 7
    %p48 = scmp.ne.s32.totalorder %s43, %s45
    %p49 = scmp.eq.s32.totalorder %s9, 0
    %p50 = por %p48, %p49
    %p51 = scmp.ne.s32.totalorder %s43, %s45
    %p52 = scmp.eq.s32.totalorder %s14, 7
    %p53 = por %p51, %p52
    %p54 = scmp.ne.s32.totalorder %s45, %s46
    %p55 = scmp.eq.s32.totalorder %s14, 0
    %p56 = por %p54, %p55
    %p57 = scmp.ne.s32.totalorder %s45, %s46
    %p58 = scmp.eq.s32.totalorder %s15, 7
    %p59 = por %p57, %p58
    %p61 = scmp.ne.s32.totalorder %s46, %s60
    %p62 = scmp.eq.s32.totalorder %s15, 0
    %p63 = por %p61, %p62
    %s65 = sadd.s32 %s64, 1
    %p68 = scmp.eq.s32.totalorder %s9, 7
    %p69 = scmp.ne.s32.totalorder %s64, %s66
    %p70 = scmp.eq.s32.totalorder %s9, 0
    %p71 = por %p69, %p70
    %p72 = scmp.ne.s32.totalorder %s64, %s66
    %p73 = scmp.eq.s32.totalorder %s14, 7
    %p74 = por %p72, %p73
    %p75 = scmp.ne.s32.totalorder %s66, %s67
    %p76 = scmp.eq.s32.totalorder %s14, 0
    %p77 = por %p75, %p76
    %p78 = scmp.ne.s32.totalorder %s66, %s67
    %p79 = scmp.eq.s32.totalorder %s15, 7
    %p80 = por %p78, %p79
    %p82 = scmp.ne.s32.totalorder %s67, %s81
    %p83 = scmp.eq.s32.totalorder %s15, 0
    %p84 = por %p82, %p83
    %s85 = ssub.s32 %s9, %s16
    %p86 = scmp.eq.s32.totalorder %s85, 0
    %s88 = sadd.s32 %s87, 1
    %s89 = scalar_select %p86, %s87, %s88
    %p92 = pneg %p86
    %p93 = scmp.eq.s32.totalorder %s9, 7
    %p94 = por %p92, %p93
    %p95 = scmp.ne.s32.totalorder %s87, %s90
    %p96 = scmp.eq.s32.totalorder %s9, 0
    %p97 = por %p95, %p96
    %p98 = scmp.ne.s32.totalorder %s87, %s90
    %p99 = scmp.eq.s32.totalorder %s14, 7
    %p100 = por %p98, %p99
    %p101 = scmp.ne.s32.totalorder %s90, %s91
    %p102 = scmp.eq.s32.totalorder %s14, 0
    %p103 = por %p101, %p102
    %p104 = scmp.ne.s32.totalorder %s90, %s91
    %p105 = scmp.eq.s32.totalorder %s15, 7
    %p106 = por %p104, %p105
    %p108 = scmp.ne.s32.totalorder %s91, %s107
    %p109 = scmp.eq.s32.totalorder %s15, 0
    %p110 = por %p108, %p109
    %p111 = scmp.le.s32.totalorder 1, %s9
    %p112 = scmp.lt.s32.totalorder %s9, 9
    %p113 = pnand %p111, %p112
    %p114 = pneg %p113
    // Predicated region
    $region9: #{_lambda_.4} parent=5 // pred_check
      _
    $region10: #{_lambda_.4} parent=5 // pred_check_branch
      %116 = sbr.rel (%p113) target = $region12
    $region11: #{_lambda_.4} parent=5 // pred_region
      %s117 = ssub.s32 %s9, 1
      // Predicated region
      $region13: #{_lambda_.4} parent=11 // pred_check
        %p118 = pneg %p56
      $region14: #{_lambda_.4} parent=11 // pred_check_branch
        %120 = sbr.rel (%p118) target = $region16
      $region15: #{_lambda_.4} parent=11 // pred_region
        _
      $region16: #{_lambda_.4} parent=11 // pred_fallthru
        _
      // Predicated region
      $region17: #{_lambda_.4} parent=11 // pred_check
        %p121 = pneg %p77
      $region18: #{_lambda_.4} parent=11 // pred_check_branch
        %123 = sbr.rel (%p121) target = $region20
      $region19: #{_lambda_.4} parent=11 // pred_region
        _
      $region20: #{_lambda_.4} parent=11 // pred_fallthru
        _
    $region12: #{_lambda_.4} parent=5 // pred_fallthru
      _
    %p124 = scmp.lt.s32.totalorder %s9, 8
    // Predicated region
    $region21: #{_lambda_.4} parent=5 // pred_check
      %p125 = pneg %p124
    $region22: #{_lambda_.4} parent=5 // pred_check_branch
      %127 = sbr.rel (%p125) target = $region24
    $region23: #{_lambda_.4} parent=5 // pred_region
      // Predicated region
      $region25: #{_lambda_.4} parent=23 // pred_check
        %p128 = pneg %p29
      $region26: #{_lambda_.4} parent=23 // pred_check_branch
        %130 = sbr.rel (%p128) target = $region28
      $region27: #{_lambda_.4} parent=23 // pred_region
        %s131 = smul.u32 32, %s9
        %p132 = scmp.lt.s32.totalorder %s131, 255
        %s133 = scalar_select %p132, %s131, 255
        %s134 = smul.addr %s133, 2
        %s135 = smul.addr %s134, 4
        %s136 = scalar_lea.vmem %s0, %s135
        %s137 = smul.u32 32, %s9
      $region28: #{_lambda_.4} parent=23 // pred_fallthru
        _
    $region24: #{_lambda_.4} parent=5 // pred_fallthru
      _
    %p138 = scmp.le.s32.totalorder 1, %s9
    %p139 = scmp.lt.s32.totalorder %s9, 9
    %p140 = pnand %p138, %p139
    %p141 = pneg %p140
    // Predicated region
    $region29: #{_lambda_.4} parent=5 // pred_check
      _
    $region30: #{_lambda_.4} parent=5 // pred_check_branch
      %143 = sbr.rel (%p140) target = $region32
    $region31: #{_lambda_.4} parent=5 // pred_region
      %s144 = ssub.s32 %s9, 1
      %s145 = smul.u32 32, %s14
      %p146 = scmp.lt.s32.totalorder %s145, 255
      %s147 = scalar_select %p146, %s145, 255
      %s148 = smul.addr %s147, 2
      %s149 = smul.addr %s148, 4
      %s150 = scalar_lea.vmem %s0, %s149
      %p151 = pneg %p35
      %p152 = pneg %p32
      %p153 = pneg %p56
      %p154 = pneg %p53
      %p155 = pneg %p77
      %p156 = pneg %p74
      %p157 = pneg %p103
      %p158 = pneg %p100
      %s159 = smul.u32 32, %s14
      %p160 = scmp.lt.s32.totalorder %s159, 255
      %s161 = scalar_select %p160, %s159, 255
      %s162 = smul.addr %s161, 4
      %s163 = scalar_lea.vmem %s3, %s162
      %s164 = smul.u32 32, %s14
      %p165 = scmp.lt.s32.totalorder %s164, 255
      %s166 = scalar_select %p165, %s164, 255
      %s167 = smul.addr %s166, 2
      %s168 = smul.addr %s167, 4
      %s169 = scalar_lea.vmem %s0, %s168
      %s170 = smul.u32 32, %s14
      %s171 = smul.u32 32, %s14
      %p172 = scmp.lt.s32.totalorder %s171, 255
      %s173 = scalar_select %p172, %s171, 255
      %s174 = smul.addr %s173, 4
      %s175 = scalar_lea.vmem %s3, %s174
      %s176 = smul.u32 32, %s14
      %v178 = vld [vmem:[%s169] sm:$0xff]
      %v179 = vld [vmem:[%s169 + $0x8] sm:$0xff]
      %v180 = vld [vmem:[%s169 + $0x10] sm:$0xff]
      %v181 = vld [vmem:[%s169 + $0x18] sm:$0xff]
      %v182 = vld [vmem:[%s169 + $0x20] sm:$0xff]
      %v183 = vld [vmem:[%s169 + $0x28] sm:$0xff]
      %v184 = vld [vmem:[%s169 + $0x30] sm:$0xff]
      %v185 = vld [vmem:[%s169 + $0x38] sm:$0xff]
      %v186 = vld [vmem:[%s169 + $0x40] sm:$0xff]
      %v187 = vld [vmem:[%s169 + $0x48] sm:$0xff]
      %v188 = vld [vmem:[%s169 + $0x50] sm:$0xff]
      %v189 = vld [vmem:[%s169 + $0x58] sm:$0xff]
      %v190 = vld [vmem:[%s169 + $0x60] sm:$0xff]
      %v191 = vld [vmem:[%s169 + $0x68] sm:$0xff]
      %v192 = vld [vmem:[%s169 + $0x70] sm:$0xff]
      %v193 = vld [vmem:[%s169 + $0x78] sm:$0xff]
      %v194 = vld [vmem:[%s169 + $0x80] sm:$0xff]
      %v195 = vld [vmem:[%s169 + $0x88] sm:$0xff]
      %v196 = vld [vmem:[%s169 + $0x90] sm:$0xff]
      %v197 = vld [vmem:[%s169 + $0x98] sm:$0xff]
      %v198 = vld [vmem:[%s169 + $0xa0] sm:$0xff]
      %v199 = vld [vmem:[%s169 + $0xa8] sm:$0xff]
      %v200 = vld [vmem:[%s169 + $0xb0] sm:$0xff]
      %v201 = vld [vmem:[%s169 + $0xb8] sm:$0xff]
      %v202 = vld [vmem:[%s169 + $0xc0] sm:$0xff]
      %v203 = vld [vmem:[%s169 + $0xc8] sm:$0xff]
      %v204 = vld [vmem:[%s169 + $0xd0] sm:$0xff]
      %v205 = vld [vmem:[%s169 + $0xd8] sm:$0xff]
      %v206 = vld [vmem:[%s169 + $0xe0] sm:$0xff]
      %v207 = vld [vmem:[%s169 + $0xe8] sm:$0xff]
      %v208 = vld [vmem:[%s169 + $0xf0] sm:$0xff]
      %v209 = vld [vmem:[%s169 + $0xf8] sm:$0xff]
      %v210 = vld [vmem:[%s1] sm:$0xff]
      %v211 = vld [vmem:[%s1 + $0x8] sm:$0xff]
      %v212 = vld [vmem:[%s1 + $0x10] sm:$0xff]
      %v213 = vld [vmem:[%s1 + $0x18] sm:$0xf]
      %v214 = vld [vmem:[%s1 + $0x1c] sm:$0xff]
      %v215 = vld [vmem:[%s1 + $0x24] sm:$0xff]
      %v216 = vld [vmem:[%s1 + $0x2c] sm:$0xff]
      %v217 = vld [vmem:[%s1 + $0x34] sm:$0xf]
      %v218 = vld [vmem:[%s1 + $0x38] sm:$0xff]
      %v219 = vld [vmem:[%s1 + $0x40] sm:$0xff]
      %v220 = vld [vmem:[%s1 + $0x48] sm:$0xff]
      %v221 = vld [vmem:[%s1 + $0x50] sm:$0xf]
      %v222 = vld [vmem:[%s1 + $0x54] sm:$0xff]
      %v223 = vld [vmem:[%s1 + $0x5c] sm:$0xff]
      %v224 = vld [vmem:[%s1 + $0x64] sm:$0xff]
      %v225 = vld [vmem:[%s1 + $0x6c] sm:$0xf]
      %v226 = vld [vmem:[%s1 + $0x70] sm:$0xff]
      %v227 = vld [vmem:[%s1 + $0x78] sm:$0xff]
      %v228 = vld [vmem:[%s1 + $0x80] sm:$0xff]
      %v229 = vld [vmem:[%s1 + $0x88] sm:$0xf]
      %v230 = vld [vmem:[%s1 + $0x8c] sm:$0xff]
      %v231 = vld [vmem:[%s1 + $0x94] sm:$0xff]
      %v232 = vld [vmem:[%s1 + $0x9c] sm:$0xff]
      %v233 = vld [vmem:[%s1 + $0xa4] sm:$0xf]
      %v234 = vld [vmem:[%s1 + $0xa8] sm:$0xff]
      %v235 = vld [vmem:[%s1 + $0xb0] sm:$0xff]
      %v236 = vld [vmem:[%s1 + $0xb8] sm:$0xff]
      %v237 = vld [vmem:[%s1 + $0xc0] sm:$0xf]
      %v238 = vld [vmem:[%s1 + $0xc4] sm:$0xff]
      %v239 = vld [vmem:[%s1 + $0xcc] sm:$0xff]
      %v240 = vld [vmem:[%s1 + $0xd4] sm:$0xff]
      %v241 = vld [vmem:[%s1 + $0xdc] sm:$0xf]
      %v242 = vld [vmem:[%s1 + $0xe0] sm:$0xff]
      %v243 = vld [vmem:[%s1 + $0xe8] sm:$0xff]
      %v244 = vld [vmem:[%s1 + $0xf0] sm:$0xff]
      %v245 = vld [vmem:[%s1 + $0xf8] sm:$0xf]
      %v246 = vld [vmem:[%s1 + $0xfc] sm:$0xff]
      %v247 = vld [vmem:[%s1 + $0x104] sm:$0xff]
      %v248 = vld [vmem:[%s1 + $0x10c] sm:$0xff]
      %v249 = vld [vmem:[%s1 + $0x114] sm:$0xf]
      %v250 = vld [vmem:[%s1 + $0x118] sm:$0xff]
      %v251 = vld [vmem:[%s1 + $0x120] sm:$0xff]
      %v252 = vld [vmem:[%s1 + $0x128] sm:$0xff]
      %v253 = vld [vmem:[%s1 + $0x130] sm:$0xf]
      %v254 = vld [vmem:[%s1 + $0x134] sm:$0xff]
      %v255 = vld [vmem:[%s1 + $0x13c] sm:$0xff]
      %v256 = vld [vmem:[%s1 + $0x144] sm:$0xff]
      %v257 = vld [vmem:[%s1 + $0x14c] sm:$0xf]
      %v258 = vld [vmem:[%s1 + $0x150] sm:$0xff]
      %v259 = vld [vmem:[%s1 + $0x158] sm:$0xff]
      %v260 = vld [vmem:[%s1 + $0x160] sm:$0xff]
      %v261 = vld [vmem:[%s1 + $0x168] sm:$0xf]
      %v262 = vld [vmem:[%s1 + $0x16c] sm:$0xff]
      %v263 = vld [vmem:[%s1 + $0x174] sm:$0xff]
      %v264 = vld [vmem:[%s1 + $0x17c] sm:$0xff]
      %v265 = vld [vmem:[%s1 + $0x184] sm:$0xf]
      %v266 = vld [vmem:[%s1 + $0x188] sm:$0xff]
      %v267 = vld [vmem:[%s1 + $0x190] sm:$0xff]
      %v268 = vld [vmem:[%s1 + $0x198] sm:$0xff]
      %v269 = vld [vmem:[%s1 + $0x1a0] sm:$0xf]
      %v270 = vld [vmem:[%s1 + $0x1a4] sm:$0xff]
      %v271 = vld [vmem:[%s1 + $0x1ac] sm:$0xff]
      %v272 = vld [vmem:[%s1 + $0x1b4] sm:$0xff]
      %v273 = vld [vmem:[%s1 + $0x1bc] sm:$0xf]
      %v274 = vld [vmem:[%s1 + $0x1c0] sm:$0xff]
      %v275 = vld [vmem:[%s1 + $0x1c8] sm:$0xff]
      %v276 = vld [vmem:[%s1 + $0x1d0] sm:$0xff]
      %v277 = vld [vmem:[%s1 + $0x1d8] sm:$0xf]
      %v278 = vld [vmem:[%s1 + $0x1dc] sm:$0xff]
      %v279 = vld [vmem:[%s1 + $0x1e4] sm:$0xff]
      %v280 = vld [vmem:[%s1 + $0x1ec] sm:$0xff]
      %v281 = vld [vmem:[%s1 + $0x1f4] sm:$0xf]
      %v282 = vld [vmem:[%s1 + $0x1f8] sm:$0xff]
      %v283 = vld [vmem:[%s1 + $0x200] sm:$0xff]
      %v284 = vld [vmem:[%s1 + $0x208] sm:$0xff]
      %v285 = vld [vmem:[%s1 + $0x210] sm:$0xf]
      %v286 = vld [vmem:[%s1 + $0x214] sm:$0xff]
      %v287 = vld [vmem:[%s1 + $0x21c] sm:$0xff]
      %v288 = vld [vmem:[%s1 + $0x224] sm:$0xff]
      %v289 = vld [vmem:[%s1 + $0x22c] sm:$0xf]
      %v290 = vld [vmem:[%s1 + $0x230] sm:$0xff]
      %v291 = vld [vmem:[%s1 + $0x238] sm:$0xff]
      %v292 = vld [vmem:[%s1 + $0x240] sm:$0xff]
      %v293 = vld [vmem:[%s1 + $0x248] sm:$0xf]
      %v294 = vld [vmem:[%s1 + $0x24c] sm:$0xff]
      %v295 = vld [vmem:[%s1 + $0x254] sm:$0xff]
      %v296 = vld [vmem:[%s1 + $0x25c] sm:$0xff]
      %v297 = vld [vmem:[%s1 + $0x264] sm:$0xf]
      %v298 = vld [vmem:[%s1 + $0x268] sm:$0xff]
      %v299 = vld [vmem:[%s1 + $0x270] sm:$0xff]
      %v300 = vld [vmem:[%s1 + $0x278] sm:$0xff]
      %v301 = vld [vmem:[%s1 + $0x280] sm:$0xf]
      %v302 = vld [vmem:[%s1 + $0x284] sm:$0xff]
      %v303 = vld [vmem:[%s1 + $0x28c] sm:$0xff]
      %v304 = vld [vmem:[%s1 + $0x294] sm:$0xff]
      %v305 = vld [vmem:[%s1 + $0x29c] sm:$0xf]
      %v306 = vld [vmem:[%s1 + $0x2a0] sm:$0xff]
      %v307 = vld [vmem:[%s1 + $0x2a8] sm:$0xff]
      %v308 = vld [vmem:[%s1 + $0x2b0] sm:$0xff]
      %v309 = vld [vmem:[%s1 + $0x2b8] sm:$0xf]
      %v310 = vld [vmem:[%s1 + $0x2bc] sm:$0xff]
      %v311 = vld [vmem:[%s1 + $0x2c4] sm:$0xff]
      %v312 = vld [vmem:[%s1 + $0x2cc] sm:$0xff]
      %v313 = vld [vmem:[%s1 + $0x2d4] sm:$0xf]
      %v314 = vld [vmem:[%s1 + $0x2d8] sm:$0xff]
      %v315 = vld [vmem:[%s1 + $0x2e0] sm:$0xff]
      %v316 = vld [vmem:[%s1 + $0x2e8] sm:$0xff]
      %v317 = vld [vmem:[%s1 + $0x2f0] sm:$0xf]
      %v318 = vld [vmem:[%s1 + $0x2f4] sm:$0xff]
      %v319 = vld [vmem:[%s1 + $0x2fc] sm:$0xff]
      %v320 = vld [vmem:[%s1 + $0x304] sm:$0xff]
      %v321 = vld [vmem:[%s1 + $0x30c] sm:$0xf]
      %v322 = vld [vmem:[%s1 + $0x310] sm:$0xff]
      %v323 = vld [vmem:[%s1 + $0x318] sm:$0xff]
      %v324 = vld [vmem:[%s1 + $0x320] sm:$0xff]
      %v325 = vld [vmem:[%s1 + $0x328] sm:$0xf]
      %v326 = vld [vmem:[%s1 + $0x32c] sm:$0xff]
      %v327 = vld [vmem:[%s1 + $0x334] sm:$0xff]
      %v328 = vld [vmem:[%s1 + $0x33c] sm:$0xff]
      %v329 = vld [vmem:[%s1 + $0x344] sm:$0xf]
      %v330 = vld [vmem:[%s1 + $0x348] sm:$0x33]
      %v331 = vld [vmem:[%s1 + $0x350] sm:$0x33]
      %v332 = vld [vmem:[%s1 + $0x358] sm:$0x33]
      %v333 = vld [vmem:[%s1 + $0x360] sm:$0x3]
      %v334 = vld [vmem:[%s2] sm:$0x7f]
      %v336 = vlaneseq
      %v337 = vshrl.u32 %v336, 7
      %v338 = vsub.s32 0, %v337
      %v339 = vrot.slane %v334, %v338
      %v340 = vlaneseq
      %v341 = vshrl.u32 %v340, 7
      %v342 = vsub.s32 1, %v341
      %v343 = vrot.slane %v334, %v342
      %v344 = vlaneseq
      %v345 = vshrl.u32 %v344, 7
      %v346 = vsub.s32 2, %v345
      %v347 = vrot.slane %v334, %v346
      %v348 = vlaneseq
      %v349 = vshrl.u32 %v348, 7
      %v350 = vsub.s32 3, %v349
      %v351 = vrot.slane %v334, %v350
      %v352 = vlaneseq
      %v353 = vshrl.u32 %v352, 7
      %v354 = vsub.s32 4, %v353
      %v355 = vrot.slane %v334, %v354
      %v356 = vlaneseq
      %v357 = vshrl.u32 %v356, 7
      %v358 = vsub.s32 5, %v357
      %v359 = vrot.slane %v334, %v358
      %v360 = vlaneseq
      %v361 = vshrl.u32 %v360, 7
      %v362 = vsub.s32 6, %v361
      %v363 = vrot.slane %v334, %v362
      %v403 = vunpack.c.l.b16 %v178
      %v404 = vunpack.c.h.b16 %v178
      %v405 = vunpack.c.l.b16 %v179
      %v406 = vunpack.c.h.b16 %v179
      %v407 = vunpack.c.l.b16 %v180
      %v408 = vunpack.c.h.b16 %v180
      %v409 = vunpack.c.l.b16 %v181
      %v410 = vunpack.c.h.b16 %v181
      %v411 = vunpack.c.l.b16 %v182
      %v412 = vunpack.c.h.b16 %v182
      %v413 = vunpack.c.l.b16 %v183
      %v414 = vunpack.c.h.b16 %v183
      %v415 = vunpack.c.l.b16 %v184
      %v416 = vunpack.c.h.b16 %v184
      %v417 = vunpack.c.l.b16 %v185
      %v418 = vunpack.c.h.b16 %v185
      %v419 = vunpack.c.l.b16 %v186
      %v420 = vunpack.c.h.b16 %v186
      %v421 = vunpack.c.l.b16 %v187
      %v422 = vunpack.c.h.b16 %v187
      %v423 = vunpack.c.l.b16 %v188
      %v424 = vunpack.c.h.b16 %v188
      %v425 = vunpack.c.l.b16 %v189
      %v426 = vunpack.c.h.b16 %v189
      %v427 = vunpack.c.l.b16 %v190
      %v428 = vunpack.c.h.b16 %v190
      %v429 = vunpack.c.l.b16 %v191
      %v430 = vunpack.c.h.b16 %v191
      %v431 = vunpack.c.l.b16 %v192
      %v432 = vunpack.c.h.b16 %v192
      %v433 = vunpack.c.l.b16 %v193
      %v434 = vunpack.c.h.b16 %v193
      %v435 = vunpack.c.l.b16 %v194
      %v436 = vunpack.c.h.b16 %v194
      %v437 = vunpack.c.l.b16 %v195
      %v438 = vunpack.c.h.b16 %v195
      %v439 = vunpack.c.l.b16 %v196
      %v440 = vunpack.c.h.b16 %v196
      %v441 = vunpack.c.l.b16 %v197
      %v442 = vunpack.c.h.b16 %v197
      %v443 = vunpack.c.l.b16 %v198
      %v444 = vunpack.c.h.b16 %v198
      %v445 = vunpack.c.l.b16 %v199
      %v446 = vunpack.c.h.b16 %v199
      %v447 = vunpack.c.l.b16 %v200
      %v448 = vunpack.c.h.b16 %v200
      %v449 = vunpack.c.l.b16 %v201
      %v450 = vunpack.c.h.b16 %v201
      %v451 = vunpack.c.l.b16 %v202
      %v452 = vunpack.c.h.b16 %v202
      %v453 = vunpack.c.l.b16 %v203
      %v454 = vunpack.c.h.b16 %v203
      %v455 = vunpack.c.l.b16 %v204
      %v456 = vunpack.c.h.b16 %v204
      %v457 = vunpack.c.l.b16 %v205
      %v458 = vunpack.c.h.b16 %v205
      %v459 = vunpack.c.l.b16 %v206
      %v460 = vunpack.c.h.b16 %v206
      %v461 = vunpack.c.l.b16 %v207
      %v462 = vunpack.c.h.b16 %v207
      %v463 = vunpack.c.l.b16 %v208
      %v464 = vunpack.c.h.b16 %v208
      %v465 = vunpack.c.l.b16 %v209
      %v466 = vunpack.c.h.b16 %v209
      %v467 = vpack.c.b16 %v405, %v403
      %v468 = vpack.c.b16 %v406, %v404
      %v469 = vpack.c.b16 %v409, %v407
      %v470 = vpack.c.b16 %v410, %v408
      %v471 = vpack.c.b16 %v413, %v411
      %v472 = vpack.c.b16 %v414, %v412
      %v473 = vpack.c.b16 %v417, %v415
      %v474 = vpack.c.b16 %v418, %v416
      %v475 = vpack.c.b16 %v421, %v419
      %v476 = vpack.c.b16 %v422, %v420
      %v477 = vpack.c.b16 %v425, %v423
      %v478 = vpack.c.b16 %v426, %v424
      %v479 = vpack.c.b16 %v429, %v427
      %v480 = vpack.c.b16 %v430, %v428
      %v481 = vpack.c.b16 %v433, %v431
      %v482 = vpack.c.b16 %v434, %v432
      %v483 = vpack.c.b16 %v437, %v435
      %v484 = vpack.c.b16 %v438, %v436
      %v485 = vpack.c.b16 %v441, %v439
      %v486 = vpack.c.b16 %v442, %v440
      %v487 = vpack.c.b16 %v445, %v443
      %v488 = vpack.c.b16 %v446, %v444
      %v489 = vpack.c.b16 %v449, %v447
      %v490 = vpack.c.b16 %v450, %v448
      %v491 = vpack.c.b16 %v453, %v451
      %v492 = vpack.c.b16 %v454, %v452
      %v493 = vpack.c.b16 %v457, %v455
      %v494 = vpack.c.b16 %v458, %v456
      %v495 = vpack.c.b16 %v461, %v459
      %v496 = vpack.c.b16 %v462, %v460
      %v497 = vpack.c.b16 %v465, %v463
      %v498 = vpack.c.b16 %v466, %v464
      %v639 = vunpack.c.l.b16 %v210
      %v640 = vunpack.c.h.b16 %v210
      %v641 = vunpack.c.l.b16 %v211
      %v642 = vunpack.c.h.b16 %v211
      %v643 = vunpack.c.l.b16 %v212
      %v644 = vunpack.c.h.b16 %v212
      %v645 = vunpack.c.l.b16 %v213
      %v646 = vunpack.c.l.b16 %v214
      %v647 = vunpack.c.h.b16 %v214
      %v648 = vunpack.c.l.b16 %v215
      %v649 = vunpack.c.h.b16 %v215
      %v650 = vunpack.c.l.b16 %v216
      %v651 = vunpack.c.h.b16 %v216
      %v652 = vunpack.c.l.b16 %v217
      %v653 = vunpack.c.l.b16 %v218
      %v654 = vunpack.c.h.b16 %v218
      %v655 = vunpack.c.l.b16 %v219
      %v656 = vunpack.c.h.b16 %v219
      %v657 = vunpack.c.l.b16 %v220
      %v658 = vunpack.c.h.b16 %v220
      %v659 = vunpack.c.l.b16 %v221
      %v660 = vunpack.c.l.b16 %v222
      %v661 = vunpack.c.h.b16 %v222
      %v662 = vunpack.c.l.b16 %v223
      %v663 = vunpack.c.h.b16 %v223
      %v664 = vunpack.c.l.b16 %v224
      %v665 = vunpack.c.h.b16 %v224
      %v666 = vunpack.c.l.b16 %v225
      %v667 = vunpack.c.l.b16 %v226
      %v668 = vunpack.c.h.b16 %v226
      %v669 = vunpack.c.l.b16 %v227
      %v670 = vunpack.c.h.b16 %v227
      %v671 = vunpack.c.l.b16 %v228
      %v672 = vunpack.c.h.b16 %v228
      %v673 = vunpack.c.l.b16 %v229
      %v674 = vunpack.c.l.b16 %v230
      %v675 = vunpack.c.h.b16 %v230
      %v676 = vunpack.c.l.b16 %v231
      %v677 = vunpack.c.h.b16 %v231
      %v678 = vunpack.c.l.b16 %v232
      %v679 = vunpack.c.h.b16 %v232
      %v680 = vunpack.c.l.b16 %v233
      %v681 = vunpack.c.l.b16 %v234
      %v682 = vunpack.c.h.b16 %v234
      %v683 = vunpack.c.l.b16 %v235
      %v684 = vunpack.c.h.b16 %v235
      %v685 = vunpack.c.l.b16 %v236
      %v686 = vunpack.c.h.b16 %v236
      %v687 = vunpack.c.l.b16 %v237
      %v688 = vunpack.c.l.b16 %v238
      %v689 = vunpack.c.h.b16 %v238
      %v690 = vunpack.c.l.b16 %v239
      %v691 = vunpack.c.h.b16 %v239
      %v692 = vunpack.c.l.b16 %v240
      %v693 = vunpack.c.h.b16 %v240
      %v694 = vunpack.c.l.b16 %v241
      %v695 = vunpack.c.l.b16 %v242
      %v696 = vunpack.c.h.b16 %v242
      %v697 = vunpack.c.l.b16 %v243
      %v698 = vunpack.c.h.b16 %v243
      %v699 = vunpack.c.l.b16 %v244
      %v700 = vunpack.c.h.b16 %v244
      %v701 = vunpack.c.l.b16 %v245
      %v702 = vunpack.c.l.b16 %v246
      %v703 = vunpack.c.h.b16 %v246
      %v704 = vunpack.c.l.b16 %v247
      %v705 = vunpack.c.h.b16 %v247
      %v706 = vunpack.c.l.b16 %v248
      %v707 = vunpack.c.h.b16 %v248
      %v708 = vunpack.c.l.b16 %v249
      %v709 = vunpack.c.l.b16 %v250
      %v710 = vunpack.c.h.b16 %v250
      %v711 = vunpack.c.l.b16 %v251
      %v712 = vunpack.c.h.b16 %v251
      %v713 = vunpack.c.l.b16 %v252
      %v714 = vunpack.c.h.b16 %v252
      %v715 = vunpack.c.l.b16 %v253
      %v716 = vunpack.c.l.b16 %v254
      %v717 = vunpack.c.h.b16 %v254
      %v718 = vunpack.c.l.b16 %v255
      %v719 = vunpack.c.h.b16 %v255
      %v720 = vunpack.c.l.b16 %v256
      %v721 = vunpack.c.h.b16 %v256
      %v722 = vunpack.c.l.b16 %v257
      %v723 = vunpack.c.l.b16 %v258
      %v724 = vunpack.c.h.b16 %v258
      %v725 = vunpack.c.l.b16 %v259
      %v726 = vunpack.c.h.b16 %v259
      %v727 = vunpack.c.l.b16 %v260
      %v728 = vunpack.c.h.b16 %v260
      %v729 = vunpack.c.l.b16 %v261
      %v730 = vunpack.c.l.b16 %v262
      %v731 = vunpack.c.h.b16 %v262
      %v732 = vunpack.c.l.b16 %v263
      %v733 = vunpack.c.h.b16 %v263
      %v734 = vunpack.c.l.b16 %v264
      %v735 = vunpack.c.h.b16 %v264
      %v736 = vunpack.c.l.b16 %v265
      %v737 = vunpack.c.l.b16 %v266
      %v738 = vunpack.c.h.b16 %v266
      %v739 = vunpack.c.l.b16 %v267
      %v740 = vunpack.c.h.b16 %v267
      %v741 = vunpack.c.l.b16 %v268
      %v742 = vunpack.c.h.b16 %v268
      %v743 = vunpack.c.l.b16 %v269
      %v744 = vunpack.c.l.b16 %v270
      %v745 = vunpack.c.h.b16 %v270
      %v746 = vunpack.c.l.b16 %v271
      %v747 = vunpack.c.h.b16 %v271
      %v748 = vunpack.c.l.b16 %v272
      %v749 = vunpack.c.h.b16 %v272
      %v750 = vunpack.c.l.b16 %v273
      %v751 = vunpack.c.l.b16 %v274
      %v752 = vunpack.c.h.b16 %v274
      %v753 = vunpack.c.l.b16 %v275
      %v754 = vunpack.c.h.b16 %v275
      %v755 = vunpack.c.l.b16 %v276
      %v756 = vunpack.c.h.b16 %v276
      %v757 = vunpack.c.l.b16 %v277
      %v758 = vunpack.c.l.b16 %v278
      %v759 = vunpack.c.h.b16 %v278
      %v760 = vunpack.c.l.b16 %v279
      %v761 = vunpack.c.h.b16 %v279
      %v762 = vunpack.c.l.b16 %v280
      %v763 = vunpack.c.h.b16 %v280
      %v764 = vunpack.c.l.b16 %v281
      %v765 = vunpack.c.l.b16 %v282
      %v766 = vunpack.c.h.b16 %v282
      %v767 = vunpack.c.l.b16 %v283
      %v768 = vunpack.c.h.b16 %v283
      %v769 = vunpack.c.l.b16 %v284
      %v770 = vunpack.c.h.b16 %v284
      %v771 = vunpack.c.l.b16 %v285
      %v772 = vunpack.c.l.b16 %v286
      %v773 = vunpack.c.h.b16 %v286
      %v774 = vunpack.c.l.b16 %v287
      %v775 = vunpack.c.h.b16 %v287
      %v776 = vunpack.c.l.b16 %v288
      %v777 = vunpack.c.h.b16 %v288
      %v778 = vunpack.c.l.b16 %v289
      %v779 = vunpack.c.l.b16 %v290
      %v780 = vunpack.c.h.b16 %v290
      %v781 = vunpack.c.l.b16 %v291
      %v782 = vunpack.c.h.b16 %v291
      %v783 = vunpack.c.l.b16 %v292
      %v784 = vunpack.c.h.b16 %v292
      %v785 = vunpack.c.l.b16 %v293
      %v786 = vunpack.c.l.b16 %v294
      %v787 = vunpack.c.h.b16 %v294
      %v788 = vunpack.c.l.b16 %v295
      %v789 = vunpack.c.h.b16 %v295
      %v790 = vunpack.c.l.b16 %v296
      %v791 = vunpack.c.h.b16 %v296
      %v792 = vunpack.c.l.b16 %v297
      %v793 = vunpack.c.l.b16 %v298
      %v794 = vunpack.c.h.b16 %v298
      %v795 = vunpack.c.l.b16 %v299
      %v796 = vunpack.c.h.b16 %v299
      %v797 = vunpack.c.l.b16 %v300
      %v798 = vunpack.c.h.b16 %v300
      %v799 = vunpack.c.l.b16 %v301
      %v800 = vunpack.c.l.b16 %v302
      %v801 = vunpack.c.h.b16 %v302
      %v802 = vunpack.c.l.b16 %v303
      %v803 = vunpack.c.h.b16 %v303
      %v804 = vunpack.c.l.b16 %v304
      %v805 = vunpack.c.h.b16 %v304
      %v806 = vunpack.c.l.b16 %v305
      %v807 = vunpack.c.l.b16 %v306
      %v808 = vunpack.c.h.b16 %v306
      %v809 = vunpack.c.l.b16 %v307
      %v810 = vunpack.c.h.b16 %v307
      %v811 = vunpack.c.l.b16 %v308
      %v812 = vunpack.c.h.b16 %v308
      %v813 = vunpack.c.l.b16 %v309
      %v814 = vunpack.c.l.b16 %v310
      %v815 = vunpack.c.h.b16 %v310
      %v816 = vunpack.c.l.b16 %v311
      %v817 = vunpack.c.h.b16 %v311
      %v818 = vunpack.c.l.b16 %v312
      %v819 = vunpack.c.h.b16 %v312
      %v820 = vunpack.c.l.b16 %v313
      %v821 = vunpack.c.l.b16 %v314
      %v822 = vunpack.c.h.b16 %v314
      %v823 = vunpack.c.l.b16 %v315
      %v824 = vunpack.c.h.b16 %v315
      %v825 = vunpack.c.l.b16 %v316
      %v826 = vunpack.c.h.b16 %v316
      %v827 = vunpack.c.l.b16 %v317
      %v828 = vunpack.c.l.b16 %v318
      %v829 = vunpack.c.h.b16 %v318
      %v830 = vunpack.c.l.b16 %v319
      %v831 = vunpack.c.h.b16 %v319
      %v832 = vunpack.c.l.b16 %v320
      %v833 = vunpack.c.h.b16 %v320
      %v834 = vunpack.c.l.b16 %v321
      %v835 = vunpack.c.l.b16 %v322
      %v836 = vunpack.c.h.b16 %v322
      %v837 = vunpack.c.l.b16 %v323
      %v838 = vunpack.c.h.b16 %v323
      %v839 = vunpack.c.l.b16 %v324
      %v840 = vunpack.c.h.b16 %v324
      %v841 = vunpack.c.l.b16 %v325
      %v842 = vunpack.c.l.b16 %v326
      %v843 = vunpack.c.h.b16 %v326
      %v844 = vunpack.c.l.b16 %v327
      %v845 = vunpack.c.h.b16 %v327
      %v846 = vunpack.c.l.b16 %v328
      %v847 = vunpack.c.h.b16 %v328
      %v848 = vunpack.c.l.b16 %v329
      %v849 = vunpack.c.l.b16 %v330
      %v850 = vunpack.c.h.b16 %v330
      %v851 = vunpack.c.l.b16 %v331
      %v852 = vunpack.c.h.b16 %v331
      %v853 = vunpack.c.l.b16 %v332
      %v854 = vunpack.c.h.b16 %v332
      %v855 = vunpack.c.l.b16 %v333
      %v856 = vpack.c.b16 %v646, %v639
      %v857 = vpack.c.b16 %v647, %v640
      %v858 = vpack.c.b16 %v648, %v641
      %v859 = vpack.c.b16 %v649, %v642
      %v860 = vpack.c.b16 %v650, %v643
      %v861 = vpack.c.b16 %v651, %v644
      %v862 = vpack.c.b16 %v652, %v645
      %v863 = vpack.c.b16 %v660, %v653
      %v864 = vpack.c.b16 %v661, %v654
      %v865 = vpack.c.b16 %v662, %v655
      %v866 = vpack.c.b16 %v663, %v656
      %v867 = vpack.c.b16 %v664, %v657
      %v868 = vpack.c.b16 %v665, %v658
      %v869 = vpack.c.b16 %v666, %v659
      %v870 = vpack.c.b16 %v674, %v667
      %v871 = vpack.c.b16 %v675, %v668
      %v872 = vpack.c.b16 %v676, %v669
      %v873 = vpack.c.b16 %v677, %v670
      %v874 = vpack.c.b16 %v678, %v671
      %v875 = vpack.c.b16 %v679, %v672
      %v876 = vpack.c.b16 %v680, %v673
      %v877 = vpack.c.b16 %v688, %v681
      %v878 = vpack.c.b16 %v689, %v682
      %v879 = vpack.c.b16 %v690, %v683
      %v880 = vpack.c.b16 %v691, %v684
      %v881 = vpack.c.b16 %v692, %v685
      %v882 = vpack.c.b16 %v693, %v686
      %v883 = vpack.c.b16 %v694, %v687
      %v884 = vpack.c.b16 %v702, %v695
      %v885 = vpack.c.b16 %v703, %v696
      %v886 = vpack.c.b16 %v704, %v697
      %v887 = vpack.c.b16 %v705, %v698
      %v888 = vpack.c.b16 %v706, %v699
      %v889 = vpack.c.b16 %v707, %v700
      %v890 = vpack.c.b16 %v708, %v701
      %v891 = vpack.c.b16 %v716, %v709
      %v892 = vpack.c.b16 %v717, %v710
      %v893 = vpack.c.b16 %v718, %v711
      %v894 = vpack.c.b16 %v719, %v712
      %v895 = vpack.c.b16 %v720, %v713
      %v896 = vpack.c.b16 %v721, %v714
      %v897 = vpack.c.b16 %v722, %v715
      %v898 = vpack.c.b16 %v730, %v723
      %v899 = vpack.c.b16 %v731, %v724
      %v900 = vpack.c.b16 %v732, %v725
      %v901 = vpack.c.b16 %v733, %v726
      %v902 = vpack.c.b16 %v734, %v727
      %v903 = vpack.c.b16 %v735, %v728
      %v904 = vpack.c.b16 %v736, %v729
      %v905 = vpack.c.b16 %v744, %v737
      %v906 = vpack.c.b16 %v745, %v738
      %v907 = vpack.c.b16 %v746, %v739
      %v908 = vpack.c.b16 %v747, %v740
      %v909 = vpack.c.b16 %v748, %v741
      %v910 = vpack.c.b16 %v749, %v742
      %v911 = vpack.c.b16 %v750, %v743
      %v912 = vpack.c.b16 %v758, %v751
      %v913 = vpack.c.b16 %v759, %v752
      %v914 = vpack.c.b16 %v760, %v753
      %v915 = vpack.c.b16 %v761, %v754
      %v916 = vpack.c.b16 %v762, %v755
      %v917 = vpack.c.b16 %v763, %v756
      %v918 = vpack.c.b16 %v764, %v757
      %v919 = vpack.c.b16 %v772, %v765
      %v920 = vpack.c.b16 %v773, %v766
      %v921 = vpack.c.b16 %v774, %v767
      %v922 = vpack.c.b16 %v775, %v768
      %v923 = vpack.c.b16 %v776, %v769
      %v924 = vpack.c.b16 %v777, %v770
      %v925 = vpack.c.b16 %v778, %v771
      %v926 = vpack.c.b16 %v786, %v779
      %v927 = vpack.c.b16 %v787, %v780
      %v928 = vpack.c.b16 %v788, %v781
      %v929 = vpack.c.b16 %v789, %v782
      %v930 = vpack.c.b16 %v790, %v783
      %v931 = vpack.c.b16 %v791, %v784
      %v932 = vpack.c.b16 %v792, %v785
      %v933 = vpack.c.b16 %v800, %v793
      %v934 = vpack.c.b16 %v801, %v794
      %v935 = vpack.c.b16 %v802, %v795
      %v936 = vpack.c.b16 %v803, %v796
      %v937 = vpack.c.b16 %v804, %v797
      %v938 = vpack.c.b16 %v805, %v798
      %v939 = vpack.c.b16 %v806, %v799
      %v940 = vpack.c.b16 %v814, %v807
      %v941 = vpack.c.b16 %v815, %v808
      %v942 = vpack.c.b16 %v816, %v809
      %v943 = vpack.c.b16 %v817, %v810
      %v944 = vpack.c.b16 %v818, %v811
      %v945 = vpack.c.b16 %v819, %v812
      %v946 = vpack.c.b16 %v820, %v813
      %v947 = vpack.c.b16 %v828, %v821
      %v948 = vpack.c.b16 %v829, %v822
      %v949 = vpack.c.b16 %v830, %v823
      %v950 = vpack.c.b16 %v831, %v824
      %v951 = vpack.c.b16 %v832, %v825
      %v952 = vpack.c.b16 %v833, %v826
      %v953 = vpack.c.b16 %v834, %v827
      %v954 = vpack.c.b16 %v842, %v835
      %v955 = vpack.c.b16 %v843, %v836
      %v956 = vpack.c.b16 %v844, %v837
      %v957 = vpack.c.b16 %v845, %v838
      %v958 = vpack.c.b16 %v846, %v839
      %v959 = vpack.c.b16 %v847, %v840
      %v960 = vpack.c.b16 %v848, %v841
      %v961 = vpack.c.b16 %v849, %v849
      %v962 = vpack.c.b16 %v850, %v850
      %v963 = vpack.c.b16 %v851, %v851
      %v964 = vpack.c.b16 %v852, %v852
      %v965 = vpack.c.b16 %v853, %v853
      %v966 = vpack.c.b16 %v854, %v854
      %v967 = vpack.c.b16 %v855, %v855
      %vm1073 = vcmask 941056
      %v1075 = vsel %vm1073, %v468, 0
      %v1078 = vsel %vm1073, %v470, 0
      %v1081 = vsel %vm1073, %v472, 0
      %v1084 = vsel %vm1073, %v474, 0
      %v1087 = vsel %vm1073, %v476, 0
      %v1090 = vsel %vm1073, %v478, 0
      %v1093 = vsel %vm1073, %v480, 0
      %v1096 = vsel %vm1073, %v482, 0
      %v1099 = vsel %vm1073, %v484, 0
      %v1102 = vsel %vm1073, %v486, 0
      %v1105 = vsel %vm1073, %v488, 0
      %v1108 = vsel %vm1073, %v490, 0
      %v1111 = vsel %vm1073, %v492, 0
      %v1114 = vsel %vm1073, %v494, 0
      %v1117 = vsel %vm1073, %v496, 0
      %v1120 = vsel %vm1073, %v498, 0
      %vm1122 = vcmask 1040384
      %vm1123 = vcmask 1041408
      %v1124 = vsel %vm1122, 4294967295, 65535
      %v1125 = vsel %vm1123, %v1124, 0
      %v1127 = vand.u32 %v961, %v1125
      %v1130 = vand.u32 %v962, %v1125
      %v1133 = vand.u32 %v963, %v1125
      %v1136 = vand.u32 %v964, %v1125
      %v1139 = vand.u32 %v965, %v1125
      %v1142 = vand.u32 %v966, %v1125
      %v1145 = vand.u32 %v967, %v1125
      %1147 = vmatprep.subr.bf16.mxu0 %v857
      %1148 = vmatpush1.bf16.msra.mxu0 %v856
      %1149 = vmatprep.subr.bf16.mxu0 %v864
      %1150 = vmatpush1.bf16.msra.mxu0 %v863
      %1151 = vmatprep.subr.bf16.mxu0 %v871
      %1152 = vmatpush1.bf16.msra.mxu0 %v870
      %1153 = vmatprep.subr.bf16.mxu0 %v878
      %1154 = vmatpush1.bf16.msra.mxu0 %v877
      %1155 = vmatprep.subr.bf16.mxu0 %v885
      %1156 = vmatpush1.bf16.msra.mxu0 %v884
      %1157 = vmatprep.subr.bf16.mxu0 %v892
      %1158 = vmatpush1.bf16.msra.mxu0 %v891
      %1159 = vmatprep.subr.bf16.mxu0 %v899
      %1160 = vmatpush1.bf16.msra.mxu0 %v898
      %1161 = vmatprep.subr.bf16.mxu0 %v906
      %1162 = vmatpush1.bf16.msra.mxu0 %v905
      %1163 = vmatprep.subr.bf16.mxu0 %v913
      %1164 = vmatpush1.bf16.msra.mxu0 %v912
      %1165 = vmatprep.subr.bf16.mxu0 %v920
      %1166 = vmatpush1.bf16.msra.mxu0 %v919
      %1167 = vmatprep.subr.bf16.mxu0 %v927
      %1168 = vmatpush1.bf16.msra.mxu0 %v926
      %1169 = vmatprep.subr.bf16.mxu0 %v934
      %1170 = vmatpush1.bf16.msra.mxu0 %v933
      %1171 = vmatprep.subr.bf16.mxu0 %v941
      %1172 = vmatpush1.bf16.msra.mxu0 %v940
      %1173 = vmatprep.subr.bf16.mxu0 %v948
      %1174 = vmatpush1.bf16.msra.mxu0 %v947
      %1175 = vmatprep.subr.bf16.mxu0 %v955
      %1176 = vmatpush1.bf16.msra.mxu0 %v954
      %1177 = vmatprep.subr.bf16.mxu0 %v1130
      %1178 = vmatpush1.bf16.msra.mxu0 %v1127
      %1179 = vmatprep.mubr.bf16.mxu0 %v1075
      %1180 = vmatmul.mubr.bf16.gmra.mrb[0].mxu0 %v467
      %v1181 = vpop.f32.mrb[0].mxu0
      %v1182 = vadd.f32 %v339, %v1181
      %v1183 = vpop.f32.mrb[0].mxu0
      %v1184 = vadd.f32 %v343, %v1183
      %v1185 = vpop.f32.mrb[0].mxu0
      %v1186 = vadd.f32 %v339, %v1185
      %v1187 = vpop.f32.mrb[0].mxu0
      %v1188 = vadd.f32 %v343, %v1187
      %1189 = vmatprep.mubr.bf16.mxu0 %v1078
      %1190 = vmatmul.mubr.bf16.gmra.mrb[0].mxu0 %v469
      %v1191 = vpop.f32.mrb[0].mxu0
      %v1192 = vadd.f32 %v339, %v1191
      %v1193 = vpop.f32.mrb[0].mxu0
      %v1194 = vadd.f32 %v343, %v1193
      %v1195 = vpop.f32.mrb[0].mxu0
      %v1196 = vadd.f32 %v339, %v1195
      %v1197 = vpop.f32.mrb[0].mxu0
      %v1198 = vadd.f32 %v343, %v1197
      %1199 = vmatprep.mubr.bf16.mxu0 %v1081
      %1200 = vmatmul.mubr.bf16.gmra.mrb[0].mxu0 %v471
      %v1201 = vpop.f32.mrb[0].mxu0
      %v1202 = vadd.f32 %v339, %v1201
      %v1203 = vpop.f32.mrb[0].mxu0
      %v1204 = vadd.f32 %v343, %v1203
      %v1205 = vpop.f32.mrb[0].mxu0
      %v1206 = vadd.f32 %v339, %v1205
      %v1207 = vpop.f32.mrb[0].mxu0
      %v1208 = vadd.f32 %v343, %v1207
      %1209 = vmatprep.mubr.bf16.mxu0 %v1084
      %1210 = vmatmul.mubr.bf16.gmra.mrb[0].mxu0 %v473
      %v1211 = vpop.f32.mrb[0].mxu0
      %v1212 = vadd.f32 %v339, %v1211
      %v1213 = vpop.f32.mrb[0].mxu0
      %v1214 = vadd.f32 %v343, %v1213
      %v1215 = vpop.f32.mrb[0].mxu0
      %v1216 = vadd.f32 %v339, %v1215
      %v1217 = vpop.f32.mrb[0].mxu0
      %v1218 = vadd.f32 %v343, %v1217
      %1219 = vmatprep.mubr.bf16.mxu0 %v1087
      %1220 = vmatmul.mubr.bf16.gmra.mrb[0].mxu0 %v475
      %v1221 = vpop.f32.mrb[0].mxu0
      %v1222 = vadd.f32 %v339, %v1221
      %v1223 = vpop.f32.mrb[0].mxu0
      %v1224 = vadd.f32 %v343, %v1223
      %v1225 = vpop.f32.mrb[0].mxu0
      %v1226 = vadd.f32 %v339, %v1225
      %v1227 = vpop.f32.mrb[0].mxu0
      %v1228 = vadd.f32 %v343, %v1227
      %1229 = vmatprep.mubr.bf16.mxu0 %v1090
      %1230 = vmatmul.mubr.bf16.gmra.mrb[0].mxu0 %v477
      %v1231 = vpop.f32.mrb[0].mxu0
      %v1232 = vadd.f32 %v339, %v1231
      %v1233 = vpop.f32.mrb[0].mxu0
      %v1234 = vadd.f32 %v343, %v1233
      %v1235 = vpop.f32.mrb[0].mxu0
      %v1236 = vadd.f32 %v339, %v1235
      %v1237 = vpop.f32.mrb[0].mxu0
      %v1238 = vadd.f32 %v343, %v1237
      %1239 = vmatprep.mubr.bf16.mxu0 %v1093
      %1240 = vmatmul.mubr.bf16.gmra.mrb[0].mxu0 %v479
      %v1241 = vpop.f32.mrb[0].mxu0
      %v1242 = vadd.f32 %v339, %v1241
      %v1243 = vpop.f32.mrb[0].mxu0
      %v1244 = vadd.f32 %v343, %v1243
      %v1245 = vpop.f32.mrb[0].mxu0
      %v1246 = vadd.f32 %v339, %v1245
      %v1247 = vpop.f32.mrb[0].mxu0
      %v1248 = vadd.f32 %v343, %v1247
      %1249 = vmatprep.mubr.bf16.mxu0 %v1096
      %1250 = vmatmul.mubr.bf16.gmra.mrb[0].mxu0 %v481
      %v1251 = vpop.f32.mrb[0].mxu0
      %v1252 = vadd.f32 %v339, %v1251
      %v1253 = vpop.f32.mrb[0].mxu0
      %v1254 = vadd.f32 %v343, %v1253
      %v1255 = vpop.f32.mrb[0].mxu0
      %v1256 = vadd.f32 %v339, %v1255
      %v1257 = vpop.f32.mrb[0].mxu0
      %v1258 = vadd.f32 %v343, %v1257
      %1259 = vmatprep.mubr.bf16.mxu0 %v1099
      %1260 = vmatmul.mubr.bf16.gmra.mrb[0].mxu0 %v483
      %v1261 = vpop.f32.mrb[0].mxu0
      %v1262 = vadd.f32 %v339, %v1261
      %v1263 = vpop.f32.mrb[0].mxu0
      %v1264 = vadd.f32 %v343, %v1263
      %v1265 = vpop.f32.mrb[0].mxu0
      %v1266 = vadd.f32 %v339, %v1265
      %v1267 = vpop.f32.mrb[0].mxu0
      %v1268 = vadd.f32 %v343, %v1267
      %1269 = vmatprep.mubr.bf16.mxu0 %v1102
      %1270 = vmatmul.mubr.bf16.gmra.mrb[0].mxu0 %v485
      %v1271 = vpop.f32.mrb[0].mxu0
      %v1272 = vadd.f32 %v339, %v1271
      %v1273 = vpop.f32.mrb[0].mxu0
      %v1274 = vadd.f32 %v343, %v1273
      %v1275 = vpop.f32.mrb[0].mxu0
      %v1276 = vadd.f32 %v339, %v1275
      %v1277 = vpop.f32.mrb[0].mxu0
      %v1278 = vadd.f32 %v343, %v1277
      %1279 = vmatprep.mubr.bf16.mxu0 %v1105
      %1280 = vmatmul.mubr.bf16.gmra.mrb[0].mxu0 %v487
      %v1281 = vpop.f32.mrb[0].mxu0
      %v1282 = vadd.f32 %v339, %v1281
      %v1283 = vpop.f32.mrb[0].mxu0
      %v1284 = vadd.f32 %v343, %v1283
      %v1285 = vpop.f32.mrb[0].mxu0
      %v1286 = vadd.f32 %v339, %v1285
      %v1287 = vpop.f32.mrb[0].mxu0
      %v1288 = vadd.f32 %v343, %v1287
      %1289 = vmatprep.mubr.bf16.mxu0 %v1108
      %1290 = vmatmul.mubr.bf16.gmra.mrb[0].mxu0 %v489
      %v1291 = vpop.f32.mrb[0].mxu0
      %v1292 = vadd.f32 %v339, %v1291
      %v1293 = vpop.f32.mrb[0].mxu0
      %v1294 = vadd.f32 %v343, %v1293
      %v1295 = vpop.f32.mrb[0].mxu0
      %v1296 = vadd.f32 %v339, %v1295
      %v1297 = vpop.f32.mrb[0].mxu0
      %v1298 = vadd.f32 %v343, %v1297
      %1299 = vmatprep.mubr.bf16.mxu0 %v1111
      %1300 = vmatmul.mubr.bf16.gmra.mrb[0].mxu0 %v491
      %v1301 = vpop.f32.mrb[0].mxu0
      %v1302 = vadd.f32 %v339, %v1301
      %v1303 = vpop.f32.mrb[0].mxu0
      %v1304 = vadd.f32 %v343, %v1303
      %v1305 = vpop.f32.mrb[0].mxu0
      %v1306 = vadd.f32 %v339, %v1305
      %v1307 = vpop.f32.mrb[0].mxu0
      %v1308 = vadd.f32 %v343, %v1307
      %1309 = vmatprep.mubr.bf16.mxu0 %v1114
      %1310 = vmatmul.mubr.bf16.gmra.mrb[0].mxu0 %v493
      %v1311 = vpop.f32.mrb[0].mxu0
      %v1312 = vadd.f32 %v339, %v1311
      %v1313 = vpop.f32.mrb[0].mxu0
      %v1314 = vadd.f32 %v343, %v1313
      %v1315 = vpop.f32.mrb[0].mxu0
      %v1316 = vadd.f32 %v339, %v1315
      %v1317 = vpop.f32.mrb[0].mxu0
      %v1318 = vadd.f32 %v343, %v1317
      %1319 = vmatprep.mubr.bf16.mxu0 %v1117
      %1320 = vmatmul.mubr.bf16.gmra.mrb[0].mxu0 %v495
      %v1321 = vpop.f32.mrb[0].mxu0
      %v1322 = vadd.f32 %v339, %v1321
      %v1323 = vpop.f32.mrb[0].mxu0
      %v1324 = vadd.f32 %v343, %v1323
      %v1325 = vpop.f32.mrb[0].mxu0
      %v1326 = vadd.f32 %v339, %v1325
      %v1327 = vpop.f32.mrb[0].mxu0
      %v1328 = vadd.f32 %v343, %v1327
      %1329 = vmatprep.mubr.bf16.mxu0 %v1120
      %1330 = vmatmul.mubr.bf16.gmra.mrb[0].mxu0 %v497
      %v1331 = vpop.f32.mrb[0].mxu0
      %v1332 = vadd.f32 %v339, %v1331
      %v1333 = vpop.f32.mrb[0].mxu0
      %v1334 = vadd.f32 %v343, %v1333
      %v1335 = vpop.f32.mrb[0].mxu0
      %v1336 = vadd.f32 %v339, %v1335
      %v1337 = vpop.f32.mrb[0].mxu0
      %v1338 = vadd.f32 %v343, %v1337
      %1339 = vdwg.mxu0
      %1340 = vmatprep.subr.bf16.mxu0 %v859
      %1341 = vmatpush1.bf16.msra.mxu0 %v858
      %1342 = vmatprep.subr.bf16.mxu0 %v866
      %1343 = vmatpush1.bf16.msra.mxu0 %v865
      %1344 = vmatprep.subr.bf16.mxu0 %v873
      %1345 = vmatpush1.bf16.msra.mxu0 %v872
      %1346 = vmatprep.subr.bf16.mxu0 %v880
      %1347 = vmatpush1.bf16.msra.mxu0 %v879
      %1348 = vmatprep.subr.bf16.mxu0 %v887
      %1349 = vmatpush1.bf16.msra.mxu0 %v886
      %1350 = vmatprep.subr.bf16.mxu0 %v894
      %1351 = vmatpush1.bf16.msra.mxu0 %v893
      %1352 = vmatprep.subr.bf16.mxu0 %v901
      %1353 = vmatpush1.bf16.msra.mxu0 %v900
      %1354 = vmatprep.subr.bf16.mxu0 %v908
      %1355 = vmatpush1.bf16.msra.mxu0 %v907
      %1356 = vmatprep.subr.bf16.mxu0 %v915
      %1357 = vmatpush1.bf16.msra.mxu0 %v914
      %1358 = vmatprep.subr.bf16.mxu0 %v922
      %1359 = vmatpush1.bf16.msra.mxu0 %v921
      %1360 = vmatprep.subr.bf16.mxu0 %v929
      %1361 = vmatpush1.bf16.msra.mxu0 %v928
      %1362 = vmatprep.subr.bf16.mxu0 %v936
      %1363 = vmatpush1.bf16.msra.mxu0 %v935
      %1364 = vmatprep.subr.bf16.mxu0 %v943
      %1365 = vmatpush1.bf16.msra.mxu0 %v942
      %1366 = vmatprep.subr.bf16.mxu0 %v950
      %1367 = vmatpush1.bf16.msra.mxu0 %v949
      %1368 = vmatprep.subr.bf16.mxu0 %v957
      %1369 = vmatpush1.bf16.msra.mxu0 %v956
      %1370 = vmatprep.subr.bf16.mxu0 %v1136
      %1371 = vmatpush1.bf16.msra.mxu0 %v1133
      %1372 = vmatprep.mubr.bf16.mxu0 %v1075
      %1373 = vmatmul.mubr.bf16.gmra.mrb[0].mxu0 %v467
      %v1374 = vpop.f32.mrb[0].mxu0
      %v1375 = vadd.f32 %v347, %v1374
      %v1376 = vpop.f32.mrb[0].mxu0
      %v1377 = vadd.f32 %v351, %v1376
      %v1378 = vpop.f32.mrb[0].mxu0
      %v1379 = vadd.f32 %v347, %v1378
      %v1380 = vpop.f32.mrb[0].mxu0
      %v1381 = vadd.f32 %v351, %v1380
      %1382 = vmatprep.mubr.bf16.mxu0 %v1078
      %1383 = vmatmul.mubr.bf16.gmra.mrb[0].mxu0 %v469
      %v1384 = vpop.f32.mrb[0].mxu0
      %v1385 = vadd.f32 %v347, %v1384
      %v1386 = vpop.f32.mrb[0].mxu0
      %v1387 = vadd.f32 %v351, %v1386
      %v1388 = vpop.f32.mrb[0].mxu0
      %v1389 = vadd.f32 %v347, %v1388
      %v1390 = vpop.f32.mrb[0].mxu0
      %v1391 = vadd.f32 %v351, %v1390
      %1392 = vmatprep.mubr.bf16.mxu0 %v1081
      %1393 = vmatmul.mubr.bf16.gmra.mrb[0].mxu0 %v471
      %v1394 = vpop.f32.mrb[0].mxu0
      %v1395 = vadd.f32 %v347, %v1394
      %v1396 = vpop.f32.mrb[0].mxu0
      %v1397 = vadd.f32 %v351, %v1396
      %v1398 = vpop.f32.mrb[0].mxu0
      %v1399 = vadd.f32 %v347, %v1398
      %v1400 = vpop.f32.mrb[0].mxu0
      %v1401 = vadd.f32 %v351, %v1400
      %1402 = vmatprep.mubr.bf16.mxu0 %v1084
      %1403 = vmatmul.mubr.bf16.gmra.mrb[0].mxu0 %v473
      %v1404 = vpop.f32.mrb[0].mxu0
      %v1405 = vadd.f32 %v347, %v1404
      %v1406 = vpop.f32.mrb[0].mxu0
      %v1407 = vadd.f32 %v351, %v1406
      %v1408 = vpop.f32.mrb[0].mxu0
      %v1409 = vadd.f32 %v347, %v1408
      %v1410 = vpop.f32.mrb[0].mxu0
      %v1411 = vadd.f32 %v351, %v1410
      %1412 = vmatprep.mubr.bf16.mxu0 %v1087
      %1413 = vmatmul.mubr.bf16.gmra.mrb[0].mxu0 %v475
      %v1414 = vpop.f32.mrb[0].mxu0
      %v1415 = vadd.f32 %v347, %v1414
      %v1416 = vpop.f32.mrb[0].mxu0
      %v1417 = vadd.f32 %v351, %v1416
      %v1418 = vpop.f32.mrb[0].mxu0
      %v1419 = vadd.f32 %v347, %v1418
      %v1420 = vpop.f32.mrb[0].mxu0
      %v1421 = vadd.f32 %v351, %v1420
      %1422 = vmatprep.mubr.bf16.mxu0 %v1090
      %1423 = vmatmul.mubr.bf16.gmra.mrb[0].mxu0 %v477
      %v1424 = vpop.f32.mrb[0].mxu0
      %v1425 = vadd.f32 %v347, %v1424
      %v1426 = vpop.f32.mrb[0].mxu0
      %v1427 = vadd.f32 %v351, %v1426
      %v1428 = vpop.f32.mrb[0].mxu0
      %v1429 = vadd.f32 %v347, %v1428
      %v1430 = vpop.f32.mrb[0].mxu0
      %v1431 = vadd.f32 %v351, %v1430
      %1432 = vmatprep.mubr.bf16.mxu0 %v1093
      %1433 = vmatmul.mubr.bf16.gmra.mrb[0].mxu0 %v479
      %v1434 = vpop.f32.mrb[0].mxu0
      %v1435 = vadd.f32 %v347, %v1434
      %v1436 = vpop.f32.mrb[0].mxu0
      %v1437 = vadd.f32 %v351, %v1436
      %v1438 = vpop.f32.mrb[0].mxu0
      %v1439 = vadd.f32 %v347, %v1438
      %v1440 = vpop.f32.mrb[0].mxu0
      %v1441 = vadd.f32 %v351, %v1440
      %1442 = vmatprep.mubr.bf16.mxu0 %v1096
      %1443 = vmatmul.mubr.bf16.gmra.mrb[0].mxu0 %v481
      %v1444 = vpop.f32.mrb[0].mxu0
      %v1445 = vadd.f32 %v347, %v1444
      %v1446 = vpop.f32.mrb[0].mxu0
      %v1447 = vadd.f32 %v351, %v1446
      %v1448 = vpop.f32.mrb[0].mxu0
      %v1449 = vadd.f32 %v347, %v1448
      %v1450 = vpop.f32.mrb[0].mxu0
      %v1451 = vadd.f32 %v351, %v1450
      %1452 = vmatprep.mubr.bf16.mxu0 %v1099
      %1453 = vmatmul.mubr.bf16.gmra.mrb[0].mxu0 %v483
      %v1454 = vpop.f32.mrb[0].mxu0
      %v1455 = vadd.f32 %v347, %v1454
      %v1456 = vpop.f32.mrb[0].mxu0
      %v1457 = vadd.f32 %v351, %v1456
      %v1458 = vpop.f32.mrb[0].mxu0
      %v1459 = vadd.f32 %v347, %v1458
      %v1460 = vpop.f32.mrb[0].mxu0
      %v1461 = vadd.f32 %v351, %v1460
      %1462 = vmatprep.mubr.bf16.mxu0 %v1102
      %1463 = vmatmul.mubr.bf16.gmra.mrb[0].mxu0 %v485
      %v1464 = vpop.f32.mrb[0].mxu0
      %v1465 = vadd.f32 %v347, %v1464
      %v1466 = vpop.f32.mrb[0].mxu0
      %v1467 = vadd.f32 %v351, %v1466
      %v1468 = vpop.f32.mrb[0].mxu0
      %v1469 = vadd.f32 %v347, %v1468
      %v1470 = vpop.f32.mrb[0].mxu0
      %v1471 = vadd.f32 %v351, %v1470
      %1472 = vmatprep.mubr.bf16.mxu0 %v1105
      %1473 = vmatmul.mubr.bf16.gmra.mrb[0].mxu0 %v487
      %v1474 = vpop.f32.mrb[0].mxu0
      %v1475 = vadd.f32 %v347, %v1474
      %v1476 = vpop.f32.mrb[0].mxu0
      %v1477 = vadd.f32 %v351, %v1476
      %v1478 = vpop.f32.mrb[0].mxu0
      %v1479 = vadd.f32 %v347, %v1478
      %v1480 = vpop.f32.mrb[0].mxu0
      %v1481 = vadd.f32 %v351, %v1480
      %1482 = vmatprep.mubr.bf16.mxu0 %v1108
      %1483 = vmatmul.mubr.bf16.gmra.mrb[0].mxu0 %v489
      %v1484 = vpop.f32.mrb[0].mxu0
      %v1485 = vadd.f32 %v347, %v1484
      %v1486 = vpop.f32.mrb[0].mxu0
      %v1487 = vadd.f32 %v351, %v1486
      %v1488 = vpop.f32.mrb[0].mxu0
      %v1489 = vadd.f32 %v347, %v1488
      %v1490 = vpop.f32.mrb[0].mxu0
      %v1491 = vadd.f32 %v351, %v1490
      %1492 = vmatprep.mubr.bf16.mxu0 %v1111
      %1493 = vmatmul.mubr.bf16.gmra.mrb[0].mxu0 %v491
      %v1494 = vpop.f32.mrb[0].mxu0
      %v1495 = vadd.f32 %v347, %v1494
      %v1496 = vpop.f32.mrb[0].mxu0
      %v1497 = vadd.f32 %v351, %v1496
      %v1498 = vpop.f32.mrb[0].mxu0
      %v1499 = vadd.f32 %v347, %v1498
      %v1500 = vpop.f32.mrb[0].mxu0
      %v1501 = vadd.f32 %v351, %v1500
      %1502 = vmatprep.mubr.bf16.mxu0 %v1114
      %1503 = vmatmul.mubr.bf16.gmra.mrb[0].mxu0 %v493
      %v1504 = vpop.f32.mrb[0].mxu0
      %v1505 = vadd.f32 %v347, %v1504
      %v1506 = vpop.f32.mrb[0].mxu0
      %v1507 = vadd.f32 %v351, %v1506
      %v1508 = vpop.f32.mrb[0].mxu0
      %v1509 = vadd.f32 %v347, %v1508
      %v1510 = vpop.f32.mrb[0].mxu0
      %v1511 = vadd.f32 %v351, %v1510
      %1512 = vmatprep.mubr.bf16.mxu0 %v1117
      %1513 = vmatmul.mubr.bf16.gmra.mrb[0].mxu0 %v495
      %v1514 = vpop.f32.mrb[0].mxu0
      %v1515 = vadd.f32 %v347, %v1514
      %v1516 = vpop.f32.mrb[0].mxu0
      %v1517 = vadd.f32 %v351, %v1516
      %v1518 = vpop.f32.mrb[0].mxu0
      %v1519 = vadd.f32 %v347, %v1518
      %v1520 = vpop.f32.mrb[0].mxu0
      %v1521 = vadd.f32 %v351, %v1520
      %1522 = vmatprep.mubr.bf16.mxu0 %v1120
      %1523 = vmatmul.mubr.bf16.gmra.mrb[0].mxu0 %v497
      %v1524 = vpop.f32.mrb[0].mxu0
      %v1525 = vadd.f32 %v347, %v1524
      %v1526 = vpop.f32.mrb[0].mxu0
      %v1527 = vadd.f32 %v351, %v1526
      %v1528 = vpop.f32.mrb[0].mxu0
      %v1529 = vadd.f32 %v347, %v1528
      %v1530 = vpop.f32.mrb[0].mxu0
      %v1531 = vadd.f32 %v351, %v1530
      %1532 = vdwg.mxu0
      %1533 = vmatprep.subr.bf16.mxu0 %v861
      %1534 = vmatpush1.bf16.msra.mxu0 %v860
      %1535 = vmatprep.subr.bf16.mxu0 %v868
      %1536 = vmatpush1.bf16.msra.mxu0 %v867
      %1537 = vmatprep.subr.bf16.mxu0 %v875
      %1538 = vmatpush1.bf16.msra.mxu0 %v874
      %1539 = vmatprep.subr.bf16.mxu0 %v882
      %1540 = vmatpush1.bf16.msra.mxu0 %v881
      %1541 = vmatprep.subr.bf16.mxu0 %v889
      %1542 = vmatpush1.bf16.msra.mxu0 %v888
      %1543 = vmatprep.subr.bf16.mxu0 %v896
      %1544 = vmatpush1.bf16.msra.mxu0 %v895
      %1545 = vmatprep.subr.bf16.mxu0 %v903
      %1546 = vmatpush1.bf16.msra.mxu0 %v902
      %1547 = vmatprep.subr.bf16.mxu0 %v910
      %1548 = vmatpush1.bf16.msra.mxu0 %v909
      %1549 = vmatprep.subr.bf16.mxu0 %v917
      %1550 = vmatpush1.bf16.msra.mxu0 %v916
      %1551 = vmatprep.subr.bf16.mxu0 %v924
      %1552 = vmatpush1.bf16.msra.mxu0 %v923
      %1553 = vmatprep.subr.bf16.mxu0 %v931
      %1554 = vmatpush1.bf16.msra.mxu0 %v930
      %1555 = vmatprep.subr.bf16.mxu0 %v938
      %1556 = vmatpush1.bf16.msra.mxu0 %v937
      %1557 = vmatprep.subr.bf16.mxu0 %v945
      %1558 = vmatpush1.bf16.msra.mxu0 %v944
      %1559 = vmatprep.subr.bf16.mxu0 %v952
      %1560 = vmatpush1.bf16.msra.mxu0 %v951
      %1561 = vmatprep.subr.bf16.mxu0 %v959
      %1562 = vmatpush1.bf16.msra.mxu0 %v958
      %1563 = vmatprep.subr.bf16.mxu0 %v1142
      %1564 = vmatpush1.bf16.msra.mxu0 %v1139
      %1565 = vmatprep.mubr.bf16.mxu0 %v1075
      %1566 = vmatmul.mubr.bf16.gmra.mrb[0].mxu0 %v467
      %v1567 = vpop.f32.mrb[0].mxu0
      %v1568 = vadd.f32 %v355, %v1567
      %v1569 = vpop.f32.mrb[0].mxu0
      %v1570 = vadd.f32 %v359, %v1569
      %v1571 = vpop.f32.mrb[0].mxu0
      %v1572 = vadd.f32 %v355, %v1571
      %v1573 = vpop.f32.mrb[0].mxu0
      %v1574 = vadd.f32 %v359, %v1573
      %1575 = vmatprep.mubr.bf16.mxu0 %v1078
      %1576 = vmatmul.mubr.bf16.gmra.mrb[0].mxu0 %v469
      %v1577 = vpop.f32.mrb[0].mxu0
      %v1578 = vadd.f32 %v355, %v1577
      %v1579 = vpop.f32.mrb[0].mxu0
      %v1580 = vadd.f32 %v359, %v1579
      %v1581 = vpop.f32.mrb[0].mxu0
      %v1582 = vadd.f32 %v355, %v1581
      %v1583 = vpop.f32.mrb[0].mxu0
      %v1584 = vadd.f32 %v359, %v1583
      %1585 = vmatprep.mubr.bf16.mxu0 %v1081
      %1586 = vmatmul.mubr.bf16.gmra.mrb[0].mxu0 %v471
      %v1587 = vpop.f32.mrb[0].mxu0
      %v1588 = vadd.f32 %v355, %v1587
      %v1589 = vpop.f32.mrb[0].mxu0
      %v1590 = vadd.f32 %v359, %v1589
      %v1591 = vpop.f32.mrb[0].mxu0
      %v1592 = vadd.f32 %v355, %v1591
      %v1593 = vpop.f32.mrb[0].mxu0
      %v1594 = vadd.f32 %v359, %v1593
      %1595 = vmatprep.mubr.bf16.mxu0 %v1084
      %1596 = vmatmul.mubr.bf16.gmra.mrb[0].mxu0 %v473
      %v1597 = vpop.f32.mrb[0].mxu0
      %v1598 = vadd.f32 %v355, %v1597
      %v1599 = vpop.f32.mrb[0].mxu0
      %v1600 = vadd.f32 %v359, %v1599
      %v1601 = vpop.f32.mrb[0].mxu0
      %v1602 = vadd.f32 %v355, %v1601
      %v1603 = vpop.f32.mrb[0].mxu0
      %v1604 = vadd.f32 %v359, %v1603
      %1605 = vmatprep.mubr.bf16.mxu0 %v1087
      %1606 = vmatmul.mubr.bf16.gmra.mrb[0].mxu0 %v475
      %v1607 = vpop.f32.mrb[0].mxu0
      %v1608 = vadd.f32 %v355, %v1607
      %v1609 = vpop.f32.mrb[0].mxu0
      %v1610 = vadd.f32 %v359, %v1609
      %v1611 = vpop.f32.mrb[0].mxu0
      %v1612 = vadd.f32 %v355, %v1611
      %v1613 = vpop.f32.mrb[0].mxu0
      %v1614 = vadd.f32 %v359, %v1613
      %1615 = vmatprep.mubr.bf16.mxu0 %v1090
      %1616 = vmatmul.mubr.bf16.gmra.mrb[0].mxu0 %v477
      %v1617 = vpop.f32.mrb[0].mxu0
      %v1618 = vadd.f32 %v355, %v1617
      %v1619 = vpop.f32.mrb[0].mxu0
      %v1620 = vadd.f32 %v359, %v1619
      %v1621 = vpop.f32.mrb[0].mxu0
      %v1622 = vadd.f32 %v355, %v1621
      %v1623 = vpop.f32.mrb[0].mxu0
      %v1624 = vadd.f32 %v359, %v1623
      %1625 = vmatprep.mubr.bf16.mxu0 %v1093
      %1626 = vmatmul.mubr.bf16.gmra.mrb[0].mxu0 %v479
      %v1627 = vpop.f32.mrb[0].mxu0
      %v1628 = vadd.f32 %v355, %v1627
      %v1629 = vpop.f32.mrb[0].mxu0
      %v1630 = vadd.f32 %v359, %v1629
      %v1631 = vpop.f32.mrb[0].mxu0
      %v1632 = vadd.f32 %v355, %v1631
      %v1633 = vpop.f32.mrb[0].mxu0
      %v1634 = vadd.f32 %v359, %v1633
      %1635 = vmatprep.mubr.bf16.mxu0 %v1096
      %1636 = vmatmul.mubr.bf16.gmra.mrb[0].mxu0 %v481
      %v1637 = vpop.f32.mrb[0].mxu0
      %v1638 = vadd.f32 %v355, %v1637
      %v1639 = vpop.f32.mrb[0].mxu0
      %v1640 = vadd.f32 %v359, %v1639
      %v1641 = vpop.f32.mrb[0].mxu0
      %v1642 = vadd.f32 %v355, %v1641
      %v1643 = vpop.f32.mrb[0].mxu0
      %v1644 = vadd.f32 %v359, %v1643
      %1645 = vmatprep.mubr.bf16.mxu0 %v1099
      %1646 = vmatmul.mubr.bf16.gmra.mrb[0].mxu0 %v483
      %v1647 = vpop.f32.mrb[0].mxu0
      %v1648 = vadd.f32 %v355, %v1647
      %v1649 = vpop.f32.mrb[0].mxu0
      %v1650 = vadd.f32 %v359, %v1649
      %v1651 = vpop.f32.mrb[0].mxu0
      %v1652 = vadd.f32 %v355, %v1651
      %v1653 = vpop.f32.mrb[0].mxu0
      %v1654 = vadd.f32 %v359, %v1653
      %1655 = vmatprep.mubr.bf16.mxu0 %v1102
      %1656 = vmatmul.mubr.bf16.gmra.mrb[0].mxu0 %v485
      %v1657 = vpop.f32.mrb[0].mxu0
      %v1658 = vadd.f32 %v355, %v1657
      %v1659 = vpop.f32.mrb[0].mxu0
      %v1660 = vadd.f32 %v359, %v1659
      %v1661 = vpop.f32.mrb[0].mxu0
      %v1662 = vadd.f32 %v355, %v1661
      %v1663 = vpop.f32.mrb[0].mxu0
      %v1664 = vadd.f32 %v359, %v1663
      %1665 = vmatprep.mubr.bf16.mxu0 %v1105
      %1666 = vmatmul.mubr.bf16.gmra.mrb[0].mxu0 %v487
      %v1667 = vpop.f32.mrb[0].mxu0
      %v1668 = vadd.f32 %v355, %v1667
      %v1669 = vpop.f32.mrb[0].mxu0
      %v1670 = vadd.f32 %v359, %v1669
      %v1671 = vpop.f32.mrb[0].mxu0
      %v1672 = vadd.f32 %v355, %v1671
      %v1673 = vpop.f32.mrb[0].mxu0
      %v1674 = vadd.f32 %v359, %v1673
      %1675 = vmatprep.mubr.bf16.mxu0 %v1108
      %1676 = vmatmul.mubr.bf16.gmra.mrb[0].mxu0 %v489
      %v1677 = vpop.f32.mrb[0].mxu0
      %v1678 = vadd.f32 %v355, %v1677
      %v1679 = vpop.f32.mrb[0].mxu0
      %v1680 = vadd.f32 %v359, %v1679
      %v1681 = vpop.f32.mrb[0].mxu0
      %v1682 = vadd.f32 %v355, %v1681
      %v1683 = vpop.f32.mrb[0].mxu0
      %v1684 = vadd.f32 %v359, %v1683
      %1685 = vmatprep.mubr.bf16.mxu0 %v1111
      %1686 = vmatmul.mubr.bf16.gmra.mrb[0].mxu0 %v491
      %v1687 = vpop.f32.mrb[0].mxu0
      %v1688 = vadd.f32 %v355, %v1687
      %v1689 = vpop.f32.mrb[0].mxu0
      %v1690 = vadd.f32 %v359, %v1689
      %v1691 = vpop.f32.mrb[0].mxu0
      %v1692 = vadd.f32 %v355, %v1691
      %v1693 = vpop.f32.mrb[0].mxu0
      %v1694 = vadd.f32 %v359, %v1693
      %1695 = vmatprep.mubr.bf16.mxu0 %v1114
      %1696 = vmatmul.mubr.bf16.gmra.mrb[0].mxu0 %v493
      %v1697 = vpop.f32.mrb[0].mxu0
      %v1698 = vadd.f32 %v355, %v1697
      %v1699 = vpop.f32.mrb[0].mxu0
      %v1700 = vadd.f32 %v359, %v1699
      %v1701 = vpop.f32.mrb[0].mxu0
      %v1702 = vadd.f32 %v355, %v1701
      %v1703 = vpop.f32.mrb[0].mxu0
      %v1704 = vadd.f32 %v359, %v1703
      %1705 = vmatprep.mubr.bf16.mxu0 %v1117
      %1706 = vmatmul.mubr.bf16.gmra.mrb[0].mxu0 %v495
      %v1707 = vpop.f32.mrb[0].mxu0
      %v1708 = vadd.f32 %v355, %v1707
      %v1709 = vpop.f32.mrb[0].mxu0
      %v1710 = vadd.f32 %v359, %v1709
      %v1711 = vpop.f32.mrb[0].mxu0
      %v1712 = vadd.f32 %v355, %v1711
      %v1713 = vpop.f32.mrb[0].mxu0
      %v1714 = vadd.f32 %v359, %v1713
      %1715 = vmatprep.mubr.bf16.mxu0 %v1120
      %1716 = vmatmul.mubr.bf16.gmra.mrb[0].mxu0 %v497
      %v1717 = vpop.f32.mrb[0].mxu0
      %v1718 = vadd.f32 %v355, %v1717
      %v1719 = vpop.f32.mrb[0].mxu0
      %v1720 = vadd.f32 %v359, %v1719
      %v1721 = vpop.f32.mrb[0].mxu0
      %v1722 = vadd.f32 %v355, %v1721
      %v1723 = vpop.f32.mrb[0].mxu0
      %v1724 = vadd.f32 %v359, %v1723
      %1725 = vdwg.mxu0
      %1726 = vmatprep.subr.bf16.mxu0 0
      %1727 = vmatpush1.bf16.msra.mxu0 %v862
      %1728 = vmatprep.subr.bf16.mxu0 0
      %1729 = vmatpush1.bf16.msra.mxu0 %v869
      %1730 = vmatprep.subr.bf16.mxu0 0
      %1731 = vmatpush1.bf16.msra.mxu0 %v876
      %1732 = vmatprep.subr.bf16.mxu0 0
      %1733 = vmatpush1.bf16.msra.mxu0 %v883
      %1734 = vmatprep.subr.bf16.mxu0 0
      %1735 = vmatpush1.bf16.msra.mxu0 %v890
      %1736 = vmatprep.subr.bf16.mxu0 0
      %1737 = vmatpush1.bf16.msra.mxu0 %v897
      %1738 = vmatprep.subr.bf16.mxu0 0
      %1739 = vmatpush1.bf16.msra.mxu0 %v904
      %1740 = vmatprep.subr.bf16.mxu0 0
      %1741 = vmatpush1.bf16.msra.mxu0 %v911
      %1742 = vmatprep.subr.bf16.mxu0 0
      %1743 = vmatpush1.bf16.msra.mxu0 %v918
      %1744 = vmatprep.subr.bf16.mxu0 0
      %1745 = vmatpush1.bf16.msra.mxu0 %v925
      %1746 = vmatprep.subr.bf16.mxu0 0
      %1747 = vmatpush1.bf16.msra.mxu0 %v932
      %1748 = vmatprep.subr.bf16.mxu0 0
      %1749 = vmatpush1.bf16.msra.mxu0 %v939
      %1750 = vmatprep.subr.bf16.mxu0 0
      %1751 = vmatpush1.bf16.msra.mxu0 %v946
      %1752 = vmatprep.subr.bf16.mxu0 0
      %1753 = vmatpush1.bf16.msra.mxu0 %v953
      %1754 = vmatprep.subr.bf16.mxu0 0
      %1755 = vmatpush1.bf16.msra.mxu0 %v960
      %1756 = vmatprep.subr.bf16.mxu0 0
      %1757 = vmatpush1.bf16.msra.mxu0 %v1145
      %1758 = vmatprep.mubr.bf16.mxu0 %v1075
      %1759 = vmatmul.mubr.bf16.gmra.mrb[0].mxu0 %v467
      %v1760 = vpop.f32.mrb[0].mxu0
      %v1761 = vadd.f32 %v363, %v1760
      %v1762 = vpop.f32.mrb[0].mxu0
      %v1763 = vpop.f32.mrb[0].mxu0
      %v1764 = vadd.f32 %v363, %v1763
      %v1765 = vpop.f32.mrb[0].mxu0
      %1766 = vmatprep.mubr.bf16.mxu0 %v1078
      %1767 = vmatmul.mubr.bf16.gmra.mrb[0].mxu0 %v469
      %v1768 = vpop.f32.mrb[0].mxu0
      %v1769 = vadd.f32 %v363, %v1768
      %v1770 = vpop.f32.mrb[0].mxu0
      %v1771 = vpop.f32.mrb[0].mxu0
      %v1772 = vadd.f32 %v363, %v1771
      %v1773 = vpop.f32.mrb[0].mxu0
      %1774 = vmatprep.mubr.bf16.mxu0 %v1081
      %1775 = vmatmul.mubr.bf16.gmra.mrb[0].mxu0 %v471
      %v1776 = vpop.f32.mrb[0].mxu0
      %v1777 = vadd.f32 %v363, %v1776
      %v1778 = vpop.f32.mrb[0].mxu0
      %v1779 = vpop.f32.mrb[0].mxu0
      %v1780 = vadd.f32 %v363, %v1779
      %v1781 = vpop.f32.mrb[0].mxu0
      %1782 = vmatprep.mubr.bf16.mxu0 %v1084
      %1783 = vmatmul.mubr.bf16.gmra.mrb[0].mxu0 %v473
      %v1784 = vpop.f32.mrb[0].mxu0
      %v1785 = vadd.f32 %v363, %v1784
      %v1786 = vpop.f32.mrb[0].mxu0
      %v1787 = vpop.f32.mrb[0].mxu0
      %v1788 = vadd.f32 %v363, %v1787
      %v1789 = vpop.f32.mrb[0].mxu0
      %1790 = vmatprep.mubr.bf16.mxu0 %v1087
      %1791 = vmatmul.mubr.bf16.gmra.mrb[0].mxu0 %v475
      %v1792 = vpop.f32.mrb[0].mxu0
      %v1793 = vadd.f32 %v363, %v1792
      %v1794 = vpop.f32.mrb[0].mxu0
      %v1795 = vpop.f32.mrb[0].mxu0
      %v1796 = vadd.f32 %v363, %v1795
      %v1797 = vpop.f32.mrb[0].mxu0
      %1798 = vmatprep.mubr.bf16.mxu0 %v1090
      %1799 = vmatmul.mubr.bf16.gmra.mrb[0].mxu0 %v477
      %v1800 = vpop.f32.mrb[0].mxu0
      %v1801 = vadd.f32 %v363, %v1800
      %v1802 = vpop.f32.mrb[0].mxu0
      %v1803 = vpop.f32.mrb[0].mxu0
      %v1804 = vadd.f32 %v363, %v1803
      %v1805 = vpop.f32.mrb[0].mxu0
      %1806 = vmatprep.mubr.bf16.mxu0 %v1093
      %1807 = vmatmul.mubr.bf16.gmra.mrb[0].mxu0 %v479
      %v1808 = vpop.f32.mrb[0].mxu0
      %v1809 = vadd.f32 %v363, %v1808
      %v1810 = vpop.f32.mrb[0].mxu0
      %v1811 = vpop.f32.mrb[0].mxu0
      %v1812 = vadd.f32 %v363, %v1811
      %v1813 = vpop.f32.mrb[0].mxu0
      %1814 = vmatprep.mubr.bf16.mxu0 %v1096
      %1815 = vmatmul.mubr.bf16.gmra.mrb[0].mxu0 %v481
      %v1816 = vpop.f32.mrb[0].mxu0
      %v1817 = vadd.f32 %v363, %v1816
      %v1818 = vpop.f32.mrb[0].mxu0
      %v1819 = vpop.f32.mrb[0].mxu0
      %v1820 = vadd.f32 %v363, %v1819
      %v1821 = vpop.f32.mrb[0].mxu0
      %1822 = vmatprep.mubr.bf16.mxu0 %v1099
      %1823 = vmatmul.mubr.bf16.gmra.mrb[0].mxu0 %v483
      %v1824 = vpop.f32.mrb[0].mxu0
      %v1825 = vadd.f32 %v363, %v1824
      %v1826 = vpop.f32.mrb[0].mxu0
      %v1827 = vpop.f32.mrb[0].mxu0
      %v1828 = vadd.f32 %v363, %v1827
      %v1829 = vpop.f32.mrb[0].mxu0
      %1830 = vmatprep.mubr.bf16.mxu0 %v1102
      %1831 = vmatmul.mubr.bf16.gmra.mrb[0].mxu0 %v485
      %v1832 = vpop.f32.mrb[0].mxu0
      %v1833 = vadd.f32 %v363, %v1832
      %v1834 = vpop.f32.mrb[0].mxu0
      %v1835 = vpop.f32.mrb[0].mxu0
      %v1836 = vadd.f32 %v363, %v1835
      %v1837 = vpop.f32.mrb[0].mxu0
      %1838 = vmatprep.mubr.bf16.mxu0 %v1105
      %1839 = vmatmul.mubr.bf16.gmra.mrb[0].mxu0 %v487
      %v1840 = vpop.f32.mrb[0].mxu0
      %v1841 = vadd.f32 %v363, %v1840
      %v1842 = vpop.f32.mrb[0].mxu0
      %v1843 = vpop.f32.mrb[0].mxu0
      %v1844 = vadd.f32 %v363, %v1843
      %v1845 = vpop.f32.mrb[0].mxu0
      %1846 = vmatprep.mubr.bf16.mxu0 %v1108
      %1847 = vmatmul.mubr.bf16.gmra.mrb[0].mxu0 %v489
      %v1848 = vpop.f32.mrb[0].mxu0
      %v1849 = vadd.f32 %v363, %v1848
      %v1850 = vpop.f32.mrb[0].mxu0
      %v1851 = vpop.f32.mrb[0].mxu0
      %v1852 = vadd.f32 %v363, %v1851
      %v1853 = vpop.f32.mrb[0].mxu0
      %1854 = vmatprep.mubr.bf16.mxu0 %v1111
      %1855 = vmatmul.mubr.bf16.gmra.mrb[0].mxu0 %v491
      %v1856 = vpop.f32.mrb[0].mxu0
      %v1857 = vadd.f32 %v363, %v1856
      %v1858 = vpop.f32.mrb[0].mxu0
      %v1859 = vpop.f32.mrb[0].mxu0
      %v1860 = vadd.f32 %v363, %v1859
      %v1861 = vpop.f32.mrb[0].mxu0
      %1862 = vmatprep.mubr.bf16.mxu0 %v1114
      %1863 = vmatmul.mubr.bf16.gmra.mrb[0].mxu0 %v493
      %v1864 = vpop.f32.mrb[0].mxu0
      %v1865 = vadd.f32 %v363, %v1864
      %v1866 = vpop.f32.mrb[0].mxu0
      %v1867 = vpop.f32.mrb[0].mxu0
      %v1868 = vadd.f32 %v363, %v1867
      %v1869 = vpop.f32.mrb[0].mxu0
      %1870 = vmatprep.mubr.bf16.mxu0 %v1117
      %1871 = vmatmul.mubr.bf16.gmra.mrb[0].mxu0 %v495
      %v1872 = vpop.f32.mrb[0].mxu0
      %v1873 = vadd.f32 %v363, %v1872
      %v1874 = vpop.f32.mrb[0].mxu0
      %v1875 = vpop.f32.mrb[0].mxu0
      %v1876 = vadd.f32 %v363, %v1875
      %v1877 = vpop.f32.mrb[0].mxu0
      %1878 = vmatprep.mubr.bf16.mxu0 %v1120
      %1879 = vmatmul.mubr.bf16.gmra.mrb[0].mxu0 %v497
      %v1880 = vpop.f32.mrb[0].mxu0
      %v1881 = vadd.f32 %v363, %v1880
      %v1882 = vpop.f32.mrb[0].mxu0
      %v1883 = vpop.f32.mrb[0].mxu0
      %v1884 = vadd.f32 %v363, %v1883
      %v1885 = vpop.f32.mrb[0].mxu0
      %1886 = vdwg.mxu0
      %v1887 = vmax.f32 %v1182, 0.0
      %v1888 = vmax.f32 %v1184, 0.0
      %v1889 = vmax.f32 %v1375, 0.0
      %v1890 = vmax.f32 %v1377, 0.0
      %v1891 = vmax.f32 %v1568, 0.0
      %v1892 = vmax.f32 %v1570, 0.0
      %v1893 = vmax.f32 %v1761, 0.0
      %v1894 = vmax.f32 %v1186, 0.0
      %v1895 = vmax.f32 %v1188, 0.0
      %v1896 = vmax.f32 %v1379, 0.0
      %v1897 = vmax.f32 %v1381, 0.0
      %v1898 = vmax.f32 %v1572, 0.0
      %v1899 = vmax.f32 %v1574, 0.0
      %v1900 = vmax.f32 %v1764, 0.0
      %v1901 = vmax.f32 %v1192, 0.0
      %v1902 = vmax.f32 %v1194, 0.0
      %v1903 = vmax.f32 %v1385, 0.0
      %v1904 = vmax.f32 %v1387, 0.0
      %v1905 = vmax.f32 %v1578, 0.0
      %v1906 = vmax.f32 %v1580, 0.0
      %v1907 = vmax.f32 %v1769, 0.0
      %v1908 = vmax.f32 %v1196, 0.0
      %v1909 = vmax.f32 %v1198, 0.0
      %v1910 = vmax.f32 %v1389, 0.0
      %v1911 = vmax.f32 %v1391, 0.0
      %v1912 = vmax.f32 %v1582, 0.0
      %v1913 = vmax.f32 %v1584, 0.0
      %v1914 = vmax.f32 %v1772, 0.0
      %v1915 = vmax.f32 %v1202, 0.0
      %v1916 = vmax.f32 %v1204, 0.0
      %v1917 = vmax.f32 %v1395, 0.0
      %v1918 = vmax.f32 %v1397, 0.0
      %v1919 = vmax.f32 %v1588, 0.0
      %v1920 = vmax.f32 %v1590, 0.0
      %v1921 = vmax.f32 %v1777, 0.0
      %v1922 = vmax.f32 %v1206, 0.0
      %v1923 = vmax.f32 %v1208, 0.0
      %v1924 = vmax.f32 %v1399, 0.0
      %v1925 = vmax.f32 %v1401, 0.0
      %v1926 = vmax.f32 %v1592, 0.0
      %v1927 = vmax.f32 %v1594, 0.0
      %v1928 = vmax.f32 %v1780, 0.0
      %v1929 = vmax.f32 %v1212, 0.0
      %v1930 = vmax.f32 %v1214, 0.0
      %v1931 = vmax.f32 %v1405, 0.0
      %v1932 = vmax.f32 %v1407, 0.0
      %v1933 = vmax.f32 %v1598, 0.0
      %v1934 = vmax.f32 %v1600, 0.0
      %v1935 = vmax.f32 %v1785, 0.0
      %v1936 = vmax.f32 %v1216, 0.0
      %v1937 = vmax.f32 %v1218, 0.0
      %v1938 = vmax.f32 %v1409, 0.0
      %v1939 = vmax.f32 %v1411, 0.0
      %v1940 = vmax.f32 %v1602, 0.0
      %v1941 = vmax.f32 %v1604, 0.0
      %v1942 = vmax.f32 %v1788, 0.0
      %v1943 = vmax.f32 %v1222, 0.0
      %v1944 = vmax.f32 %v1224, 0.0
      %v1945 = vmax.f32 %v1415, 0.0
      %v1946 = vmax.f32 %v1417, 0.0
      %v1947 = vmax.f32 %v1608, 0.0
      %v1948 = vmax.f32 %v1610, 0.0
      %v1949 = vmax.f32 %v1793, 0.0
      %v1950 = vmax.f32 %v1226, 0.0
      %v1951 = vmax.f32 %v1228, 0.0
      %v1952 = vmax.f32 %v1419, 0.0
      %v1953 = vmax.f32 %v1421, 0.0
      %v1954 = vmax.f32 %v1612, 0.0
      %v1955 = vmax.f32 %v1614, 0.0
      %v1956 = vmax.f32 %v1796, 0.0
      %v1957 = vmax.f32 %v1232, 0.0
      %v1958 = vmax.f32 %v1234, 0.0
      %v1959 = vmax.f32 %v1425, 0.0
      %v1960 = vmax.f32 %v1427, 0.0
      %v1961 = vmax.f32 %v1618, 0.0
      %v1962 = vmax.f32 %v1620, 0.0
      %v1963 = vmax.f32 %v1801, 0.0
      %v1964 = vmax.f32 %v1236, 0.0
      %v1965 = vmax.f32 %v1238, 0.0
      %v1966 = vmax.f32 %v1429, 0.0
      %v1967 = vmax.f32 %v1431, 0.0
      %v1968 = vmax.f32 %v1622, 0.0
      %v1969 = vmax.f32 %v1624, 0.0
      %v1970 = vmax.f32 %v1804, 0.0
      %v1971 = vmax.f32 %v1242, 0.0
      %v1972 = vmax.f32 %v1244, 0.0
      %v1973 = vmax.f32 %v1435, 0.0
      %v1974 = vmax.f32 %v1437, 0.0
      %v1975 = vmax.f32 %v1628, 0.0
      %v1976 = vmax.f32 %v1630, 0.0
      %v1977 = vmax.f32 %v1809, 0.0
      %v1978 = vmax.f32 %v1246, 0.0
      %v1979 = vmax.f32 %v1248, 0.0
      %v1980 = vmax.f32 %v1439, 0.0
      %v1981 = vmax.f32 %v1441, 0.0
      %v1982 = vmax.f32 %v1632, 0.0
      %v1983 = vmax.f32 %v1634, 0.0
      %v1984 = vmax.f32 %v1812, 0.0
      %v1985 = vmax.f32 %v1252, 0.0
      %v1986 = vmax.f32 %v1254, 0.0
      %v1987 = vmax.f32 %v1445, 0.0
      %v1988 = vmax.f32 %v1447, 0.0
      %v1989 = vmax.f32 %v1638, 0.0
      %v1990 = vmax.f32 %v1640, 0.0
      %v1991 = vmax.f32 %v1817, 0.0
      %v1992 = vmax.f32 %v1256, 0.0
      %v1993 = vmax.f32 %v1258, 0.0
      %v1994 = vmax.f32 %v1449, 0.0
      %v1995 = vmax.f32 %v1451, 0.0
      %v1996 = vmax.f32 %v1642, 0.0
      %v1997 = vmax.f32 %v1644, 0.0
      %v1998 = vmax.f32 %v1820, 0.0
      %v1999 = vmax.f32 %v1262, 0.0
      %v2000 = vmax.f32 %v1264, 0.0
      %v2001 = vmax.f32 %v1455, 0.0
      %v2002 = vmax.f32 %v1457, 0.0
      %v2003 = vmax.f32 %v1648, 0.0
      %v2004 = vmax.f32 %v1650, 0.0
      %v2005 = vmax.f32 %v1825, 0.0
      %v2006 = vmax.f32 %v1266, 0.0
      %v2007 = vmax.f32 %v1268, 0.0
      %v2008 = vmax.f32 %v1459, 0.0
      %v2009 = vmax.f32 %v1461, 0.0
      %v2010 = vmax.f32 %v1652, 0.0
      %v2011 = vmax.f32 %v1654, 0.0
      %v2012 = vmax.f32 %v1828, 0.0
      %v2013 = vmax.f32 %v1272, 0.0
      %v2014 = vmax.f32 %v1274, 0.0
      %v2015 = vmax.f32 %v1465, 0.0
      %v2016 = vmax.f32 %v1467, 0.0
      %v2017 = vmax.f32 %v1658, 0.0
      %v2018 = vmax.f32 %v1660, 0.0
      %v2019 = vmax.f32 %v1833, 0.0
      %v2020 = vmax.f32 %v1276, 0.0
      %v2021 = vmax.f32 %v1278, 0.0
      %v2022 = vmax.f32 %v1469, 0.0
      %v2023 = vmax.f32 %v1471, 0.0
      %v2024 = vmax.f32 %v1662, 0.0
      %v2025 = vmax.f32 %v1664, 0.0
      %v2026 = vmax.f32 %v1836, 0.0
      %v2027 = vmax.f32 %v1282, 0.0
      %v2028 = vmax.f32 %v1284, 0.0
      %v2029 = vmax.f32 %v1475, 0.0
      %v2030 = vmax.f32 %v1477, 0.0
      %v2031 = vmax.f32 %v1668, 0.0
      %v2032 = vmax.f32 %v1670, 0.0
      %v2033 = vmax.f32 %v1841, 0.0
      %v2034 = vmax.f32 %v1286, 0.0
      %v2035 = vmax.f32 %v1288, 0.0
      %v2036 = vmax.f32 %v1479, 0.0
      %v2037 = vmax.f32 %v1481, 0.0
      %v2038 = vmax.f32 %v1672, 0.0
      %v2039 = vmax.f32 %v1674, 0.0
      %v2040 = vmax.f32 %v1844, 0.0
      %v2041 = vmax.f32 %v1292, 0.0
      %v2042 = vmax.f32 %v1294, 0.0
      %v2043 = vmax.f32 %v1485, 0.0
      %v2044 = vmax.f32 %v1487, 0.0
      %v2045 = vmax.f32 %v1678, 0.0
      %v2046 = vmax.f32 %v1680, 0.0
      %v2047 = vmax.f32 %v1849, 0.0
      %v2048 = vmax.f32 %v1296, 0.0
      %v2049 = vmax.f32 %v1298, 0.0
      %v2050 = vmax.f32 %v1489, 0.0
      %v2051 = vmax.f32 %v1491, 0.0
      %v2052 = vmax.f32 %v1682, 0.0
      %v2053 = vmax.f32 %v1684, 0.0
      %v2054 = vmax.f32 %v1852, 0.0
      %v2055 = vmax.f32 %v1302, 0.0
      %v2056 = vmax.f32 %v1304, 0.0
      %v2057 = vmax.f32 %v1495, 0.0
      %v2058 = vmax.f32 %v1497, 0.0
      %v2059 = vmax.f32 %v1688, 0.0
      %v2060 = vmax.f32 %v1690, 0.0
      %v2061 = vmax.f32 %v1857, 0.0
      %v2062 = vmax.f32 %v1306, 0.0
      %v2063 = vmax.f32 %v1308, 0.0
      %v2064 = vmax.f32 %v1499, 0.0
      %v2065 = vmax.f32 %v1501, 0.0
      %v2066 = vmax.f32 %v1692, 0.0
      %v2067 = vmax.f32 %v1694, 0.0
      %v2068 = vmax.f32 %v1860, 0.0
      %v2069 = vmax.f32 %v1312, 0.0
      %v2070 = vmax.f32 %v1314, 0.0
      %v2071 = vmax.f32 %v1505, 0.0
      %v2072 = vmax.f32 %v1507, 0.0
      %v2073 = vmax.f32 %v1698, 0.0
      %v2074 = vmax.f32 %v1700, 0.0
      %v2075 = vmax.f32 %v1865, 0.0
      %v2076 = vmax.f32 %v1316, 0.0
      %v2077 = vmax.f32 %v1318, 0.0
      %v2078 = vmax.f32 %v1509, 0.0
      %v2079 = vmax.f32 %v1511, 0.0
      %v2080 = vmax.f32 %v1702, 0.0
      %v2081 = vmax.f32 %v1704, 0.0
      %v2082 = vmax.f32 %v1868, 0.0
      %v2083 = vmax.f32 %v1322, 0.0
      %v2084 = vmax.f32 %v1324, 0.0
      %v2085 = vmax.f32 %v1515, 0.0
      %v2086 = vmax.f32 %v1517, 0.0
      %v2087 = vmax.f32 %v1708, 0.0
      %v2088 = vmax.f32 %v1710, 0.0
      %v2089 = vmax.f32 %v1873, 0.0
      %v2090 = vmax.f32 %v1326, 0.0
      %v2091 = vmax.f32 %v1328, 0.0
      %v2092 = vmax.f32 %v1519, 0.0
      %v2093 = vmax.f32 %v1521, 0.0
      %v2094 = vmax.f32 %v1712, 0.0
      %v2095 = vmax.f32 %v1714, 0.0
      %v2096 = vmax.f32 %v1876, 0.0
      %v2097 = vmax.f32 %v1332, 0.0
      %v2098 = vmax.f32 %v1334, 0.0
      %v2099 = vmax.f32 %v1525, 0.0
      %v2100 = vmax.f32 %v1527, 0.0
      %v2101 = vmax.f32 %v1718, 0.0
      %v2102 = vmax.f32 %v1720, 0.0
      %v2103 = vmax.f32 %v1881, 0.0
      %v2104 = vmax.f32 %v1336, 0.0
      %v2105 = vmax.f32 %v1338, 0.0
      %v2106 = vmax.f32 %v1529, 0.0
      %v2107 = vmax.f32 %v1531, 0.0
      %v2108 = vmax.f32 %v1722, 0.0
      %v2109 = vmax.f32 %v1724, 0.0
      %v2110 = vmax.f32 %v1884, 0.0
      %2143 = vrot.lane.b32.xlu0 %v1887, 96
      %v2144 = vpop.permute.xlu0 %2143
      %2145 = vrot.lane.b32.xlu0 %v1894, 96
      %v2146 = vpop.permute.xlu0 %2145
      %2147 = vrot.lane.b32.xlu0 %v1901, 96
      %v2148 = vpop.permute.xlu0 %2147
      %2149 = vrot.lane.b32.xlu0 %v1908, 96
      %v2150 = vpop.permute.xlu0 %2149
      %2151 = vrot.lane.b32.xlu0 %v1915, 96
      %v2152 = vpop.permute.xlu0 %2151
      %2153 = vrot.lane.b32.xlu0 %v1922, 96
      %v2154 = vpop.permute.xlu0 %2153
      %2155 = vrot.lane.b32.xlu0 %v1929, 96
      %v2156 = vpop.permute.xlu0 %2155
      %2157 = vrot.lane.b32.xlu0 %v1936, 96
      %v2158 = vpop.permute.xlu0 %2157
      %2159 = vrot.lane.b32.xlu0 %v1943, 96
      %v2160 = vpop.permute.xlu0 %2159
      %2161 = vrot.lane.b32.xlu0 %v1950, 96
      %v2162 = vpop.permute.xlu0 %2161
      %2163 = vrot.lane.b32.xlu0 %v1957, 96
      %v2164 = vpop.permute.xlu0 %2163
      %2165 = vrot.lane.b32.xlu0 %v1964, 96
      %v2166 = vpop.permute.xlu0 %2165
      %2167 = vrot.lane.b32.xlu0 %v1971, 96
      %v2168 = vpop.permute.xlu0 %2167
      %2169 = vrot.lane.b32.xlu0 %v1978, 96
      %v2170 = vpop.permute.xlu0 %2169
      %2171 = vrot.lane.b32.xlu0 %v1985, 96
      %v2172 = vpop.permute.xlu0 %2171
      %2173 = vrot.lane.b32.xlu0 %v1992, 96
      %v2174 = vpop.permute.xlu0 %2173
      %2175 = vrot.lane.b32.xlu0 %v1999, 96
      %v2176 = vpop.permute.xlu0 %2175
      %2177 = vrot.lane.b32.xlu0 %v2006, 96
      %v2178 = vpop.permute.xlu0 %2177
      %2179 = vrot.lane.b32.xlu0 %v2013, 96
      %v2180 = vpop.permute.xlu0 %2179
      %2181 = vrot.lane.b32.xlu0 %v2020, 96
      %v2182 = vpop.permute.xlu0 %2181
      %2183 = vrot.lane.b32.xlu0 %v2027, 96
      %v2184 = vpop.permute.xlu0 %2183
      %2185 = vrot.lane.b32.xlu0 %v2034, 96
      %v2186 = vpop.permute.xlu0 %2185
      %2187 = vrot.lane.b32.xlu0 %v2041, 96
      %v2188 = vpop.permute.xlu0 %2187
      %2189 = vrot.lane.b32.xlu0 %v2048, 96
      %v2190 = vpop.permute.xlu0 %2189
      %2191 = vrot.lane.b32.xlu0 %v2055, 96
      %v2192 = vpop.permute.xlu0 %2191
      %2193 = vrot.lane.b32.xlu0 %v2062, 96
      %v2194 = vpop.permute.xlu0 %2193
      %2195 = vrot.lane.b32.xlu0 %v2069, 96
      %v2196 = vpop.permute.xlu0 %2195
      %2197 = vrot.lane.b32.xlu0 %v2076, 96
      %v2198 = vpop.permute.xlu0 %2197
      %2199 = vrot.lane.b32.xlu0 %v2083, 96
      %v2200 = vpop.permute.xlu0 %2199
      %2201 = vrot.lane.b32.xlu0 %v2090, 96
      %v2202 = vpop.permute.xlu0 %2201
      %2203 = vrot.lane.b32.xlu0 %v2097, 96
      %v2204 = vpop.permute.xlu0 %2203
      %2205 = vrot.lane.b32.xlu0 %v2104, 96
      %v2206 = vpop.permute.xlu0 %2205
      %v2239 = vmax.f32 %v1887, %v2144
      %v2240 = vmax.f32 %v1894, %v2146
      %v2241 = vmax.f32 %v1901, %v2148
      %v2242 = vmax.f32 %v1908, %v2150
      %v2243 = vmax.f32 %v1915, %v2152
      %v2244 = vmax.f32 %v1922, %v2154
      %v2245 = vmax.f32 %v1929, %v2156
      %v2246 = vmax.f32 %v1936, %v2158
      %v2247 = vmax.f32 %v1943, %v2160
      %v2248 = vmax.f32 %v1950, %v2162
      %v2249 = vmax.f32 %v1957, %v2164
      %v2250 = vmax.f32 %v1964, %v2166
      %v2251 = vmax.f32 %v1971, %v2168
      %v2252 = vmax.f32 %v1978, %v2170
      %v2253 = vmax.f32 %v1985, %v2172
      %v2254 = vmax.f32 %v1992, %v2174
      %v2255 = vmax.f32 %v1999, %v2176
      %v2256 = vmax.f32 %v2006, %v2178
      %v2257 = vmax.f32 %v2013, %v2180
      %v2258 = vmax.f32 %v2020, %v2182
      %v2259 = vmax.f32 %v2027, %v2184
      %v2260 = vmax.f32 %v2034, %v2186
      %v2261 = vmax.f32 %v2041, %v2188
      %v2262 = vmax.f32 %v2048, %v2190
      %v2263 = vmax.f32 %v2055, %v2192
      %v2264 = vmax.f32 %v2062, %v2194
      %v2265 = vmax.f32 %v2069, %v2196
      %v2266 = vmax.f32 %v2076, %v2198
      %v2267 = vmax.f32 %v2083, %v2200
      %v2268 = vmax.f32 %v2090, %v2202
      %v2269 = vmax.f32 %v2097, %v2204
      %v2270 = vmax.f32 %v2104, %v2206
      %2271 = vrot.lane.b32.xlu0 %v1887, 64
      %v2272 = vpop.permute.xlu0 %2271
      %2273 = vrot.lane.b32.xlu0 %v1894, 64
      %v2274 = vpop.permute.xlu0 %2273
      %2275 = vrot.lane.b32.xlu0 %v1901, 64
      %v2276 = vpop.permute.xlu0 %2275
      %2277 = vrot.lane.b32.xlu0 %v1908, 64
      %v2278 = vpop.permute.xlu0 %2277
      %2279 = vrot.lane.b32.xlu0 %v1915, 64
      %v2280 = vpop.permute.xlu0 %2279
      %2281 = vrot.lane.b32.xlu0 %v1922, 64
      %v2282 = vpop.permute.xlu0 %2281
      %2283 = vrot.lane.b32.xlu0 %v1929, 64
      %v2284 = vpop.permute.xlu0 %2283
      %2285 = vrot.lane.b32.xlu0 %v1936, 64
      %v2286 = vpop.permute.xlu0 %2285
      %2287 = vrot.lane.b32.xlu0 %v1943, 64
      %v2288 = vpop.permute.xlu0 %2287
      %2289 = vrot.lane.b32.xlu0 %v1950, 64
      %v2290 = vpop.permute.xlu0 %2289
      %2291 = vrot.lane.b32.xlu0 %v1957, 64
      %v2292 = vpop.permute.xlu0 %2291
      %2293 = vrot.lane.b32.xlu0 %v1964, 64
      %v2294 = vpop.permute.xlu0 %2293
      %2295 = vrot.lane.b32.xlu0 %v1971, 64
      %v2296 = vpop.permute.xlu0 %2295
      %2297 = vrot.lane.b32.xlu0 %v1978, 64
      %v2298 = vpop.permute.xlu0 %2297
      %2299 = vrot.lane.b32.xlu0 %v1985, 64
      %v2300 = vpop.permute.xlu0 %2299
      %2301 = vrot.lane.b32.xlu0 %v1992, 64
      %v2302 = vpop.permute.xlu0 %2301
      %2303 = vrot.lane.b32.xlu0 %v1999, 64
      %v2304 = vpop.permute.xlu0 %2303
      %2305 = vrot.lane.b32.xlu0 %v2006, 64
      %v2306 = vpop.permute.xlu0 %2305
      %2307 = vrot.lane.b32.xlu0 %v2013, 64
      %v2308 = vpop.permute.xlu0 %2307
      %2309 = vrot.lane.b32.xlu0 %v2020, 64
      %v2310 = vpop.permute.xlu0 %2309
      %2311 = vrot.lane.b32.xlu0 %v2027, 64
      %v2312 = vpop.permute.xlu0 %2311
      %2313 = vrot.lane.b32.xlu0 %v2034, 64
      %v2314 = vpop.permute.xlu0 %2313
      %2315 = vrot.lane.b32.xlu0 %v2041, 64
      %v2316 = vpop.permute.xlu0 %2315
      %2317 = vrot.lane.b32.xlu0 %v2048, 64
      %v2318 = vpop.permute.xlu0 %2317
      %2319 = vrot.lane.b32.xlu0 %v2055, 64
      %v2320 = vpop.permute.xlu0 %2319
      %2321 = vrot.lane.b32.xlu0 %v2062, 64
      %v2322 = vpop.permute.xlu0 %2321
      %2323 = vrot.lane.b32.xlu0 %v2069, 64
      %v2324 = vpop.permute.xlu0 %2323
      %2325 = vrot.lane.b32.xlu0 %v2076, 64
      %v2326 = vpop.permute.xlu0 %2325
      %2327 = vrot.lane.b32.xlu0 %v2083, 64
      %v2328 = vpop.permute.xlu0 %2327
      %2329 = vrot.lane.b32.xlu0 %v2090, 64
      %v2330 = vpop.permute.xlu0 %2329
      %2331 = vrot.lane.b32.xlu0 %v2097, 64
      %v2332 = vpop.permute.xlu0 %2331
      %2333 = vrot.lane.b32.xlu0 %v2104, 64
      %v2334 = vpop.permute.xlu0 %2333
      %v2367 = vmax.f32 %v2239, %v2272
      %v2368 = vmax.f32 %v2240, %v2274
      %v2369 = vmax.f32 %v2241, %v2276
      %v2370 = vmax.f32 %v2242, %v2278
      %v2371 = vmax.f32 %v2243, %v2280
      %v2372 = vmax.f32 %v2244, %v2282
      %v2373 = vmax.f32 %v2245, %v2284
      %v2374 = vmax.f32 %v2246, %v2286
      %v2375 = vmax.f32 %v2247, %v2288
      %v2376 = vmax.f32 %v2248, %v2290
      %v2377 = vmax.f32 %v2249, %v2292
      %v2378 = vmax.f32 %v2250, %v2294
      %v2379 = vmax.f32 %v2251, %v2296
      %v2380 = vmax.f32 %v2252, %v2298
      %v2381 = vmax.f32 %v2253, %v2300
      %v2382 = vmax.f32 %v2254, %v2302
      %v2383 = vmax.f32 %v2255, %v2304
      %v2384 = vmax.f32 %v2256, %v2306
      %v2385 = vmax.f32 %v2257, %v2308
      %v2386 = vmax.f32 %v2258, %v2310
      %v2387 = vmax.f32 %v2259, %v2312
      %v2388 = vmax.f32 %v2260, %v2314
      %v2389 = vmax.f32 %v2261, %v2316
      %v2390 = vmax.f32 %v2262, %v2318
      %v2391 = vmax.f32 %v2263, %v2320
      %v2392 = vmax.f32 %v2264, %v2322
      %v2393 = vmax.f32 %v2265, %v2324
      %v2394 = vmax.f32 %v2266, %v2326
      %v2395 = vmax.f32 %v2267, %v2328
      %v2396 = vmax.f32 %v2268, %v2330
      %v2397 = vmax.f32 %v2269, %v2332
      %v2398 = vmax.f32 %v2270, %v2334
      %2399 = vrot.lane.b32.xlu0 %v1887, 32
      %v2400 = vpop.permute.xlu0 %2399
      %2401 = vrot.lane.b32.xlu0 %v1894, 32
      %v2402 = vpop.permute.xlu0 %2401
      %2403 = vrot.lane.b32.xlu0 %v1901, 32
      %v2404 = vpop.permute.xlu0 %2403
      %2405 = vrot.lane.b32.xlu0 %v1908, 32
      %v2406 = vpop.permute.xlu0 %2405
      %2407 = vrot.lane.b32.xlu0 %v1915, 32
      %v2408 = vpop.permute.xlu0 %2407
      %2409 = vrot.lane.b32.xlu0 %v1922, 32
      %v2410 = vpop.permute.xlu0 %2409
      %2411 = vrot.lane.b32.xlu0 %v1929, 32
      %v2412 = vpop.permute.xlu0 %2411
      %2413 = vrot.lane.b32.xlu0 %v1936, 32
      %v2414 = vpop.permute.xlu0 %2413
      %2415 = vrot.lane.b32.xlu0 %v1943, 32
      %v2416 = vpop.permute.xlu0 %2415
      %2417 = vrot.lane.b32.xlu0 %v1950, 32
      %v2418 = vpop.permute.xlu0 %2417
      %2419 = vrot.lane.b32.xlu0 %v1957, 32
      %v2420 = vpop.permute.xlu0 %2419
      %2421 = vrot.lane.b32.xlu0 %v1964, 32
      %v2422 = vpop.permute.xlu0 %2421
      %2423 = vrot.lane.b32.xlu0 %v1971, 32
      %v2424 = vpop.permute.xlu0 %2423
      %2425 = vrot.lane.b32.xlu0 %v1978, 32
      %v2426 = vpop.permute.xlu0 %2425
      %2427 = vrot.lane.b32.xlu0 %v1985, 32
      %v2428 = vpop.permute.xlu0 %2427
      %2429 = vrot.lane.b32.xlu0 %v1992, 32
      %v2430 = vpop.permute.xlu0 %2429
      %2431 = vrot.lane.b32.xlu0 %v1999, 32
      %v2432 = vpop.permute.xlu0 %2431
      %2433 = vrot.lane.b32.xlu0 %v2006, 32
      %v2434 = vpop.permute.xlu0 %2433
      %2435 = vrot.lane.b32.xlu0 %v2013, 32
      %v2436 = vpop.permute.xlu0 %2435
      %2437 = vrot.lane.b32.xlu0 %v2020, 32
      %v2438 = vpop.permute.xlu0 %2437
      %2439 = vrot.lane.b32.xlu0 %v2027, 32
      %v2440 = vpop.permute.xlu0 %2439
      %2441 = vrot.lane.b32.xlu0 %v2034, 32
      %v2442 = vpop.permute.xlu0 %2441
      %2443 = vrot.lane.b32.xlu0 %v2041, 32
      %v2444 = vpop.permute.xlu0 %2443
      %2445 = vrot.lane.b32.xlu0 %v2048, 32
      %v2446 = vpop.permute.xlu0 %2445
      %2447 = vrot.lane.b32.xlu0 %v2055, 32
      %v2448 = vpop.permute.xlu0 %2447
      %2449 = vrot.lane.b32.xlu0 %v2062, 32
      %v2450 = vpop.permute.xlu0 %2449
      %2451 = vrot.lane.b32.xlu0 %v2069, 32
      %v2452 = vpop.permute.xlu0 %2451
      %2453 = vrot.lane.b32.xlu0 %v2076, 32
      %v2454 = vpop.permute.xlu0 %2453
      %2455 = vrot.lane.b32.xlu0 %v2083, 32
      %v2456 = vpop.permute.xlu0 %2455
      %2457 = vrot.lane.b32.xlu0 %v2090, 32
      %v2458 = vpop.permute.xlu0 %2457
      %2459 = vrot.lane.b32.xlu0 %v2097, 32
      %v2460 = vpop.permute.xlu0 %2459
      %2461 = vrot.lane.b32.xlu0 %v2104, 32
      %v2462 = vpop.permute.xlu0 %2461
      %v2495 = vmax.f32 %v2367, %v2400
      %v2496 = vmax.f32 %v2368, %v2402
      %v2497 = vmax.f32 %v2369, %v2404
      %v2498 = vmax.f32 %v2370, %v2406
      %v2499 = vmax.f32 %v2371, %v2408
      %v2500 = vmax.f32 %v2372, %v2410
      %v2501 = vmax.f32 %v2373, %v2412
      %v2502 = vmax.f32 %v2374, %v2414
      %v2503 = vmax.f32 %v2375, %v2416
      %v2504 = vmax.f32 %v2376, %v2418
      %v2505 = vmax.f32 %v2377, %v2420
      %v2506 = vmax.f32 %v2378, %v2422
      %v2507 = vmax.f32 %v2379, %v2424
      %v2508 = vmax.f32 %v2380, %v2426
      %v2509 = vmax.f32 %v2381, %v2428
      %v2510 = vmax.f32 %v2382, %v2430
      %v2511 = vmax.f32 %v2383, %v2432
      %v2512 = vmax.f32 %v2384, %v2434
      %v2513 = vmax.f32 %v2385, %v2436
      %v2514 = vmax.f32 %v2386, %v2438
      %v2515 = vmax.f32 %v2387, %v2440
      %v2516 = vmax.f32 %v2388, %v2442
      %v2517 = vmax.f32 %v2389, %v2444
      %v2518 = vmax.f32 %v2390, %v2446
      %v2519 = vmax.f32 %v2391, %v2448
      %v2520 = vmax.f32 %v2392, %v2450
      %v2521 = vmax.f32 %v2393, %v2452
      %v2522 = vmax.f32 %v2394, %v2454
      %v2523 = vmax.f32 %v2395, %v2456
      %v2524 = vmax.f32 %v2396, %v2458
      %v2525 = vmax.f32 %v2397, %v2460
      %v2526 = vmax.f32 %v2398, %v2462
      %v2527 = vmax.f32 %v2495, %v1888
      %v2528 = vmax.f32 %v2496, %v1895
      %v2529 = vmax.f32 %v2497, %v1902
      %v2530 = vmax.f32 %v2498, %v1909
      %v2531 = vmax.f32 %v2499, %v1916
      %v2532 = vmax.f32 %v2500, %v1923
      %v2533 = vmax.f32 %v2501, %v1930
      %v2534 = vmax.f32 %v2502, %v1937
      %v2535 = vmax.f32 %v2503, %v1944
      %v2536 = vmax.f32 %v2504, %v1951
      %v2537 = vmax.f32 %v2505, %v1958
      %v2538 = vmax.f32 %v2506, %v1965
      %v2539 = vmax.f32 %v2507, %v1972
      %v2540 = vmax.f32 %v2508, %v1979
      %v2541 = vmax.f32 %v2509, %v1986
      %v2542 = vmax.f32 %v2510, %v1993
      %v2543 = vmax.f32 %v2511, %v2000
      %v2544 = vmax.f32 %v2512, %v2007
      %v2545 = vmax.f32 %v2513, %v2014
      %v2546 = vmax.f32 %v2514, %v2021
      %v2547 = vmax.f32 %v2515, %v2028
      %v2548 = vmax.f32 %v2516, %v2035
      %v2549 = vmax.f32 %v2517, %v2042
      %v2550 = vmax.f32 %v2518, %v2049
      %v2551 = vmax.f32 %v2519, %v2056
      %v2552 = vmax.f32 %v2520, %v2063
      %v2553 = vmax.f32 %v2521, %v2070
      %v2554 = vmax.f32 %v2522, %v2077
      %v2555 = vmax.f32 %v2523, %v2084
      %v2556 = vmax.f32 %v2524, %v2091
      %v2557 = vmax.f32 %v2525, %v2098
      %v2558 = vmax.f32 %v2526, %v2105
      %2591 = vrot.lane.b32.xlu0 %v1888, 96
      %v2592 = vpop.permute.xlu0 %2591
      %2593 = vrot.lane.b32.xlu0 %v1895, 96
      %v2594 = vpop.permute.xlu0 %2593
      %2595 = vrot.lane.b32.xlu0 %v1902, 96
      %v2596 = vpop.permute.xlu0 %2595
      %2597 = vrot.lane.b32.xlu0 %v1909, 96
      %v2598 = vpop.permute.xlu0 %2597
      %2599 = vrot.lane.b32.xlu0 %v1916, 96
      %v2600 = vpop.permute.xlu0 %2599
      %2601 = vrot.lane.b32.xlu0 %v1923, 96
      %v2602 = vpop.permute.xlu0 %2601
      %2603 = vrot.lane.b32.xlu0 %v1930, 96
      %v2604 = vpop.permute.xlu0 %2603
      %2605 = vrot.lane.b32.xlu0 %v1937, 96
      %v2606 = vpop.permute.xlu0 %2605
      %2607 = vrot.lane.b32.xlu0 %v1944, 96
      %v2608 = vpop.permute.xlu0 %2607
      %2609 = vrot.lane.b32.xlu0 %v1951, 96
      %v2610 = vpop.permute.xlu0 %2609
      %2611 = vrot.lane.b32.xlu0 %v1958, 96
      %v2612 = vpop.permute.xlu0 %2611
      %2613 = vrot.lane.b32.xlu0 %v1965, 96
      %v2614 = vpop.permute.xlu0 %2613
      %2615 = vrot.lane.b32.xlu0 %v1972, 96
      %v2616 = vpop.permute.xlu0 %2615
      %2617 = vrot.lane.b32.xlu0 %v1979, 96
      %v2618 = vpop.permute.xlu0 %2617
      %2619 = vrot.lane.b32.xlu0 %v1986, 96
      %v2620 = vpop.permute.xlu0 %2619
      %2621 = vrot.lane.b32.xlu0 %v1993, 96
      %v2622 = vpop.permute.xlu0 %2621
      %2623 = vrot.lane.b32.xlu0 %v2000, 96
      %v2624 = vpop.permute.xlu0 %2623
      %2625 = vrot.lane.b32.xlu0 %v2007, 96
      %v2626 = vpop.permute.xlu0 %2625
      %2627 = vrot.lane.b32.xlu0 %v2014, 96
      %v2628 = vpop.permute.xlu0 %2627
      %2629 = vrot.lane.b32.xlu0 %v2021, 96
      %v2630 = vpop.permute.xlu0 %2629
      %2631 = vrot.lane.b32.xlu0 %v2028, 96
      %v2632 = vpop.permute.xlu0 %2631
      %2633 = vrot.lane.b32.xlu0 %v2035, 96
      %v2634 = vpop.permute.xlu0 %2633
      %2635 = vrot.lane.b32.xlu0 %v2042, 96
      %v2636 = vpop.permute.xlu0 %2635
      %2637 = vrot.lane.b32.xlu0 %v2049, 96
      %v2638 = vpop.permute.xlu0 %2637
      %2639 = vrot.lane.b32.xlu0 %v2056, 96
      %v2640 = vpop.permute.xlu0 %2639
      %2641 = vrot.lane.b32.xlu0 %v2063, 96
      %v2642 = vpop.permute.xlu0 %2641
      %2643 = vrot.lane.b32.xlu0 %v2070, 96
      %v2644 = vpop.permute.xlu0 %2643
      %2645 = vrot.lane.b32.xlu0 %v2077, 96
      %v2646 = vpop.permute.xlu0 %2645
      %2647 = vrot.lane.b32.xlu0 %v2084, 96
      %v2648 = vpop.permute.xlu0 %2647
      %2649 = vrot.lane.b32.xlu0 %v2091, 96
      %v2650 = vpop.permute.xlu0 %2649
      %2651 = vrot.lane.b32.xlu0 %v2098, 96
      %v2652 = vpop.permute.xlu0 %2651
      %2653 = vrot.lane.b32.xlu0 %v2105, 96
      %v2654 = vpop.permute.xlu0 %2653
      %v2687 = vmax.f32 %v2527, %v2592
      %v2688 = vmax.f32 %v2528, %v2594
      %v2689 = vmax.f32 %v2529, %v2596
      %v2690 = vmax.f32 %v2530, %v2598
      %v2691 = vmax.f32 %v2531, %v2600
      %v2692 = vmax.f32 %v2532, %v2602
      %v2693 = vmax.f32 %v2533, %v2604
      %v2694 = vmax.f32 %v2534, %v2606
      %v2695 = vmax.f32 %v2535, %v2608
      %v2696 = vmax.f32 %v2536, %v2610
      %v2697 = vmax.f32 %v2537, %v2612
      %v2698 = vmax.f32 %v2538, %v2614
      %v2699 = vmax.f32 %v2539, %v2616
      %v2700 = vmax.f32 %v2540, %v2618
      %v2701 = vmax.f32 %v2541, %v2620
      %v2702 = vmax.f32 %v2542, %v2622
      %v2703 = vmax.f32 %v2543, %v2624
      %v2704 = vmax.f32 %v2544, %v2626
      %v2705 = vmax.f32 %v2545, %v2628
      %v2706 = vmax.f32 %v2546, %v2630
      %v2707 = vmax.f32 %v2547, %v2632
      %v2708 = vmax.f32 %v2548, %v2634
      %v2709 = vmax.f32 %v2549, %v2636
      %v2710 = vmax.f32 %v2550, %v2638
      %v2711 = vmax.f32 %v2551, %v2640
      %v2712 = vmax.f32 %v2552, %v2642
      %v2713 = vmax.f32 %v2553, %v2644
      %v2714 = vmax.f32 %v2554, %v2646
      %v2715 = vmax.f32 %v2555, %v2648
      %v2716 = vmax.f32 %v2556, %v2650
      %v2717 = vmax.f32 %v2557, %v2652
      %v2718 = vmax.f32 %v2558, %v2654
      %2719 = vrot.lane.b32.xlu0 %v1888, 64
      %v2720 = vpop.permute.xlu0 %2719
      %2721 = vrot.lane.b32.xlu0 %v1895, 64
      %v2722 = vpop.permute.xlu0 %2721
      %2723 = vrot.lane.b32.xlu0 %v1902, 64
      %v2724 = vpop.permute.xlu0 %2723
      %2725 = vrot.lane.b32.xlu0 %v1909, 64
      %v2726 = vpop.permute.xlu0 %2725
      %2727 = vrot.lane.b32.xlu0 %v1916, 64
      %v2728 = vpop.permute.xlu0 %2727
      %2729 = vrot.lane.b32.xlu0 %v1923, 64
      %v2730 = vpop.permute.xlu0 %2729
      %2731 = vrot.lane.b32.xlu0 %v1930, 64
      %v2732 = vpop.permute.xlu0 %2731
      %2733 = vrot.lane.b32.xlu0 %v1937, 64
      %v2734 = vpop.permute.xlu0 %2733
      %2735 = vrot.lane.b32.xlu0 %v1944, 64
      %v2736 = vpop.permute.xlu0 %2735
      %2737 = vrot.lane.b32.xlu0 %v1951, 64
      %v2738 = vpop.permute.xlu0 %2737
      %2739 = vrot.lane.b32.xlu0 %v1958, 64
      %v2740 = vpop.permute.xlu0 %2739
      %2741 = vrot.lane.b32.xlu0 %v1965, 64
      %v2742 = vpop.permute.xlu0 %2741
      %2743 = vrot.lane.b32.xlu0 %v1972, 64
      %v2744 = vpop.permute.xlu0 %2743
      %2745 = vrot.lane.b32.xlu0 %v1979, 64
      %v2746 = vpop.permute.xlu0 %2745
      %2747 = vrot.lane.b32.xlu0 %v1986, 64
      %v2748 = vpop.permute.xlu0 %2747
      %2749 = vrot.lane.b32.xlu0 %v1993, 64
      %v2750 = vpop.permute.xlu0 %2749
      %2751 = vrot.lane.b32.xlu0 %v2000, 64
      %v2752 = vpop.permute.xlu0 %2751
      %2753 = vrot.lane.b32.xlu0 %v2007, 64
      %v2754 = vpop.permute.xlu0 %2753
      %2755 = vrot.lane.b32.xlu0 %v2014, 64
      %v2756 = vpop.permute.xlu0 %2755
      %2757 = vrot.lane.b32.xlu0 %v2021, 64
      %v2758 = vpop.permute.xlu0 %2757
      %2759 = vrot.lane.b32.xlu0 %v2028, 64
      %v2760 = vpop.permute.xlu0 %2759
      %2761 = vrot.lane.b32.xlu0 %v2035, 64
      %v2762 = vpop.permute.xlu0 %2761
      %2763 = vrot.lane.b32.xlu0 %v2042, 64
      %v2764 = vpop.permute.xlu0 %2763
      %2765 = vrot.lane.b32.xlu0 %v2049, 64
      %v2766 = vpop.permute.xlu0 %2765
      %2767 = vrot.lane.b32.xlu0 %v2056, 64
      %v2768 = vpop.permute.xlu0 %2767
      %2769 = vrot.lane.b32.xlu0 %v2063, 64
      %v2770 = vpop.permute.xlu0 %2769
      %2771 = vrot.lane.b32.xlu0 %v2070, 64
      %v2772 = vpop.permute.xlu0 %2771
      %2773 = vrot.lane.b32.xlu0 %v2077, 64
      %v2774 = vpop.permute.xlu0 %2773
      %2775 = vrot.lane.b32.xlu0 %v2084, 64
      %v2776 = vpop.permute.xlu0 %2775
      %2777 = vrot.lane.b32.xlu0 %v2091, 64
      %v2778 = vpop.permute.xlu0 %2777
      %2779 = vrot.lane.b32.xlu0 %v2098, 64
      %v2780 = vpop.permute.xlu0 %2779
      %2781 = vrot.lane.b32.xlu0 %v2105, 64
      %v2782 = vpop.permute.xlu0 %2781
      %v2815 = vmax.f32 %v2687, %v2720
      %v2816 = vmax.f32 %v2688, %v2722
      %v2817 = vmax.f32 %v2689, %v2724
      %v2818 = vmax.f32 %v2690, %v2726
      %v2819 = vmax.f32 %v2691, %v2728
      %v2820 = vmax.f32 %v2692, %v2730
      %v2821 = vmax.f32 %v2693, %v2732
      %v2822 = vmax.f32 %v2694, %v2734
      %v2823 = vmax.f32 %v2695, %v2736
      %v2824 = vmax.f32 %v2696, %v2738
      %v2825 = vmax.f32 %v2697, %v2740
      %v2826 = vmax.f32 %v2698, %v2742
      %v2827 = vmax.f32 %v2699, %v2744
      %v2828 = vmax.f32 %v2700, %v2746
      %v2829 = vmax.f32 %v2701, %v2748
      %v2830 = vmax.f32 %v2702, %v2750
      %v2831 = vmax.f32 %v2703, %v2752
      %v2832 = vmax.f32 %v2704, %v2754
      %v2833 = vmax.f32 %v2705, %v2756
      %v2834 = vmax.f32 %v2706, %v2758
      %v2835 = vmax.f32 %v2707, %v2760
      %v2836 = vmax.f32 %v2708, %v2762
      %v2837 = vmax.f32 %v2709, %v2764
      %v2838 = vmax.f32 %v2710, %v2766
      %v2839 = vmax.f32 %v2711, %v2768
      %v2840 = vmax.f32 %v2712, %v2770
      %v2841 = vmax.f32 %v2713, %v2772
      %v2842 = vmax.f32 %v2714, %v2774
      %v2843 = vmax.f32 %v2715, %v2776
      %v2844 = vmax.f32 %v2716, %v2778
      %v2845 = vmax.f32 %v2717, %v2780
      %v2846 = vmax.f32 %v2718, %v2782
      %2847 = vrot.lane.b32.xlu0 %v1888, 32
      %v2848 = vpop.permute.xlu0 %2847
      %2849 = vrot.lane.b32.xlu0 %v1895, 32
      %v2850 = vpop.permute.xlu0 %2849
      %2851 = vrot.lane.b32.xlu0 %v1902, 32
      %v2852 = vpop.permute.xlu0 %2851
      %2853 = vrot.lane.b32.xlu0 %v1909, 32
      %v2854 = vpop.permute.xlu0 %2853
      %2855 = vrot.lane.b32.xlu0 %v1916, 32
      %v2856 = vpop.permute.xlu0 %2855
      %2857 = vrot.lane.b32.xlu0 %v1923, 32
      %v2858 = vpop.permute.xlu0 %2857
      %2859 = vrot.lane.b32.xlu0 %v1930, 32
      %v2860 = vpop.permute.xlu0 %2859
      %2861 = vrot.lane.b32.xlu0 %v1937, 32
      %v2862 = vpop.permute.xlu0 %2861
      %2863 = vrot.lane.b32.xlu0 %v1944, 32
      %v2864 = vpop.permute.xlu0 %2863
      %2865 = vrot.lane.b32.xlu0 %v1951, 32
      %v2866 = vpop.permute.xlu0 %2865
      %2867 = vrot.lane.b32.xlu0 %v1958, 32
      %v2868 = vpop.permute.xlu0 %2867
      %2869 = vrot.lane.b32.xlu0 %v1965, 32
      %v2870 = vpop.permute.xlu0 %2869
      %2871 = vrot.lane.b32.xlu0 %v1972, 32
      %v2872 = vpop.permute.xlu0 %2871
      %2873 = vrot.lane.b32.xlu0 %v1979, 32
      %v2874 = vpop.permute.xlu0 %2873
      %2875 = vrot.lane.b32.xlu0 %v1986, 32
      %v2876 = vpop.permute.xlu0 %2875
      %2877 = vrot.lane.b32.xlu0 %v1993, 32
      %v2878 = vpop.permute.xlu0 %2877
      %2879 = vrot.lane.b32.xlu0 %v2000, 32
      %v2880 = vpop.permute.xlu0 %2879
      %2881 = vrot.lane.b32.xlu0 %v2007, 32
      %v2882 = vpop.permute.xlu0 %2881
      %2883 = vrot.lane.b32.xlu0 %v2014, 32
      %v2884 = vpop.permute.xlu0 %2883
      %2885 = vrot.lane.b32.xlu0 %v2021, 32
      %v2886 = vpop.permute.xlu0 %2885
      %2887 = vrot.lane.b32.xlu0 %v2028, 32
      %v2888 = vpop.permute.xlu0 %2887
      %2889 = vrot.lane.b32.xlu0 %v2035, 32
      %v2890 = vpop.permute.xlu0 %2889
      %2891 = vrot.lane.b32.xlu0 %v2042, 32
      %v2892 = vpop.permute.xlu0 %2891
      %2893 = vrot.lane.b32.xlu0 %v2049, 32
      %v2894 = vpop.permute.xlu0 %2893
      %2895 = vrot.lane.b32.xlu0 %v2056, 32
      %v2896 = vpop.permute.xlu0 %2895
      %2897 = vrot.lane.b32.xlu0 %v2063, 32
      %v2898 = vpop.permute.xlu0 %2897
      %2899 = vrot.lane.b32.xlu0 %v2070, 32
      %v2900 = vpop.permute.xlu0 %2899
      %2901 = vrot.lane.b32.xlu0 %v2077, 32
      %v2902 = vpop.permute.xlu0 %2901
      %2903 = vrot.lane.b32.xlu0 %v2084, 32
      %v2904 = vpop.permute.xlu0 %2903
      %2905 = vrot.lane.b32.xlu0 %v2091, 32
      %v2906 = vpop.permute.xlu0 %2905
      %2907 = vrot.lane.b32.xlu0 %v2098, 32
      %v2908 = vpop.permute.xlu0 %2907
      %2909 = vrot.lane.b32.xlu0 %v2105, 32
      %v2910 = vpop.permute.xlu0 %2909
      %v2943 = vmax.f32 %v2815, %v2848
      %v2944 = vmax.f32 %v2816, %v2850
      %v2945 = vmax.f32 %v2817, %v2852
      %v2946 = vmax.f32 %v2818, %v2854
      %v2947 = vmax.f32 %v2819, %v2856
      %v2948 = vmax.f32 %v2820, %v2858
      %v2949 = vmax.f32 %v2821, %v2860
      %v2950 = vmax.f32 %v2822, %v2862
      %v2951 = vmax.f32 %v2823, %v2864
      %v2952 = vmax.f32 %v2824, %v2866
      %v2953 = vmax.f32 %v2825, %v2868
      %v2954 = vmax.f32 %v2826, %v2870
      %v2955 = vmax.f32 %v2827, %v2872
      %v2956 = vmax.f32 %v2828, %v2874
      %v2957 = vmax.f32 %v2829, %v2876
      %v2958 = vmax.f32 %v2830, %v2878
      %v2959 = vmax.f32 %v2831, %v2880
      %v2960 = vmax.f32 %v2832, %v2882
      %v2961 = vmax.f32 %v2833, %v2884
      %v2962 = vmax.f32 %v2834, %v2886
      %v2963 = vmax.f32 %v2835, %v2888
      %v2964 = vmax.f32 %v2836, %v2890
      %v2965 = vmax.f32 %v2837, %v2892
      %v2966 = vmax.f32 %v2838, %v2894
      %v2967 = vmax.f32 %v2839, %v2896
      %v2968 = vmax.f32 %v2840, %v2898
      %v2969 = vmax.f32 %v2841, %v2900
      %v2970 = vmax.f32 %v2842, %v2902
      %v2971 = vmax.f32 %v2843, %v2904
      %v2972 = vmax.f32 %v2844, %v2906
      %v2973 = vmax.f32 %v2845, %v2908
      %v2974 = vmax.f32 %v2846, %v2910
      %v2975 = vmax.f32 %v2943, %v1889
      %v2976 = vmax.f32 %v2944, %v1896
      %v2977 = vmax.f32 %v2945, %v1903
      %v2978 = vmax.f32 %v2946, %v1910
      %v2979 = vmax.f32 %v2947, %v1917
      %v2980 = vmax.f32 %v2948, %v1924
      %v2981 = vmax.f32 %v2949, %v1931
      %v2982 = vmax.f32 %v2950, %v1938
      %v2983 = vmax.f32 %v2951, %v1945
      %v2984 = vmax.f32 %v2952, %v1952
      %v2985 = vmax.f32 %v2953, %v1959
      %v2986 = vmax.f32 %v2954, %v1966
      %v2987 = vmax.f32 %v2955, %v1973
      %v2988 = vmax.f32 %v2956, %v1980
      %v2989 = vmax.f32 %v2957, %v1987
      %v2990 = vmax.f32 %v2958, %v1994
      %v2991 = vmax.f32 %v2959, %v2001
      %v2992 = vmax.f32 %v2960, %v2008
      %v2993 = vmax.f32 %v2961, %v2015
      %v2994 = vmax.f32 %v2962, %v2022
      %v2995 = vmax.f32 %v2963, %v2029
      %v2996 = vmax.f32 %v2964, %v2036
      %v2997 = vmax.f32 %v2965, %v2043
      %v2998 = vmax.f32 %v2966, %v2050
      %v2999 = vmax.f32 %v2967, %v2057
      %v3000 = vmax.f32 %v2968, %v2064
      %v3001 = vmax.f32 %v2969, %v2071
      %v3002 = vmax.f32 %v2970, %v2078
      %v3003 = vmax.f32 %v2971, %v2085
      %v3004 = vmax.f32 %v2972, %v2092
      %v3005 = vmax.f32 %v2973, %v2099
      %v3006 = vmax.f32 %v2974, %v2106
      %3039 = vrot.lane.b32.xlu0 %v1889, 96
      %v3040 = vpop.permute.xlu0 %3039
      %3041 = vrot.lane.b32.xlu0 %v1896, 96
      %v3042 = vpop.permute.xlu0 %3041
      %3043 = vrot.lane.b32.xlu0 %v1903, 96
      %v3044 = vpop.permute.xlu0 %3043
      %3045 = vrot.lane.b32.xlu0 %v1910, 96
      %v3046 = vpop.permute.xlu0 %3045
      %3047 = vrot.lane.b32.xlu0 %v1917, 96
      %v3048 = vpop.permute.xlu0 %3047
      %3049 = vrot.lane.b32.xlu0 %v1924, 96
      %v3050 = vpop.permute.xlu0 %3049
      %3051 = vrot.lane.b32.xlu0 %v1931, 96
      %v3052 = vpop.permute.xlu0 %3051
      %3053 = vrot.lane.b32.xlu0 %v1938, 96
      %v3054 = vpop.permute.xlu0 %3053
      %3055 = vrot.lane.b32.xlu0 %v1945, 96
      %v3056 = vpop.permute.xlu0 %3055
      %3057 = vrot.lane.b32.xlu0 %v1952, 96
      %v3058 = vpop.permute.xlu0 %3057
      %3059 = vrot.lane.b32.xlu0 %v1959, 96
      %v3060 = vpop.permute.xlu0 %3059
      %3061 = vrot.lane.b32.xlu0 %v1966, 96
      %v3062 = vpop.permute.xlu0 %3061
      %3063 = vrot.lane.b32.xlu0 %v1973, 96
      %v3064 = vpop.permute.xlu0 %3063
      %3065 = vrot.lane.b32.xlu0 %v1980, 96
      %v3066 = vpop.permute.xlu0 %3065
      %3067 = vrot.lane.b32.xlu0 %v1987, 96
      %v3068 = vpop.permute.xlu0 %3067
      %3069 = vrot.lane.b32.xlu0 %v1994, 96
      %v3070 = vpop.permute.xlu0 %3069
      %3071 = vrot.lane.b32.xlu0 %v2001, 96
      %v3072 = vpop.permute.xlu0 %3071
      %3073 = vrot.lane.b32.xlu0 %v2008, 96
      %v3074 = vpop.permute.xlu0 %3073
      %3075 = vrot.lane.b32.xlu0 %v2015, 96
      %v3076 = vpop.permute.xlu0 %3075
      %3077 = vrot.lane.b32.xlu0 %v2022, 96
      %v3078 = vpop.permute.xlu0 %3077
      %3079 = vrot.lane.b32.xlu0 %v2029, 96
      %v3080 = vpop.permute.xlu0 %3079
      %3081 = vrot.lane.b32.xlu0 %v2036, 96
      %v3082 = vpop.permute.xlu0 %3081
      %3083 = vrot.lane.b32.xlu0 %v2043, 96
      %v3084 = vpop.permute.xlu0 %3083
      %3085 = vrot.lane.b32.xlu0 %v2050, 96
      %v3086 = vpop.permute.xlu0 %3085
      %3087 = vrot.lane.b32.xlu0 %v2057, 96
      %v3088 = vpop.permute.xlu0 %3087
      %3089 = vrot.lane.b32.xlu0 %v2064, 96
      %v3090 = vpop.permute.xlu0 %3089
      %3091 = vrot.lane.b32.xlu0 %v2071, 96
      %v3092 = vpop.permute.xlu0 %3091
      %3093 = vrot.lane.b32.xlu0 %v2078, 96
      %v3094 = vpop.permute.xlu0 %3093
      %3095 = vrot.lane.b32.xlu0 %v2085, 96
      %v3096 = vpop.permute.xlu0 %3095
      %3097 = vrot.lane.b32.xlu0 %v2092, 96
      %v3098 = vpop.permute.xlu0 %3097
      %3099 = vrot.lane.b32.xlu0 %v2099, 96
      %v3100 = vpop.permute.xlu0 %3099
      %3101 = vrot.lane.b32.xlu0 %v2106, 96
      %v3102 = vpop.permute.xlu0 %3101
      %v3135 = vmax.f32 %v2975, %v3040
      %v3136 = vmax.f32 %v2976, %v3042
      %v3137 = vmax.f32 %v2977, %v3044
      %v3138 = vmax.f32 %v2978, %v3046
      %v3139 = vmax.f32 %v2979, %v3048
      %v3140 = vmax.f32 %v2980, %v3050
      %v3141 = vmax.f32 %v2981, %v3052
      %v3142 = vmax.f32 %v2982, %v3054
      %v3143 = vmax.f32 %v2983, %v3056
      %v3144 = vmax.f32 %v2984, %v3058
      %v3145 = vmax.f32 %v2985, %v3060
      %v3146 = vmax.f32 %v2986, %v3062
      %v3147 = vmax.f32 %v2987, %v3064
      %v3148 = vmax.f32 %v2988, %v3066
      %v3149 = vmax.f32 %v2989, %v3068
      %v3150 = vmax.f32 %v2990, %v3070
      %v3151 = vmax.f32 %v2991, %v3072
      %v3152 = vmax.f32 %v2992, %v3074
      %v3153 = vmax.f32 %v2993, %v3076
      %v3154 = vmax.f32 %v2994, %v3078
      %v3155 = vmax.f32 %v2995, %v3080
      %v3156 = vmax.f32 %v2996, %v3082
      %v3157 = vmax.f32 %v2997, %v3084
      %v3158 = vmax.f32 %v2998, %v3086
      %v3159 = vmax.f32 %v2999, %v3088
      %v3160 = vmax.f32 %v3000, %v3090
      %v3161 = vmax.f32 %v3001, %v3092
      %v3162 = vmax.f32 %v3002, %v3094
      %v3163 = vmax.f32 %v3003, %v3096
      %v3164 = vmax.f32 %v3004, %v3098
      %v3165 = vmax.f32 %v3005, %v3100
      %v3166 = vmax.f32 %v3006, %v3102
      %3167 = vrot.lane.b32.xlu0 %v1889, 64
      %v3168 = vpop.permute.xlu0 %3167
      %3169 = vrot.lane.b32.xlu0 %v1896, 64
      %v3170 = vpop.permute.xlu0 %3169
      %3171 = vrot.lane.b32.xlu0 %v1903, 64
      %v3172 = vpop.permute.xlu0 %3171
      %3173 = vrot.lane.b32.xlu0 %v1910, 64
      %v3174 = vpop.permute.xlu0 %3173
      %3175 = vrot.lane.b32.xlu0 %v1917, 64
      %v3176 = vpop.permute.xlu0 %3175
      %3177 = vrot.lane.b32.xlu0 %v1924, 64
      %v3178 = vpop.permute.xlu0 %3177
      %3179 = vrot.lane.b32.xlu0 %v1931, 64
      %v3180 = vpop.permute.xlu0 %3179
      %3181 = vrot.lane.b32.xlu0 %v1938, 64
      %v3182 = vpop.permute.xlu0 %3181
      %3183 = vrot.lane.b32.xlu0 %v1945, 64
      %v3184 = vpop.permute.xlu0 %3183
      %3185 = vrot.lane.b32.xlu0 %v1952, 64
      %v3186 = vpop.permute.xlu0 %3185
      %3187 = vrot.lane.b32.xlu0 %v1959, 64
      %v3188 = vpop.permute.xlu0 %3187
      %3189 = vrot.lane.b32.xlu0 %v1966, 64
      %v3190 = vpop.permute.xlu0 %3189
      %3191 = vrot.lane.b32.xlu0 %v1973, 64
      %v3192 = vpop.permute.xlu0 %3191
      %3193 = vrot.lane.b32.xlu0 %v1980, 64
      %v3194 = vpop.permute.xlu0 %3193
      %3195 = vrot.lane.b32.xlu0 %v1987, 64
      %v3196 = vpop.permute.xlu0 %3195
      %3197 = vrot.lane.b32.xlu0 %v1994, 64
      %v3198 = vpop.permute.xlu0 %3197
      %3199 = vrot.lane.b32.xlu0 %v2001, 64
      %v3200 = vpop.permute.xlu0 %3199
      %3201 = vrot.lane.b32.xlu0 %v2008, 64
      %v3202 = vpop.permute.xlu0 %3201
      %3203 = vrot.lane.b32.xlu0 %v2015, 64
      %v3204 = vpop.permute.xlu0 %3203
      %3205 = vrot.lane.b32.xlu0 %v2022, 64
      %v3206 = vpop.permute.xlu0 %3205
      %3207 = vrot.lane.b32.xlu0 %v2029, 64
      %v3208 = vpop.permute.xlu0 %3207
      %3209 = vrot.lane.b32.xlu0 %v2036, 64
      %v3210 = vpop.permute.xlu0 %3209
      %3211 = vrot.lane.b32.xlu0 %v2043, 64
      %v3212 = vpop.permute.xlu0 %3211
      %3213 = vrot.lane.b32.xlu0 %v2050, 64
      %v3214 = vpop.permute.xlu0 %3213
      %3215 = vrot.lane.b32.xlu0 %v2057, 64
      %v3216 = vpop.permute.xlu0 %3215
      %3217 = vrot.lane.b32.xlu0 %v2064, 64
      %v3218 = vpop.permute.xlu0 %3217
      %3219 = vrot.lane.b32.xlu0 %v2071, 64
      %v3220 = vpop.permute.xlu0 %3219
      %3221 = vrot.lane.b32.xlu0 %v2078, 64
      %v3222 = vpop.permute.xlu0 %3221
      %3223 = vrot.lane.b32.xlu0 %v2085, 64
      %v3224 = vpop.permute.xlu0 %3223
      %3225 = vrot.lane.b32.xlu0 %v2092, 64
      %v3226 = vpop.permute.xlu0 %3225
      %3227 = vrot.lane.b32.xlu0 %v2099, 64
      %v3228 = vpop.permute.xlu0 %3227
      %3229 = vrot.lane.b32.xlu0 %v2106, 64
      %v3230 = vpop.permute.xlu0 %3229
      %v3263 = vmax.f32 %v3135, %v3168
      %v3264 = vmax.f32 %v3136, %v3170
      %v3265 = vmax.f32 %v3137, %v3172
      %v3266 = vmax.f32 %v3138, %v3174
      %v3267 = vmax.f32 %v3139, %v3176
      %v3268 = vmax.f32 %v3140, %v3178
      %v3269 = vmax.f32 %v3141, %v3180
      %v3270 = vmax.f32 %v3142, %v3182
      %v3271 = vmax.f32 %v3143, %v3184
      %v3272 = vmax.f32 %v3144, %v3186
      %v3273 = vmax.f32 %v3145, %v3188
      %v3274 = vmax.f32 %v3146, %v3190
      %v3275 = vmax.f32 %v3147, %v3192
      %v3276 = vmax.f32 %v3148, %v3194
      %v3277 = vmax.f32 %v3149, %v3196
      %v3278 = vmax.f32 %v3150, %v3198
      %v3279 = vmax.f32 %v3151, %v3200
      %v3280 = vmax.f32 %v3152, %v3202
      %v3281 = vmax.f32 %v3153, %v3204
      %v3282 = vmax.f32 %v3154, %v3206
      %v3283 = vmax.f32 %v3155, %v3208
      %v3284 = vmax.f32 %v3156, %v3210
      %v3285 = vmax.f32 %v3157, %v3212
      %v3286 = vmax.f32 %v3158, %v3214
      %v3287 = vmax.f32 %v3159, %v3216
      %v3288 = vmax.f32 %v3160, %v3218
      %v3289 = vmax.f32 %v3161, %v3220
      %v3290 = vmax.f32 %v3162, %v3222
      %v3291 = vmax.f32 %v3163, %v3224
      %v3292 = vmax.f32 %v3164, %v3226
      %v3293 = vmax.f32 %v3165, %v3228
      %v3294 = vmax.f32 %v3166, %v3230
      %3295 = vrot.lane.b32.xlu0 %v1889, 32
      %v3296 = vpop.permute.xlu0 %3295
      %3297 = vrot.lane.b32.xlu0 %v1896, 32
      %v3298 = vpop.permute.xlu0 %3297
      %3299 = vrot.lane.b32.xlu0 %v1903, 32
      %v3300 = vpop.permute.xlu0 %3299
      %3301 = vrot.lane.b32.xlu0 %v1910, 32
      %v3302 = vpop.permute.xlu0 %3301
      %3303 = vrot.lane.b32.xlu0 %v1917, 32
      %v3304 = vpop.permute.xlu0 %3303
      %3305 = vrot.lane.b32.xlu0 %v1924, 32
      %v3306 = vpop.permute.xlu0 %3305
      %3307 = vrot.lane.b32.xlu0 %v1931, 32
      %v3308 = vpop.permute.xlu0 %3307
      %3309 = vrot.lane.b32.xlu0 %v1938, 32
      %v3310 = vpop.permute.xlu0 %3309
      %3311 = vrot.lane.b32.xlu0 %v1945, 32
      %v3312 = vpop.permute.xlu0 %3311
      %3313 = vrot.lane.b32.xlu0 %v1952, 32
      %v3314 = vpop.permute.xlu0 %3313
      %3315 = vrot.lane.b32.xlu0 %v1959, 32
      %v3316 = vpop.permute.xlu0 %3315
      %3317 = vrot.lane.b32.xlu0 %v1966, 32
      %v3318 = vpop.permute.xlu0 %3317
      %3319 = vrot.lane.b32.xlu0 %v1973, 32
      %v3320 = vpop.permute.xlu0 %3319
      %3321 = vrot.lane.b32.xlu0 %v1980, 32
      %v3322 = vpop.permute.xlu0 %3321
      %3323 = vrot.lane.b32.xlu0 %v1987, 32
      %v3324 = vpop.permute.xlu0 %3323
      %3325 = vrot.lane.b32.xlu0 %v1994, 32
      %v3326 = vpop.permute.xlu0 %3325
      %3327 = vrot.lane.b32.xlu0 %v2001, 32
      %v3328 = vpop.permute.xlu0 %3327
      %3329 = vrot.lane.b32.xlu0 %v2008, 32
      %v3330 = vpop.permute.xlu0 %3329
      %3331 = vrot.lane.b32.xlu0 %v2015, 32
      %v3332 = vpop.permute.xlu0 %3331
      %3333 = vrot.lane.b32.xlu0 %v2022, 32
      %v3334 = vpop.permute.xlu0 %3333
      %3335 = vrot.lane.b32.xlu0 %v2029, 32
      %v3336 = vpop.permute.xlu0 %3335
      %3337 = vrot.lane.b32.xlu0 %v2036, 32
      %v3338 = vpop.permute.xlu0 %3337
      %3339 = vrot.lane.b32.xlu0 %v2043, 32
      %v3340 = vpop.permute.xlu0 %3339
      %3341 = vrot.lane.b32.xlu0 %v2050, 32
      %v3342 = vpop.permute.xlu0 %3341
      %3343 = vrot.lane.b32.xlu0 %v2057, 32
      %v3344 = vpop.permute.xlu0 %3343
      %3345 = vrot.lane.b32.xlu0 %v2064, 32
      %v3346 = vpop.permute.xlu0 %3345
      %3347 = vrot.lane.b32.xlu0 %v2071, 32
      %v3348 = vpop.permute.xlu0 %3347
      %3349 = vrot.lane.b32.xlu0 %v2078, 32
      %v3350 = vpop.permute.xlu0 %3349
      %3351 = vrot.lane.b32.xlu0 %v2085, 32
      %v3352 = vpop.permute.xlu0 %3351
      %3353 = vrot.lane.b32.xlu0 %v2092, 32
      %v3354 = vpop.permute.xlu0 %3353
      %3355 = vrot.lane.b32.xlu0 %v2099, 32
      %v3356 = vpop.permute.xlu0 %3355
      %3357 = vrot.lane.b32.xlu0 %v2106, 32
      %v3358 = vpop.permute.xlu0 %3357
      %v3391 = vmax.f32 %v3263, %v3296
      %v3392 = vmax.f32 %v3264, %v3298
      %v3393 = vmax.f32 %v3265, %v3300
      %v3394 = vmax.f32 %v3266, %v3302
      %v3395 = vmax.f32 %v3267, %v3304
      %v3396 = vmax.f32 %v3268, %v3306
      %v3397 = vmax.f32 %v3269, %v3308
      %v3398 = vmax.f32 %v3270, %v3310
      %v3399 = vmax.f32 %v3271, %v3312
      %v3400 = vmax.f32 %v3272, %v3314
      %v3401 = vmax.f32 %v3273, %v3316
      %v3402 = vmax.f32 %v3274, %v3318
      %v3403 = vmax.f32 %v3275, %v3320
      %v3404 = vmax.f32 %v3276, %v3322
      %v3405 = vmax.f32 %v3277, %v3324
      %v3406 = vmax.f32 %v3278, %v3326
      %v3407 = vmax.f32 %v3279, %v3328
      %v3408 = vmax.f32 %v3280, %v3330
      %v3409 = vmax.f32 %v3281, %v3332
      %v3410 = vmax.f32 %v3282, %v3334
      %v3411 = vmax.f32 %v3283, %v3336
      %v3412 = vmax.f32 %v3284, %v3338
      %v3413 = vmax.f32 %v3285, %v3340
      %v3414 = vmax.f32 %v3286, %v3342
      %v3415 = vmax.f32 %v3287, %v3344
      %v3416 = vmax.f32 %v3288, %v3346
      %v3417 = vmax.f32 %v3289, %v3348
      %v3418 = vmax.f32 %v3290, %v3350
      %v3419 = vmax.f32 %v3291, %v3352
      %v3420 = vmax.f32 %v3292, %v3354
      %v3421 = vmax.f32 %v3293, %v3356
      %v3422 = vmax.f32 %v3294, %v3358
      %v3423 = vmax.f32 %v3391, %v1890
      %v3424 = vmax.f32 %v3392, %v1897
      %v3425 = vmax.f32 %v3393, %v1904
      %v3426 = vmax.f32 %v3394, %v1911
      %v3427 = vmax.f32 %v3395, %v1918
      %v3428 = vmax.f32 %v3396, %v1925
      %v3429 = vmax.f32 %v3397, %v1932
      %v3430 = vmax.f32 %v3398, %v1939
      %v3431 = vmax.f32 %v3399, %v1946
      %v3432 = vmax.f32 %v3400, %v1953
      %v3433 = vmax.f32 %v3401, %v1960
      %v3434 = vmax.f32 %v3402, %v1967
      %v3435 = vmax.f32 %v3403, %v1974
      %v3436 = vmax.f32 %v3404, %v1981
      %v3437 = vmax.f32 %v3405, %v1988
      %v3438 = vmax.f32 %v3406, %v1995
      %v3439 = vmax.f32 %v3407, %v2002
      %v3440 = vmax.f32 %v3408, %v2009
      %v3441 = vmax.f32 %v3409, %v2016
      %v3442 = vmax.f32 %v3410, %v2023
      %v3443 = vmax.f32 %v3411, %v2030
      %v3444 = vmax.f32 %v3412, %v2037
      %v3445 = vmax.f32 %v3413, %v2044
      %v3446 = vmax.f32 %v3414, %v2051
      %v3447 = vmax.f32 %v3415, %v2058
      %v3448 = vmax.f32 %v3416, %v2065
      %v3449 = vmax.f32 %v3417, %v2072
      %v3450 = vmax.f32 %v3418, %v2079
      %v3451 = vmax.f32 %v3419, %v2086
      %v3452 = vmax.f32 %v3420, %v2093
      %v3453 = vmax.f32 %v3421, %v2100
      %v3454 = vmax.f32 %v3422, %v2107
      %3487 = vrot.lane.b32.xlu0 %v1890, 96
      %v3488 = vpop.permute.xlu0 %3487
      %3489 = vrot.lane.b32.xlu0 %v1897, 96
      %v3490 = vpop.permute.xlu0 %3489
      %3491 = vrot.lane.b32.xlu0 %v1904, 96
      %v3492 = vpop.permute.xlu0 %3491
      %3493 = vrot.lane.b32.xlu0 %v1911, 96
      %v3494 = vpop.permute.xlu0 %3493
      %3495 = vrot.lane.b32.xlu0 %v1918, 96
      %v3496 = vpop.permute.xlu0 %3495
      %3497 = vrot.lane.b32.xlu0 %v1925, 96
      %v3498 = vpop.permute.xlu0 %3497
      %3499 = vrot.lane.b32.xlu0 %v1932, 96
      %v3500 = vpop.permute.xlu0 %3499
      %3501 = vrot.lane.b32.xlu0 %v1939, 96
      %v3502 = vpop.permute.xlu0 %3501
      %3503 = vrot.lane.b32.xlu0 %v1946, 96
      %v3504 = vpop.permute.xlu0 %3503
      %3505 = vrot.lane.b32.xlu0 %v1953, 96
      %v3506 = vpop.permute.xlu0 %3505
      %3507 = vrot.lane.b32.xlu0 %v1960, 96
      %v3508 = vpop.permute.xlu0 %3507
      %3509 = vrot.lane.b32.xlu0 %v1967, 96
      %v3510 = vpop.permute.xlu0 %3509
      %3511 = vrot.lane.b32.xlu0 %v1974, 96
      %v3512 = vpop.permute.xlu0 %3511
      %3513 = vrot.lane.b32.xlu0 %v1981, 96
      %v3514 = vpop.permute.xlu0 %3513
      %3515 = vrot.lane.b32.xlu0 %v1988, 96
      %v3516 = vpop.permute.xlu0 %3515
      %3517 = vrot.lane.b32.xlu0 %v1995, 96
      %v3518 = vpop.permute.xlu0 %3517
      %3519 = vrot.lane.b32.xlu0 %v2002, 96
      %v3520 = vpop.permute.xlu0 %3519
      %3521 = vrot.lane.b32.xlu0 %v2009, 96
      %v3522 = vpop.permute.xlu0 %3521
      %3523 = vrot.lane.b32.xlu0 %v2016, 96
      %v3524 = vpop.permute.xlu0 %3523
      %3525 = vrot.lane.b32.xlu0 %v2023, 96
      %v3526 = vpop.permute.xlu0 %3525
      %3527 = vrot.lane.b32.xlu0 %v2030, 96
      %v3528 = vpop.permute.xlu0 %3527
      %3529 = vrot.lane.b32.xlu0 %v2037, 96
      %v3530 = vpop.permute.xlu0 %3529
      %3531 = vrot.lane.b32.xlu0 %v2044, 96
      %v3532 = vpop.permute.xlu0 %3531
      %3533 = vrot.lane.b32.xlu0 %v2051, 96
      %v3534 = vpop.permute.xlu0 %3533
      %3535 = vrot.lane.b32.xlu0 %v2058, 96
      %v3536 = vpop.permute.xlu0 %3535
      %3537 = vrot.lane.b32.xlu0 %v2065, 96
      %v3538 = vpop.permute.xlu0 %3537
      %3539 = vrot.lane.b32.xlu0 %v2072, 96
      %v3540 = vpop.permute.xlu0 %3539
      %3541 = vrot.lane.b32.xlu0 %v2079, 96
      %v3542 = vpop.permute.xlu0 %3541
      %3543 = vrot.lane.b32.xlu0 %v2086, 96
      %v3544 = vpop.permute.xlu0 %3543
      %3545 = vrot.lane.b32.xlu0 %v2093, 96
      %v3546 = vpop.permute.xlu0 %3545
      %3547 = vrot.lane.b32.xlu0 %v2100, 96
      %v3548 = vpop.permute.xlu0 %3547
      %3549 = vrot.lane.b32.xlu0 %v2107, 96
      %v3550 = vpop.permute.xlu0 %3549
      %v3583 = vmax.f32 %v3423, %v3488
      %v3584 = vmax.f32 %v3424, %v3490
      %v3585 = vmax.f32 %v3425, %v3492
      %v3586 = vmax.f32 %v3426, %v3494
      %v3587 = vmax.f32 %v3427, %v3496
      %v3588 = vmax.f32 %v3428, %v3498
      %v3589 = vmax.f32 %v3429, %v3500
      %v3590 = vmax.f32 %v3430, %v3502
      %v3591 = vmax.f32 %v3431, %v3504
      %v3592 = vmax.f32 %v3432, %v3506
      %v3593 = vmax.f32 %v3433, %v3508
      %v3594 = vmax.f32 %v3434, %v3510
      %v3595 = vmax.f32 %v3435, %v3512
      %v3596 = vmax.f32 %v3436, %v3514
      %v3597 = vmax.f32 %v3437, %v3516
      %v3598 = vmax.f32 %v3438, %v3518
      %v3599 = vmax.f32 %v3439, %v3520
      %v3600 = vmax.f32 %v3440, %v3522
      %v3601 = vmax.f32 %v3441, %v3524
      %v3602 = vmax.f32 %v3442, %v3526
      %v3603 = vmax.f32 %v3443, %v3528
      %v3604 = vmax.f32 %v3444, %v3530
      %v3605 = vmax.f32 %v3445, %v3532
      %v3606 = vmax.f32 %v3446, %v3534
      %v3607 = vmax.f32 %v3447, %v3536
      %v3608 = vmax.f32 %v3448, %v3538
      %v3609 = vmax.f32 %v3449, %v3540
      %v3610 = vmax.f32 %v3450, %v3542
      %v3611 = vmax.f32 %v3451, %v3544
      %v3612 = vmax.f32 %v3452, %v3546
      %v3613 = vmax.f32 %v3453, %v3548
      %v3614 = vmax.f32 %v3454, %v3550
      %3615 = vrot.lane.b32.xlu0 %v1890, 64
      %v3616 = vpop.permute.xlu0 %3615
      %3617 = vrot.lane.b32.xlu0 %v1897, 64
      %v3618 = vpop.permute.xlu0 %3617
      %3619 = vrot.lane.b32.xlu0 %v1904, 64
      %v3620 = vpop.permute.xlu0 %3619
      %3621 = vrot.lane.b32.xlu0 %v1911, 64
      %v3622 = vpop.permute.xlu0 %3621
      %3623 = vrot.lane.b32.xlu0 %v1918, 64
      %v3624 = vpop.permute.xlu0 %3623
      %3625 = vrot.lane.b32.xlu0 %v1925, 64
      %v3626 = vpop.permute.xlu0 %3625
      %3627 = vrot.lane.b32.xlu0 %v1932, 64
      %v3628 = vpop.permute.xlu0 %3627
      %3629 = vrot.lane.b32.xlu0 %v1939, 64
      %v3630 = vpop.permute.xlu0 %3629
      %3631 = vrot.lane.b32.xlu0 %v1946, 64
      %v3632 = vpop.permute.xlu0 %3631
      %3633 = vrot.lane.b32.xlu0 %v1953, 64
      %v3634 = vpop.permute.xlu0 %3633
      %3635 = vrot.lane.b32.xlu0 %v1960, 64
      %v3636 = vpop.permute.xlu0 %3635
      %3637 = vrot.lane.b32.xlu0 %v1967, 64
      %v3638 = vpop.permute.xlu0 %3637
      %3639 = vrot.lane.b32.xlu0 %v1974, 64
      %v3640 = vpop.permute.xlu0 %3639
      %3641 = vrot.lane.b32.xlu0 %v1981, 64
      %v3642 = vpop.permute.xlu0 %3641
      %3643 = vrot.lane.b32.xlu0 %v1988, 64
      %v3644 = vpop.permute.xlu0 %3643
      %3645 = vrot.lane.b32.xlu0 %v1995, 64
      %v3646 = vpop.permute.xlu0 %3645
      %3647 = vrot.lane.b32.xlu0 %v2002, 64
      %v3648 = vpop.permute.xlu0 %3647
      %3649 = vrot.lane.b32.xlu0 %v2009, 64
      %v3650 = vpop.permute.xlu0 %3649
      %3651 = vrot.lane.b32.xlu0 %v2016, 64
      %v3652 = vpop.permute.xlu0 %3651
      %3653 = vrot.lane.b32.xlu0 %v2023, 64
      %v3654 = vpop.permute.xlu0 %3653
      %3655 = vrot.lane.b32.xlu0 %v2030, 64
      %v3656 = vpop.permute.xlu0 %3655
      %3657 = vrot.lane.b32.xlu0 %v2037, 64
      %v3658 = vpop.permute.xlu0 %3657
      %3659 = vrot.lane.b32.xlu0 %v2044, 64
      %v3660 = vpop.permute.xlu0 %3659
      %3661 = vrot.lane.b32.xlu0 %v2051, 64
      %v3662 = vpop.permute.xlu0 %3661
      %3663 = vrot.lane.b32.xlu0 %v2058, 64
      %v3664 = vpop.permute.xlu0 %3663
      %3665 = vrot.lane.b32.xlu0 %v2065, 64
      %v3666 = vpop.permute.xlu0 %3665
      %3667 = vrot.lane.b32.xlu0 %v2072, 64
      %v3668 = vpop.permute.xlu0 %3667
      %3669 = vrot.lane.b32.xlu0 %v2079, 64
      %v3670 = vpop.permute.xlu0 %3669
      %3671 = vrot.lane.b32.xlu0 %v2086, 64
      %v3672 = vpop.permute.xlu0 %3671
      %3673 = vrot.lane.b32.xlu0 %v2093, 64
      %v3674 = vpop.permute.xlu0 %3673
      %3675 = vrot.lane.b32.xlu0 %v2100, 64
      %v3676 = vpop.permute.xlu0 %3675
      %3677 = vrot.lane.b32.xlu0 %v2107, 64
      %v3678 = vpop.permute.xlu0 %3677
      %v3711 = vmax.f32 %v3583, %v3616
      %v3712 = vmax.f32 %v3584, %v3618
      %v3713 = vmax.f32 %v3585, %v3620
      %v3714 = vmax.f32 %v3586, %v3622
      %v3715 = vmax.f32 %v3587, %v3624
      %v3716 = vmax.f32 %v3588, %v3626
      %v3717 = vmax.f32 %v3589, %v3628
      %v3718 = vmax.f32 %v3590, %v3630
      %v3719 = vmax.f32 %v3591, %v3632
      %v3720 = vmax.f32 %v3592, %v3634
      %v3721 = vmax.f32 %v3593, %v3636
      %v3722 = vmax.f32 %v3594, %v3638
      %v3723 = vmax.f32 %v3595, %v3640
      %v3724 = vmax.f32 %v3596, %v3642
      %v3725 = vmax.f32 %v3597, %v3644
      %v3726 = vmax.f32 %v3598, %v3646
      %v3727 = vmax.f32 %v3599, %v3648
      %v3728 = vmax.f32 %v3600, %v3650
      %v3729 = vmax.f32 %v3601, %v3652
      %v3730 = vmax.f32 %v3602, %v3654
      %v3731 = vmax.f32 %v3603, %v3656
      %v3732 = vmax.f32 %v3604, %v3658
      %v3733 = vmax.f32 %v3605, %v3660
      %v3734 = vmax.f32 %v3606, %v3662
      %v3735 = vmax.f32 %v3607, %v3664
      %v3736 = vmax.f32 %v3608, %v3666
      %v3737 = vmax.f32 %v3609, %v3668
      %v3738 = vmax.f32 %v3610, %v3670
      %v3739 = vmax.f32 %v3611, %v3672
      %v3740 = vmax.f32 %v3612, %v3674
      %v3741 = vmax.f32 %v3613, %v3676
      %v3742 = vmax.f32 %v3614, %v3678
      %3743 = vrot.lane.b32.xlu0 %v1890, 32
      %v3744 = vpop.permute.xlu0 %3743
      %3745 = vrot.lane.b32.xlu0 %v1897, 32
      %v3746 = vpop.permute.xlu0 %3745
      %3747 = vrot.lane.b32.xlu0 %v1904, 32
      %v3748 = vpop.permute.xlu0 %3747
      %3749 = vrot.lane.b32.xlu0 %v1911, 32
      %v3750 = vpop.permute.xlu0 %3749
      %3751 = vrot.lane.b32.xlu0 %v1918, 32
      %v3752 = vpop.permute.xlu0 %3751
      %3753 = vrot.lane.b32.xlu0 %v1925, 32
      %v3754 = vpop.permute.xlu0 %3753
      %3755 = vrot.lane.b32.xlu0 %v1932, 32
      %v3756 = vpop.permute.xlu0 %3755
      %3757 = vrot.lane.b32.xlu0 %v1939, 32
      %v3758 = vpop.permute.xlu0 %3757
      %3759 = vrot.lane.b32.xlu0 %v1946, 32
      %v3760 = vpop.permute.xlu0 %3759
      %3761 = vrot.lane.b32.xlu0 %v1953, 32
      %v3762 = vpop.permute.xlu0 %3761
      %3763 = vrot.lane.b32.xlu0 %v1960, 32
      %v3764 = vpop.permute.xlu0 %3763
      %3765 = vrot.lane.b32.xlu0 %v1967, 32
      %v3766 = vpop.permute.xlu0 %3765
      %3767 = vrot.lane.b32.xlu0 %v1974, 32
      %v3768 = vpop.permute.xlu0 %3767
      %3769 = vrot.lane.b32.xlu0 %v1981, 32
      %v3770 = vpop.permute.xlu0 %3769
      %3771 = vrot.lane.b32.xlu0 %v1988, 32
      %v3772 = vpop.permute.xlu0 %3771
      %3773 = vrot.lane.b32.xlu0 %v1995, 32
      %v3774 = vpop.permute.xlu0 %3773
      %3775 = vrot.lane.b32.xlu0 %v2002, 32
      %v3776 = vpop.permute.xlu0 %3775
      %3777 = vrot.lane.b32.xlu0 %v2009, 32
      %v3778 = vpop.permute.xlu0 %3777
      %3779 = vrot.lane.b32.xlu0 %v2016, 32
      %v3780 = vpop.permute.xlu0 %3779
      %3781 = vrot.lane.b32.xlu0 %v2023, 32
      %v3782 = vpop.permute.xlu0 %3781
      %3783 = vrot.lane.b32.xlu0 %v2030, 32
      %v3784 = vpop.permute.xlu0 %3783
      %3785 = vrot.lane.b32.xlu0 %v2037, 32
      %v3786 = vpop.permute.xlu0 %3785
      %3787 = vrot.lane.b32.xlu0 %v2044, 32
      %v3788 = vpop.permute.xlu0 %3787
      %3789 = vrot.lane.b32.xlu0 %v2051, 32
      %v3790 = vpop.permute.xlu0 %3789
      %3791 = vrot.lane.b32.xlu0 %v2058, 32
      %v3792 = vpop.permute.xlu0 %3791
      %3793 = vrot.lane.b32.xlu0 %v2065, 32
      %v3794 = vpop.permute.xlu0 %3793
      %3795 = vrot.lane.b32.xlu0 %v2072, 32
      %v3796 = vpop.permute.xlu0 %3795
      %3797 = vrot.lane.b32.xlu0 %v2079, 32
      %v3798 = vpop.permute.xlu0 %3797
      %3799 = vrot.lane.b32.xlu0 %v2086, 32
      %v3800 = vpop.permute.xlu0 %3799
      %3801 = vrot.lane.b32.xlu0 %v2093, 32
      %v3802 = vpop.permute.xlu0 %3801
      %3803 = vrot.lane.b32.xlu0 %v2100, 32
      %v3804 = vpop.permute.xlu0 %3803
      %3805 = vrot.lane.b32.xlu0 %v2107, 32
      %v3806 = vpop.permute.xlu0 %3805
      %v3839 = vmax.f32 %v3711, %v3744
      %v3840 = vmax.f32 %v3712, %v3746
      %v3841 = vmax.f32 %v3713, %v3748
      %v3842 = vmax.f32 %v3714, %v3750
      %v3843 = vmax.f32 %v3715, %v3752
      %v3844 = vmax.f32 %v3716, %v3754
      %v3845 = vmax.f32 %v3717, %v3756
      %v3846 = vmax.f32 %v3718, %v3758
      %v3847 = vmax.f32 %v3719, %v3760
      %v3848 = vmax.f32 %v3720, %v3762
      %v3849 = vmax.f32 %v3721, %v3764
      %v3850 = vmax.f32 %v3722, %v3766
      %v3851 = vmax.f32 %v3723, %v3768
      %v3852 = vmax.f32 %v3724, %v3770
      %v3853 = vmax.f32 %v3725, %v3772
      %v3854 = vmax.f32 %v3726, %v3774
      %v3855 = vmax.f32 %v3727, %v3776
      %v3856 = vmax.f32 %v3728, %v3778
      %v3857 = vmax.f32 %v3729, %v3780
      %v3858 = vmax.f32 %v3730, %v3782
      %v3859 = vmax.f32 %v3731, %v3784
      %v3860 = vmax.f32 %v3732, %v3786
      %v3861 = vmax.f32 %v3733, %v3788
      %v3862 = vmax.f32 %v3734, %v3790
      %v3863 = vmax.f32 %v3735, %v3792
      %v3864 = vmax.f32 %v3736, %v3794
      %v3865 = vmax.f32 %v3737, %v3796
      %v3866 = vmax.f32 %v3738, %v3798
      %v3867 = vmax.f32 %v3739, %v3800
      %v3868 = vmax.f32 %v3740, %v3802
      %v3869 = vmax.f32 %v3741, %v3804
      %v3870 = vmax.f32 %v3742, %v3806
      %v3871 = vmax.f32 %v3839, %v1891
      %v3872 = vmax.f32 %v3840, %v1898
      %v3873 = vmax.f32 %v3841, %v1905
      %v3874 = vmax.f32 %v3842, %v1912
      %v3875 = vmax.f32 %v3843, %v1919
      %v3876 = vmax.f32 %v3844, %v1926
      %v3877 = vmax.f32 %v3845, %v1933
      %v3878 = vmax.f32 %v3846, %v1940
      %v3879 = vmax.f32 %v3847, %v1947
      %v3880 = vmax.f32 %v3848, %v1954
      %v3881 = vmax.f32 %v3849, %v1961
      %v3882 = vmax.f32 %v3850, %v1968
      %v3883 = vmax.f32 %v3851, %v1975
      %v3884 = vmax.f32 %v3852, %v1982
      %v3885 = vmax.f32 %v3853, %v1989
      %v3886 = vmax.f32 %v3854, %v1996
      %v3887 = vmax.f32 %v3855, %v2003
      %v3888 = vmax.f32 %v3856, %v2010
      %v3889 = vmax.f32 %v3857, %v2017
      %v3890 = vmax.f32 %v3858, %v2024
      %v3891 = vmax.f32 %v3859, %v2031
      %v3892 = vmax.f32 %v3860, %v2038
      %v3893 = vmax.f32 %v3861, %v2045
      %v3894 = vmax.f32 %v3862, %v2052
      %v3895 = vmax.f32 %v3863, %v2059
      %v3896 = vmax.f32 %v3864, %v2066
      %v3897 = vmax.f32 %v3865, %v2073
      %v3898 = vmax.f32 %v3866, %v2080
      %v3899 = vmax.f32 %v3867, %v2087
      %v3900 = vmax.f32 %v3868, %v2094
      %v3901 = vmax.f32 %v3869, %v2101
      %v3902 = vmax.f32 %v3870, %v2108
      %3935 = vrot.lane.b32.xlu0 %v1891, 96
      %v3936 = vpop.permute.xlu0 %3935
      %3937 = vrot.lane.b32.xlu0 %v1898, 96
      %v3938 = vpop.permute.xlu0 %3937
      %3939 = vrot.lane.b32.xlu0 %v1905, 96
      %v3940 = vpop.permute.xlu0 %3939
      %3941 = vrot.lane.b32.xlu0 %v1912, 96
      %v3942 = vpop.permute.xlu0 %3941
      %3943 = vrot.lane.b32.xlu0 %v1919, 96
      %v3944 = vpop.permute.xlu0 %3943
      %3945 = vrot.lane.b32.xlu0 %v1926, 96
      %v3946 = vpop.permute.xlu0 %3945
      %3947 = vrot.lane.b32.xlu0 %v1933, 96
      %v3948 = vpop.permute.xlu0 %3947
      %3949 = vrot.lane.b32.xlu0 %v1940, 96
      %v3950 = vpop.permute.xlu0 %3949
      %3951 = vrot.lane.b32.xlu0 %v1947, 96
      %v3952 = vpop.permute.xlu0 %3951
      %3953 = vrot.lane.b32.xlu0 %v1954, 96
      %v3954 = vpop.permute.xlu0 %3953
      %3955 = vrot.lane.b32.xlu0 %v1961, 96
      %v3956 = vpop.permute.xlu0 %3955
      %3957 = vrot.lane.b32.xlu0 %v1968, 96
      %v3958 = vpop.permute.xlu0 %3957
      %3959 = vrot.lane.b32.xlu0 %v1975, 96
      %v3960 = vpop.permute.xlu0 %3959
      %3961 = vrot.lane.b32.xlu0 %v1982, 96
      %v3962 = vpop.permute.xlu0 %3961
      %3963 = vrot.lane.b32.xlu0 %v1989, 96
      %v3964 = vpop.permute.xlu0 %3963
      %3965 = vrot.lane.b32.xlu0 %v1996, 96
      %v3966 = vpop.permute.xlu0 %3965
      %3967 = vrot.lane.b32.xlu0 %v2003, 96
      %v3968 = vpop.permute.xlu0 %3967
      %3969 = vrot.lane.b32.xlu0 %v2010, 96
      %v3970 = vpop.permute.xlu0 %3969
      %3971 = vrot.lane.b32.xlu0 %v2017, 96
      %v3972 = vpop.permute.xlu0 %3971
      %3973 = vrot.lane.b32.xlu0 %v2024, 96
      %v3974 = vpop.permute.xlu0 %3973
      %3975 = vrot.lane.b32.xlu0 %v2031, 96
      %v3976 = vpop.permute.xlu0 %3975
      %3977 = vrot.lane.b32.xlu0 %v2038, 96
      %v3978 = vpop.permute.xlu0 %3977
      %3979 = vrot.lane.b32.xlu0 %v2045, 96
      %v3980 = vpop.permute.xlu0 %3979
      %3981 = vrot.lane.b32.xlu0 %v2052, 96
      %v3982 = vpop.permute.xlu0 %3981
      %3983 = vrot.lane.b32.xlu0 %v2059, 96
      %v3984 = vpop.permute.xlu0 %3983
      %3985 = vrot.lane.b32.xlu0 %v2066, 96
      %v3986 = vpop.permute.xlu0 %3985
      %3987 = vrot.lane.b32.xlu0 %v2073, 96
      %v3988 = vpop.permute.xlu0 %3987
      %3989 = vrot.lane.b32.xlu0 %v2080, 96
      %v3990 = vpop.permute.xlu0 %3989
      %3991 = vrot.lane.b32.xlu0 %v2087, 96
      %v3992 = vpop.permute.xlu0 %3991
      %3993 = vrot.lane.b32.xlu0 %v2094, 96
      %v3994 = vpop.permute.xlu0 %3993
      %3995 = vrot.lane.b32.xlu0 %v2101, 96
      %v3996 = vpop.permute.xlu0 %3995
      %3997 = vrot.lane.b32.xlu0 %v2108, 96
      %v3998 = vpop.permute.xlu0 %3997
      %v4031 = vmax.f32 %v3871, %v3936
      %v4032 = vmax.f32 %v3872, %v3938
      %v4033 = vmax.f32 %v3873, %v3940
      %v4034 = vmax.f32 %v3874, %v3942
      %v4035 = vmax.f32 %v3875, %v3944
      %v4036 = vmax.f32 %v3876, %v3946
      %v4037 = vmax.f32 %v3877, %v3948
      %v4038 = vmax.f32 %v3878, %v3950
      %v4039 = vmax.f32 %v3879, %v3952
      %v4040 = vmax.f32 %v3880, %v3954
      %v4041 = vmax.f32 %v3881, %v3956
      %v4042 = vmax.f32 %v3882, %v3958
      %v4043 = vmax.f32 %v3883, %v3960
      %v4044 = vmax.f32 %v3884, %v3962
      %v4045 = vmax.f32 %v3885, %v3964
      %v4046 = vmax.f32 %v3886, %v3966
      %v4047 = vmax.f32 %v3887, %v3968
      %v4048 = vmax.f32 %v3888, %v3970
      %v4049 = vmax.f32 %v3889, %v3972
      %v4050 = vmax.f32 %v3890, %v3974
      %v4051 = vmax.f32 %v3891, %v3976
      %v4052 = vmax.f32 %v3892, %v3978
      %v4053 = vmax.f32 %v3893, %v3980
      %v4054 = vmax.f32 %v3894, %v3982
      %v4055 = vmax.f32 %v3895, %v3984
      %v4056 = vmax.f32 %v3896, %v3986
      %v4057 = vmax.f32 %v3897, %v3988
      %v4058 = vmax.f32 %v3898, %v3990
      %v4059 = vmax.f32 %v3899, %v3992
      %v4060 = vmax.f32 %v3900, %v3994
      %v4061 = vmax.f32 %v3901, %v3996
      %v4062 = vmax.f32 %v3902, %v3998
      %4063 = vrot.lane.b32.xlu0 %v1891, 64
      %v4064 = vpop.permute.xlu0 %4063
      %4065 = vrot.lane.b32.xlu0 %v1898, 64
      %v4066 = vpop.permute.xlu0 %4065
      %4067 = vrot.lane.b32.xlu0 %v1905, 64
      %v4068 = vpop.permute.xlu0 %4067
      %4069 = vrot.lane.b32.xlu0 %v1912, 64
      %v4070 = vpop.permute.xlu0 %4069
      %4071 = vrot.lane.b32.xlu0 %v1919, 64
      %v4072 = vpop.permute.xlu0 %4071
      %4073 = vrot.lane.b32.xlu0 %v1926, 64
      %v4074 = vpop.permute.xlu0 %4073
      %4075 = vrot.lane.b32.xlu0 %v1933, 64
      %v4076 = vpop.permute.xlu0 %4075
      %4077 = vrot.lane.b32.xlu0 %v1940, 64
      %v4078 = vpop.permute.xlu0 %4077
      %4079 = vrot.lane.b32.xlu0 %v1947, 64
      %v4080 = vpop.permute.xlu0 %4079
      %4081 = vrot.lane.b32.xlu0 %v1954, 64
      %v4082 = vpop.permute.xlu0 %4081
      %4083 = vrot.lane.b32.xlu0 %v1961, 64
      %v4084 = vpop.permute.xlu0 %4083
      %4085 = vrot.lane.b32.xlu0 %v1968, 64
      %v4086 = vpop.permute.xlu0 %4085
      %4087 = vrot.lane.b32.xlu0 %v1975, 64
      %v4088 = vpop.permute.xlu0 %4087
      %4089 = vrot.lane.b32.xlu0 %v1982, 64
      %v4090 = vpop.permute.xlu0 %4089
      %4091 = vrot.lane.b32.xlu0 %v1989, 64
      %v4092 = vpop.permute.xlu0 %4091
      %4093 = vrot.lane.b32.xlu0 %v1996, 64
      %v4094 = vpop.permute.xlu0 %4093
      %4095 = vrot.lane.b32.xlu0 %v2003, 64
      %v4096 = vpop.permute.xlu0 %4095
      %4097 = vrot.lane.b32.xlu0 %v2010, 64
      %v4098 = vpop.permute.xlu0 %4097
      %4099 = vrot.lane.b32.xlu0 %v2017, 64
      %v4100 = vpop.permute.xlu0 %4099
      %4101 = vrot.lane.b32.xlu0 %v2024, 64
      %v4102 = vpop.permute.xlu0 %4101
      %4103 = vrot.lane.b32.xlu0 %v2031, 64
      %v4104 = vpop.permute.xlu0 %4103
      %4105 = vrot.lane.b32.xlu0 %v2038, 64
      %v4106 = vpop.permute.xlu0 %4105
      %4107 = vrot.lane.b32.xlu0 %v2045, 64
      %v4108 = vpop.permute.xlu0 %4107
      %4109 = vrot.lane.b32.xlu0 %v2052, 64
      %v4110 = vpop.permute.xlu0 %4109
      %4111 = vrot.lane.b32.xlu0 %v2059, 64
      %v4112 = vpop.permute.xlu0 %4111
      %4113 = vrot.lane.b32.xlu0 %v2066, 64
      %v4114 = vpop.permute.xlu0 %4113
      %4115 = vrot.lane.b32.xlu0 %v2073, 64
      %v4116 = vpop.permute.xlu0 %4115
      %4117 = vrot.lane.b32.xlu0 %v2080, 64
      %v4118 = vpop.permute.xlu0 %4117
      %4119 = vrot.lane.b32.xlu0 %v2087, 64
      %v4120 = vpop.permute.xlu0 %4119
      %4121 = vrot.lane.b32.xlu0 %v2094, 64
      %v4122 = vpop.permute.xlu0 %4121
      %4123 = vrot.lane.b32.xlu0 %v2101, 64
      %v4124 = vpop.permute.xlu0 %4123
      %4125 = vrot.lane.b32.xlu0 %v2108, 64
      %v4126 = vpop.permute.xlu0 %4125
      %v4159 = vmax.f32 %v4031, %v4064
      %v4160 = vmax.f32 %v4032, %v4066
      %v4161 = vmax.f32 %v4033, %v4068
      %v4162 = vmax.f32 %v4034, %v4070
      %v4163 = vmax.f32 %v4035, %v4072
      %v4164 = vmax.f32 %v4036, %v4074
      %v4165 = vmax.f32 %v4037, %v4076
      %v4166 = vmax.f32 %v4038, %v4078
      %v4167 = vmax.f32 %v4039, %v4080
      %v4168 = vmax.f32 %v4040, %v4082
      %v4169 = vmax.f32 %v4041, %v4084
      %v4170 = vmax.f32 %v4042, %v4086
      %v4171 = vmax.f32 %v4043, %v4088
      %v4172 = vmax.f32 %v4044, %v4090
      %v4173 = vmax.f32 %v4045, %v4092
      %v4174 = vmax.f32 %v4046, %v4094
      %v4175 = vmax.f32 %v4047, %v4096
      %v4176 = vmax.f32 %v4048, %v4098
      %v4177 = vmax.f32 %v4049, %v4100
      %v4178 = vmax.f32 %v4050, %v4102
      %v4179 = vmax.f32 %v4051, %v4104
      %v4180 = vmax.f32 %v4052, %v4106
      %v4181 = vmax.f32 %v4053, %v4108
      %v4182 = vmax.f32 %v4054, %v4110
      %v4183 = vmax.f32 %v4055, %v4112
      %v4184 = vmax.f32 %v4056, %v4114
      %v4185 = vmax.f32 %v4057, %v4116
      %v4186 = vmax.f32 %v4058, %v4118
      %v4187 = vmax.f32 %v4059, %v4120
      %v4188 = vmax.f32 %v4060, %v4122
      %v4189 = vmax.f32 %v4061, %v4124
      %v4190 = vmax.f32 %v4062, %v4126
      %4191 = vrot.lane.b32.xlu0 %v1891, 32
      %v4192 = vpop.permute.xlu0 %4191
      %4193 = vrot.lane.b32.xlu0 %v1898, 32
      %v4194 = vpop.permute.xlu0 %4193
      %4195 = vrot.lane.b32.xlu0 %v1905, 32
      %v4196 = vpop.permute.xlu0 %4195
      %4197 = vrot.lane.b32.xlu0 %v1912, 32
      %v4198 = vpop.permute.xlu0 %4197
      %4199 = vrot.lane.b32.xlu0 %v1919, 32
      %v4200 = vpop.permute.xlu0 %4199
      %4201 = vrot.lane.b32.xlu0 %v1926, 32
      %v4202 = vpop.permute.xlu0 %4201
      %4203 = vrot.lane.b32.xlu0 %v1933, 32
      %v4204 = vpop.permute.xlu0 %4203
      %4205 = vrot.lane.b32.xlu0 %v1940, 32
      %v4206 = vpop.permute.xlu0 %4205
      %4207 = vrot.lane.b32.xlu0 %v1947, 32
      %v4208 = vpop.permute.xlu0 %4207
      %4209 = vrot.lane.b32.xlu0 %v1954, 32
      %v4210 = vpop.permute.xlu0 %4209
      %4211 = vrot.lane.b32.xlu0 %v1961, 32
      %v4212 = vpop.permute.xlu0 %4211
      %4213 = vrot.lane.b32.xlu0 %v1968, 32
      %v4214 = vpop.permute.xlu0 %4213
      %4215 = vrot.lane.b32.xlu0 %v1975, 32
      %v4216 = vpop.permute.xlu0 %4215
      %4217 = vrot.lane.b32.xlu0 %v1982, 32
      %v4218 = vpop.permute.xlu0 %4217
      %4219 = vrot.lane.b32.xlu0 %v1989, 32
      %v4220 = vpop.permute.xlu0 %4219
      %4221 = vrot.lane.b32.xlu0 %v1996, 32
      %v4222 = vpop.permute.xlu0 %4221
      %4223 = vrot.lane.b32.xlu0 %v2003, 32
      %v4224 = vpop.permute.xlu0 %4223
      %4225 = vrot.lane.b32.xlu0 %v2010, 32
      %v4226 = vpop.permute.xlu0 %4225
      %4227 = vrot.lane.b32.xlu0 %v2017, 32
      %v4228 = vpop.permute.xlu0 %4227
      %4229 = vrot.lane.b32.xlu0 %v2024, 32
      %v4230 = vpop.permute.xlu0 %4229
      %4231 = vrot.lane.b32.xlu0 %v2031, 32
      %v4232 = vpop.permute.xlu0 %4231
      %4233 = vrot.lane.b32.xlu0 %v2038, 32
      %v4234 = vpop.permute.xlu0 %4233
      %4235 = vrot.lane.b32.xlu0 %v2045, 32
      %v4236 = vpop.permute.xlu0 %4235
      %4237 = vrot.lane.b32.xlu0 %v2052, 32
      %v4238 = vpop.permute.xlu0 %4237
      %4239 = vrot.lane.b32.xlu0 %v2059, 32
      %v4240 = vpop.permute.xlu0 %4239
      %4241 = vrot.lane.b32.xlu0 %v2066, 32
      %v4242 = vpop.permute.xlu0 %4241
      %4243 = vrot.lane.b32.xlu0 %v2073, 32
      %v4244 = vpop.permute.xlu0 %4243
      %4245 = vrot.lane.b32.xlu0 %v2080, 32
      %v4246 = vpop.permute.xlu0 %4245
      %4247 = vrot.lane.b32.xlu0 %v2087, 32
      %v4248 = vpop.permute.xlu0 %4247
      %4249 = vrot.lane.b32.xlu0 %v2094, 32
      %v4250 = vpop.permute.xlu0 %4249
      %4251 = vrot.lane.b32.xlu0 %v2101, 32
      %v4252 = vpop.permute.xlu0 %4251
      %4253 = vrot.lane.b32.xlu0 %v2108, 32
      %v4254 = vpop.permute.xlu0 %4253
      %v4287 = vmax.f32 %v4159, %v4192
      %v4288 = vmax.f32 %v4160, %v4194
      %v4289 = vmax.f32 %v4161, %v4196
      %v4290 = vmax.f32 %v4162, %v4198
      %v4291 = vmax.f32 %v4163, %v4200
      %v4292 = vmax.f32 %v4164, %v4202
      %v4293 = vmax.f32 %v4165, %v4204
      %v4294 = vmax.f32 %v4166, %v4206
      %v4295 = vmax.f32 %v4167, %v4208
      %v4296 = vmax.f32 %v4168, %v4210
      %v4297 = vmax.f32 %v4169, %v4212
      %v4298 = vmax.f32 %v4170, %v4214
      %v4299 = vmax.f32 %v4171, %v4216
      %v4300 = vmax.f32 %v4172, %v4218
      %v4301 = vmax.f32 %v4173, %v4220
      %v4302 = vmax.f32 %v4174, %v4222
      %v4303 = vmax.f32 %v4175, %v4224
      %v4304 = vmax.f32 %v4176, %v4226
      %v4305 = vmax.f32 %v4177, %v4228
      %v4306 = vmax.f32 %v4178, %v4230
      %v4307 = vmax.f32 %v4179, %v4232
      %v4308 = vmax.f32 %v4180, %v4234
      %v4309 = vmax.f32 %v4181, %v4236
      %v4310 = vmax.f32 %v4182, %v4238
      %v4311 = vmax.f32 %v4183, %v4240
      %v4312 = vmax.f32 %v4184, %v4242
      %v4313 = vmax.f32 %v4185, %v4244
      %v4314 = vmax.f32 %v4186, %v4246
      %v4315 = vmax.f32 %v4187, %v4248
      %v4316 = vmax.f32 %v4188, %v4250
      %v4317 = vmax.f32 %v4189, %v4252
      %v4318 = vmax.f32 %v4190, %v4254
      %v4319 = vmax.f32 %v4287, %v1892
      %v4320 = vmax.f32 %v4288, %v1899
      %v4321 = vmax.f32 %v4289, %v1906
      %v4322 = vmax.f32 %v4290, %v1913
      %v4323 = vmax.f32 %v4291, %v1920
      %v4324 = vmax.f32 %v4292, %v1927
      %v4325 = vmax.f32 %v4293, %v1934
      %v4326 = vmax.f32 %v4294, %v1941
      %v4327 = vmax.f32 %v4295, %v1948
      %v4328 = vmax.f32 %v4296, %v1955
      %v4329 = vmax.f32 %v4297, %v1962
      %v4330 = vmax.f32 %v4298, %v1969
      %v4331 = vmax.f32 %v4299, %v1976
      %v4332 = vmax.f32 %v4300, %v1983
      %v4333 = vmax.f32 %v4301, %v1990
      %v4334 = vmax.f32 %v4302, %v1997
      %v4335 = vmax.f32 %v4303, %v2004
      %v4336 = vmax.f32 %v4304, %v2011
      %v4337 = vmax.f32 %v4305, %v2018
      %v4338 = vmax.f32 %v4306, %v2025
      %v4339 = vmax.f32 %v4307, %v2032
      %v4340 = vmax.f32 %v4308, %v2039
      %v4341 = vmax.f32 %v4309, %v2046
      %v4342 = vmax.f32 %v4310, %v2053
      %v4343 = vmax.f32 %v4311, %v2060
      %v4344 = vmax.f32 %v4312, %v2067
      %v4345 = vmax.f32 %v4313, %v2074
      %v4346 = vmax.f32 %v4314, %v2081
      %v4347 = vmax.f32 %v4315, %v2088
      %v4348 = vmax.f32 %v4316, %v2095
      %v4349 = vmax.f32 %v4317, %v2102
      %v4350 = vmax.f32 %v4318, %v2109
      %4383 = vrot.lane.b32.xlu0 %v1892, 96
      %v4384 = vpop.permute.xlu0 %4383
      %4385 = vrot.lane.b32.xlu0 %v1899, 96
      %v4386 = vpop.permute.xlu0 %4385
      %4387 = vrot.lane.b32.xlu0 %v1906, 96
      %v4388 = vpop.permute.xlu0 %4387
      %4389 = vrot.lane.b32.xlu0 %v1913, 96
      %v4390 = vpop.permute.xlu0 %4389
      %4391 = vrot.lane.b32.xlu0 %v1920, 96
      %v4392 = vpop.permute.xlu0 %4391
      %4393 = vrot.lane.b32.xlu0 %v1927, 96
      %v4394 = vpop.permute.xlu0 %4393
      %4395 = vrot.lane.b32.xlu0 %v1934, 96
      %v4396 = vpop.permute.xlu0 %4395
      %4397 = vrot.lane.b32.xlu0 %v1941, 96
      %v4398 = vpop.permute.xlu0 %4397
      %4399 = vrot.lane.b32.xlu0 %v1948, 96
      %v4400 = vpop.permute.xlu0 %4399
      %4401 = vrot.lane.b32.xlu0 %v1955, 96
      %v4402 = vpop.permute.xlu0 %4401
      %4403 = vrot.lane.b32.xlu0 %v1962, 96
      %v4404 = vpop.permute.xlu0 %4403
      %4405 = vrot.lane.b32.xlu0 %v1969, 96
      %v4406 = vpop.permute.xlu0 %4405
      %4407 = vrot.lane.b32.xlu0 %v1976, 96
      %v4408 = vpop.permute.xlu0 %4407
      %4409 = vrot.lane.b32.xlu0 %v1983, 96
      %v4410 = vpop.permute.xlu0 %4409
      %4411 = vrot.lane.b32.xlu0 %v1990, 96
      %v4412 = vpop.permute.xlu0 %4411
      %4413 = vrot.lane.b32.xlu0 %v1997, 96
      %v4414 = vpop.permute.xlu0 %4413
      %4415 = vrot.lane.b32.xlu0 %v2004, 96
      %v4416 = vpop.permute.xlu0 %4415
      %4417 = vrot.lane.b32.xlu0 %v2011, 96
      %v4418 = vpop.permute.xlu0 %4417
      %4419 = vrot.lane.b32.xlu0 %v2018, 96
      %v4420 = vpop.permute.xlu0 %4419
      %4421 = vrot.lane.b32.xlu0 %v2025, 96
      %v4422 = vpop.permute.xlu0 %4421
      %4423 = vrot.lane.b32.xlu0 %v2032, 96
      %v4424 = vpop.permute.xlu0 %4423
      %4425 = vrot.lane.b32.xlu0 %v2039, 96
      %v4426 = vpop.permute.xlu0 %4425
      %4427 = vrot.lane.b32.xlu0 %v2046, 96
      %v4428 = vpop.permute.xlu0 %4427
      %4429 = vrot.lane.b32.xlu0 %v2053, 96
      %v4430 = vpop.permute.xlu0 %4429
      %4431 = vrot.lane.b32.xlu0 %v2060, 96
      %v4432 = vpop.permute.xlu0 %4431
      %4433 = vrot.lane.b32.xlu0 %v2067, 96
      %v4434 = vpop.permute.xlu0 %4433
      %4435 = vrot.lane.b32.xlu0 %v2074, 96
      %v4436 = vpop.permute.xlu0 %4435
      %4437 = vrot.lane.b32.xlu0 %v2081, 96
      %v4438 = vpop.permute.xlu0 %4437
      %4439 = vrot.lane.b32.xlu0 %v2088, 96
      %v4440 = vpop.permute.xlu0 %4439
      %4441 = vrot.lane.b32.xlu0 %v2095, 96
      %v4442 = vpop.permute.xlu0 %4441
      %4443 = vrot.lane.b32.xlu0 %v2102, 96
      %v4444 = vpop.permute.xlu0 %4443
      %4445 = vrot.lane.b32.xlu0 %v2109, 96
      %v4446 = vpop.permute.xlu0 %4445
      %v4479 = vmax.f32 %v4319, %v4384
      %v4480 = vmax.f32 %v4320, %v4386
      %v4481 = vmax.f32 %v4321, %v4388
      %v4482 = vmax.f32 %v4322, %v4390
      %v4483 = vmax.f32 %v4323, %v4392
      %v4484 = vmax.f32 %v4324, %v4394
      %v4485 = vmax.f32 %v4325, %v4396
      %v4486 = vmax.f32 %v4326, %v4398
      %v4487 = vmax.f32 %v4327, %v4400
      %v4488 = vmax.f32 %v4328, %v4402
      %v4489 = vmax.f32 %v4329, %v4404
      %v4490 = vmax.f32 %v4330, %v4406
      %v4491 = vmax.f32 %v4331, %v4408
      %v4492 = vmax.f32 %v4332, %v4410
      %v4493 = vmax.f32 %v4333, %v4412
      %v4494 = vmax.f32 %v4334, %v4414
      %v4495 = vmax.f32 %v4335, %v4416
      %v4496 = vmax.f32 %v4336, %v4418
      %v4497 = vmax.f32 %v4337, %v4420
      %v4498 = vmax.f32 %v4338, %v4422
      %v4499 = vmax.f32 %v4339, %v4424
      %v4500 = vmax.f32 %v4340, %v4426
      %v4501 = vmax.f32 %v4341, %v4428
      %v4502 = vmax.f32 %v4342, %v4430
      %v4503 = vmax.f32 %v4343, %v4432
      %v4504 = vmax.f32 %v4344, %v4434
      %v4505 = vmax.f32 %v4345, %v4436
      %v4506 = vmax.f32 %v4346, %v4438
      %v4507 = vmax.f32 %v4347, %v4440
      %v4508 = vmax.f32 %v4348, %v4442
      %v4509 = vmax.f32 %v4349, %v4444
      %v4510 = vmax.f32 %v4350, %v4446
      %4511 = vrot.lane.b32.xlu0 %v1892, 64
      %v4512 = vpop.permute.xlu0 %4511
      %4513 = vrot.lane.b32.xlu0 %v1899, 64
      %v4514 = vpop.permute.xlu0 %4513
      %4515 = vrot.lane.b32.xlu0 %v1906, 64
      %v4516 = vpop.permute.xlu0 %4515
      %4517 = vrot.lane.b32.xlu0 %v1913, 64
      %v4518 = vpop.permute.xlu0 %4517
      %4519 = vrot.lane.b32.xlu0 %v1920, 64
      %v4520 = vpop.permute.xlu0 %4519
      %4521 = vrot.lane.b32.xlu0 %v1927, 64
      %v4522 = vpop.permute.xlu0 %4521
      %4523 = vrot.lane.b32.xlu0 %v1934, 64
      %v4524 = vpop.permute.xlu0 %4523
      %4525 = vrot.lane.b32.xlu0 %v1941, 64
      %v4526 = vpop.permute.xlu0 %4525
      %4527 = vrot.lane.b32.xlu0 %v1948, 64
      %v4528 = vpop.permute.xlu0 %4527
      %4529 = vrot.lane.b32.xlu0 %v1955, 64
      %v4530 = vpop.permute.xlu0 %4529
      %4531 = vrot.lane.b32.xlu0 %v1962, 64
      %v4532 = vpop.permute.xlu0 %4531
      %4533 = vrot.lane.b32.xlu0 %v1969, 64
      %v4534 = vpop.permute.xlu0 %4533
      %4535 = vrot.lane.b32.xlu0 %v1976, 64
      %v4536 = vpop.permute.xlu0 %4535
      %4537 = vrot.lane.b32.xlu0 %v1983, 64
      %v4538 = vpop.permute.xlu0 %4537
      %4539 = vrot.lane.b32.xlu0 %v1990, 64
      %v4540 = vpop.permute.xlu0 %4539
      %4541 = vrot.lane.b32.xlu0 %v1997, 64
      %v4542 = vpop.permute.xlu0 %4541
      %4543 = vrot.lane.b32.xlu0 %v2004, 64
      %v4544 = vpop.permute.xlu0 %4543
      %4545 = vrot.lane.b32.xlu0 %v2011, 64
      %v4546 = vpop.permute.xlu0 %4545
      %4547 = vrot.lane.b32.xlu0 %v2018, 64
      %v4548 = vpop.permute.xlu0 %4547
      %4549 = vrot.lane.b32.xlu0 %v2025, 64
      %v4550 = vpop.permute.xlu0 %4549
      %4551 = vrot.lane.b32.xlu0 %v2032, 64
      %v4552 = vpop.permute.xlu0 %4551
      %4553 = vrot.lane.b32.xlu0 %v2039, 64
      %v4554 = vpop.permute.xlu0 %4553
      %4555 = vrot.lane.b32.xlu0 %v2046, 64
      %v4556 = vpop.permute.xlu0 %4555
      %4557 = vrot.lane.b32.xlu0 %v2053, 64
      %v4558 = vpop.permute.xlu0 %4557
      %4559 = vrot.lane.b32.xlu0 %v2060, 64
      %v4560 = vpop.permute.xlu0 %4559
      %4561 = vrot.lane.b32.xlu0 %v2067, 64
      %v4562 = vpop.permute.xlu0 %4561
      %4563 = vrot.lane.b32.xlu0 %v2074, 64
      %v4564 = vpop.permute.xlu0 %4563
      %4565 = vrot.lane.b32.xlu0 %v2081, 64
      %v4566 = vpop.permute.xlu0 %4565
      %4567 = vrot.lane.b32.xlu0 %v2088, 64
      %v4568 = vpop.permute.xlu0 %4567
      %4569 = vrot.lane.b32.xlu0 %v2095, 64
      %v4570 = vpop.permute.xlu0 %4569
      %4571 = vrot.lane.b32.xlu0 %v2102, 64
      %v4572 = vpop.permute.xlu0 %4571
      %4573 = vrot.lane.b32.xlu0 %v2109, 64
      %v4574 = vpop.permute.xlu0 %4573
      %v4607 = vmax.f32 %v4479, %v4512
      %v4608 = vmax.f32 %v4480, %v4514
      %v4609 = vmax.f32 %v4481, %v4516
      %v4610 = vmax.f32 %v4482, %v4518
      %v4611 = vmax.f32 %v4483, %v4520
      %v4612 = vmax.f32 %v4484, %v4522
      %v4613 = vmax.f32 %v4485, %v4524
      %v4614 = vmax.f32 %v4486, %v4526
      %v4615 = vmax.f32 %v4487, %v4528
      %v4616 = vmax.f32 %v4488, %v4530
      %v4617 = vmax.f32 %v4489, %v4532
      %v4618 = vmax.f32 %v4490, %v4534
      %v4619 = vmax.f32 %v4491, %v4536
      %v4620 = vmax.f32 %v4492, %v4538
      %v4621 = vmax.f32 %v4493, %v4540
      %v4622 = vmax.f32 %v4494, %v4542
      %v4623 = vmax.f32 %v4495, %v4544
      %v4624 = vmax.f32 %v4496, %v4546
      %v4625 = vmax.f32 %v4497, %v4548
      %v4626 = vmax.f32 %v4498, %v4550
      %v4627 = vmax.f32 %v4499, %v4552
      %v4628 = vmax.f32 %v4500, %v4554
      %v4629 = vmax.f32 %v4501, %v4556
      %v4630 = vmax.f32 %v4502, %v4558
      %v4631 = vmax.f32 %v4503, %v4560
      %v4632 = vmax.f32 %v4504, %v4562
      %v4633 = vmax.f32 %v4505, %v4564
      %v4634 = vmax.f32 %v4506, %v4566
      %v4635 = vmax.f32 %v4507, %v4568
      %v4636 = vmax.f32 %v4508, %v4570
      %v4637 = vmax.f32 %v4509, %v4572
      %v4638 = vmax.f32 %v4510, %v4574
      %4639 = vrot.lane.b32.xlu0 %v1892, 32
      %v4640 = vpop.permute.xlu0 %4639
      %4641 = vrot.lane.b32.xlu0 %v1899, 32
      %v4642 = vpop.permute.xlu0 %4641
      %4643 = vrot.lane.b32.xlu0 %v1906, 32
      %v4644 = vpop.permute.xlu0 %4643
      %4645 = vrot.lane.b32.xlu0 %v1913, 32
      %v4646 = vpop.permute.xlu0 %4645
      %4647 = vrot.lane.b32.xlu0 %v1920, 32
      %v4648 = vpop.permute.xlu0 %4647
      %4649 = vrot.lane.b32.xlu0 %v1927, 32
      %v4650 = vpop.permute.xlu0 %4649
      %4651 = vrot.lane.b32.xlu0 %v1934, 32
      %v4652 = vpop.permute.xlu0 %4651
      %4653 = vrot.lane.b32.xlu0 %v1941, 32
      %v4654 = vpop.permute.xlu0 %4653
      %4655 = vrot.lane.b32.xlu0 %v1948, 32
      %v4656 = vpop.permute.xlu0 %4655
      %4657 = vrot.lane.b32.xlu0 %v1955, 32
      %v4658 = vpop.permute.xlu0 %4657
      %4659 = vrot.lane.b32.xlu0 %v1962, 32
      %v4660 = vpop.permute.xlu0 %4659
      %4661 = vrot.lane.b32.xlu0 %v1969, 32
      %v4662 = vpop.permute.xlu0 %4661
      %4663 = vrot.lane.b32.xlu0 %v1976, 32
      %v4664 = vpop.permute.xlu0 %4663
      %4665 = vrot.lane.b32.xlu0 %v1983, 32
      %v4666 = vpop.permute.xlu0 %4665
      %4667 = vrot.lane.b32.xlu0 %v1990, 32
      %v4668 = vpop.permute.xlu0 %4667
      %4669 = vrot.lane.b32.xlu0 %v1997, 32
      %v4670 = vpop.permute.xlu0 %4669
      %4671 = vrot.lane.b32.xlu0 %v2004, 32
      %v4672 = vpop.permute.xlu0 %4671
      %4673 = vrot.lane.b32.xlu0 %v2011, 32
      %v4674 = vpop.permute.xlu0 %4673
      %4675 = vrot.lane.b32.xlu0 %v2018, 32
      %v4676 = vpop.permute.xlu0 %4675
      %4677 = vrot.lane.b32.xlu0 %v2025, 32
      %v4678 = vpop.permute.xlu0 %4677
      %4679 = vrot.lane.b32.xlu0 %v2032, 32
      %v4680 = vpop.permute.xlu0 %4679
      %4681 = vrot.lane.b32.xlu0 %v2039, 32
      %v4682 = vpop.permute.xlu0 %4681
      %4683 = vrot.lane.b32.xlu0 %v2046, 32
      %v4684 = vpop.permute.xlu0 %4683
      %4685 = vrot.lane.b32.xlu0 %v2053, 32
      %v4686 = vpop.permute.xlu0 %4685
      %4687 = vrot.lane.b32.xlu0 %v2060, 32
      %v4688 = vpop.permute.xlu0 %4687
      %4689 = vrot.lane.b32.xlu0 %v2067, 32
      %v4690 = vpop.permute.xlu0 %4689
      %4691 = vrot.lane.b32.xlu0 %v2074, 32
      %v4692 = vpop.permute.xlu0 %4691
      %4693 = vrot.lane.b32.xlu0 %v2081, 32
      %v4694 = vpop.permute.xlu0 %4693
      %4695 = vrot.lane.b32.xlu0 %v2088, 32
      %v4696 = vpop.permute.xlu0 %4695
      %4697 = vrot.lane.b32.xlu0 %v2095, 32
      %v4698 = vpop.permute.xlu0 %4697
      %4699 = vrot.lane.b32.xlu0 %v2102, 32
      %v4700 = vpop.permute.xlu0 %4699
      %4701 = vrot.lane.b32.xlu0 %v2109, 32
      %v4702 = vpop.permute.xlu0 %4701
      %v4735 = vmax.f32 %v4607, %v4640
      %v4736 = vmax.f32 %v4608, %v4642
      %v4737 = vmax.f32 %v4609, %v4644
      %v4738 = vmax.f32 %v4610, %v4646
      %v4739 = vmax.f32 %v4611, %v4648
      %v4740 = vmax.f32 %v4612, %v4650
      %v4741 = vmax.f32 %v4613, %v4652
      %v4742 = vmax.f32 %v4614, %v4654
      %v4743 = vmax.f32 %v4615, %v4656
      %v4744 = vmax.f32 %v4616, %v4658
      %v4745 = vmax.f32 %v4617, %v4660
      %v4746 = vmax.f32 %v4618, %v4662
      %v4747 = vmax.f32 %v4619, %v4664
      %v4748 = vmax.f32 %v4620, %v4666
      %v4749 = vmax.f32 %v4621, %v4668
      %v4750 = vmax.f32 %v4622, %v4670
      %v4751 = vmax.f32 %v4623, %v4672
      %v4752 = vmax.f32 %v4624, %v4674
      %v4753 = vmax.f32 %v4625, %v4676
      %v4754 = vmax.f32 %v4626, %v4678
      %v4755 = vmax.f32 %v4627, %v4680
      %v4756 = vmax.f32 %v4628, %v4682
      %v4757 = vmax.f32 %v4629, %v4684
      %v4758 = vmax.f32 %v4630, %v4686
      %v4759 = vmax.f32 %v4631, %v4688
      %v4760 = vmax.f32 %v4632, %v4690
      %v4761 = vmax.f32 %v4633, %v4692
      %v4762 = vmax.f32 %v4634, %v4694
      %v4763 = vmax.f32 %v4635, %v4696
      %v4764 = vmax.f32 %v4636, %v4698
      %v4765 = vmax.f32 %v4637, %v4700
      %v4766 = vmax.f32 %v4638, %v4702
      %v4767 = vmax.f32 %v4735, %v1893
      %v4768 = vmax.f32 %v4736, %v1900
      %v4769 = vmax.f32 %v4737, %v1907
      %v4770 = vmax.f32 %v4738, %v1914
      %v4771 = vmax.f32 %v4739, %v1921
      %v4772 = vmax.f32 %v4740, %v1928
      %v4773 = vmax.f32 %v4741, %v1935
      %v4774 = vmax.f32 %v4742, %v1942
      %v4775 = vmax.f32 %v4743, %v1949
      %v4776 = vmax.f32 %v4744, %v1956
      %v4777 = vmax.f32 %v4745, %v1963
      %v4778 = vmax.f32 %v4746, %v1970
      %v4779 = vmax.f32 %v4747, %v1977
      %v4780 = vmax.f32 %v4748, %v1984
      %v4781 = vmax.f32 %v4749, %v1991
      %v4782 = vmax.f32 %v4750, %v1998
      %v4783 = vmax.f32 %v4751, %v2005
      %v4784 = vmax.f32 %v4752, %v2012
      %v4785 = vmax.f32 %v4753, %v2019
      %v4786 = vmax.f32 %v4754, %v2026
      %v4787 = vmax.f32 %v4755, %v2033
      %v4788 = vmax.f32 %v4756, %v2040
      %v4789 = vmax.f32 %v4757, %v2047
      %v4790 = vmax.f32 %v4758, %v2054
      %v4791 = vmax.f32 %v4759, %v2061
      %v4792 = vmax.f32 %v4760, %v2068
      %v4793 = vmax.f32 %v4761, %v2075
      %v4794 = vmax.f32 %v4762, %v2082
      %v4795 = vmax.f32 %v4763, %v2089
      %v4796 = vmax.f32 %v4764, %v2096
      %v4797 = vmax.f32 %v4765, %v2103
      %v4798 = vmax.f32 %v4766, %v2110
      %v4799 = vpack.c.bf16 %v4768, %v4767
      %v4800 = vpack.c.bf16 %v4770, %v4769
      %v4801 = vpack.c.bf16 %v4772, %v4771
      %v4802 = vpack.c.bf16 %v4774, %v4773
      %v4803 = vpack.c.bf16 %v4776, %v4775
      %v4804 = vpack.c.bf16 %v4778, %v4777
      %v4805 = vpack.c.bf16 %v4780, %v4779
      %v4806 = vpack.c.bf16 %v4782, %v4781
      %v4807 = vpack.c.bf16 %v4784, %v4783
      %v4808 = vpack.c.bf16 %v4786, %v4785
      %v4809 = vpack.c.bf16 %v4788, %v4787
      %v4810 = vpack.c.bf16 %v4790, %v4789
      %v4811 = vpack.c.bf16 %v4792, %v4791
      %v4812 = vpack.c.bf16 %v4794, %v4793
      %v4813 = vpack.c.bf16 %v4796, %v4795
      %v4814 = vpack.c.bf16 %v4798, %v4797
      %v4831 = vunpack.c.l.b16 %v4799
      %v4832 = vunpack.c.h.b16 %v4799
      %v4833 = vunpack.c.l.b16 %v4800
      %v4834 = vunpack.c.h.b16 %v4800
      %v4835 = vunpack.c.l.b16 %v4801
      %v4836 = vunpack.c.h.b16 %v4801
      %v4837 = vunpack.c.l.b16 %v4802
      %v4838 = vunpack.c.h.b16 %v4802
      %v4839 = vunpack.c.l.b16 %v4803
      %v4840 = vunpack.c.h.b16 %v4803
      %v4841 = vunpack.c.l.b16 %v4804
      %v4842 = vunpack.c.h.b16 %v4804
      %v4843 = vunpack.c.l.b16 %v4805
      %v4844 = vunpack.c.h.b16 %v4805
      %v4845 = vunpack.c.l.b16 %v4806
      %v4846 = vunpack.c.h.b16 %v4806
      %v4847 = vunpack.c.l.b16 %v4807
      %v4848 = vunpack.c.h.b16 %v4807
      %v4849 = vunpack.c.l.b16 %v4808
      %v4850 = vunpack.c.h.b16 %v4808
      %v4851 = vunpack.c.l.b16 %v4809
      %v4852 = vunpack.c.h.b16 %v4809
      %v4853 = vunpack.c.l.b16 %v4810
      %v4854 = vunpack.c.h.b16 %v4810
      %v4855 = vunpack.c.l.b16 %v4811
      %v4856 = vunpack.c.h.b16 %v4811
      %v4857 = vunpack.c.l.b16 %v4812
      %v4858 = vunpack.c.h.b16 %v4812
      %v4859 = vunpack.c.l.b16 %v4813
      %v4860 = vunpack.c.h.b16 %v4813
      %v4861 = vunpack.c.l.b16 %v4814
      %v4862 = vunpack.c.h.b16 %v4814
      %v4863 = vpack.c.b16 %v4831, %v4831
      %v4864 = vpack.c.b16 %v4832, %v4832
      %v4865 = vpack.c.b16 %v4833, %v4833
      %v4866 = vpack.c.b16 %v4834, %v4834
      %v4867 = vpack.c.b16 %v4835, %v4835
      %v4868 = vpack.c.b16 %v4836, %v4836
      %v4869 = vpack.c.b16 %v4837, %v4837
      %v4870 = vpack.c.b16 %v4838, %v4838
      %v4871 = vpack.c.b16 %v4839, %v4839
      %v4872 = vpack.c.b16 %v4840, %v4840
      %v4873 = vpack.c.b16 %v4841, %v4841
      %v4874 = vpack.c.b16 %v4842, %v4842
      %v4875 = vpack.c.b16 %v4843, %v4843
      %v4876 = vpack.c.b16 %v4844, %v4844
      %v4877 = vpack.c.b16 %v4845, %v4845
      %v4878 = vpack.c.b16 %v4846, %v4846
      %v4879 = vpack.c.b16 %v4847, %v4847
      %v4880 = vpack.c.b16 %v4848, %v4848
      %v4881 = vpack.c.b16 %v4849, %v4849
      %v4882 = vpack.c.b16 %v4850, %v4850
      %v4883 = vpack.c.b16 %v4851, %v4851
      %v4884 = vpack.c.b16 %v4852, %v4852
      %v4885 = vpack.c.b16 %v4853, %v4853
      %v4886 = vpack.c.b16 %v4854, %v4854
      %v4887 = vpack.c.b16 %v4855, %v4855
      %v4888 = vpack.c.b16 %v4856, %v4856
      %v4889 = vpack.c.b16 %v4857, %v4857
      %v4890 = vpack.c.b16 %v4858, %v4858
      %v4891 = vpack.c.b16 %v4859, %v4859
      %v4892 = vpack.c.b16 %v4860, %v4860
      %v4893 = vpack.c.b16 %v4861, %v4861
      %v4894 = vpack.c.b16 %v4862, %v4862
      %vm4927 = vcmask 257024
      %4928 = vst.msk [vmem:[%s175] sm:$0xf] %vm4927, %v4863
      %4929 = vst.msk [vmem:[%s175 + $0x4] sm:$0xf] %vm4927, %v4864
      %4930 = vst.msk [vmem:[%s175 + $0x8] sm:$0xf] %vm4927, %v4865
      %4931 = vst.msk [vmem:[%s175 + $0xc] sm:$0xf] %vm4927, %v4866
      %4932 = vst.msk [vmem:[%s175 + $0x10] sm:$0xf] %vm4927, %v4867
      %4933 = vst.msk [vmem:[%s175 + $0x14] sm:$0xf] %vm4927, %v4868
      %4934 = vst.msk [vmem:[%s175 + $0x18] sm:$0xf] %vm4927, %v4869
      %4935 = vst.msk [vmem:[%s175 + $0x1c] sm:$0xf] %vm4927, %v4870
      %4936 = vst.msk [vmem:[%s175 + $0x20] sm:$0xf] %vm4927, %v4871
      %4937 = vst.msk [vmem:[%s175 + $0x24] sm:$0xf] %vm4927, %v4872
      %4938 = vst.msk [vmem:[%s175 + $0x28] sm:$0xf] %vm4927, %v4873
      %4939 = vst.msk [vmem:[%s175 + $0x2c] sm:$0xf] %vm4927, %v4874
      %4940 = vst.msk [vmem:[%s175 + $0x30] sm:$0xf] %vm4927, %v4875
      %4941 = vst.msk [vmem:[%s175 + $0x34] sm:$0xf] %vm4927, %v4876
      %4942 = vst.msk [vmem:[%s175 + $0x38] sm:$0xf] %vm4927, %v4877
      %4943 = vst.msk [vmem:[%s175 + $0x3c] sm:$0xf] %vm4927, %v4878
      %4944 = vst.msk [vmem:[%s175 + $0x40] sm:$0xf] %vm4927, %v4879
      %4945 = vst.msk [vmem:[%s175 + $0x44] sm:$0xf] %vm4927, %v4880
      %4946 = vst.msk [vmem:[%s175 + $0x48] sm:$0xf] %vm4927, %v4881
      %4947 = vst.msk [vmem:[%s175 + $0x4c] sm:$0xf] %vm4927, %v4882
      %4948 = vst.msk [vmem:[%s175 + $0x50] sm:$0xf] %vm4927, %v4883
      %4949 = vst.msk [vmem:[%s175 + $0x54] sm:$0xf] %vm4927, %v4884
      %4950 = vst.msk [vmem:[%s175 + $0x58] sm:$0xf] %vm4927, %v4885
      %4951 = vst.msk [vmem:[%s175 + $0x5c] sm:$0xf] %vm4927, %v4886
      %4952 = vst.msk [vmem:[%s175 + $0x60] sm:$0xf] %vm4927, %v4887
      %4953 = vst.msk [vmem:[%s175 + $0x64] sm:$0xf] %vm4927, %v4888
      %4954 = vst.msk [vmem:[%s175 + $0x68] sm:$0xf] %vm4927, %v4889
      %4955 = vst.msk [vmem:[%s175 + $0x6c] sm:$0xf] %vm4927, %v4890
      %4956 = vst.msk [vmem:[%s175 + $0x70] sm:$0xf] %vm4927, %v4891
      %4957 = vst.msk [vmem:[%s175 + $0x74] sm:$0xf] %vm4927, %v4892
      %4958 = vst.msk [vmem:[%s175 + $0x78] sm:$0xf] %vm4927, %v4893
      %4959 = vst.msk [vmem:[%s175 + $0x7c] sm:$0xf] %vm4927, %v4894
      %s4960 = smul.u32 32, %s14
      %p4961 = scmp.lt.s32.totalorder %s4960, 255
      %s4962 = scalar_select %p4961, %s4960, 255
      %s4963 = smul.addr %s4962, 4
      %s4964 = scalar_lea.vmem %s3, %s4963
      // Predicated region
      $region33: #{_lambda_.4} parent=31 // pred_check
        %p4965 = pneg %p100
      $region34: #{_lambda_.4} parent=31 // pred_check_branch
        %4967 = sbr.rel (%p4965) target = $region36
      $region35: #{_lambda_.4} parent=31 // pred_region
        %s4968 = smul.u32 32, %s14
      $region36: #{_lambda_.4} parent=31 // pred_fallthru
        _
    $region32: #{_lambda_.4} parent=5 // pred_fallthru
      _
    %p4969 = scmp.le.s32.totalorder 2, %s9
    // Predicated region
    $region37: #{_lambda_.4} parent=5 // pred_check
      %p4970 = pneg %p4969
    $region38: #{_lambda_.4} parent=5 // pred_check_branch
      %4972 = sbr.rel (%p4970) target = $region40
    $region39: #{_lambda_.4} parent=5 // pred_region
      %s4973 = ssub.s32 %s9, 2
      // Predicated region
      $region41: #{_lambda_.4} parent=39 // pred_check
        %p4974 = pneg %p106
      $region42: #{_lambda_.4} parent=39 // pred_check_branch
        %4976 = sbr.rel (%p4974) target = $region44
      $region43: #{_lambda_.4} parent=39 // pred_region
        %s4977 = smul.u32 32, %s15
        %p4978 = scmp.lt.s32.totalorder %s4977, 255
        %s4979 = scalar_select %p4978, %s4977, 255
        %s4980 = smul.addr %s4979, 4
        %s4981 = scalar_lea.vmem %s3, %s4980
      $region44: #{_lambda_.4} parent=39 // pred_fallthru
        _
    $region40: #{_lambda_.4} parent=5 // pred_fallthru
      _
  $region6: #{_lambda_.4} parent=0 // loop_footer
    %s13 = sadd.s32 1, %s9
  $region7: #{_lambda_.4} parent=0 // loop_footer_branch
    %8 = sbr.rel target = $region3
  $region8: #{_lambda_.4} parent=0 // loop_exit
    _

// kernel: _lambda_.5
$region0: #{_lambda_.5}
  #allocation0 [shape = 'u32[]', space=smem, size = 0x4, offset = 0x4, fixed_abs, tag = 'smem constant byte address 0x4 - core index']
  #allocation1 [shape = 'u32[144,128]{1,0:T(1,128)}', space=vmem, size = 0x12000, scoped, tag = 'internal scratch']
  %s0 = inlined_call_operand.vmem [shape: bf16[104,1568], index: 0, kind: input, shape index: {}]
  %s1 = inlined_call_operand.vmem [shape: bf16[1568,512], index: 1, kind: input, shape index: {}]
  %s2 = inlined_call_operand.vmem [shape: f32[1,512], index: 2, kind: input, shape index: {}]
  %s3 = inlined_call_operand.vmem [shape: bf16[104,32], index: 3, kind: output, shape index: {}]
  %s4 = sld [smem:[#allocation0]]
  $region22: #{_lambda_.5} parent=0
    _
  %s6 = ssub.s32 1, %s4
  %s7 = scalar_select 0, %s6, %s4
  // Predicated region
  $region2: #{_lambda_.5} parent=0 // pred_check
    _
  $region3: #{_lambda_.5} parent=0 // pred_check_branch
    %9 = sbr.rel (0) target = $region5
  $region4: #{_lambda_.5} parent=0 // pred_region
    _
  $region5: #{_lambda_.5} parent=0 // pred_fallthru
    _
  // Predicated region
  $region6: #{_lambda_.5} parent=0 // pred_check
    _
  $region7: #{_lambda_.5} parent=0 // pred_check_branch
    %11 = sbr.rel (0) target = $region9
  $region8: #{_lambda_.5} parent=0 // pred_region
    _
  $region9: #{_lambda_.5} parent=0 // pred_fallthru
    _
  // Predicated region
  $region10: #{_lambda_.5} parent=0 // pred_check
    _
  $region11: #{_lambda_.5} parent=0 // pred_check_branch
    %13 = sbr.rel (0) target = $region13
  $region12: #{_lambda_.5} parent=0 // pred_region
    _
  $region13: #{_lambda_.5} parent=0 // pred_fallthru
    _
  %v15 = vld [vmem:[%s0] sm:$0xff]
  %v16 = vld [vmem:[%s0 + $0x8] sm:$0xff]
  %v17 = vld [vmem:[%s0 + $0x10] sm:$0xff]
  %v18 = vld [vmem:[%s0 + $0x18] sm:$0xff]
  %v19 = vld [vmem:[%s0 + $0x20] sm:$0xff]
  %v20 = vld [vmem:[%s0 + $0x28] sm:$0xff]
  %v21 = vld [vmem:[%s0 + $0x30] sm:$0xf]
  %v22 = vld [vmem:[%s0 + $0x34] sm:$0xff]
  %v23 = vld [vmem:[%s0 + $0x3c] sm:$0xff]
  %v24 = vld [vmem:[%s0 + $0x44] sm:$0xff]
  %v25 = vld [vmem:[%s0 + $0x4c] sm:$0xff]
  %v26 = vld [vmem:[%s0 + $0x54] sm:$0xff]
  %v27 = vld [vmem:[%s0 + $0x5c] sm:$0xff]
  %v28 = vld [vmem:[%s0 + $0x64] sm:$0xf]
  %v29 = vld [vmem:[%s0 + $0x68] sm:$0xff]
  %v30 = vld [vmem:[%s0 + $0x70] sm:$0xff]
  %v31 = vld [vmem:[%s0 + $0x78] sm:$0xff]
  %v32 = vld [vmem:[%s0 + $0x80] sm:$0xff]
  %v33 = vld [vmem:[%s0 + $0x88] sm:$0xff]
  %v34 = vld [vmem:[%s0 + $0x90] sm:$0xff]
  %v35 = vld [vmem:[%s0 + $0x98] sm:$0xf]
  %v36 = vld [vmem:[%s0 + $0x9c] sm:$0xff]
  %v37 = vld [vmem:[%s0 + $0xa4] sm:$0xff]
  %v38 = vld [vmem:[%s0 + $0xac] sm:$0xff]
  %v39 = vld [vmem:[%s0 + $0xb4] sm:$0xff]
  %v40 = vld [vmem:[%s0 + $0xbc] sm:$0xff]
  %v41 = vld [vmem:[%s0 + $0xc4] sm:$0xff]
  %v42 = vld [vmem:[%s0 + $0xcc] sm:$0xf]
  %v43 = vld [vmem:[%s0 + $0xd0] sm:$0xff]
  %v44 = vld [vmem:[%s0 + $0xd8] sm:$0xff]
  %v45 = vld [vmem:[%s0 + $0xe0] sm:$0xff]
  %v46 = vld [vmem:[%s0 + $0xe8] sm:$0xff]
  %v47 = vld [vmem:[%s0 + $0xf0] sm:$0xff]
  %v48 = vld [vmem:[%s0 + $0xf8] sm:$0xff]
  %v49 = vld [vmem:[%s0 + $0x100] sm:$0xf]
  %v50 = vld [vmem:[%s0 + $0x104] sm:$0xff]
  %v51 = vld [vmem:[%s0 + $0x10c] sm:$0xff]
  %v52 = vld [vmem:[%s0 + $0x114] sm:$0xff]
  %v53 = vld [vmem:[%s0 + $0x11c] sm:$0xff]
  %v54 = vld [vmem:[%s0 + $0x124] sm:$0xff]
  %v55 = vld [vmem:[%s0 + $0x12c] sm:$0xff]
  %v56 = vld [vmem:[%s0 + $0x134] sm:$0xf]
  %v57 = vld [vmem:[%s0 + $0x138] sm:$0xff]
  %v58 = vld [vmem:[%s0 + $0x140] sm:$0xff]
  %v59 = vld [vmem:[%s0 + $0x148] sm:$0xff]
  %v60 = vld [vmem:[%s0 + $0x150] sm:$0xff]
  %v61 = vld [vmem:[%s0 + $0x158] sm:$0xff]
  %v62 = vld [vmem:[%s0 + $0x160] sm:$0xff]
  %v63 = vld [vmem:[%s0 + $0x168] sm:$0xf]
  %v64 = vld [vmem:[%s0 + $0x16c] sm:$0xff]
  %v65 = vld [vmem:[%s0 + $0x174] sm:$0xff]
  %v66 = vld [vmem:[%s0 + $0x17c] sm:$0xff]
  %v67 = vld [vmem:[%s0 + $0x184] sm:$0xff]
  %v68 = vld [vmem:[%s0 + $0x18c] sm:$0xff]
  %v69 = vld [vmem:[%s0 + $0x194] sm:$0xff]
  %v70 = vld [vmem:[%s0 + $0x19c] sm:$0xf]
  %v71 = vld [vmem:[%s0 + $0x1a0] sm:$0xff]
  %v72 = vld [vmem:[%s0 + $0x1a8] sm:$0xff]
  %v73 = vld [vmem:[%s0 + $0x1b0] sm:$0xff]
  %v74 = vld [vmem:[%s0 + $0x1b8] sm:$0xff]
  %v75 = vld [vmem:[%s0 + $0x1c0] sm:$0xff]
  %v76 = vld [vmem:[%s0 + $0x1c8] sm:$0xff]
  %v77 = vld [vmem:[%s0 + $0x1d0] sm:$0xf]
  %v78 = vld [vmem:[%s0 + $0x1d4] sm:$0xff]
  %v79 = vld [vmem:[%s0 + $0x1dc] sm:$0xff]
  %v80 = vld [vmem:[%s0 + $0x1e4] sm:$0xff]
  %v81 = vld [vmem:[%s0 + $0x1ec] sm:$0xff]
  %v82 = vld [vmem:[%s0 + $0x1f4] sm:$0xff]
  %v83 = vld [vmem:[%s0 + $0x1fc] sm:$0xff]
  %v84 = vld [vmem:[%s0 + $0x204] sm:$0xf]
  %v85 = vld [vmem:[%s0 + $0x208] sm:$0xff]
  %v86 = vld [vmem:[%s0 + $0x210] sm:$0xff]
  %v87 = vld [vmem:[%s0 + $0x218] sm:$0xff]
  %v88 = vld [vmem:[%s0 + $0x220] sm:$0xff]
  %v89 = vld [vmem:[%s0 + $0x228] sm:$0xff]
  %v90 = vld [vmem:[%s0 + $0x230] sm:$0xff]
  %v91 = vld [vmem:[%s0 + $0x238] sm:$0xf]
  %v92 = vld [vmem:[%s0 + $0x23c] sm:$0xff]
  %v93 = vld [vmem:[%s0 + $0x244] sm:$0xff]
  %v94 = vld [vmem:[%s0 + $0x24c] sm:$0xff]
  %v95 = vld [vmem:[%s0 + $0x254] sm:$0xff]
  %v96 = vld [vmem:[%s0 + $0x25c] sm:$0xff]
  %v97 = vld [vmem:[%s0 + $0x264] sm:$0xff]
  %v98 = vld [vmem:[%s0 + $0x26c] sm:$0xf]
  %v99 = vld [vmem:[%s0 + $0x270] sm:$0xff]
  %v100 = vld [vmem:[%s0 + $0x278] sm:$0xff]
  %v101 = vld [vmem:[%s0 + $0x280] sm:$0xff]
  %v102 = vld [vmem:[%s0 + $0x288] sm:$0xff]
  %v103 = vld [vmem:[%s0 + $0x290] sm:$0xff]
  %v104 = vld [vmem:[%s0 + $0x298] sm:$0xff]
  %v105 = vld [vmem:[%s0 + $0x2a0] sm:$0xf]
  %v106 = vld [vmem:[%s1] sm:$0xff]
  %v107 = vld [vmem:[%s1 + $0x8] sm:$0xff]
  %v108 = vld [vmem:[%s1 + $0x10] sm:$0xff]
  %v109 = vld [vmem:[%s1 + $0x18] sm:$0xff]
  %v110 = vld [vmem:[%s1 + $0x20] sm:$0xff]
  %v111 = vld [vmem:[%s1 + $0x28] sm:$0xff]
  %v112 = vld [vmem:[%s1 + $0x30] sm:$0xff]
  %v113 = vld [vmem:[%s1 + $0x38] sm:$0xff]
  %v114 = vld [vmem:[%s1 + $0x40] sm:$0xff]
  %v115 = vld [vmem:[%s1 + $0x48] sm:$0xff]
  %v116 = vld [vmem:[%s1 + $0x50] sm:$0xff]
  %v117 = vld [vmem:[%s1 + $0x58] sm:$0xff]
  %v118 = vld [vmem:[%s1 + $0x60] sm:$0xff]
  %v119 = vld [vmem:[%s1 + $0x68] sm:$0xff]
  %v120 = vld [vmem:[%s1 + $0x70] sm:$0xff]
  %v121 = vld [vmem:[%s1 + $0x78] sm:$0xff]
  %v122 = vld [vmem:[%s1 + $0x80] sm:$0xff]
  %v123 = vld [vmem:[%s1 + $0x88] sm:$0xff]
  %v124 = vld [vmem:[%s1 + $0x90] sm:$0xff]
  %v125 = vld [vmem:[%s1 + $0x98] sm:$0xff]
  %v126 = vld [vmem:[%s1 + $0xa0] sm:$0xff]
  %v127 = vld [vmem:[%s1 + $0xa8] sm:$0xff]
  %v128 = vld [vmem:[%s1 + $0xb0] sm:$0xff]
  %v129 = vld [vmem:[%s1 + $0xb8] sm:$0xff]
  %v130 = vld [vmem:[%s1 + $0xc0] sm:$0xff]
  %v131 = vld [vmem:[%s1 + $0xc8] sm:$0xff]
  %v132 = vld [vmem:[%s1 + $0xd0] sm:$0xff]
  %v133 = vld [vmem:[%s1 + $0xd8] sm:$0xff]
  %v134 = vld [vmem:[%s1 + $0xe0] sm:$0xff]
  %v135 = vld [vmem:[%s1 + $0xe8] sm:$0xff]
  %v136 = vld [vmem:[%s1 + $0xf0] sm:$0xff]
  %v137 = vld [vmem:[%s1 + $0xf8] sm:$0xff]
  %v138 = vld [vmem:[%s1 + $0x100] sm:$0xff]
  %v139 = vld [vmem:[%s1 + $0x108] sm:$0xff]
  %v140 = vld [vmem:[%s1 + $0x110] sm:$0xff]
  %v141 = vld [vmem:[%s1 + $0x118] sm:$0xff]
  %v142 = vld [vmem:[%s1 + $0x120] sm:$0xff]
  %v143 = vld [vmem:[%s1 + $0x128] sm:$0xff]
  %v144 = vld [vmem:[%s1 + $0x130] sm:$0xff]
  %v145 = vld [vmem:[%s1 + $0x138] sm:$0xff]
  %v146 = vld [vmem:[%s1 + $0x140] sm:$0xff]
  %v147 = vld [vmem:[%s1 + $0x148] sm:$0xff]
  %v148 = vld [vmem:[%s1 + $0x150] sm:$0xff]
  %v149 = vld [vmem:[%s1 + $0x158] sm:$0xff]
  %v150 = vld [vmem:[%s1 + $0x160] sm:$0xff]
  %v151 = vld [vmem:[%s1 + $0x168] sm:$0xff]
  %v152 = vld [vmem:[%s1 + $0x170] sm:$0xff]
  %v153 = vld [vmem:[%s1 + $0x178] sm:$0xff]
  %v154 = vld [vmem:[%s1 + $0x180] sm:$0xff]
  %v155 = vld [vmem:[%s1 + $0x188] sm:$0xff]
  %v156 = vld [vmem:[%s1 + $0x190] sm:$0xff]
  %v157 = vld [vmem:[%s1 + $0x198] sm:$0xff]
  %v158 = vld [vmem:[%s1 + $0x1a0] sm:$0xff]
  %v159 = vld [vmem:[%s1 + $0x1a8] sm:$0xff]
  %v160 = vld [vmem:[%s1 + $0x1b0] sm:$0xff]
  %v161 = vld [vmem:[%s1 + $0x1b8] sm:$0xff]
  %v162 = vld [vmem:[%s1 + $0x1c0] sm:$0xff]
  %v163 = vld [vmem:[%s1 + $0x1c8] sm:$0xff]
  %v164 = vld [vmem:[%s1 + $0x1d0] sm:$0xff]
  %v165 = vld [vmem:[%s1 + $0x1d8] sm:$0xff]
  %v166 = vld [vmem:[%s1 + $0x1e0] sm:$0xff]
  %v167 = vld [vmem:[%s1 + $0x1e8] sm:$0xff]
  %v168 = vld [vmem:[%s1 + $0x1f0] sm:$0xff]
  %v169 = vld [vmem:[%s1 + $0x1f8] sm:$0xff]
  %v170 = vld [vmem:[%s1 + $0x200] sm:$0xff]
  %v171 = vld [vmem:[%s1 + $0x208] sm:$0xff]
  %v172 = vld [vmem:[%s1 + $0x210] sm:$0xff]
  %v173 = vld [vmem:[%s1 + $0x218] sm:$0xff]
  %v174 = vld [vmem:[%s1 + $0x220] sm:$0xff]
  %v175 = vld [vmem:[%s1 + $0x228] sm:$0xff]
  %v176 = vld [vmem:[%s1 + $0x230] sm:$0xff]
  %v177 = vld [vmem:[%s1 + $0x238] sm:$0xff]
  %v178 = vld [vmem:[%s1 + $0x240] sm:$0xff]
  %v179 = vld [vmem:[%s1 + $0x248] sm:$0xff]
  %v180 = vld [vmem:[%s1 + $0x250] sm:$0xff]
  %v181 = vld [vmem:[%s1 + $0x258] sm:$0xff]
  %v182 = vld [vmem:[%s1 + $0x260] sm:$0xff]
  %v183 = vld [vmem:[%s1 + $0x268] sm:$0xff]
  %v184 = vld [vmem:[%s1 + $0x270] sm:$0xff]
  %v185 = vld [vmem:[%s1 + $0x278] sm:$0xff]
  %v186 = vld [vmem:[%s1 + $0x280] sm:$0xff]
  %v187 = vld [vmem:[%s1 + $0x288] sm:$0xff]
  %v188 = vld [vmem:[%s1 + $0x290] sm:$0xff]
  %v189 = vld [vmem:[%s1 + $0x298] sm:$0xff]
  %v190 = vld [vmem:[%s1 + $0x2a0] sm:$0xff]
  %v191 = vld [vmem:[%s1 + $0x2a8] sm:$0xff]
  %v192 = vld [vmem:[%s1 + $0x2b0] sm:$0xff]
  %v193 = vld [vmem:[%s1 + $0x2b8] sm:$0xff]
  %v194 = vld [vmem:[%s1 + $0x2c0] sm:$0xff]
  %v195 = vld [vmem:[%s1 + $0x2c8] sm:$0xff]
  %v196 = vld [vmem:[%s1 + $0x2d0] sm:$0xff]
  %v197 = vld [vmem:[%s1 + $0x2d8] sm:$0xff]
  %v198 = vld [vmem:[%s1 + $0x2e0] sm:$0xff]
  %v199 = vld [vmem:[%s1 + $0x2e8] sm:$0xff]
  %v200 = vld [vmem:[%s1 + $0x2f0] sm:$0xff]
  %v201 = vld [vmem:[%s1 + $0x2f8] sm:$0xff]
  %v202 = vld [vmem:[%s1 + $0x300] sm:$0xff]
  %v203 = vld [vmem:[%s1 + $0x308] sm:$0xff]
  %v204 = vld [vmem:[%s1 + $0x310] sm:$0xff]
  %v205 = vld [vmem:[%s1 + $0x318] sm:$0xff]
  %v206 = vld [vmem:[%s1 + $0x320] sm:$0xff]
  %v207 = vld [vmem:[%s1 + $0x328] sm:$0xff]
  %v208 = vld [vmem:[%s1 + $0x330] sm:$0xff]
  %v209 = vld [vmem:[%s1 + $0x338] sm:$0xff]
  %v210 = vld [vmem:[%s1 + $0x340] sm:$0xff]
  %v211 = vld [vmem:[%s1 + $0x348] sm:$0xff]
  %v212 = vld [vmem:[%s1 + $0x350] sm:$0xff]
  %v213 = vld [vmem:[%s1 + $0x358] sm:$0xff]
  %v214 = vld [vmem:[%s1 + $0x360] sm:$0xff]
  %v215 = vld [vmem:[%s1 + $0x368] sm:$0xff]
  %v216 = vld [vmem:[%s1 + $0x370] sm:$0xff]
  %v217 = vld [vmem:[%s1 + $0x378] sm:$0xff]
  %v218 = vld [vmem:[%s1 + $0x380] sm:$0xff]
  %v219 = vld [vmem:[%s1 + $0x388] sm:$0xff]
  %v220 = vld [vmem:[%s1 + $0x390] sm:$0xff]
  %v221 = vld [vmem:[%s1 + $0x398] sm:$0xff]
  %v222 = vld [vmem:[%s1 + $0x3a0] sm:$0xff]
  %v223 = vld [vmem:[%s1 + $0x3a8] sm:$0xff]
  %v224 = vld [vmem:[%s1 + $0x3b0] sm:$0xff]
  %v225 = vld [vmem:[%s1 + $0x3b8] sm:$0xff]
  %v226 = vld [vmem:[%s1 + $0x3c0] sm:$0xff]
  %v227 = vld [vmem:[%s1 + $0x3c8] sm:$0xff]
  %v228 = vld [vmem:[%s1 + $0x3d0] sm:$0xff]
  %v229 = vld [vmem:[%s1 + $0x3d8] sm:$0xff]
  %v230 = vld [vmem:[%s1 + $0x3e0] sm:$0xff]
  %v231 = vld [vmem:[%s1 + $0x3e8] sm:$0xff]
  %v232 = vld [vmem:[%s1 + $0x3f0] sm:$0xff]
  %v233 = vld [vmem:[%s1 + $0x3f8] sm:$0xff]
  %v234 = vld [vmem:[%s1 + $0x400] sm:$0xff]
  %v235 = vld [vmem:[%s1 + $0x408] sm:$0xff]
  %v236 = vld [vmem:[%s1 + $0x410] sm:$0xff]
  %v237 = vld [vmem:[%s1 + $0x418] sm:$0xff]
  %v238 = vld [vmem:[%s1 + $0x420] sm:$0xff]
  %v239 = vld [vmem:[%s1 + $0x428] sm:$0xff]
  %v240 = vld [vmem:[%s1 + $0x430] sm:$0xff]
  %v241 = vld [vmem:[%s1 + $0x438] sm:$0xff]
  %v242 = vld [vmem:[%s1 + $0x440] sm:$0xff]
  %v243 = vld [vmem:[%s1 + $0x448] sm:$0xff]
  %v244 = vld [vmem:[%s1 + $0x450] sm:$0xff]
  %v245 = vld [vmem:[%s1 + $0x458] sm:$0xff]
  %v246 = vld [vmem:[%s1 + $0x460] sm:$0xff]
  %v247 = vld [vmem:[%s1 + $0x468] sm:$0xff]
  %v248 = vld [vmem:[%s1 + $0x470] sm:$0xff]
  %v249 = vld [vmem:[%s1 + $0x478] sm:$0xff]
  %v250 = vld [vmem:[%s1 + $0x480] sm:$0xff]
  %v251 = vld [vmem:[%s1 + $0x488] sm:$0xff]
  %v252 = vld [vmem:[%s1 + $0x490] sm:$0xff]
  %v253 = vld [vmem:[%s1 + $0x498] sm:$0xff]
  %v254 = vld [vmem:[%s1 + $0x4a0] sm:$0xff]
  %v255 = vld [vmem:[%s1 + $0x4a8] sm:$0xff]
  %v256 = vld [vmem:[%s1 + $0x4b0] sm:$0xff]
  %v257 = vld [vmem:[%s1 + $0x4b8] sm:$0xff]
  %v258 = vld [vmem:[%s1 + $0x4c0] sm:$0xff]
  %v259 = vld [vmem:[%s1 + $0x4c8] sm:$0xff]
  %v260 = vld [vmem:[%s1 + $0x4d0] sm:$0xff]
  %v261 = vld [vmem:[%s1 + $0x4d8] sm:$0xff]
  %v262 = vld [vmem:[%s1 + $0x4e0] sm:$0xff]
  %v263 = vld [vmem:[%s1 + $0x4e8] sm:$0xff]
  %v264 = vld [vmem:[%s1 + $0x4f0] sm:$0xff]
  %v265 = vld [vmem:[%s1 + $0x4f8] sm:$0xff]
  %v266 = vld [vmem:[%s1 + $0x500] sm:$0xff]
  %v267 = vld [vmem:[%s1 + $0x508] sm:$0xff]
  %v268 = vld [vmem:[%s1 + $0x510] sm:$0xff]
  %v269 = vld [vmem:[%s1 + $0x518] sm:$0xff]
  %v270 = vld [vmem:[%s1 + $0x520] sm:$0xff]
  %v271 = vld [vmem:[%s1 + $0x528] sm:$0xff]
  %v272 = vld [vmem:[%s1 + $0x530] sm:$0xff]
  %v273 = vld [vmem:[%s1 + $0x538] sm:$0xff]
  %v274 = vld [vmem:[%s1 + $0x540] sm:$0xff]
  %v275 = vld [vmem:[%s1 + $0x548] sm:$0xff]
  %v276 = vld [vmem:[%s1 + $0x550] sm:$0xff]
  %v277 = vld [vmem:[%s1 + $0x558] sm:$0xff]
  %v278 = vld [vmem:[%s1 + $0x560] sm:$0xff]
  %v279 = vld [vmem:[%s1 + $0x568] sm:$0xff]
  %v280 = vld [vmem:[%s1 + $0x570] sm:$0xff]
  %v281 = vld [vmem:[%s1 + $0x578] sm:$0xff]
  %v282 = vld [vmem:[%s1 + $0x580] sm:$0xff]
  %v283 = vld [vmem:[%s1 + $0x588] sm:$0xff]
  %v284 = vld [vmem:[%s1 + $0x590] sm:$0xff]
  %v285 = vld [vmem:[%s1 + $0x598] sm:$0xff]
  %v286 = vld [vmem:[%s1 + $0x5a0] sm:$0xff]
  %v287 = vld [vmem:[%s1 + $0x5a8] sm:$0xff]
  %v288 = vld [vmem:[%s1 + $0x5b0] sm:$0xff]
  %v289 = vld [vmem:[%s1 + $0x5b8] sm:$0xff]
  %v290 = vld [vmem:[%s1 + $0x5c0] sm:$0xff]
  %v291 = vld [vmem:[%s1 + $0x5c8] sm:$0xff]
  %v292 = vld [vmem:[%s1 + $0x5d0] sm:$0xff]
  %v293 = vld [vmem:[%s1 + $0x5d8] sm:$0xff]
  %v294 = vld [vmem:[%s1 + $0x5e0] sm:$0xff]
  %v295 = vld [vmem:[%s1 + $0x5e8] sm:$0xff]
  %v296 = vld [vmem:[%s1 + $0x5f0] sm:$0xff]
  %v297 = vld [vmem:[%s1 + $0x5f8] sm:$0xff]
  %v298 = vld [vmem:[%s1 + $0x600] sm:$0xff]
  %v299 = vld [vmem:[%s1 + $0x608] sm:$0xff]
  %v300 = vld [vmem:[%s1 + $0x610] sm:$0xff]
  %v301 = vld [vmem:[%s1 + $0x618] sm:$0xff]
  %v302 = vld [vmem:[%s1 + $0x620] sm:$0xff]
  %v303 = vld [vmem:[%s1 + $0x628] sm:$0xff]
  %v304 = vld [vmem:[%s1 + $0x630] sm:$0xff]
  %v305 = vld [vmem:[%s1 + $0x638] sm:$0xff]
  %v306 = vld [vmem:[%s1 + $0x640] sm:$0xff]
  %v307 = vld [vmem:[%s1 + $0x648] sm:$0xff]
  %v308 = vld [vmem:[%s1 + $0x650] sm:$0xff]
  %v309 = vld [vmem:[%s1 + $0x658] sm:$0xff]
  %v310 = vld [vmem:[%s1 + $0x660] sm:$0xff]
  %v311 = vld [vmem:[%s1 + $0x668] sm:$0xff]
  %v312 = vld [vmem:[%s1 + $0x670] sm:$0xff]
  %v313 = vld [vmem:[%s1 + $0x678] sm:$0xff]
  %v314 = vld [vmem:[%s1 + $0x680] sm:$0xff]
  %v315 = vld [vmem:[%s1 + $0x688] sm:$0xff]
  %v316 = vld [vmem:[%s1 + $0x690] sm:$0xff]
  %v317 = vld [vmem:[%s1 + $0x698] sm:$0xff]
  %v318 = vld [vmem:[%s1 + $0x6a0] sm:$0xff]
  %v319 = vld [vmem:[%s1 + $0x6a8] sm:$0xff]
  %v320 = vld [vmem:[%s1 + $0x6b0] sm:$0xff]
  %v321 = vld [vmem:[%s1 + $0x6b8] sm:$0xff]
  %v322 = vld [vmem:[%s1 + $0x6c0] sm:$0xff]
  %v323 = vld [vmem:[%s1 + $0x6c8] sm:$0xff]
  %v324 = vld [vmem:[%s1 + $0x6d0] sm:$0xff]
  %v325 = vld [vmem:[%s1 + $0x6d8] sm:$0xff]
  %v326 = vld [vmem:[%s1 + $0x6e0] sm:$0xff]
  %v327 = vld [vmem:[%s1 + $0x6e8] sm:$0xff]
  %v328 = vld [vmem:[%s1 + $0x6f0] sm:$0xff]
  %v329 = vld [vmem:[%s1 + $0x6f8] sm:$0xff]
  %v330 = vld [vmem:[%s1 + $0x700] sm:$0xff]
  %v331 = vld [vmem:[%s1 + $0x708] sm:$0xff]
  %v332 = vld [vmem:[%s1 + $0x710] sm:$0xff]
  %v333 = vld [vmem:[%s1 + $0x718] sm:$0xff]
  %v334 = vld [vmem:[%s1 + $0x720] sm:$0xff]
  %v335 = vld [vmem:[%s1 + $0x728] sm:$0xff]
  %v336 = vld [vmem:[%s1 + $0x730] sm:$0xff]
  %v337 = vld [vmem:[%s1 + $0x738] sm:$0xff]
  %v338 = vld [vmem:[%s1 + $0x740] sm:$0xff]
  %v339 = vld [vmem:[%s1 + $0x748] sm:$0xff]
  %v340 = vld [vmem:[%s1 + $0x750] sm:$0xff]
  %v341 = vld [vmem:[%s1 + $0x758] sm:$0xff]
  %v342 = vld [vmem:[%s1 + $0x760] sm:$0xff]
  %v343 = vld [vmem:[%s1 + $0x768] sm:$0xff]
  %v344 = vld [vmem:[%s1 + $0x770] sm:$0xff]
  %v345 = vld [vmem:[%s1 + $0x778] sm:$0xff]
  %v346 = vld [vmem:[%s1 + $0x780] sm:$0xff]
  %v347 = vld [vmem:[%s1 + $0x788] sm:$0xff]
  %v348 = vld [vmem:[%s1 + $0x790] sm:$0xff]
  %v349 = vld [vmem:[%s1 + $0x798] sm:$0xff]
  %v350 = vld [vmem:[%s1 + $0x7a0] sm:$0xff]
  %v351 = vld [vmem:[%s1 + $0x7a8] sm:$0xff]
  %v352 = vld [vmem:[%s1 + $0x7b0] sm:$0xff]
  %v353 = vld [vmem:[%s1 + $0x7b8] sm:$0xff]
  %v354 = vld [vmem:[%s1 + $0x7c0] sm:$0xff]
  %v355 = vld [vmem:[%s1 + $0x7c8] sm:$0xff]
  %v356 = vld [vmem:[%s1 + $0x7d0] sm:$0xff]
  %v357 = vld [vmem:[%s1 + $0x7d8] sm:$0xff]
  %v358 = vld [vmem:[%s1 + $0x7e0] sm:$0xff]
  %v359 = vld [vmem:[%s1 + $0x7e8] sm:$0xff]
  %v360 = vld [vmem:[%s1 + $0x7f0] sm:$0xff]
  %v361 = vld [vmem:[%s1 + $0x7f8] sm:$0xff]
  %v362 = vld [vmem:[%s1 + $0x800] sm:$0xff]
  %v363 = vld [vmem:[%s1 + $0x808] sm:$0xff]
  %v364 = vld [vmem:[%s1 + $0x810] sm:$0xff]
  %v365 = vld [vmem:[%s1 + $0x818] sm:$0xff]
  %v366 = vld [vmem:[%s1 + $0x820] sm:$0xff]
  %v367 = vld [vmem:[%s1 + $0x828] sm:$0xff]
  %v368 = vld [vmem:[%s1 + $0x830] sm:$0xff]
  %v369 = vld [vmem:[%s1 + $0x838] sm:$0xff]
  %v370 = vld [vmem:[%s1 + $0x840] sm:$0xff]
  %v371 = vld [vmem:[%s1 + $0x848] sm:$0xff]
  %v372 = vld [vmem:[%s1 + $0x850] sm:$0xff]
  %v373 = vld [vmem:[%s1 + $0x858] sm:$0xff]
  %v374 = vld [vmem:[%s1 + $0x860] sm:$0xff]
  %v375 = vld [vmem:[%s1 + $0x868] sm:$0xff]
  %v376 = vld [vmem:[%s1 + $0x870] sm:$0xff]
  %v377 = vld [vmem:[%s1 + $0x878] sm:$0xff]
  %v378 = vld [vmem:[%s1 + $0x880] sm:$0xff]
  %v379 = vld [vmem:[%s1 + $0x888] sm:$0xff]
  %v380 = vld [vmem:[%s1 + $0x890] sm:$0xff]
  %v381 = vld [vmem:[%s1 + $0x898] sm:$0xff]
  %v382 = vld [vmem:[%s1 + $0x8a0] sm:$0xff]
  %v383 = vld [vmem:[%s1 + $0x8a8] sm:$0xff]
  %v384 = vld [vmem:[%s1 + $0x8b0] sm:$0xff]
  %v385 = vld [vmem:[%s1 + $0x8b8] sm:$0xff]
  %v386 = vld [vmem:[%s1 + $0x8c0] sm:$0xff]
  %v387 = vld [vmem:[%s1 + $0x8c8] sm:$0xff]
  %v388 = vld [vmem:[%s1 + $0x8d0] sm:$0xff]
  %v389 = vld [vmem:[%s1 + $0x8d8] sm:$0xff]
  %v390 = vld [vmem:[%s1 + $0x8e0] sm:$0xff]
  %v391 = vld [vmem:[%s1 + $0x8e8] sm:$0xff]
  %v392 = vld [vmem:[%s1 + $0x8f0] sm:$0xff]
  %v393 = vld [vmem:[%s1 + $0x8f8] sm:$0xff]
  %v394 = vld [vmem:[%s1 + $0x900] sm:$0xff]
  %v395 = vld [vmem:[%s1 + $0x908] sm:$0xff]
  %v396 = vld [vmem:[%s1 + $0x910] sm:$0xff]
  %v397 = vld [vmem:[%s1 + $0x918] sm:$0xff]
  %v398 = vld [vmem:[%s1 + $0x920] sm:$0xff]
  %v399 = vld [vmem:[%s1 + $0x928] sm:$0xff]
  %v400 = vld [vmem:[%s1 + $0x930] sm:$0xff]
  %v401 = vld [vmem:[%s1 + $0x938] sm:$0xff]
  %v402 = vld [vmem:[%s1 + $0x940] sm:$0xff]
  %v403 = vld [vmem:[%s1 + $0x948] sm:$0xff]
  %v404 = vld [vmem:[%s1 + $0x950] sm:$0xff]
  %v405 = vld [vmem:[%s1 + $0x958] sm:$0xff]
  %v406 = vld [vmem:[%s1 + $0x960] sm:$0xff]
  %v407 = vld [vmem:[%s1 + $0x968] sm:$0xff]
  %v408 = vld [vmem:[%s1 + $0x970] sm:$0xff]
  %v409 = vld [vmem:[%s1 + $0x978] sm:$0xff]
  %v410 = vld [vmem:[%s1 + $0x980] sm:$0xff]
  %v411 = vld [vmem:[%s1 + $0x988] sm:$0xff]
  %v412 = vld [vmem:[%s1 + $0x990] sm:$0xff]
  %v413 = vld [vmem:[%s1 + $0x998] sm:$0xff]
  %v414 = vld [vmem:[%s1 + $0x9a0] sm:$0xff]
  %v415 = vld [vmem:[%s1 + $0x9a8] sm:$0xff]
  %v416 = vld [vmem:[%s1 + $0x9b0] sm:$0xff]
  %v417 = vld [vmem:[%s1 + $0x9b8] sm:$0xff]
  %v418 = vld [vmem:[%s1 + $0x9c0] sm:$0xff]
  %v419 = vld [vmem:[%s1 + $0x9c8] sm:$0xff]
  %v420 = vld [vmem:[%s1 + $0x9d0] sm:$0xff]
  %v421 = vld [vmem:[%s1 + $0x9d8] sm:$0xff]
  %v422 = vld [vmem:[%s1 + $0x9e0] sm:$0xff]
  %v423 = vld [vmem:[%s1 + $0x9e8] sm:$0xff]
  %v424 = vld [vmem:[%s1 + $0x9f0] sm:$0xff]
  %v425 = vld [vmem:[%s1 + $0x9f8] sm:$0xff]
  %v426 = vld [vmem:[%s1 + $0xa00] sm:$0xff]
  %v427 = vld [vmem:[%s1 + $0xa08] sm:$0xff]
  %v428 = vld [vmem:[%s1 + $0xa10] sm:$0xff]
  %v429 = vld [vmem:[%s1 + $0xa18] sm:$0xff]
  %v430 = vld [vmem:[%s1 + $0xa20] sm:$0xff]
  %v431 = vld [vmem:[%s1 + $0xa28] sm:$0xff]
  %v432 = vld [vmem:[%s1 + $0xa30] sm:$0xff]
  %v433 = vld [vmem:[%s1 + $0xa38] sm:$0xff]
  %v434 = vld [vmem:[%s1 + $0xa40] sm:$0xff]
  %v435 = vld [vmem:[%s1 + $0xa48] sm:$0xff]
  %v436 = vld [vmem:[%s1 + $0xa50] sm:$0xff]
  %v437 = vld [vmem:[%s1 + $0xa58] sm:$0xff]
  %v438 = vld [vmem:[%s1 + $0xa60] sm:$0xff]
  %v439 = vld [vmem:[%s1 + $0xa68] sm:$0xff]
  %v440 = vld [vmem:[%s1 + $0xa70] sm:$0xff]
  %v441 = vld [vmem:[%s1 + $0xa78] sm:$0xff]
  %v442 = vld [vmem:[%s1 + $0xa80] sm:$0xff]
  %v443 = vld [vmem:[%s1 + $0xa88] sm:$0xff]
  %v444 = vld [vmem:[%s1 + $0xa90] sm:$0xff]
  %v445 = vld [vmem:[%s1 + $0xa98] sm:$0xff]
  %v446 = vld [vmem:[%s1 + $0xaa0] sm:$0xff]
  %v447 = vld [vmem:[%s1 + $0xaa8] sm:$0xff]
  %v448 = vld [vmem:[%s1 + $0xab0] sm:$0xff]
  %v449 = vld [vmem:[%s1 + $0xab8] sm:$0xff]
  %v450 = vld [vmem:[%s1 + $0xac0] sm:$0xff]
  %v451 = vld [vmem:[%s1 + $0xac8] sm:$0xff]
  %v452 = vld [vmem:[%s1 + $0xad0] sm:$0xff]
  %v453 = vld [vmem:[%s1 + $0xad8] sm:$0xff]
  %v454 = vld [vmem:[%s1 + $0xae0] sm:$0xff]
  %v455 = vld [vmem:[%s1 + $0xae8] sm:$0xff]
  %v456 = vld [vmem:[%s1 + $0xaf0] sm:$0xff]
  %v457 = vld [vmem:[%s1 + $0xaf8] sm:$0xff]
  %v458 = vld [vmem:[%s1 + $0xb00] sm:$0xff]
  %v459 = vld [vmem:[%s1 + $0xb08] sm:$0xff]
  %v460 = vld [vmem:[%s1 + $0xb10] sm:$0xff]
  %v461 = vld [vmem:[%s1 + $0xb18] sm:$0xff]
  %v462 = vld [vmem:[%s1 + $0xb20] sm:$0xff]
  %v463 = vld [vmem:[%s1 + $0xb28] sm:$0xff]
  %v464 = vld [vmem:[%s1 + $0xb30] sm:$0xff]
  %v465 = vld [vmem:[%s1 + $0xb38] sm:$0xff]
  %v466 = vld [vmem:[%s1 + $0xb40] sm:$0xff]
  %v467 = vld [vmem:[%s1 + $0xb48] sm:$0xff]
  %v468 = vld [vmem:[%s1 + $0xb50] sm:$0xff]
  %v469 = vld [vmem:[%s1 + $0xb58] sm:$0xff]
  %v470 = vld [vmem:[%s1 + $0xb60] sm:$0xff]
  %v471 = vld [vmem:[%s1 + $0xb68] sm:$0xff]
  %v472 = vld [vmem:[%s1 + $0xb70] sm:$0xff]
  %v473 = vld [vmem:[%s1 + $0xb78] sm:$0xff]
  %v474 = vld [vmem:[%s1 + $0xb80] sm:$0xff]
  %v475 = vld [vmem:[%s1 + $0xb88] sm:$0xff]
  %v476 = vld [vmem:[%s1 + $0xb90] sm:$0xff]
  %v477 = vld [vmem:[%s1 + $0xb98] sm:$0xff]
  %v478 = vld [vmem:[%s1 + $0xba0] sm:$0xff]
  %v479 = vld [vmem:[%s1 + $0xba8] sm:$0xff]
  %v480 = vld [vmem:[%s1 + $0xbb0] sm:$0xff]
  %v481 = vld [vmem:[%s1 + $0xbb8] sm:$0xff]
  %v482 = vld [vmem:[%s1 + $0xbc0] sm:$0xff]
  %v483 = vld [vmem:[%s1 + $0xbc8] sm:$0xff]
  %v484 = vld [vmem:[%s1 + $0xbd0] sm:$0xff]
  %v485 = vld [vmem:[%s1 + $0xbd8] sm:$0xff]
  %v486 = vld [vmem:[%s1 + $0xbe0] sm:$0xff]
  %v487 = vld [vmem:[%s1 + $0xbe8] sm:$0xff]
  %v488 = vld [vmem:[%s1 + $0xbf0] sm:$0xff]
  %v489 = vld [vmem:[%s1 + $0xbf8] sm:$0xff]
  %v490 = vld [vmem:[%s1 + $0xc00] sm:$0xff]
  %v491 = vld [vmem:[%s1 + $0xc08] sm:$0xff]
  %v492 = vld [vmem:[%s1 + $0xc10] sm:$0xff]
  %v493 = vld [vmem:[%s1 + $0xc18] sm:$0xff]
  %v494 = vld [vmem:[%s1 + $0xc20] sm:$0xff]
  %v495 = vld [vmem:[%s1 + $0xc28] sm:$0xff]
  %v496 = vld [vmem:[%s1 + $0xc30] sm:$0xff]
  %v497 = vld [vmem:[%s1 + $0xc38] sm:$0xff]
  %v498 = vld [vmem:[%s2] sm:$0xf]
  %v500 = vlaneseq
  %v501 = vshrl.u32 %v500, 7
  %v502 = vsub.s32 0, %v501
  %v503 = vrot.slane %v498, %v502
  %v504 = vlaneseq
  %v505 = vshrl.u32 %v504, 7
  %v506 = vsub.s32 1, %v505
  %v507 = vrot.slane %v498, %v506
  %v508 = vlaneseq
  %v509 = vshrl.u32 %v508, 7
  %v510 = vsub.s32 2, %v509
  %v511 = vrot.slane %v498, %v510
  %v512 = vlaneseq
  %v513 = vshrl.u32 %v512, 7
  %v514 = vsub.s32 3, %v513
  %v515 = vrot.slane %v498, %v514
  %v611 = vunpack.c.l.b16 %v15
  %v612 = vunpack.c.h.b16 %v15
  %v613 = vunpack.c.l.b16 %v16
  %v614 = vunpack.c.h.b16 %v16
  %v615 = vunpack.c.l.b16 %v17
  %v616 = vunpack.c.h.b16 %v17
  %v617 = vunpack.c.l.b16 %v18
  %v618 = vunpack.c.h.b16 %v18
  %v619 = vunpack.c.l.b16 %v19
  %v620 = vunpack.c.h.b16 %v19
  %v621 = vunpack.c.l.b16 %v20
  %v622 = vunpack.c.h.b16 %v20
  %v623 = vunpack.c.l.b16 %v21
  %v624 = vunpack.c.l.b16 %v22
  %v625 = vunpack.c.h.b16 %v22
  %v626 = vunpack.c.l.b16 %v23
  %v627 = vunpack.c.h.b16 %v23
  %v628 = vunpack.c.l.b16 %v24
  %v629 = vunpack.c.h.b16 %v24
  %v630 = vunpack.c.l.b16 %v25
  %v631 = vunpack.c.h.b16 %v25
  %v632 = vunpack.c.l.b16 %v26
  %v633 = vunpack.c.h.b16 %v26
  %v634 = vunpack.c.l.b16 %v27
  %v635 = vunpack.c.h.b16 %v27
  %v636 = vunpack.c.l.b16 %v28
  %v637 = vunpack.c.l.b16 %v29
  %v638 = vunpack.c.h.b16 %v29
  %v639 = vunpack.c.l.b16 %v30
  %v640 = vunpack.c.h.b16 %v30
  %v641 = vunpack.c.l.b16 %v31
  %v642 = vunpack.c.h.b16 %v31
  %v643 = vunpack.c.l.b16 %v32
  %v644 = vunpack.c.h.b16 %v32
  %v645 = vunpack.c.l.b16 %v33
  %v646 = vunpack.c.h.b16 %v33
  %v647 = vunpack.c.l.b16 %v34
  %v648 = vunpack.c.h.b16 %v34
  %v649 = vunpack.c.l.b16 %v35
  %v650 = vunpack.c.l.b16 %v36
  %v651 = vunpack.c.h.b16 %v36
  %v652 = vunpack.c.l.b16 %v37
  %v653 = vunpack.c.h.b16 %v37
  %v654 = vunpack.c.l.b16 %v38
  %v655 = vunpack.c.h.b16 %v38
  %v656 = vunpack.c.l.b16 %v39
  %v657 = vunpack.c.h.b16 %v39
  %v658 = vunpack.c.l.b16 %v40
  %v659 = vunpack.c.h.b16 %v40
  %v660 = vunpack.c.l.b16 %v41
  %v661 = vunpack.c.h.b16 %v41
  %v662 = vunpack.c.l.b16 %v42
  %v663 = vunpack.c.l.b16 %v43
  %v664 = vunpack.c.h.b16 %v43
  %v665 = vunpack.c.l.b16 %v44
  %v666 = vunpack.c.h.b16 %v44
  %v667 = vunpack.c.l.b16 %v45
  %v668 = vunpack.c.h.b16 %v45
  %v669 = vunpack.c.l.b16 %v46
  %v670 = vunpack.c.h.b16 %v46
  %v671 = vunpack.c.l.b16 %v47
  %v672 = vunpack.c.h.b16 %v47
  %v673 = vunpack.c.l.b16 %v48
  %v674 = vunpack.c.h.b16 %v48
  %v675 = vunpack.c.l.b16 %v49
  %v676 = vunpack.c.l.b16 %v50
  %v677 = vunpack.c.h.b16 %v50
  %v678 = vunpack.c.l.b16 %v51
  %v679 = vunpack.c.h.b16 %v51
  %v680 = vunpack.c.l.b16 %v52
  %v681 = vunpack.c.h.b16 %v52
  %v682 = vunpack.c.l.b16 %v53
  %v683 = vunpack.c.h.b16 %v53
  %v684 = vunpack.c.l.b16 %v54
  %v685 = vunpack.c.h.b16 %v54
  %v686 = vunpack.c.l.b16 %v55
  %v687 = vunpack.c.h.b16 %v55
  %v688 = vunpack.c.l.b16 %v56
  %v689 = vunpack.c.l.b16 %v57
  %v690 = vunpack.c.h.b16 %v57
  %v691 = vunpack.c.l.b16 %v58
  %v692 = vunpack.c.h.b16 %v58
  %v693 = vunpack.c.l.b16 %v59
  %v694 = vunpack.c.h.b16 %v59
  %v695 = vunpack.c.l.b16 %v60
  %v696 = vunpack.c.h.b16 %v60
  %v697 = vunpack.c.l.b16 %v61
  %v698 = vunpack.c.h.b16 %v61
  %v699 = vunpack.c.l.b16 %v62
  %v700 = vunpack.c.h.b16 %v62
  %v701 = vunpack.c.l.b16 %v63
  %v702 = vunpack.c.l.b16 %v64
  %v703 = vunpack.c.h.b16 %v64
  %v704 = vunpack.c.l.b16 %v65
  %v705 = vunpack.c.h.b16 %v65
  %v706 = vunpack.c.l.b16 %v66
  %v707 = vunpack.c.h.b16 %v66
  %v708 = vunpack.c.l.b16 %v67
  %v709 = vunpack.c.h.b16 %v67
  %v710 = vunpack.c.l.b16 %v68
  %v711 = vunpack.c.h.b16 %v68
  %v712 = vunpack.c.l.b16 %v69
  %v713 = vunpack.c.h.b16 %v69
  %v714 = vunpack.c.l.b16 %v70
  %v715 = vunpack.c.l.b16 %v71
  %v716 = vunpack.c.h.b16 %v71
  %v717 = vunpack.c.l.b16 %v72
  %v718 = vunpack.c.h.b16 %v72
  %v719 = vunpack.c.l.b16 %v73
  %v720 = vunpack.c.h.b16 %v73
  %v721 = vunpack.c.l.b16 %v74
  %v722 = vunpack.c.h.b16 %v74
  %v723 = vunpack.c.l.b16 %v75
  %v724 = vunpack.c.h.b16 %v75
  %v725 = vunpack.c.l.b16 %v76
  %v726 = vunpack.c.h.b16 %v76
  %v727 = vunpack.c.l.b16 %v77
  %v728 = vunpack.c.l.b16 %v78
  %v729 = vunpack.c.h.b16 %v78
  %v730 = vunpack.c.l.b16 %v79
  %v731 = vunpack.c.h.b16 %v79
  %v732 = vunpack.c.l.b16 %v80
  %v733 = vunpack.c.h.b16 %v80
  %v734 = vunpack.c.l.b16 %v81
  %v735 = vunpack.c.h.b16 %v81
  %v736 = vunpack.c.l.b16 %v82
  %v737 = vunpack.c.h.b16 %v82
  %v738 = vunpack.c.l.b16 %v83
  %v739 = vunpack.c.h.b16 %v83
  %v740 = vunpack.c.l.b16 %v84
  %v741 = vunpack.c.l.b16 %v85
  %v742 = vunpack.c.h.b16 %v85
  %v743 = vunpack.c.l.b16 %v86
  %v744 = vunpack.c.h.b16 %v86
  %v745 = vunpack.c.l.b16 %v87
  %v746 = vunpack.c.h.b16 %v87
  %v747 = vunpack.c.l.b16 %v88
  %v748 = vunpack.c.h.b16 %v88
  %v749 = vunpack.c.l.b16 %v89
  %v750 = vunpack.c.h.b16 %v89
  %v751 = vunpack.c.l.b16 %v90
  %v752 = vunpack.c.h.b16 %v90
  %v753 = vunpack.c.l.b16 %v91
  %v754 = vunpack.c.l.b16 %v92
  %v755 = vunpack.c.h.b16 %v92
  %v756 = vunpack.c.l.b16 %v93
  %v757 = vunpack.c.h.b16 %v93
  %v758 = vunpack.c.l.b16 %v94
  %v759 = vunpack.c.h.b16 %v94
  %v760 = vunpack.c.l.b16 %v95
  %v761 = vunpack.c.h.b16 %v95
  %v762 = vunpack.c.l.b16 %v96
  %v763 = vunpack.c.h.b16 %v96
  %v764 = vunpack.c.l.b16 %v97
  %v765 = vunpack.c.h.b16 %v97
  %v766 = vunpack.c.l.b16 %v98
  %v767 = vunpack.c.l.b16 %v99
  %v768 = vunpack.c.h.b16 %v99
  %v769 = vunpack.c.l.b16 %v100
  %v770 = vunpack.c.h.b16 %v100
  %v771 = vunpack.c.l.b16 %v101
  %v772 = vunpack.c.h.b16 %v101
  %v773 = vunpack.c.l.b16 %v102
  %v774 = vunpack.c.h.b16 %v102
  %v775 = vunpack.c.l.b16 %v103
  %v776 = vunpack.c.h.b16 %v103
  %v777 = vunpack.c.l.b16 %v104
  %v778 = vunpack.c.h.b16 %v104
  %v779 = vunpack.c.l.b16 %v105
  %v780 = vpack.c.b16 %v624, %v611
  %v781 = vpack.c.b16 %v625, %v612
  %v782 = vpack.c.b16 %v626, %v613
  %v783 = vpack.c.b16 %v627, %v614
  %v784 = vpack.c.b16 %v628, %v615
  %v785 = vpack.c.b16 %v629, %v616
  %v786 = vpack.c.b16 %v630, %v617
  %v787 = vpack.c.b16 %v631, %v618
  %v788 = vpack.c.b16 %v632, %v619
  %v789 = vpack.c.b16 %v633, %v620
  %v790 = vpack.c.b16 %v634, %v621
  %v791 = vpack.c.b16 %v635, %v622
  %v792 = vpack.c.b16 %v636, %v623
  %v793 = vpack.c.b16 %v650, %v637
  %v794 = vpack.c.b16 %v651, %v638
  %v795 = vpack.c.b16 %v652, %v639
  %v796 = vpack.c.b16 %v653, %v640
  %v797 = vpack.c.b16 %v654, %v641
  %v798 = vpack.c.b16 %v655, %v642
  %v799 = vpack.c.b16 %v656, %v643
  %v800 = vpack.c.b16 %v657, %v644
  %v801 = vpack.c.b16 %v658, %v645
  %v802 = vpack.c.b16 %v659, %v646
  %v803 = vpack.c.b16 %v660, %v647
  %v804 = vpack.c.b16 %v661, %v648
  %v805 = vpack.c.b16 %v662, %v649
  %v806 = vpack.c.b16 %v676, %v663
  %v807 = vpack.c.b16 %v677, %v664
  %v808 = vpack.c.b16 %v678, %v665
  %v809 = vpack.c.b16 %v679, %v666
  %v810 = vpack.c.b16 %v680, %v667
  %v811 = vpack.c.b16 %v681, %v668
  %v812 = vpack.c.b16 %v682, %v669
  %v813 = vpack.c.b16 %v683, %v670
  %v814 = vpack.c.b16 %v684, %v671
  %v815 = vpack.c.b16 %v685, %v672
  %v816 = vpack.c.b16 %v686, %v673
  %v817 = vpack.c.b16 %v687, %v674
  %v818 = vpack.c.b16 %v688, %v675
  %v819 = vpack.c.b16 %v702, %v689
  %v820 = vpack.c.b16 %v703, %v690
  %v821 = vpack.c.b16 %v704, %v691
  %v822 = vpack.c.b16 %v705, %v692
  %v823 = vpack.c.b16 %v706, %v693
  %v824 = vpack.c.b16 %v707, %v694
  %v825 = vpack.c.b16 %v708, %v695
  %v826 = vpack.c.b16 %v709, %v696
  %v827 = vpack.c.b16 %v710, %v697
  %v828 = vpack.c.b16 %v711, %v698
  %v829 = vpack.c.b16 %v712, %v699
  %v830 = vpack.c.b16 %v713, %v700
  %v831 = vpack.c.b16 %v714, %v701
  %v832 = vpack.c.b16 %v728, %v715
  %v833 = vpack.c.b16 %v729, %v716
  %v834 = vpack.c.b16 %v730, %v717
  %v835 = vpack.c.b16 %v731, %v718
  %v836 = vpack.c.b16 %v732, %v719
  %v837 = vpack.c.b16 %v733, %v720
  %v838 = vpack.c.b16 %v734, %v721
  %v839 = vpack.c.b16 %v735, %v722
  %v840 = vpack.c.b16 %v736, %v723
  %v841 = vpack.c.b16 %v737, %v724
  %v842 = vpack.c.b16 %v738, %v725
  %v843 = vpack.c.b16 %v739, %v726
  %v844 = vpack.c.b16 %v740, %v727
  %v845 = vpack.c.b16 %v754, %v741
  %v846 = vpack.c.b16 %v755, %v742
  %v847 = vpack.c.b16 %v756, %v743
  %v848 = vpack.c.b16 %v757, %v744
  %v849 = vpack.c.b16 %v758, %v745
  %v850 = vpack.c.b16 %v759, %v746
  %v851 = vpack.c.b16 %v760, %v747
  %v852 = vpack.c.b16 %v761, %v748
  %v853 = vpack.c.b16 %v762, %v749
  %v854 = vpack.c.b16 %v763, %v750
  %v855 = vpack.c.b16 %v764, %v751
  %v856 = vpack.c.b16 %v765, %v752
  %v857 = vpack.c.b16 %v766, %v753
  %v858 = vpack.c.b16 %v767, %v767
  %v859 = vpack.c.b16 %v768, %v768
  %v860 = vpack.c.b16 %v769, %v769
  %v861 = vpack.c.b16 %v770, %v770
  %v862 = vpack.c.b16 %v771, %v771
  %v863 = vpack.c.b16 %v772, %v772
  %v864 = vpack.c.b16 %v773, %v773
  %v865 = vpack.c.b16 %v774, %v774
  %v866 = vpack.c.b16 %v775, %v775
  %v867 = vpack.c.b16 %v776, %v776
  %v868 = vpack.c.b16 %v777, %v777
  %v869 = vpack.c.b16 %v778, %v778
  %v870 = vpack.c.b16 %v779, %v779
  %v1347 = vunpack.c.l.b16 %v106
  %v1348 = vunpack.c.h.b16 %v106
  %v1349 = vunpack.c.l.b16 %v107
  %v1350 = vunpack.c.h.b16 %v107
  %v1351 = vunpack.c.l.b16 %v108
  %v1352 = vunpack.c.h.b16 %v108
  %v1353 = vunpack.c.l.b16 %v109
  %v1354 = vunpack.c.h.b16 %v109
  %v1355 = vunpack.c.l.b16 %v110
  %v1356 = vunpack.c.h.b16 %v110
  %v1357 = vunpack.c.l.b16 %v111
  %v1358 = vunpack.c.h.b16 %v111
  %v1359 = vunpack.c.l.b16 %v112
  %v1360 = vunpack.c.h.b16 %v112
  %v1361 = vunpack.c.l.b16 %v113
  %v1362 = vunpack.c.h.b16 %v113
  %v1363 = vunpack.c.l.b16 %v114
  %v1364 = vunpack.c.h.b16 %v114
  %v1365 = vunpack.c.l.b16 %v115
  %v1366 = vunpack.c.h.b16 %v115
  %v1367 = vunpack.c.l.b16 %v116
  %v1368 = vunpack.c.h.b16 %v116
  %v1369 = vunpack.c.l.b16 %v117
  %v1370 = vunpack.c.h.b16 %v117
  %v1371 = vunpack.c.l.b16 %v118
  %v1372 = vunpack.c.h.b16 %v118
  %v1373 = vunpack.c.l.b16 %v119
  %v1374 = vunpack.c.h.b16 %v119
  %v1375 = vunpack.c.l.b16 %v120
  %v1376 = vunpack.c.h.b16 %v120
  %v1377 = vunpack.c.l.b16 %v121
  %v1378 = vunpack.c.h.b16 %v121
  %v1379 = vunpack.c.l.b16 %v122
  %v1380 = vunpack.c.h.b16 %v122
  %v1381 = vunpack.c.l.b16 %v123
  %v1382 = vunpack.c.h.b16 %v123
  %v1383 = vunpack.c.l.b16 %v124
  %v1384 = vunpack.c.h.b16 %v124
  %v1385 = vunpack.c.l.b16 %v125
  %v1386 = vunpack.c.h.b16 %v125
  %v1387 = vunpack.c.l.b16 %v126
  %v1388 = vunpack.c.h.b16 %v126
  %v1389 = vunpack.c.l.b16 %v127
  %v1390 = vunpack.c.h.b16 %v127
  %v1391 = vunpack.c.l.b16 %v128
  %v1392 = vunpack.c.h.b16 %v128
  %v1393 = vunpack.c.l.b16 %v129
  %v1394 = vunpack.c.h.b16 %v129
  %v1395 = vunpack.c.l.b16 %v130
  %v1396 = vunpack.c.h.b16 %v130
  %v1397 = vunpack.c.l.b16 %v131
  %v1398 = vunpack.c.h.b16 %v131
  %v1399 = vunpack.c.l.b16 %v132
  %v1400 = vunpack.c.h.b16 %v132
  %v1401 = vunpack.c.l.b16 %v133
  %v1402 = vunpack.c.h.b16 %v133
  %v1403 = vunpack.c.l.b16 %v134
  %v1404 = vunpack.c.h.b16 %v134
  %v1405 = vunpack.c.l.b16 %v135
  %v1406 = vunpack.c.h.b16 %v135
  %v1407 = vunpack.c.l.b16 %v136
  %v1408 = vunpack.c.h.b16 %v136
  %v1409 = vunpack.c.l.b16 %v137
  %v1410 = vunpack.c.h.b16 %v137
  %v1411 = vunpack.c.l.b16 %v138
  %v1412 = vunpack.c.h.b16 %v138
  %v1413 = vunpack.c.l.b16 %v139
  %v1414 = vunpack.c.h.b16 %v139
  %v1415 = vunpack.c.l.b16 %v140
  %v1416 = vunpack.c.h.b16 %v140
  %v1417 = vunpack.c.l.b16 %v141
  %v1418 = vunpack.c.h.b16 %v141
  %v1419 = vunpack.c.l.b16 %v142
  %v1420 = vunpack.c.h.b16 %v142
  %v1421 = vunpack.c.l.b16 %v143
  %v1422 = vunpack.c.h.b16 %v143
  %v1423 = vunpack.c.l.b16 %v144
  %v1424 = vunpack.c.h.b16 %v144
  %v1425 = vunpack.c.l.b16 %v145
  %v1426 = vunpack.c.h.b16 %v145
  %v1427 = vunpack.c.l.b16 %v146
  %v1428 = vunpack.c.h.b16 %v146
  %v1429 = vunpack.c.l.b16 %v147
  %v1430 = vunpack.c.h.b16 %v147
  %v1431 = vunpack.c.l.b16 %v148
  %v1432 = vunpack.c.h.b16 %v148
  %v1433 = vunpack.c.l.b16 %v149
  %v1434 = vunpack.c.h.b16 %v149
  %v1435 = vunpack.c.l.b16 %v150
  %v1436 = vunpack.c.h.b16 %v150
  %v1437 = vunpack.c.l.b16 %v151
  %v1438 = vunpack.c.h.b16 %v151
  %v1439 = vunpack.c.l.b16 %v152
  %v1440 = vunpack.c.h.b16 %v152
  %v1441 = vunpack.c.l.b16 %v153
  %v1442 = vunpack.c.h.b16 %v153
  %v1443 = vunpack.c.l.b16 %v154
  %v1444 = vunpack.c.h.b16 %v154
  %v1445 = vunpack.c.l.b16 %v155
  %v1446 = vunpack.c.h.b16 %v155
  %v1447 = vunpack.c.l.b16 %v156
  %v1448 = vunpack.c.h.b16 %v156
  %v1449 = vunpack.c.l.b16 %v157
  %v1450 = vunpack.c.h.b16 %v157
  %v1451 = vunpack.c.l.b16 %v158
  %v1452 = vunpack.c.h.b16 %v158
  %v1453 = vunpack.c.l.b16 %v159
  %v1454 = vunpack.c.h.b16 %v159
  %v1455 = vunpack.c.l.b16 %v160
  %v1456 = vunpack.c.h.b16 %v160
  %v1457 = vunpack.c.l.b16 %v161
  %v1458 = vunpack.c.h.b16 %v161
  %v1459 = vunpack.c.l.b16 %v162
  %v1460 = vunpack.c.h.b16 %v162
  %v1461 = vunpack.c.l.b16 %v163
  %v1462 = vunpack.c.h.b16 %v163
  %v1463 = vunpack.c.l.b16 %v164
  %v1464 = vunpack.c.h.b16 %v164
  %v1465 = vunpack.c.l.b16 %v165
  %v1466 = vunpack.c.h.b16 %v165
  %v1467 = vunpack.c.l.b16 %v166
  %v1468 = vunpack.c.h.b16 %v166
  %v1469 = vunpack.c.l.b16 %v167
  %v1470 = vunpack.c.h.b16 %v167
  %v1471 = vunpack.c.l.b16 %v168
  %v1472 = vunpack.c.h.b16 %v168
  %v1473 = vunpack.c.l.b16 %v169
  %v1474 = vunpack.c.h.b16 %v169
  %v1475 = vunpack.c.l.b16 %v170
  %v1476 = vunpack.c.h.b16 %v170
  %v1477 = vunpack.c.l.b16 %v171
  %v1478 = vunpack.c.h.b16 %v171
  %v1479 = vunpack.c.l.b16 %v172
  %v1480 = vunpack.c.h.b16 %v172
  %v1481 = vunpack.c.l.b16 %v173
  %v1482 = vunpack.c.h.b16 %v173
  %v1483 = vunpack.c.l.b16 %v174
  %v1484 = vunpack.c.h.b16 %v174
  %v1485 = vunpack.c.l.b16 %v175
  %v1486 = vunpack.c.h.b16 %v175
  %v1487 = vunpack.c.l.b16 %v176
  %v1488 = vunpack.c.h.b16 %v176
  %v1489 = vunpack.c.l.b16 %v177
  %v1490 = vunpack.c.h.b16 %v177
  %v1491 = vunpack.c.l.b16 %v178
  %v1492 = vunpack.c.h.b16 %v178
  %v1493 = vunpack.c.l.b16 %v179
  %v1494 = vunpack.c.h.b16 %v179
  %v1495 = vunpack.c.l.b16 %v180
  %v1496 = vunpack.c.h.b16 %v180
  %v1497 = vunpack.c.l.b16 %v181
  %v1498 = vunpack.c.h.b16 %v181
  %v1499 = vunpack.c.l.b16 %v182
  %v1500 = vunpack.c.h.b16 %v182
  %v1501 = vunpack.c.l.b16 %v183
  %v1502 = vunpack.c.h.b16 %v183
  %v1503 = vunpack.c.l.b16 %v184
  %v1504 = vunpack.c.h.b16 %v184
  %v1505 = vunpack.c.l.b16 %v185
  %v1506 = vunpack.c.h.b16 %v185
  %v1507 = vunpack.c.l.b16 %v186
  %v1508 = vunpack.c.h.b16 %v186
  %v1509 = vunpack.c.l.b16 %v187
  %v1510 = vunpack.c.h.b16 %v187
  %v1511 = vunpack.c.l.b16 %v188
  %v1512 = vunpack.c.h.b16 %v188
  %v1513 = vunpack.c.l.b16 %v189
  %v1514 = vunpack.c.h.b16 %v189
  %v1515 = vunpack.c.l.b16 %v190
  %v1516 = vunpack.c.h.b16 %v190
  %v1517 = vunpack.c.l.b16 %v191
  %v1518 = vunpack.c.h.b16 %v191
  %v1519 = vunpack.c.l.b16 %v192
  %v1520 = vunpack.c.h.b16 %v192
  %v1521 = vunpack.c.l.b16 %v193
  %v1522 = vunpack.c.h.b16 %v193
  %v1523 = vunpack.c.l.b16 %v194
  %v1524 = vunpack.c.h.b16 %v194
  %v1525 = vunpack.c.l.b16 %v195
  %v1526 = vunpack.c.h.b16 %v195
  %v1527 = vunpack.c.l.b16 %v196
  %v1528 = vunpack.c.h.b16 %v196
  %v1529 = vunpack.c.l.b16 %v197
  %v1530 = vunpack.c.h.b16 %v197
  %v1531 = vunpack.c.l.b16 %v198
  %v1532 = vunpack.c.h.b16 %v198
  %v1533 = vunpack.c.l.b16 %v199
  %v1534 = vunpack.c.h.b16 %v199
  %v1535 = vunpack.c.l.b16 %v200
  %v1536 = vunpack.c.h.b16 %v200
  %v1537 = vunpack.c.l.b16 %v201
  %v1538 = vunpack.c.h.b16 %v201
  %v1539 = vunpack.c.l.b16 %v202
  %v1540 = vunpack.c.h.b16 %v202
  %v1541 = vunpack.c.l.b16 %v203
  %v1542 = vunpack.c.h.b16 %v203
  %v1543 = vunpack.c.l.b16 %v204
  %v1544 = vunpack.c.h.b16 %v204
  %v1545 = vunpack.c.l.b16 %v205
  %v1546 = vunpack.c.h.b16 %v205
  %v1547 = vunpack.c.l.b16 %v206
  %v1548 = vunpack.c.h.b16 %v206
  %v1549 = vunpack.c.l.b16 %v207
  %v1550 = vunpack.c.h.b16 %v207
  %v1551 = vunpack.c.l.b16 %v208
  %v1552 = vunpack.c.h.b16 %v208
  %v1553 = vunpack.c.l.b16 %v209
  %v1554 = vunpack.c.h.b16 %v209
  %v1555 = vunpack.c.l.b16 %v210
  %v1556 = vunpack.c.h.b16 %v210
  %v1557 = vunpack.c.l.b16 %v211
  %v1558 = vunpack.c.h.b16 %v211
  %v1559 = vunpack.c.l.b16 %v212
  %v1560 = vunpack.c.h.b16 %v212
  %v1561 = vunpack.c.l.b16 %v213
  %v1562 = vunpack.c.h.b16 %v213
  %v1563 = vunpack.c.l.b16 %v214
  %v1564 = vunpack.c.h.b16 %v214
  %v1565 = vunpack.c.l.b16 %v215
  %v1566 = vunpack.c.h.b16 %v215
  %v1567 = vunpack.c.l.b16 %v216
  %v1568 = vunpack.c.h.b16 %v216
  %v1569 = vunpack.c.l.b16 %v217
  %v1570 = vunpack.c.h.b16 %v217
  %v1571 = vunpack.c.l.b16 %v218
  %v1572 = vunpack.c.h.b16 %v218
  %v1573 = vunpack.c.l.b16 %v219
  %v1574 = vunpack.c.h.b16 %v219
  %v1575 = vunpack.c.l.b16 %v220
  %v1576 = vunpack.c.h.b16 %v220
  %v1577 = vunpack.c.l.b16 %v221
  %v1578 = vunpack.c.h.b16 %v221
  %v1579 = vunpack.c.l.b16 %v222
  %v1580 = vunpack.c.h.b16 %v222
  %v1581 = vunpack.c.l.b16 %v223
  %v1582 = vunpack.c.h.b16 %v223
  %v1583 = vunpack.c.l.b16 %v224
  %v1584 = vunpack.c.h.b16 %v224
  %v1585 = vunpack.c.l.b16 %v225
  %v1586 = vunpack.c.h.b16 %v225
  %v1587 = vunpack.c.l.b16 %v226
  %v1588 = vunpack.c.h.b16 %v226
  %v1589 = vunpack.c.l.b16 %v227
  %v1590 = vunpack.c.h.b16 %v227
  %v1591 = vunpack.c.l.b16 %v228
  %v1592 = vunpack.c.h.b16 %v228
  %v1593 = vunpack.c.l.b16 %v229
  %v1594 = vunpack.c.h.b16 %v229
  %v1595 = vunpack.c.l.b16 %v230
  %v1596 = vunpack.c.h.b16 %v230
  %v1597 = vunpack.c.l.b16 %v231
  %v1598 = vunpack.c.h.b16 %v231
  %v1599 = vunpack.c.l.b16 %v232
  %v1600 = vunpack.c.h.b16 %v232
  %v1601 = vunpack.c.l.b16 %v233
  %v1602 = vunpack.c.h.b16 %v233
  %v1603 = vunpack.c.l.b16 %v234
  %v1604 = vunpack.c.h.b16 %v234
  %v1605 = vunpack.c.l.b16 %v235
  %v1606 = vunpack.c.h.b16 %v235
  %v1607 = vunpack.c.l.b16 %v236
  %v1608 = vunpack.c.h.b16 %v236
  %v1609 = vunpack.c.l.b16 %v237
  %v1610 = vunpack.c.h.b16 %v237
  %v1611 = vunpack.c.l.b16 %v238
  %v1612 = vunpack.c.h.b16 %v238
  %v1613 = vunpack.c.l.b16 %v239
  %v1614 = vunpack.c.h.b16 %v239
  %v1615 = vunpack.c.l.b16 %v240
  %v1616 = vunpack.c.h.b16 %v240
  %v1617 = vunpack.c.l.b16 %v241
  %v1618 = vunpack.c.h.b16 %v241
  %v1619 = vunpack.c.l.b16 %v242
  %v1620 = vunpack.c.h.b16 %v242
  %v1621 = vunpack.c.l.b16 %v243
  %v1622 = vunpack.c.h.b16 %v243
  %v1623 = vunpack.c.l.b16 %v244
  %v1624 = vunpack.c.h.b16 %v244
  %v1625 = vunpack.c.l.b16 %v245
  %v1626 = vunpack.c.h.b16 %v245
  %v1627 = vunpack.c.l.b16 %v246
  %v1628 = vunpack.c.h.b16 %v246
  %v1629 = vunpack.c.l.b16 %v247
  %v1630 = vunpack.c.h.b16 %v247
  %v1631 = vunpack.c.l.b16 %v248
  %v1632 = vunpack.c.h.b16 %v248
  %v1633 = vunpack.c.l.b16 %v249
  %v1634 = vunpack.c.h.b16 %v249
  %v1635 = vunpack.c.l.b16 %v250
  %v1636 = vunpack.c.h.b16 %v250
  %v1637 = vunpack.c.l.b16 %v251
  %v1638 = vunpack.c.h.b16 %v251
  %v1639 = vunpack.c.l.b16 %v252
  %v1640 = vunpack.c.h.b16 %v252
  %v1641 = vunpack.c.l.b16 %v253
  %v1642 = vunpack.c.h.b16 %v253
  %v1643 = vunpack.c.l.b16 %v254
  %v1644 = vunpack.c.h.b16 %v254
  %v1645 = vunpack.c.l.b16 %v255
  %v1646 = vunpack.c.h.b16 %v255
  %v1647 = vunpack.c.l.b16 %v256
  %v1648 = vunpack.c.h.b16 %v256
  %v1649 = vunpack.c.l.b16 %v257
  %v1650 = vunpack.c.h.b16 %v257
  %v1651 = vunpack.c.l.b16 %v258
  %v1652 = vunpack.c.h.b16 %v258
  %v1653 = vunpack.c.l.b16 %v259
  %v1654 = vunpack.c.h.b16 %v259
  %v1655 = vunpack.c.l.b16 %v260
  %v1656 = vunpack.c.h.b16 %v260
  %v1657 = vunpack.c.l.b16 %v261
  %v1658 = vunpack.c.h.b16 %v261
  %v1659 = vunpack.c.l.b16 %v262
  %v1660 = vunpack.c.h.b16 %v262
  %v1661 = vunpack.c.l.b16 %v263
  %v1662 = vunpack.c.h.b16 %v263
  %v1663 = vunpack.c.l.b16 %v264
  %v1664 = vunpack.c.h.b16 %v264
  %v1665 = vunpack.c.l.b16 %v265
  %v1666 = vunpack.c.h.b16 %v265
  %v1667 = vunpack.c.l.b16 %v266
  %v1668 = vunpack.c.h.b16 %v266
  %v1669 = vunpack.c.l.b16 %v267
  %v1670 = vunpack.c.h.b16 %v267
  %v1671 = vunpack.c.l.b16 %v268
  %v1672 = vunpack.c.h.b16 %v268
  %v1673 = vunpack.c.l.b16 %v269
  %v1674 = vunpack.c.h.b16 %v269
  %v1675 = vunpack.c.l.b16 %v270
  %v1676 = vunpack.c.h.b16 %v270
  %v1677 = vunpack.c.l.b16 %v271
  %v1678 = vunpack.c.h.b16 %v271
  %v1679 = vunpack.c.l.b16 %v272
  %v1680 = vunpack.c.h.b16 %v272
  %v1681 = vunpack.c.l.b16 %v273
  %v1682 = vunpack.c.h.b16 %v273
  %v1683 = vunpack.c.l.b16 %v274
  %v1684 = vunpack.c.h.b16 %v274
  %v1685 = vunpack.c.l.b16 %v275
  %v1686 = vunpack.c.h.b16 %v275
  %v1687 = vunpack.c.l.b16 %v276
  %v1688 = vunpack.c.h.b16 %v276
  %v1689 = vunpack.c.l.b16 %v277
  %v1690 = vunpack.c.h.b16 %v277
  %v1691 = vunpack.c.l.b16 %v278
  %v1692 = vunpack.c.h.b16 %v278
  %v1693 = vunpack.c.l.b16 %v279
  %v1694 = vunpack.c.h.b16 %v279
  %v1695 = vunpack.c.l.b16 %v280
  %v1696 = vunpack.c.h.b16 %v280
  %v1697 = vunpack.c.l.b16 %v281
  %v1698 = vunpack.c.h.b16 %v281
  %v1699 = vunpack.c.l.b16 %v282
  %v1700 = vunpack.c.h.b16 %v282
  %v1701 = vunpack.c.l.b16 %v283
  %v1702 = vunpack.c.h.b16 %v283
  %v1703 = vunpack.c.l.b16 %v284
  %v1704 = vunpack.c.h.b16 %v284
  %v1705 = vunpack.c.l.b16 %v285
  %v1706 = vunpack.c.h.b16 %v285
  %v1707 = vunpack.c.l.b16 %v286
  %v1708 = vunpack.c.h.b16 %v286
  %v1709 = vunpack.c.l.b16 %v287
  %v1710 = vunpack.c.h.b16 %v287
  %v1711 = vunpack.c.l.b16 %v288
  %v1712 = vunpack.c.h.b16 %v288
  %v1713 = vunpack.c.l.b16 %v289
  %v1714 = vunpack.c.h.b16 %v289
  %v1715 = vunpack.c.l.b16 %v290
  %v1716 = vunpack.c.h.b16 %v290
  %v1717 = vunpack.c.l.b16 %v291
  %v1718 = vunpack.c.h.b16 %v291
  %v1719 = vunpack.c.l.b16 %v292
  %v1720 = vunpack.c.h.b16 %v292
  %v1721 = vunpack.c.l.b16 %v293
  %v1722 = vunpack.c.h.b16 %v293
  %v1723 = vunpack.c.l.b16 %v294
  %v1724 = vunpack.c.h.b16 %v294
  %v1725 = vunpack.c.l.b16 %v295
  %v1726 = vunpack.c.h.b16 %v295
  %v1727 = vunpack.c.l.b16 %v296
  %v1728 = vunpack.c.h.b16 %v296
  %v1729 = vunpack.c.l.b16 %v297
  %v1730 = vunpack.c.h.b16 %v297
  %v1731 = vunpack.c.l.b16 %v298
  %v1732 = vunpack.c.h.b16 %v298
  %v1733 = vunpack.c.l.b16 %v299
  %v1734 = vunpack.c.h.b16 %v299
  %v1735 = vunpack.c.l.b16 %v300
  %v1736 = vunpack.c.h.b16 %v300
  %v1737 = vunpack.c.l.b16 %v301
  %v1738 = vunpack.c.h.b16 %v301
  %v1739 = vunpack.c.l.b16 %v302
  %v1740 = vunpack.c.h.b16 %v302
  %v1741 = vunpack.c.l.b16 %v303
  %v1742 = vunpack.c.h.b16 %v303
  %v1743 = vunpack.c.l.b16 %v304
  %v1744 = vunpack.c.h.b16 %v304
  %v1745 = vunpack.c.l.b16 %v305
  %v1746 = vunpack.c.h.b16 %v305
  %v1747 = vunpack.c.l.b16 %v306
  %v1748 = vunpack.c.h.b16 %v306
  %v1749 = vunpack.c.l.b16 %v307
  %v1750 = vunpack.c.h.b16 %v307
  %v1751 = vunpack.c.l.b16 %v308
  %v1752 = vunpack.c.h.b16 %v308
  %v1753 = vunpack.c.l.b16 %v309
  %v1754 = vunpack.c.h.b16 %v309
  %v1755 = vunpack.c.l.b16 %v310
  %v1756 = vunpack.c.h.b16 %v310
  %v1757 = vunpack.c.l.b16 %v311
  %v1758 = vunpack.c.h.b16 %v311
  %v1759 = vunpack.c.l.b16 %v312
  %v1760 = vunpack.c.h.b16 %v312
  %v1761 = vunpack.c.l.b16 %v313
  %v1762 = vunpack.c.h.b16 %v313
  %v1763 = vunpack.c.l.b16 %v314
  %v1764 = vunpack.c.h.b16 %v314
  %v1765 = vunpack.c.l.b16 %v315
  %v1766 = vunpack.c.h.b16 %v315
  %v1767 = vunpack.c.l.b16 %v316
  %v1768 = vunpack.c.h.b16 %v316
  %v1769 = vunpack.c.l.b16 %v317
  %v1770 = vunpack.c.h.b16 %v317
  %v1771 = vunpack.c.l.b16 %v318
  %v1772 = vunpack.c.h.b16 %v318
  %v1773 = vunpack.c.l.b16 %v319
  %v1774 = vunpack.c.h.b16 %v319
  %v1775 = vunpack.c.l.b16 %v320
  %v1776 = vunpack.c.h.b16 %v320
  %v1777 = vunpack.c.l.b16 %v321
  %v1778 = vunpack.c.h.b16 %v321
  %v1779 = vunpack.c.l.b16 %v322
  %v1780 = vunpack.c.h.b16 %v322
  %v1781 = vunpack.c.l.b16 %v323
  %v1782 = vunpack.c.h.b16 %v323
  %v1783 = vunpack.c.l.b16 %v324
  %v1784 = vunpack.c.h.b16 %v324
  %v1785 = vunpack.c.l.b16 %v325
  %v1786 = vunpack.c.h.b16 %v325
  %v1787 = vunpack.c.l.b16 %v326
  %v1788 = vunpack.c.h.b16 %v326
  %v1789 = vunpack.c.l.b16 %v327
  %v1790 = vunpack.c.h.b16 %v327
  %v1791 = vunpack.c.l.b16 %v328
  %v1792 = vunpack.c.h.b16 %v328
  %v1793 = vunpack.c.l.b16 %v329
  %v1794 = vunpack.c.h.b16 %v329
  %v1795 = vunpack.c.l.b16 %v330
  %v1796 = vunpack.c.h.b16 %v330
  %v1797 = vunpack.c.l.b16 %v331
  %v1798 = vunpack.c.h.b16 %v331
  %v1799 = vunpack.c.l.b16 %v332
  %v1800 = vunpack.c.h.b16 %v332
  %v1801 = vunpack.c.l.b16 %v333
  %v1802 = vunpack.c.h.b16 %v333
  %v1803 = vunpack.c.l.b16 %v334
  %v1804 = vunpack.c.h.b16 %v334
  %v1805 = vunpack.c.l.b16 %v335
  %v1806 = vunpack.c.h.b16 %v335
  %v1807 = vunpack.c.l.b16 %v336
  %v1808 = vunpack.c.h.b16 %v336
  %v1809 = vunpack.c.l.b16 %v337
  %v1810 = vunpack.c.h.b16 %v337
  %v1811 = vunpack.c.l.b16 %v338
  %v1812 = vunpack.c.h.b16 %v338
  %v1813 = vunpack.c.l.b16 %v339
  %v1814 = vunpack.c.h.b16 %v339
  %v1815 = vunpack.c.l.b16 %v340
  %v1816 = vunpack.c.h.b16 %v340
  %v1817 = vunpack.c.l.b16 %v341
  %v1818 = vunpack.c.h.b16 %v341
  %v1819 = vunpack.c.l.b16 %v342
  %v1820 = vunpack.c.h.b16 %v342
  %v1821 = vunpack.c.l.b16 %v343
  %v1822 = vunpack.c.h.b16 %v343
  %v1823 = vunpack.c.l.b16 %v344
  %v1824 = vunpack.c.h.b16 %v344
  %v1825 = vunpack.c.l.b16 %v345
  %v1826 = vunpack.c.h.b16 %v345
  %v1827 = vunpack.c.l.b16 %v346
  %v1828 = vunpack.c.h.b16 %v346
  %v1829 = vunpack.c.l.b16 %v347
  %v1830 = vunpack.c.h.b16 %v347
  %v1831 = vunpack.c.l.b16 %v348
  %v1832 = vunpack.c.h.b16 %v348
  %v1833 = vunpack.c.l.b16 %v349
  %v1834 = vunpack.c.h.b16 %v349
  %v1835 = vunpack.c.l.b16 %v350
  %v1836 = vunpack.c.h.b16 %v350
  %v1837 = vunpack.c.l.b16 %v351
  %v1838 = vunpack.c.h.b16 %v351
  %v1839 = vunpack.c.l.b16 %v352
  %v1840 = vunpack.c.h.b16 %v352
  %v1841 = vunpack.c.l.b16 %v353
  %v1842 = vunpack.c.h.b16 %v353
  %v1843 = vunpack.c.l.b16 %v354
  %v1844 = vunpack.c.h.b16 %v354
  %v1845 = vunpack.c.l.b16 %v355
  %v1846 = vunpack.c.h.b16 %v355
  %v1847 = vunpack.c.l.b16 %v356
  %v1848 = vunpack.c.h.b16 %v356
  %v1849 = vunpack.c.l.b16 %v357
  %v1850 = vunpack.c.h.b16 %v357
  %v1851 = vunpack.c.l.b16 %v358
  %v1852 = vunpack.c.h.b16 %v358
  %v1853 = vunpack.c.l.b16 %v359
  %v1854 = vunpack.c.h.b16 %v359
  %v1855 = vunpack.c.l.b16 %v360
  %v1856 = vunpack.c.h.b16 %v360
  %v1857 = vunpack.c.l.b16 %v361
  %v1858 = vunpack.c.h.b16 %v361
  %v1859 = vunpack.c.l.b16 %v362
  %v1860 = vunpack.c.h.b16 %v362
  %v1861 = vunpack.c.l.b16 %v363
  %v1862 = vunpack.c.h.b16 %v363
  %v1863 = vunpack.c.l.b16 %v364
  %v1864 = vunpack.c.h.b16 %v364
  %v1865 = vunpack.c.l.b16 %v365
  %v1866 = vunpack.c.h.b16 %v365
  %v1867 = vunpack.c.l.b16 %v366
  %v1868 = vunpack.c.h.b16 %v366
  %v1869 = vunpack.c.l.b16 %v367
  %v1870 = vunpack.c.h.b16 %v367
  %v1871 = vunpack.c.l.b16 %v368
  %v1872 = vunpack.c.h.b16 %v368
  %v1873 = vunpack.c.l.b16 %v369
  %v1874 = vunpack.c.h.b16 %v369
  %v1875 = vunpack.c.l.b16 %v370
  %v1876 = vunpack.c.h.b16 %v370
  %v1877 = vunpack.c.l.b16 %v371
  %v1878 = vunpack.c.h.b16 %v371
  %v1879 = vunpack.c.l.b16 %v372
  %v1880 = vunpack.c.h.b16 %v372
  %v1881 = vunpack.c.l.b16 %v373
  %v1882 = vunpack.c.h.b16 %v373
  %v1883 = vunpack.c.l.b16 %v374
  %v1884 = vunpack.c.h.b16 %v374
  %v1885 = vunpack.c.l.b16 %v375
  %v1886 = vunpack.c.h.b16 %v375
  %v1887 = vunpack.c.l.b16 %v376
  %v1888 = vunpack.c.h.b16 %v376
  %v1889 = vunpack.c.l.b16 %v377
  %v1890 = vunpack.c.h.b16 %v377
  %v1891 = vunpack.c.l.b16 %v378
  %v1892 = vunpack.c.h.b16 %v378
  %v1893 = vunpack.c.l.b16 %v379
  %v1894 = vunpack.c.h.b16 %v379
  %v1895 = vunpack.c.l.b16 %v380
  %v1896 = vunpack.c.h.b16 %v380
  %v1897 = vunpack.c.l.b16 %v381
  %v1898 = vunpack.c.h.b16 %v381
  %v1899 = vunpack.c.l.b16 %v382
  %v1900 = vunpack.c.h.b16 %v382
  %v1901 = vunpack.c.l.b16 %v383
  %v1902 = vunpack.c.h.b16 %v383
  %v1903 = vunpack.c.l.b16 %v384
  %v1904 = vunpack.c.h.b16 %v384
  %v1905 = vunpack.c.l.b16 %v385
  %v1906 = vunpack.c.h.b16 %v385
  %v1907 = vunpack.c.l.b16 %v386
  %v1908 = vunpack.c.h.b16 %v386
  %v1909 = vunpack.c.l.b16 %v387
  %v1910 = vunpack.c.h.b16 %v387
  %v1911 = vunpack.c.l.b16 %v388
  %v1912 = vunpack.c.h.b16 %v388
  %v1913 = vunpack.c.l.b16 %v389
  %v1914 = vunpack.c.h.b16 %v389
  %v1915 = vunpack.c.l.b16 %v390
  %v1916 = vunpack.c.h.b16 %v390
  %v1917 = vunpack.c.l.b16 %v391
  %v1918 = vunpack.c.h.b16 %v391
  %v1919 = vunpack.c.l.b16 %v392
  %v1920 = vunpack.c.h.b16 %v392
  %v1921 = vunpack.c.l.b16 %v393
  %v1922 = vunpack.c.h.b16 %v393
  %v1923 = vunpack.c.l.b16 %v394
  %v1924 = vunpack.c.h.b16 %v394
  %v1925 = vunpack.c.l.b16 %v395
  %v1926 = vunpack.c.h.b16 %v395
  %v1927 = vunpack.c.l.b16 %v396
  %v1928 = vunpack.c.h.b16 %v396
  %v1929 = vunpack.c.l.b16 %v397
  %v1930 = vunpack.c.h.b16 %v397
  %v1931 = vunpack.c.l.b16 %v398
  %v1932 = vunpack.c.h.b16 %v398
  %v1933 = vunpack.c.l.b16 %v399
  %v1934 = vunpack.c.h.b16 %v399
  %v1935 = vunpack.c.l.b16 %v400
  %v1936 = vunpack.c.h.b16 %v400
  %v1937 = vunpack.c.l.b16 %v401
  %v1938 = vunpack.c.h.b16 %v401
  %v1939 = vunpack.c.l.b16 %v402
  %v1940 = vunpack.c.h.b16 %v402
  %v1941 = vunpack.c.l.b16 %v403
  %v1942 = vunpack.c.h.b16 %v403
  %v1943 = vunpack.c.l.b16 %v404
  %v1944 = vunpack.c.h.b16 %v404
  %v1945 = vunpack.c.l.b16 %v405
  %v1946 = vunpack.c.h.b16 %v405
  %v1947 = vunpack.c.l.b16 %v406
  %v1948 = vunpack.c.h.b16 %v406
  %v1949 = vunpack.c.l.b16 %v407
  %v1950 = vunpack.c.h.b16 %v407
  %v1951 = vunpack.c.l.b16 %v408
  %v1952 = vunpack.c.h.b16 %v408
  %v1953 = vunpack.c.l.b16 %v409
  %v1954 = vunpack.c.h.b16 %v409
  %v1955 = vunpack.c.l.b16 %v410
  %v1956 = vunpack.c.h.b16 %v410
  %v1957 = vunpack.c.l.b16 %v411
  %v1958 = vunpack.c.h.b16 %v411
  %v1959 = vunpack.c.l.b16 %v412
  %v1960 = vunpack.c.h.b16 %v412
  %v1961 = vunpack.c.l.b16 %v413
  %v1962 = vunpack.c.h.b16 %v413
  %v1963 = vunpack.c.l.b16 %v414
  %v1964 = vunpack.c.h.b16 %v414
  %v1965 = vunpack.c.l.b16 %v415
  %v1966 = vunpack.c.h.b16 %v415
  %v1967 = vunpack.c.l.b16 %v416
  %v1968 = vunpack.c.h.b16 %v416
  %v1969 = vunpack.c.l.b16 %v417
  %v1970 = vunpack.c.h.b16 %v417
  %v1971 = vunpack.c.l.b16 %v418
  %v1972 = vunpack.c.h.b16 %v418
  %v1973 = vunpack.c.l.b16 %v419
  %v1974 = vunpack.c.h.b16 %v419
  %v1975 = vunpack.c.l.b16 %v420
  %v1976 = vunpack.c.h.b16 %v420
  %v1977 = vunpack.c.l.b16 %v421
  %v1978 = vunpack.c.h.b16 %v421
  %v1979 = vunpack.c.l.b16 %v422
  %v1980 = vunpack.c.h.b16 %v422
  %v1981 = vunpack.c.l.b16 %v423
  %v1982 = vunpack.c.h.b16 %v423
  %v1983 = vunpack.c.l.b16 %v424
  %v1984 = vunpack.c.h.b16 %v424
  %v1985 = vunpack.c.l.b16 %v425
  %v1986 = vunpack.c.h.b16 %v425
  %v1987 = vunpack.c.l.b16 %v426
  %v1988 = vunpack.c.h.b16 %v426
  %v1989 = vunpack.c.l.b16 %v427
  %v1990 = vunpack.c.h.b16 %v427
  %v1991 = vunpack.c.l.b16 %v428
  %v1992 = vunpack.c.h.b16 %v428
  %v1993 = vunpack.c.l.b16 %v429
  %v1994 = vunpack.c.h.b16 %v429
  %v1995 = vunpack.c.l.b16 %v430
  %v1996 = vunpack.c.h.b16 %v430
  %v1997 = vunpack.c.l.b16 %v431
  %v1998 = vunpack.c.h.b16 %v431
  %v1999 = vunpack.c.l.b16 %v432
  %v2000 = vunpack.c.h.b16 %v432
  %v2001 = vunpack.c.l.b16 %v433
  %v2002 = vunpack.c.h.b16 %v433
  %v2003 = vunpack.c.l.b16 %v434
  %v2004 = vunpack.c.h.b16 %v434
  %v2005 = vunpack.c.l.b16 %v435
  %v2006 = vunpack.c.h.b16 %v435
  %v2007 = vunpack.c.l.b16 %v436
  %v2008 = vunpack.c.h.b16 %v436
  %v2009 = vunpack.c.l.b16 %v437
  %v2010 = vunpack.c.h.b16 %v437
  %v2011 = vunpack.c.l.b16 %v438
  %v2012 = vunpack.c.h.b16 %v438
  %v2013 = vunpack.c.l.b16 %v439
  %v2014 = vunpack.c.h.b16 %v439
  %v2015 = vunpack.c.l.b16 %v440
  %v2016 = vunpack.c.h.b16 %v440
  %v2017 = vunpack.c.l.b16 %v441
  %v2018 = vunpack.c.h.b16 %v441
  %v2019 = vunpack.c.l.b16 %v442
  %v2020 = vunpack.c.h.b16 %v442
  %v2021 = vunpack.c.l.b16 %v443
  %v2022 = vunpack.c.h.b16 %v443
  %v2023 = vunpack.c.l.b16 %v444
  %v2024 = vunpack.c.h.b16 %v444
  %v2025 = vunpack.c.l.b16 %v445
  %v2026 = vunpack.c.h.b16 %v445
  %v2027 = vunpack.c.l.b16 %v446
  %v2028 = vunpack.c.h.b16 %v446
  %v2029 = vunpack.c.l.b16 %v447
  %v2030 = vunpack.c.h.b16 %v447
  %v2031 = vunpack.c.l.b16 %v448
  %v2032 = vunpack.c.h.b16 %v448
  %v2033 = vunpack.c.l.b16 %v449
  %v2034 = vunpack.c.h.b16 %v449
  %v2035 = vunpack.c.l.b16 %v450
  %v2036 = vunpack.c.h.b16 %v450
  %v2037 = vunpack.c.l.b16 %v451
  %v2038 = vunpack.c.h.b16 %v451
  %v2039 = vunpack.c.l.b16 %v452
  %v2040 = vunpack.c.h.b16 %v452
  %v2041 = vunpack.c.l.b16 %v453
  %v2042 = vunpack.c.h.b16 %v453
  %v2043 = vunpack.c.l.b16 %v454
  %v2044 = vunpack.c.h.b16 %v454
  %v2045 = vunpack.c.l.b16 %v455
  %v2046 = vunpack.c.h.b16 %v455
  %v2047 = vunpack.c.l.b16 %v456
  %v2048 = vunpack.c.h.b16 %v456
  %v2049 = vunpack.c.l.b16 %v457
  %v2050 = vunpack.c.h.b16 %v457
  %v2051 = vunpack.c.l.b16 %v458
  %v2052 = vunpack.c.h.b16 %v458
  %v2053 = vunpack.c.l.b16 %v459
  %v2054 = vunpack.c.h.b16 %v459
  %v2055 = vunpack.c.l.b16 %v460
  %v2056 = vunpack.c.h.b16 %v460
  %v2057 = vunpack.c.l.b16 %v461
  %v2058 = vunpack.c.h.b16 %v461
  %v2059 = vunpack.c.l.b16 %v462
  %v2060 = vunpack.c.h.b16 %v462
  %v2061 = vunpack.c.l.b16 %v463
  %v2062 = vunpack.c.h.b16 %v463
  %v2063 = vunpack.c.l.b16 %v464
  %v2064 = vunpack.c.h.b16 %v464
  %v2065 = vunpack.c.l.b16 %v465
  %v2066 = vunpack.c.h.b16 %v465
  %v2067 = vunpack.c.l.b16 %v466
  %v2068 = vunpack.c.h.b16 %v466
  %v2069 = vunpack.c.l.b16 %v467
  %v2070 = vunpack.c.h.b16 %v467
  %v2071 = vunpack.c.l.b16 %v468
  %v2072 = vunpack.c.h.b16 %v468
  %v2073 = vunpack.c.l.b16 %v469
  %v2074 = vunpack.c.h.b16 %v469
  %v2075 = vunpack.c.l.b16 %v470
  %v2076 = vunpack.c.h.b16 %v470
  %v2077 = vunpack.c.l.b16 %v471
  %v2078 = vunpack.c.h.b16 %v471
  %v2079 = vunpack.c.l.b16 %v472
  %v2080 = vunpack.c.h.b16 %v472
  %v2081 = vunpack.c.l.b16 %v473
  %v2082 = vunpack.c.h.b16 %v473
  %v2083 = vunpack.c.l.b16 %v474
  %v2084 = vunpack.c.h.b16 %v474
  %v2085 = vunpack.c.l.b16 %v475
  %v2086 = vunpack.c.h.b16 %v475
  %v2087 = vunpack.c.l.b16 %v476
  %v2088 = vunpack.c.h.b16 %v476
  %v2089 = vunpack.c.l.b16 %v477
  %v2090 = vunpack.c.h.b16 %v477
  %v2091 = vunpack.c.l.b16 %v478
  %v2092 = vunpack.c.h.b16 %v478
  %v2093 = vunpack.c.l.b16 %v479
  %v2094 = vunpack.c.h.b16 %v479
  %v2095 = vunpack.c.l.b16 %v480
  %v2096 = vunpack.c.h.b16 %v480
  %v2097 = vunpack.c.l.b16 %v481
  %v2098 = vunpack.c.h.b16 %v481
  %v2099 = vunpack.c.l.b16 %v482
  %v2100 = vunpack.c.h.b16 %v482
  %v2101 = vunpack.c.l.b16 %v483
  %v2102 = vunpack.c.h.b16 %v483
  %v2103 = vunpack.c.l.b16 %v484
  %v2104 = vunpack.c.h.b16 %v484
  %v2105 = vunpack.c.l.b16 %v485
  %v2106 = vunpack.c.h.b16 %v485
  %v2107 = vunpack.c.l.b16 %v486
  %v2108 = vunpack.c.h.b16 %v486
  %v2109 = vunpack.c.l.b16 %v487
  %v2110 = vunpack.c.h.b16 %v487
  %v2111 = vunpack.c.l.b16 %v488
  %v2112 = vunpack.c.h.b16 %v488
  %v2113 = vunpack.c.l.b16 %v489
  %v2114 = vunpack.c.h.b16 %v489
  %v2115 = vunpack.c.l.b16 %v490
  %v2116 = vunpack.c.h.b16 %v490
  %v2117 = vunpack.c.l.b16 %v491
  %v2118 = vunpack.c.h.b16 %v491
  %v2119 = vunpack.c.l.b16 %v492
  %v2120 = vunpack.c.h.b16 %v492
  %v2121 = vunpack.c.l.b16 %v493
  %v2122 = vunpack.c.h.b16 %v493
  %v2123 = vunpack.c.l.b16 %v494
  %v2124 = vunpack.c.h.b16 %v494
  %v2125 = vunpack.c.l.b16 %v495
  %v2126 = vunpack.c.h.b16 %v495
  %v2127 = vunpack.c.l.b16 %v496
  %v2128 = vunpack.c.h.b16 %v496
  %v2129 = vunpack.c.l.b16 %v497
  %v2130 = vunpack.c.h.b16 %v497
  %v2131 = vpack.c.b16 %v1351, %v1347
  %v2132 = vpack.c.b16 %v1352, %v1348
  %v2133 = vpack.c.b16 %v1353, %v1349
  %v2134 = vpack.c.b16 %v1354, %v1350
  %v2135 = vpack.c.b16 %v1359, %v1355
  %v2136 = vpack.c.b16 %v1360, %v1356
  %v2137 = vpack.c.b16 %v1361, %v1357
  %v2138 = vpack.c.b16 %v1362, %v1358
  %v2139 = vpack.c.b16 %v1367, %v1363
  %v2140 = vpack.c.b16 %v1368, %v1364
  %v2141 = vpack.c.b16 %v1369, %v1365
  %v2142 = vpack.c.b16 %v1370, %v1366
  %v2143 = vpack.c.b16 %v1375, %v1371
  %v2144 = vpack.c.b16 %v1376, %v1372
  %v2145 = vpack.c.b16 %v1377, %v1373
  %v2146 = vpack.c.b16 %v1378, %v1374
  %v2147 = vpack.c.b16 %v1383, %v1379
  %v2148 = vpack.c.b16 %v1384, %v1380
  %v2149 = vpack.c.b16 %v1385, %v1381
  %v2150 = vpack.c.b16 %v1386, %v1382
  %v2151 = vpack.c.b16 %v1391, %v1387
  %v2152 = vpack.c.b16 %v1392, %v1388
  %v2153 = vpack.c.b16 %v1393, %v1389
  %v2154 = vpack.c.b16 %v1394, %v1390
  %v2155 = vpack.c.b16 %v1399, %v1395
  %v2156 = vpack.c.b16 %v1400, %v1396
  %v2157 = vpack.c.b16 %v1401, %v1397
  %v2158 = vpack.c.b16 %v1402, %v1398
  %v2159 = vpack.c.b16 %v1407, %v1403
  %v2160 = vpack.c.b16 %v1408, %v1404
  %v2161 = vpack.c.b16 %v1409, %v1405
  %v2162 = vpack.c.b16 %v1410, %v1406
  %v2163 = vpack.c.b16 %v1415, %v1411
  %v2164 = vpack.c.b16 %v1416, %v1412
  %v2165 = vpack.c.b16 %v1417, %v1413
  %v2166 = vpack.c.b16 %v1418, %v1414
  %v2167 = vpack.c.b16 %v1423, %v1419
  %v2168 = vpack.c.b16 %v1424, %v1420
  %v2169 = vpack.c.b16 %v1425, %v1421
  %v2170 = vpack.c.b16 %v1426, %v1422
  %v2171 = vpack.c.b16 %v1431, %v1427
  %v2172 = vpack.c.b16 %v1432, %v1428
  %v2173 = vpack.c.b16 %v1433, %v1429
  %v2174 = vpack.c.b16 %v1434, %v1430
  %v2175 = vpack.c.b16 %v1439, %v1435
  %v2176 = vpack.c.b16 %v1440, %v1436
  %v2177 = vpack.c.b16 %v1441, %v1437
  %v2178 = vpack.c.b16 %v1442, %v1438
  %v2179 = vpack.c.b16 %v1447, %v1443
  %v2180 = vpack.c.b16 %v1448, %v1444
  %v2181 = vpack.c.b16 %v1449, %v1445
  %v2182 = vpack.c.b16 %v1450, %v1446
  %v2183 = vpack.c.b16 %v1455, %v1451
  %v2184 = vpack.c.b16 %v1456, %v1452
  %v2185 = vpack.c.b16 %v1457, %v1453
  %v2186 = vpack.c.b16 %v1458, %v1454
  %v2187 = vpack.c.b16 %v1463, %v1459
  %v2188 = vpack.c.b16 %v1464, %v1460
  %v2189 = vpack.c.b16 %v1465, %v1461
  %v2190 = vpack.c.b16 %v1466, %v1462
  %v2191 = vpack.c.b16 %v1471, %v1467
  %v2192 = vpack.c.b16 %v1472, %v1468
  %v2193 = vpack.c.b16 %v1473, %v1469
  %v2194 = vpack.c.b16 %v1474, %v1470
  %v2195 = vpack.c.b16 %v1479, %v1475
  %v2196 = vpack.c.b16 %v1480, %v1476
  %v2197 = vpack.c.b16 %v1481, %v1477
  %v2198 = vpack.c.b16 %v1482, %v1478
  %v2199 = vpack.c.b16 %v1487, %v1483
  %v2200 = vpack.c.b16 %v1488, %v1484
  %v2201 = vpack.c.b16 %v1489, %v1485
  %v2202 = vpack.c.b16 %v1490, %v1486
  %v2203 = vpack.c.b16 %v1495, %v1491
  %v2204 = vpack.c.b16 %v1496, %v1492
  %v2205 = vpack.c.b16 %v1497, %v1493
  %v2206 = vpack.c.b16 %v1498, %v1494
  %v2207 = vpack.c.b16 %v1503, %v1499
  %v2208 = vpack.c.b16 %v1504, %v1500
  %v2209 = vpack.c.b16 %v1505, %v1501
  %v2210 = vpack.c.b16 %v1506, %v1502
  %v2211 = vpack.c.b16 %v1511, %v1507
  %v2212 = vpack.c.b16 %v1512, %v1508
  %v2213 = vpack.c.b16 %v1513, %v1509
  %v2214 = vpack.c.b16 %v1514, %v1510
  %v2215 = vpack.c.b16 %v1519, %v1515
  %v2216 = vpack.c.b16 %v1520, %v1516
  %v2217 = vpack.c.b16 %v1521, %v1517
  %v2218 = vpack.c.b16 %v1522, %v1518
  %v2219 = vpack.c.b16 %v1527, %v1523
  %v2220 = vpack.c.b16 %v1528, %v1524
  %v2221 = vpack.c.b16 %v1529, %v1525
  %v2222 = vpack.c.b16 %v1530, %v1526
  %v2223 = vpack.c.b16 %v1535, %v1531
  %v2224 = vpack.c.b16 %v1536, %v1532
  %v2225 = vpack.c.b16 %v1537, %v1533
  %v2226 = vpack.c.b16 %v1538, %v1534
  %v2227 = vpack.c.b16 %v1543, %v1539
  %v2228 = vpack.c.b16 %v1544, %v1540
  %v2229 = vpack.c.b16 %v1545, %v1541
  %v2230 = vpack.c.b16 %v1546, %v1542
  %v2231 = vpack.c.b16 %v1551, %v1547
  %v2232 = vpack.c.b16 %v1552, %v1548
  %v2233 = vpack.c.b16 %v1553, %v1549
  %v2234 = vpack.c.b16 %v1554, %v1550
  %v2235 = vpack.c.b16 %v1559, %v1555
  %v2236 = vpack.c.b16 %v1560, %v1556
  %v2237 = vpack.c.b16 %v1561, %v1557
  %v2238 = vpack.c.b16 %v1562, %v1558
  %v2239 = vpack.c.b16 %v1567, %v1563
  %v2240 = vpack.c.b16 %v1568, %v1564
  %v2241 = vpack.c.b16 %v1569, %v1565
  %v2242 = vpack.c.b16 %v1570, %v1566
  %v2243 = vpack.c.b16 %v1575, %v1571
  %v2244 = vpack.c.b16 %v1576, %v1572
  %v2245 = vpack.c.b16 %v1577, %v1573
  %v2246 = vpack.c.b16 %v1578, %v1574
  %v2247 = vpack.c.b16 %v1583, %v1579
  %v2248 = vpack.c.b16 %v1584, %v1580
  %v2249 = vpack.c.b16 %v1585, %v1581
  %v2250 = vpack.c.b16 %v1586, %v1582
  %v2251 = vpack.c.b16 %v1591, %v1587
  %v2252 = vpack.c.b16 %v1592, %v1588
  %v2253 = vpack.c.b16 %v1593, %v1589
  %v2254 = vpack.c.b16 %v1594, %v1590
  %v2255 = vpack.c.b16 %v1599, %v1595
  %v2256 = vpack.c.b16 %v1600, %v1596
  %v2257 = vpack.c.b16 %v1601, %v1597
  %v2258 = vpack.c.b16 %v1602, %v1598
  %v2259 = vpack.c.b16 %v1607, %v1603
  %v2260 = vpack.c.b16 %v1608, %v1604
  %v2261 = vpack.c.b16 %v1609, %v1605
  %v2262 = vpack.c.b16 %v1610, %v1606
  %v2263 = vpack.c.b16 %v1615, %v1611
  %v2264 = vpack.c.b16 %v1616, %v1612
  %v2265 = vpack.c.b16 %v1617, %v1613
  %v2266 = vpack.c.b16 %v1618, %v1614
  %v2267 = vpack.c.b16 %v1623, %v1619
  %v2268 = vpack.c.b16 %v1624, %v1620
  %v2269 = vpack.c.b16 %v1625, %v1621
  %v2270 = vpack.c.b16 %v1626, %v1622
  %v2271 = vpack.c.b16 %v1631, %v1627
  %v2272 = vpack.c.b16 %v1632, %v1628
  %v2273 = vpack.c.b16 %v1633, %v1629
  %v2274 = vpack.c.b16 %v1634, %v1630
  %v2275 = vpack.c.b16 %v1639, %v1635
  %v2276 = vpack.c.b16 %v1640, %v1636
  %v2277 = vpack.c.b16 %v1641, %v1637
  %v2278 = vpack.c.b16 %v1642, %v1638
  %v2279 = vpack.c.b16 %v1647, %v1643
  %v2280 = vpack.c.b16 %v1648, %v1644
  %v2281 = vpack.c.b16 %v1649, %v1645
  %v2282 = vpack.c.b16 %v1650, %v1646
  %v2283 = vpack.c.b16 %v1655, %v1651
  %v2284 = vpack.c.b16 %v1656, %v1652
  %v2285 = vpack.c.b16 %v1657, %v1653
  %v2286 = vpack.c.b16 %v1658, %v1654
  %v2287 = vpack.c.b16 %v1663, %v1659
  %v2288 = vpack.c.b16 %v1664, %v1660
  %v2289 = vpack.c.b16 %v1665, %v1661
  %v2290 = vpack.c.b16 %v1666, %v1662
  %v2291 = vpack.c.b16 %v1671, %v1667
  %v2292 = vpack.c.b16 %v1672, %v1668
  %v2293 = vpack.c.b16 %v1673, %v1669
  %v2294 = vpack.c.b16 %v1674, %v1670
  %v2295 = vpack.c.b16 %v1679, %v1675
  %v2296 = vpack.c.b16 %v1680, %v1676
  %v2297 = vpack.c.b16 %v1681, %v1677
  %v2298 = vpack.c.b16 %v1682, %v1678
  %v2299 = vpack.c.b16 %v1687, %v1683
  %v2300 = vpack.c.b16 %v1688, %v1684
  %v2301 = vpack.c.b16 %v1689, %v1685
  %v2302 = vpack.c.b16 %v1690, %v1686
  %v2303 = vpack.c.b16 %v1695, %v1691
  %v2304 = vpack.c.b16 %v1696, %v1692
  %v2305 = vpack.c.b16 %v1697, %v1693
  %v2306 = vpack.c.b16 %v1698, %v1694
  %v2307 = vpack.c.b16 %v1703, %v1699
  %v2308 = vpack.c.b16 %v1704, %v1700
  %v2309 = vpack.c.b16 %v1705, %v1701
  %v2310 = vpack.c.b16 %v1706, %v1702
  %v2311 = vpack.c.b16 %v1711, %v1707
  %v2312 = vpack.c.b16 %v1712, %v1708
  %v2313 = vpack.c.b16 %v1713, %v1709
  %v2314 = vpack.c.b16 %v1714, %v1710
  %v2315 = vpack.c.b16 %v1719, %v1715
  %v2316 = vpack.c.b16 %v1720, %v1716
  %v2317 = vpack.c.b16 %v1721, %v1717
  %v2318 = vpack.c.b16 %v1722, %v1718
  %v2319 = vpack.c.b16 %v1727, %v1723
  %v2320 = vpack.c.b16 %v1728, %v1724
  %v2321 = vpack.c.b16 %v1729, %v1725
  %v2322 = vpack.c.b16 %v1730, %v1726
  %v2323 = vpack.c.b16 %v1735, %v1731
  %v2324 = vpack.c.b16 %v1736, %v1732
  %v2325 = vpack.c.b16 %v1737, %v1733
  %v2326 = vpack.c.b16 %v1738, %v1734
  %v2327 = vpack.c.b16 %v1743, %v1739
  %v2328 = vpack.c.b16 %v1744, %v1740
  %v2329 = vpack.c.b16 %v1745, %v1741
  %v2330 = vpack.c.b16 %v1746, %v1742
  %v2331 = vpack.c.b16 %v1751, %v1747
  %v2332 = vpack.c.b16 %v1752, %v1748
  %v2333 = vpack.c.b16 %v1753, %v1749
  %v2334 = vpack.c.b16 %v1754, %v1750
  %v2335 = vpack.c.b16 %v1759, %v1755
  %v2336 = vpack.c.b16 %v1760, %v1756
  %v2337 = vpack.c.b16 %v1761, %v1757
  %v2338 = vpack.c.b16 %v1762, %v1758
  %v2339 = vpack.c.b16 %v1767, %v1763
  %v2340 = vpack.c.b16 %v1768, %v1764
  %v2341 = vpack.c.b16 %v1769, %v1765
  %v2342 = vpack.c.b16 %v1770, %v1766
  %v2343 = vpack.c.b16 %v1775, %v1771
  %v2344 = vpack.c.b16 %v1776, %v1772
  %v2345 = vpack.c.b16 %v1777, %v1773
  %v2346 = vpack.c.b16 %v1778, %v1774
  %v2347 = vpack.c.b16 %v1783, %v1779
  %v2348 = vpack.c.b16 %v1784, %v1780
  %v2349 = vpack.c.b16 %v1785, %v1781
  %v2350 = vpack.c.b16 %v1786, %v1782
  %v2351 = vpack.c.b16 %v1791, %v1787
  %v2352 = vpack.c.b16 %v1792, %v1788
  %v2353 = vpack.c.b16 %v1793, %v1789
  %v2354 = vpack.c.b16 %v1794, %v1790
  %v2355 = vpack.c.b16 %v1799, %v1795
  %v2356 = vpack.c.b16 %v1800, %v1796
  %v2357 = vpack.c.b16 %v1801, %v1797
  %v2358 = vpack.c.b16 %v1802, %v1798
  %v2359 = vpack.c.b16 %v1807, %v1803
  %v2360 = vpack.c.b16 %v1808, %v1804
  %v2361 = vpack.c.b16 %v1809, %v1805
  %v2362 = vpack.c.b16 %v1810, %v1806
  %v2363 = vpack.c.b16 %v1815, %v1811
  %v2364 = vpack.c.b16 %v1816, %v1812
  %v2365 = vpack.c.b16 %v1817, %v1813
  %v2366 = vpack.c.b16 %v1818, %v1814
  %v2367 = vpack.c.b16 %v1823, %v1819
  %v2368 = vpack.c.b16 %v1824, %v1820
  %v2369 = vpack.c.b16 %v1825, %v1821
  %v2370 = vpack.c.b16 %v1826, %v1822
  %v2371 = vpack.c.b16 %v1831, %v1827
  %v2372 = vpack.c.b16 %v1832, %v1828
  %v2373 = vpack.c.b16 %v1833, %v1829
  %v2374 = vpack.c.b16 %v1834, %v1830
  %v2375 = vpack.c.b16 %v1839, %v1835
  %v2376 = vpack.c.b16 %v1840, %v1836
  %v2377 = vpack.c.b16 %v1841, %v1837
  %v2378 = vpack.c.b16 %v1842, %v1838
  %v2379 = vpack.c.b16 %v1847, %v1843
  %v2380 = vpack.c.b16 %v1848, %v1844
  %v2381 = vpack.c.b16 %v1849, %v1845
  %v2382 = vpack.c.b16 %v1850, %v1846
  %v2383 = vpack.c.b16 %v1855, %v1851
  %v2384 = vpack.c.b16 %v1856, %v1852
  %v2385 = vpack.c.b16 %v1857, %v1853
  %v2386 = vpack.c.b16 %v1858, %v1854
  %v2387 = vpack.c.b16 %v1863, %v1859
  %v2388 = vpack.c.b16 %v1864, %v1860
  %v2389 = vpack.c.b16 %v1865, %v1861
  %v2390 = vpack.c.b16 %v1866, %v1862
  %v2391 = vpack.c.b16 %v1871, %v1867
  %v2392 = vpack.c.b16 %v1872, %v1868
  %v2393 = vpack.c.b16 %v1873, %v1869
  %v2394 = vpack.c.b16 %v1874, %v1870
  %v2395 = vpack.c.b16 %v1879, %v1875
  %v2396 = vpack.c.b16 %v1880, %v1876
  %v2397 = vpack.c.b16 %v1881, %v1877
  %v2398 = vpack.c.b16 %v1882, %v1878
  %v2399 = vpack.c.b16 %v1887, %v1883
  %v2400 = vpack.c.b16 %v1888, %v1884
  %v2401 = vpack.c.b16 %v1889, %v1885
  %v2402 = vpack.c.b16 %v1890, %v1886
  %v2403 = vpack.c.b16 %v1895, %v1891
  %v2404 = vpack.c.b16 %v1896, %v1892
  %v2405 = vpack.c.b16 %v1897, %v1893
  %v2406 = vpack.c.b16 %v1898, %v1894
  %v2407 = vpack.c.b16 %v1903, %v1899
  %v2408 = vpack.c.b16 %v1904, %v1900
  %v2409 = vpack.c.b16 %v1905, %v1901
  %v2410 = vpack.c.b16 %v1906, %v1902
  %v2411 = vpack.c.b16 %v1911, %v1907
  %v2412 = vpack.c.b16 %v1912, %v1908
  %v2413 = vpack.c.b16 %v1913, %v1909
  %v2414 = vpack.c.b16 %v1914, %v1910
  %v2415 = vpack.c.b16 %v1919, %v1915
  %v2416 = vpack.c.b16 %v1920, %v1916
  %v2417 = vpack.c.b16 %v1921, %v1917
  %v2418 = vpack.c.b16 %v1922, %v1918
  %v2419 = vpack.c.b16 %v1927, %v1923
  %v2420 = vpack.c.b16 %v1928, %v1924
  %v2421 = vpack.c.b16 %v1929, %v1925
  %v2422 = vpack.c.b16 %v1930, %v1926
  %v2423 = vpack.c.b16 %v1935, %v1931
  %v2424 = vpack.c.b16 %v1936, %v1932
  %v2425 = vpack.c.b16 %v1937, %v1933
  %v2426 = vpack.c.b16 %v1938, %v1934
  %v2427 = vpack.c.b16 %v1943, %v1939
  %v2428 = vpack.c.b16 %v1944, %v1940
  %v2429 = vpack.c.b16 %v1945, %v1941
  %v2430 = vpack.c.b16 %v1946, %v1942
  %v2431 = vpack.c.b16 %v1951, %v1947
  %v2432 = vpack.c.b16 %v1952, %v1948
  %v2433 = vpack.c.b16 %v1953, %v1949
  %v2434 = vpack.c.b16 %v1954, %v1950
  %v2435 = vpack.c.b16 %v1959, %v1955
  %v2436 = vpack.c.b16 %v1960, %v1956
  %v2437 = vpack.c.b16 %v1961, %v1957
  %v2438 = vpack.c.b16 %v1962, %v1958
  %v2439 = vpack.c.b16 %v1967, %v1963
  %v2440 = vpack.c.b16 %v1968, %v1964
  %v2441 = vpack.c.b16 %v1969, %v1965
  %v2442 = vpack.c.b16 %v1970, %v1966
  %v2443 = vpack.c.b16 %v1975, %v1971
  %v2444 = vpack.c.b16 %v1976, %v1972
  %v2445 = vpack.c.b16 %v1977, %v1973
  %v2446 = vpack.c.b16 %v1978, %v1974
  %v2447 = vpack.c.b16 %v1983, %v1979
  %v2448 = vpack.c.b16 %v1984, %v1980
  %v2449 = vpack.c.b16 %v1985, %v1981
  %v2450 = vpack.c.b16 %v1986, %v1982
  %v2451 = vpack.c.b16 %v1991, %v1987
  %v2452 = vpack.c.b16 %v1992, %v1988
  %v2453 = vpack.c.b16 %v1993, %v1989
  %v2454 = vpack.c.b16 %v1994, %v1990
  %v2455 = vpack.c.b16 %v1999, %v1995
  %v2456 = vpack.c.b16 %v2000, %v1996
  %v2457 = vpack.c.b16 %v2001, %v1997
  %v2458 = vpack.c.b16 %v2002, %v1998
  %v2459 = vpack.c.b16 %v2007, %v2003
  %v2460 = vpack.c.b16 %v2008, %v2004
  %v2461 = vpack.c.b16 %v2009, %v2005
  %v2462 = vpack.c.b16 %v2010, %v2006
  %v2463 = vpack.c.b16 %v2015, %v2011
  %v2464 = vpack.c.b16 %v2016, %v2012
  %v2465 = vpack.c.b16 %v2017, %v2013
  %v2466 = vpack.c.b16 %v2018, %v2014
  %v2467 = vpack.c.b16 %v2023, %v2019
  %v2468 = vpack.c.b16 %v2024, %v2020
  %v2469 = vpack.c.b16 %v2025, %v2021
  %v2470 = vpack.c.b16 %v2026, %v2022
  %v2471 = vpack.c.b16 %v2031, %v2027
  %v2472 = vpack.c.b16 %v2032, %v2028
  %v2473 = vpack.c.b16 %v2033, %v2029
  %v2474 = vpack.c.b16 %v2034, %v2030
  %v2475 = vpack.c.b16 %v2039, %v2035
  %v2476 = vpack.c.b16 %v2040, %v2036
  %v2477 = vpack.c.b16 %v2041, %v2037
  %v2478 = vpack.c.b16 %v2042, %v2038
  %v2479 = vpack.c.b16 %v2047, %v2043
  %v2480 = vpack.c.b16 %v2048, %v2044
  %v2481 = vpack.c.b16 %v2049, %v2045
  %v2482 = vpack.c.b16 %v2050, %v2046
  %v2483 = vpack.c.b16 %v2055, %v2051
  %v2484 = vpack.c.b16 %v2056, %v2052
  %v2485 = vpack.c.b16 %v2057, %v2053
  %v2486 = vpack.c.b16 %v2058, %v2054
  %v2487 = vpack.c.b16 %v2063, %v2059
  %v2488 = vpack.c.b16 %v2064, %v2060
  %v2489 = vpack.c.b16 %v2065, %v2061
  %v2490 = vpack.c.b16 %v2066, %v2062
  %v2491 = vpack.c.b16 %v2071, %v2067
  %v2492 = vpack.c.b16 %v2072, %v2068
  %v2493 = vpack.c.b16 %v2073, %v2069
  %v2494 = vpack.c.b16 %v2074, %v2070
  %v2495 = vpack.c.b16 %v2079, %v2075
  %v2496 = vpack.c.b16 %v2080, %v2076
  %v2497 = vpack.c.b16 %v2081, %v2077
  %v2498 = vpack.c.b16 %v2082, %v2078
  %v2499 = vpack.c.b16 %v2087, %v2083
  %v2500 = vpack.c.b16 %v2088, %v2084
  %v2501 = vpack.c.b16 %v2089, %v2085
  %v2502 = vpack.c.b16 %v2090, %v2086
  %v2503 = vpack.c.b16 %v2095, %v2091
  %v2504 = vpack.c.b16 %v2096, %v2092
  %v2505 = vpack.c.b16 %v2097, %v2093
  %v2506 = vpack.c.b16 %v2098, %v2094
  %v2507 = vpack.c.b16 %v2103, %v2099
  %v2508 = vpack.c.b16 %v2104, %v2100
  %v2509 = vpack.c.b16 %v2105, %v2101
  %v2510 = vpack.c.b16 %v2106, %v2102
  %v2511 = vpack.c.b16 %v2111, %v2107
  %v2512 = vpack.c.b16 %v2112, %v2108
  %v2513 = vpack.c.b16 %v2113, %v2109
  %v2514 = vpack.c.b16 %v2114, %v2110
  %v2515 = vpack.c.b16 %v2119, %v2115
  %v2516 = vpack.c.b16 %v2120, %v2116
  %v2517 = vpack.c.b16 %v2121, %v2117
  %v2518 = vpack.c.b16 %v2122, %v2118
  %v2519 = vpack.c.b16 %v2127, %v2123
  %v2520 = vpack.c.b16 %v2128, %v2124
  %v2521 = vpack.c.b16 %v2129, %v2125
  %v2522 = vpack.c.b16 %v2130, %v2126
  %vm2915 = vcmask 261120
  %v2917 = vsel %vm2915, %v792, 0
  %v2920 = vsel %vm2915, %v805, 0
  %v2923 = vsel %vm2915, %v818, 0
  %v2926 = vsel %vm2915, %v831, 0
  %v2929 = vsel %vm2915, %v844, 0
  %v2932 = vsel %vm2915, %v857, 0
  %v2935 = vsel %vm2915, %v870, 0
  %2937 = vmatprep.subr.bf16.mxu0 %v2132
  %2938 = vmatpush1.bf16.msra.mxu0 %v2131
  %2939 = vmatprep.subr.bf16.mxu0 %v2136
  %2940 = vmatpush1.bf16.msra.mxu0 %v2135
  %2941 = vmatprep.subr.bf16.mxu0 %v2140
  %2942 = vmatpush1.bf16.msra.mxu0 %v2139
  %2943 = vmatprep.subr.bf16.mxu0 %v2144
  %2944 = vmatpush1.bf16.msra.mxu0 %v2143
  %2945 = vmatprep.subr.bf16.mxu0 %v2148
  %2946 = vmatpush1.bf16.msra.mxu0 %v2147
  %2947 = vmatprep.subr.bf16.mxu0 %v2152
  %2948 = vmatpush1.bf16.msra.mxu0 %v2151
  %2949 = vmatprep.subr.bf16.mxu0 %v2156
  %2950 = vmatpush1.bf16.msra.mxu0 %v2155
  %2951 = vmatprep.subr.bf16.mxu0 %v2160
  %2952 = vmatpush1.bf16.msra.mxu0 %v2159
  %2953 = vmatprep.subr.bf16.mxu0 %v2164
  %2954 = vmatpush1.bf16.msra.mxu0 %v2163
  %2955 = vmatprep.subr.bf16.mxu0 %v2168
  %2956 = vmatpush1.bf16.msra.mxu0 %v2167
  %2957 = vmatprep.subr.bf16.mxu0 %v2172
  %2958 = vmatpush1.bf16.msra.mxu0 %v2171
  %2959 = vmatprep.subr.bf16.mxu0 %v2176
  %2960 = vmatpush1.bf16.msra.mxu0 %v2175
  %2961 = vmatprep.subr.bf16.mxu0 %v2180
  %2962 = vmatpush1.bf16.msra.mxu0 %v2179
  %2963 = vmatprep.subr.bf16.mxu0 %v2184
  %2964 = vmatpush1.bf16.msra.mxu0 %v2183
  %2965 = vmatprep.subr.bf16.mxu0 %v2188
  %2966 = vmatpush1.bf16.msra.mxu0 %v2187
  %2967 = vmatprep.subr.bf16.mxu0 %v2192
  %2968 = vmatpush1.bf16.msra.mxu0 %v2191
  %2969 = vmatprep.mubr.bf16.mxu0 %v781
  %2970 = vmatmul.mubr.bf16.gmra.mrb[0].mxu0 %v780
  %v2971 = vpop.f32.mrb[0].mxu0
  %v2972 = vadd.f32 %v503, %v2971
  %v2973 = vpop.f32.mrb[0].mxu0
  %v2974 = vadd.f32 %v507, %v2973
  %v2975 = vpop.f32.mrb[0].mxu0
  %v2976 = vadd.f32 %v503, %v2975
  %v2977 = vpop.f32.mrb[0].mxu0
  %v2978 = vadd.f32 %v507, %v2977
  %2979 = vmatprep.mubr.bf16.mxu0 %v794
  %2980 = vmatmul.mubr.bf16.gmra.mrb[0].mxu0 %v793
  %v2981 = vpop.f32.mrb[0].mxu0
  %v2982 = vadd.f32 %v503, %v2981
  %v2983 = vpop.f32.mrb[0].mxu0
  %v2984 = vadd.f32 %v507, %v2983
  %v2985 = vpop.f32.mrb[0].mxu0
  %v2986 = vadd.f32 %v503, %v2985
  %v2987 = vpop.f32.mrb[0].mxu0
  %v2988 = vadd.f32 %v507, %v2987
  %2989 = vmatprep.mubr.bf16.mxu0 %v807
  %2990 = vmatmul.mubr.bf16.gmra.mrb[0].mxu0 %v806
  %v2991 = vpop.f32.mrb[0].mxu0
  %v2992 = vadd.f32 %v503, %v2991
  %v2993 = vpop.f32.mrb[0].mxu0
  %v2994 = vadd.f32 %v507, %v2993
  %v2995 = vpop.f32.mrb[0].mxu0
  %v2996 = vadd.f32 %v503, %v2995
  %v2997 = vpop.f32.mrb[0].mxu0
  %v2998 = vadd.f32 %v507, %v2997
  %2999 = vmatprep.mubr.bf16.mxu0 %v820
  %3000 = vmatmul.mubr.bf16.gmra.mrb[0].mxu0 %v819
  %v3001 = vpop.f32.mrb[0].mxu0
  %v3002 = vadd.f32 %v503, %v3001
  %v3003 = vpop.f32.mrb[0].mxu0
  %v3004 = vadd.f32 %v507, %v3003
  %v3005 = vpop.f32.mrb[0].mxu0
  %v3006 = vadd.f32 %v503, %v3005
  %v3007 = vpop.f32.mrb[0].mxu0
  %v3008 = vadd.f32 %v507, %v3007
  %3009 = vmatprep.mubr.bf16.mxu0 %v833
  %3010 = vmatmul.mubr.bf16.gmra.mrb[0].mxu0 %v832
  %v3011 = vpop.f32.mrb[0].mxu0
  %v3012 = vadd.f32 %v503, %v3011
  %v3013 = vpop.f32.mrb[0].mxu0
  %v3014 = vadd.f32 %v507, %v3013
  %v3015 = vpop.f32.mrb[0].mxu0
  %v3016 = vadd.f32 %v503, %v3015
  %v3017 = vpop.f32.mrb[0].mxu0
  %v3018 = vadd.f32 %v507, %v3017
  %3019 = vmatprep.mubr.bf16.mxu0 %v846
  %3020 = vmatmul.mubr.bf16.gmra.mrb[0].mxu0 %v845
  %v3021 = vpop.f32.mrb[0].mxu0
  %v3022 = vadd.f32 %v503, %v3021
  %v3023 = vpop.f32.mrb[0].mxu0
  %v3024 = vadd.f32 %v507, %v3023
  %v3025 = vpop.f32.mrb[0].mxu0
  %v3026 = vadd.f32 %v503, %v3025
  %v3027 = vpop.f32.mrb[0].mxu0
  %v3028 = vadd.f32 %v507, %v3027
  %3029 = vmatprep.mubr.bf16.mxu0 %v859
  %3030 = vmatmul.mubr.bf16.gmra.mrb[0].mxu0 %v858
  %v3031 = vpop.f32.mrb[0].mxu0
  %v3032 = vadd.f32 %v503, %v3031
  %v3033 = vpop.f32.mrb[0].mxu0
  %v3034 = vadd.f32 %v507, %v3033
  %v3035 = vpop.f32.mrb[0].mxu0
  %v3036 = vpop.f32.mrb[0].mxu0
  %3037 = vdwg.mxu0
  %3038 = vmatprep.subr.bf16.mxu0 %v2196
  %3039 = vmatpush1.bf16.msra.mxu0 %v2195
  %3040 = vmatprep.subr.bf16.mxu0 %v2200
  %3041 = vmatpush1.bf16.msra.mxu0 %v2199
  %3042 = vmatprep.subr.bf16.mxu0 %v2204
  %3043 = vmatpush1.bf16.msra.mxu0 %v2203
  %3044 = vmatprep.subr.bf16.mxu0 %v2208
  %3045 = vmatpush1.bf16.msra.mxu0 %v2207
  %3046 = vmatprep.subr.bf16.mxu0 %v2212
  %3047 = vmatpush1.bf16.msra.mxu0 %v2211
  %3048 = vmatprep.subr.bf16.mxu0 %v2216
  %3049 = vmatpush1.bf16.msra.mxu0 %v2215
  %3050 = vmatprep.subr.bf16.mxu0 %v2220
  %3051 = vmatpush1.bf16.msra.mxu0 %v2219
  %3052 = vmatprep.subr.bf16.mxu0 %v2224
  %3053 = vmatpush1.bf16.msra.mxu0 %v2223
  %3054 = vmatprep.subr.bf16.mxu0 %v2228
  %3055 = vmatpush1.bf16.msra.mxu0 %v2227
  %3056 = vmatprep.subr.bf16.mxu0 %v2232
  %3057 = vmatpush1.bf16.msra.mxu0 %v2231
  %3058 = vmatprep.subr.bf16.mxu0 %v2236
  %3059 = vmatpush1.bf16.msra.mxu0 %v2235
  %3060 = vmatprep.subr.bf16.mxu0 %v2240
  %3061 = vmatpush1.bf16.msra.mxu0 %v2239
  %3062 = vmatprep.subr.bf16.mxu0 %v2244
  %3063 = vmatpush1.bf16.msra.mxu0 %v2243
  %3064 = vmatprep.subr.bf16.mxu0 %v2248
  %3065 = vmatpush1.bf16.msra.mxu0 %v2247
  %3066 = vmatprep.subr.bf16.mxu0 %v2252
  %3067 = vmatpush1.bf16.msra.mxu0 %v2251
  %3068 = vmatprep.subr.bf16.mxu0 %v2256
  %3069 = vmatpush1.bf16.msra.mxu0 %v2255
  %3070 = vmatprep.mubr.bf16.mxu0 %v783
  %3071 = vmatmul.mubr.bf16.gmra.mrb[0].mxu0 %v782
  %v3072 = vpop.f32.mrb[0].mxu0
  %v3073 = vadd.f32 %v2972, %v3072
  %v3074 = vpop.f32.mrb[0].mxu0
  %v3075 = vadd.f32 %v2974, %v3074
  %v3076 = vpop.f32.mrb[0].mxu0
  %v3077 = vadd.f32 %v2976, %v3076
  %v3078 = vpop.f32.mrb[0].mxu0
  %v3079 = vadd.f32 %v2978, %v3078
  %3080 = vmatprep.mubr.bf16.mxu0 %v796
  %3081 = vmatmul.mubr.bf16.gmra.mrb[0].mxu0 %v795
  %v3082 = vpop.f32.mrb[0].mxu0
  %v3083 = vadd.f32 %v2982, %v3082
  %v3084 = vpop.f32.mrb[0].mxu0
  %v3085 = vadd.f32 %v2984, %v3084
  %v3086 = vpop.f32.mrb[0].mxu0
  %v3087 = vadd.f32 %v2986, %v3086
  %v3088 = vpop.f32.mrb[0].mxu0
  %v3089 = vadd.f32 %v2988, %v3088
  %3090 = vmatprep.mubr.bf16.mxu0 %v809
  %3091 = vmatmul.mubr.bf16.gmra.mrb[0].mxu0 %v808
  %v3092 = vpop.f32.mrb[0].mxu0
  %v3093 = vadd.f32 %v2992, %v3092
  %v3094 = vpop.f32.mrb[0].mxu0
  %v3095 = vadd.f32 %v2994, %v3094
  %v3096 = vpop.f32.mrb[0].mxu0
  %v3097 = vadd.f32 %v2996, %v3096
  %v3098 = vpop.f32.mrb[0].mxu0
  %v3099 = vadd.f32 %v2998, %v3098
  %3100 = vmatprep.mubr.bf16.mxu0 %v822
  %3101 = vmatmul.mubr.bf16.gmra.mrb[0].mxu0 %v821
  %v3102 = vpop.f32.mrb[0].mxu0
  %v3103 = vadd.f32 %v3002, %v3102
  %v3104 = vpop.f32.mrb[0].mxu0
  %v3105 = vadd.f32 %v3004, %v3104
  %v3106 = vpop.f32.mrb[0].mxu0
  %v3107 = vadd.f32 %v3006, %v3106
  %v3108 = vpop.f32.mrb[0].mxu0
  %v3109 = vadd.f32 %v3008, %v3108
  %3110 = vmatprep.mubr.bf16.mxu0 %v835
  %3111 = vmatmul.mubr.bf16.gmra.mrb[0].mxu0 %v834
  %v3112 = vpop.f32.mrb[0].mxu0
  %v3113 = vadd.f32 %v3012, %v3112
  %v3114 = vpop.f32.mrb[0].mxu0
  %v3115 = vadd.f32 %v3014, %v3114
  %v3116 = vpop.f32.mrb[0].mxu0
  %v3117 = vadd.f32 %v3016, %v3116
  %v3118 = vpop.f32.mrb[0].mxu0
  %v3119 = vadd.f32 %v3018, %v3118
  %3120 = vmatprep.mubr.bf16.mxu0 %v848
  %3121 = vmatmul.mubr.bf16.gmra.mrb[0].mxu0 %v847
  %v3122 = vpop.f32.mrb[0].mxu0
  %v3123 = vadd.f32 %v3022, %v3122
  %v3124 = vpop.f32.mrb[0].mxu0
  %v3125 = vadd.f32 %v3024, %v3124
  %v3126 = vpop.f32.mrb[0].mxu0
  %v3127 = vadd.f32 %v3026, %v3126
  %v3128 = vpop.f32.mrb[0].mxu0
  %v3129 = vadd.f32 %v3028, %v3128
  %3130 = vmatprep.mubr.bf16.mxu0 %v861
  %3131 = vmatmul.mubr.bf16.gmra.mrb[0].mxu0 %v860
  %v3132 = vpop.f32.mrb[0].mxu0
  %v3133 = vadd.f32 %v3032, %v3132
  %v3134 = vpop.f32.mrb[0].mxu0
  %v3135 = vadd.f32 %v3034, %v3134
  %v3136 = vpop.f32.mrb[0].mxu0
  %v3137 = vpop.f32.mrb[0].mxu0
  %3138 = vdwg.mxu0
  %3139 = vmatprep.subr.bf16.mxu0 %v2260
  %3140 = vmatpush1.bf16.msra.mxu0 %v2259
  %3141 = vmatprep.subr.bf16.mxu0 %v2264
  %3142 = vmatpush1.bf16.msra.mxu0 %v2263
  %3143 = vmatprep.subr.bf16.mxu0 %v2268
  %3144 = vmatpush1.bf16.msra.mxu0 %v2267
  %3145 = vmatprep.subr.bf16.mxu0 %v2272
  %3146 = vmatpush1.bf16.msra.mxu0 %v2271
  %3147 = vmatprep.subr.bf16.mxu0 %v2276
  %3148 = vmatpush1.bf16.msra.mxu0 %v2275
  %3149 = vmatprep.subr.bf16.mxu0 %v2280
  %3150 = vmatpush1.bf16.msra.mxu0 %v2279
  %3151 = vmatprep.subr.bf16.mxu0 %v2284
  %3152 = vmatpush1.bf16.msra.mxu0 %v2283
  %3153 = vmatprep.subr.bf16.mxu0 %v2288
  %3154 = vmatpush1.bf16.msra.mxu0 %v2287
  %3155 = vmatprep.subr.bf16.mxu0 %v2292
  %3156 = vmatpush1.bf16.msra.mxu0 %v2291
  %3157 = vmatprep.subr.bf16.mxu0 %v2296
  %3158 = vmatpush1.bf16.msra.mxu0 %v2295
  %3159 = vmatprep.subr.bf16.mxu0 %v2300
  %3160 = vmatpush1.bf16.msra.mxu0 %v2299
  %3161 = vmatprep.subr.bf16.mxu0 %v2304
  %3162 = vmatpush1.bf16.msra.mxu0 %v2303
  %3163 = vmatprep.subr.bf16.mxu0 %v2308
  %3164 = vmatpush1.bf16.msra.mxu0 %v2307
  %3165 = vmatprep.subr.bf16.mxu0 %v2312
  %3166 = vmatpush1.bf16.msra.mxu0 %v2311
  %3167 = vmatprep.subr.bf16.mxu0 %v2316
  %3168 = vmatpush1.bf16.msra.mxu0 %v2315
  %3169 = vmatprep.subr.bf16.mxu0 %v2320
  %3170 = vmatpush1.bf16.msra.mxu0 %v2319
  %3171 = vmatprep.mubr.bf16.mxu0 %v785
  %3172 = vmatmul.mubr.bf16.gmra.mrb[0].mxu0 %v784
  %v3173 = vpop.f32.mrb[0].mxu0
  %v3174 = vadd.f32 %v3073, %v3173
  %v3175 = vpop.f32.mrb[0].mxu0
  %v3176 = vadd.f32 %v3075, %v3175
  %v3177 = vpop.f32.mrb[0].mxu0
  %v3178 = vadd.f32 %v3077, %v3177
  %v3179 = vpop.f32.mrb[0].mxu0
  %v3180 = vadd.f32 %v3079, %v3179
  %3181 = vmatprep.mubr.bf16.mxu0 %v798
  %3182 = vmatmul.mubr.bf16.gmra.mrb[0].mxu0 %v797
  %v3183 = vpop.f32.mrb[0].mxu0
  %v3184 = vadd.f32 %v3083, %v3183
  %v3185 = vpop.f32.mrb[0].mxu0
  %v3186 = vadd.f32 %v3085, %v3185
  %v3187 = vpop.f32.mrb[0].mxu0
  %v3188 = vadd.f32 %v3087, %v3187
  %v3189 = vpop.f32.mrb[0].mxu0
  %v3190 = vadd.f32 %v3089, %v3189
  %3191 = vmatprep.mubr.bf16.mxu0 %v811
  %3192 = vmatmul.mubr.bf16.gmra.mrb[0].mxu0 %v810
  %v3193 = vpop.f32.mrb[0].mxu0
  %v3194 = vadd.f32 %v3093, %v3193
  %v3195 = vpop.f32.mrb[0].mxu0
  %v3196 = vadd.f32 %v3095, %v3195
  %v3197 = vpop.f32.mrb[0].mxu0
  %v3198 = vadd.f32 %v3097, %v3197
  %v3199 = vpop.f32.mrb[0].mxu0
  %v3200 = vadd.f32 %v3099, %v3199
  %3201 = vmatprep.mubr.bf16.mxu0 %v824
  %3202 = vmatmul.mubr.bf16.gmra.mrb[0].mxu0 %v823
  %v3203 = vpop.f32.mrb[0].mxu0
  %v3204 = vadd.f32 %v3103, %v3203
  %v3205 = vpop.f32.mrb[0].mxu0
  %v3206 = vadd.f32 %v3105, %v3205
  %v3207 = vpop.f32.mrb[0].mxu0
  %v3208 = vadd.f32 %v3107, %v3207
  %v3209 = vpop.f32.mrb[0].mxu0
  %v3210 = vadd.f32 %v3109, %v3209
  %3211 = vmatprep.mubr.bf16.mxu0 %v837
  %3212 = vmatmul.mubr.bf16.gmra.mrb[0].mxu0 %v836
  %v3213 = vpop.f32.mrb[0].mxu0
  %v3214 = vadd.f32 %v3113, %v3213
  %v3215 = vpop.f32.mrb[0].mxu0
  %v3216 = vadd.f32 %v3115, %v3215
  %v3217 = vpop.f32.mrb[0].mxu0
  %v3218 = vadd.f32 %v3117, %v3217
  %v3219 = vpop.f32.mrb[0].mxu0
  %v3220 = vadd.f32 %v3119, %v3219
  %3221 = vmatprep.mubr.bf16.mxu0 %v850
  %3222 = vmatmul.mubr.bf16.gmra.mrb[0].mxu0 %v849
  %v3223 = vpop.f32.mrb[0].mxu0
  %v3224 = vadd.f32 %v3123, %v3223
  %v3225 = vpop.f32.mrb[0].mxu0
  %v3226 = vadd.f32 %v3125, %v3225
  %v3227 = vpop.f32.mrb[0].mxu0
  %v3228 = vadd.f32 %v3127, %v3227
  %v3229 = vpop.f32.mrb[0].mxu0
  %v3230 = vadd.f32 %v3129, %v3229
  %3231 = vmatprep.mubr.bf16.mxu0 %v863
  %3232 = vmatmul.mubr.bf16.gmra.mrb[0].mxu0 %v862
  %v3233 = vpop.f32.mrb[0].mxu0
  %v3234 = vadd.f32 %v3133, %v3233
  %v3235 = vpop.f32.mrb[0].mxu0
  %v3236 = vadd.f32 %v3135, %v3235
  %v3237 = vpop.f32.mrb[0].mxu0
  %v3238 = vpop.f32.mrb[0].mxu0
  %3239 = vdwg.mxu0
  %3240 = vmatprep.subr.bf16.mxu0 %v2324
  %3241 = vmatpush1.bf16.msra.mxu0 %v2323
  %3242 = vmatprep.subr.bf16.mxu0 %v2328
  %3243 = vmatpush1.bf16.msra.mxu0 %v2327
  %3244 = vmatprep.subr.bf16.mxu0 %v2332
  %3245 = vmatpush1.bf16.msra.mxu0 %v2331
  %3246 = vmatprep.subr.bf16.mxu0 %v2336
  %3247 = vmatpush1.bf16.msra.mxu0 %v2335
  %3248 = vmatprep.subr.bf16.mxu0 %v2340
  %3249 = vmatpush1.bf16.msra.mxu0 %v2339
  %3250 = vmatprep.subr.bf16.mxu0 %v2344
  %3251 = vmatpush1.bf16.msra.mxu0 %v2343
  %3252 = vmatprep.subr.bf16.mxu0 %v2348
  %3253 = vmatpush1.bf16.msra.mxu0 %v2347
  %3254 = vmatprep.subr.bf16.mxu0 %v2352
  %3255 = vmatpush1.bf16.msra.mxu0 %v2351
  %3256 = vmatprep.subr.bf16.mxu0 %v2356
  %3257 = vmatpush1.bf16.msra.mxu0 %v2355
  %3258 = vmatprep.subr.bf16.mxu0 %v2360
  %3259 = vmatpush1.bf16.msra.mxu0 %v2359
  %3260 = vmatprep.subr.bf16.mxu0 %v2364
  %3261 = vmatpush1.bf16.msra.mxu0 %v2363
  %3262 = vmatprep.subr.bf16.mxu0 %v2368
  %3263 = vmatpush1.bf16.msra.mxu0 %v2367
  %3264 = vmatprep.subr.bf16.mxu0 %v2372
  %3265 = vmatpush1.bf16.msra.mxu0 %v2371
  %3266 = vmatprep.subr.bf16.mxu0 %v2376
  %3267 = vmatpush1.bf16.msra.mxu0 %v2375
  %3268 = vmatprep.subr.bf16.mxu0 %v2380
  %3269 = vmatpush1.bf16.msra.mxu0 %v2379
  %3270 = vmatprep.subr.bf16.mxu0 %v2384
  %3271 = vmatpush1.bf16.msra.mxu0 %v2383
  %3272 = vmatprep.mubr.bf16.mxu0 %v787
  %3273 = vmatmul.mubr.bf16.gmra.mrb[0].mxu0 %v786
  %v3274 = vpop.f32.mrb[0].mxu0
  %v3275 = vadd.f32 %v3174, %v3274
  %v3276 = vpop.f32.mrb[0].mxu0
  %v3277 = vadd.f32 %v3176, %v3276
  %v3278 = vpop.f32.mrb[0].mxu0
  %v3279 = vadd.f32 %v3178, %v3278
  %v3280 = vpop.f32.mrb[0].mxu0
  %v3281 = vadd.f32 %v3180, %v3280
  %3282 = vmatprep.mubr.bf16.mxu0 %v800
  %3283 = vmatmul.mubr.bf16.gmra.mrb[0].mxu0 %v799
  %v3284 = vpop.f32.mrb[0].mxu0
  %v3285 = vadd.f32 %v3184, %v3284
  %v3286 = vpop.f32.mrb[0].mxu0
  %v3287 = vadd.f32 %v3186, %v3286
  %v3288 = vpop.f32.mrb[0].mxu0
  %v3289 = vadd.f32 %v3188, %v3288
  %v3290 = vpop.f32.mrb[0].mxu0
  %v3291 = vadd.f32 %v3190, %v3290
  %3292 = vmatprep.mubr.bf16.mxu0 %v813
  %3293 = vmatmul.mubr.bf16.gmra.mrb[0].mxu0 %v812
  %v3294 = vpop.f32.mrb[0].mxu0
  %v3295 = vadd.f32 %v3194, %v3294
  %v3296 = vpop.f32.mrb[0].mxu0
  %v3297 = vadd.f32 %v3196, %v3296
  %v3298 = vpop.f32.mrb[0].mxu0
  %v3299 = vadd.f32 %v3198, %v3298
  %v3300 = vpop.f32.mrb[0].mxu0
  %v3301 = vadd.f32 %v3200, %v3300
  %3302 = vmatprep.mubr.bf16.mxu0 %v826
  %3303 = vmatmul.mubr.bf16.gmra.mrb[0].mxu0 %v825
  %v3304 = vpop.f32.mrb[0].mxu0
  %v3305 = vadd.f32 %v3204, %v3304
  %v3306 = vpop.f32.mrb[0].mxu0
  %v3307 = vadd.f32 %v3206, %v3306
  %v3308 = vpop.f32.mrb[0].mxu0
  %v3309 = vadd.f32 %v3208, %v3308
  %v3310 = vpop.f32.mrb[0].mxu0
  %v3311 = vadd.f32 %v3210, %v3310
  %3312 = vmatprep.mubr.bf16.mxu0 %v839
  %3313 = vmatmul.mubr.bf16.gmra.mrb[0].mxu0 %v838
  %v3314 = vpop.f32.mrb[0].mxu0
  %v3315 = vadd.f32 %v3214, %v3314
  %v3316 = vpop.f32.mrb[0].mxu0
  %v3317 = vadd.f32 %v3216, %v3316
  %v3318 = vpop.f32.mrb[0].mxu0
  %v3319 = vadd.f32 %v3218, %v3318
  %v3320 = vpop.f32.mrb[0].mxu0
  %v3321 = vadd.f32 %v3220, %v3320
  %3322 = vmatprep.mubr.bf16.mxu0 %v852
  %3323 = vmatmul.mubr.bf16.gmra.mrb[0].mxu0 %v851
  %v3324 = vpop.f32.mrb[0].mxu0
  %v3325 = vadd.f32 %v3224, %v3324
  %v3326 = vpop.f32.mrb[0].mxu0
  %v3327 = vadd.f32 %v3226, %v3326
  %v3328 = vpop.f32.mrb[0].mxu0
  %v3329 = vadd.f32 %v3228, %v3328
  %v3330 = vpop.f32.mrb[0].mxu0
  %v3331 = vadd.f32 %v3230, %v3330
  %3332 = vmatprep.mubr.bf16.mxu0 %v865
  %3333 = vmatmul.mubr.bf16.gmra.mrb[0].mxu0 %v864
  %v3334 = vpop.f32.mrb[0].mxu0
  %v3335 = vadd.f32 %v3234, %v3334
  %v3336 = vpop.f32.mrb[0].mxu0
  %v3337 = vadd.f32 %v3236, %v3336
  %v3338 = vpop.f32.mrb[0].mxu0
  %v3339 = vpop.f32.mrb[0].mxu0
  %3340 = vdwg.mxu0
  %3341 = vmatprep.subr.bf16.mxu0 %v2388
  %3342 = vmatpush1.bf16.msra.mxu0 %v2387
  %3343 = vmatprep.subr.bf16.mxu0 %v2392
  %3344 = vmatpush1.bf16.msra.mxu0 %v2391
  %3345 = vmatprep.subr.bf16.mxu0 %v2396
  %3346 = vmatpush1.bf16.msra.mxu0 %v2395
  %3347 = vmatprep.subr.bf16.mxu0 %v2400
  %3348 = vmatpush1.bf16.msra.mxu0 %v2399
  %3349 = vmatprep.subr.bf16.mxu0 %v2404
  %3350 = vmatpush1.bf16.msra.mxu0 %v2403
  %3351 = vmatprep.subr.bf16.mxu0 %v2408
  %3352 = vmatpush1.bf16.msra.mxu0 %v2407
  %3353 = vmatprep.subr.bf16.mxu0 %v2412
  %3354 = vmatpush1.bf16.msra.mxu0 %v2411
  %3355 = vmatprep.subr.bf16.mxu0 %v2416
  %3356 = vmatpush1.bf16.msra.mxu0 %v2415
  %3357 = vmatprep.subr.bf16.mxu0 %v2420
  %3358 = vmatpush1.bf16.msra.mxu0 %v2419
  %3359 = vmatprep.subr.bf16.mxu0 %v2424
  %3360 = vmatpush1.bf16.msra.mxu0 %v2423
  %3361 = vmatprep.subr.bf16.mxu0 %v2428
  %3362 = vmatpush1.bf16.msra.mxu0 %v2427
  %3363 = vmatprep.subr.bf16.mxu0 %v2432
  %3364 = vmatpush1.bf16.msra.mxu0 %v2431
  %3365 = vmatprep.subr.bf16.mxu0 %v2436
  %3366 = vmatpush1.bf16.msra.mxu0 %v2435
  %3367 = vmatprep.subr.bf16.mxu0 %v2440
  %3368 = vmatpush1.bf16.msra.mxu0 %v2439
  %3369 = vmatprep.subr.bf16.mxu0 %v2444
  %3370 = vmatpush1.bf16.msra.mxu0 %v2443
  %3371 = vmatprep.subr.bf16.mxu0 %v2448
  %3372 = vmatpush1.bf16.msra.mxu0 %v2447
  %3373 = vmatprep.mubr.bf16.mxu0 %v789
  %3374 = vmatmul.mubr.bf16.gmra.mrb[0].mxu0 %v788
  %v3375 = vpop.f32.mrb[0].mxu0
  %v3376 = vadd.f32 %v3275, %v3375
  %v3377 = vpop.f32.mrb[0].mxu0
  %v3378 = vadd.f32 %v3277, %v3377
  %v3379 = vpop.f32.mrb[0].mxu0
  %v3380 = vadd.f32 %v3279, %v3379
  %v3381 = vpop.f32.mrb[0].mxu0
  %v3382 = vadd.f32 %v3281, %v3381
  %3383 = vmatprep.mubr.bf16.mxu0 %v802
  %3384 = vmatmul.mubr.bf16.gmra.mrb[0].mxu0 %v801
  %v3385 = vpop.f32.mrb[0].mxu0
  %v3386 = vadd.f32 %v3285, %v3385
  %v3387 = vpop.f32.mrb[0].mxu0
  %v3388 = vadd.f32 %v3287, %v3387
  %v3389 = vpop.f32.mrb[0].mxu0
  %v3390 = vadd.f32 %v3289, %v3389
  %v3391 = vpop.f32.mrb[0].mxu0
  %v3392 = vadd.f32 %v3291, %v3391
  %3393 = vmatprep.mubr.bf16.mxu0 %v815
  %3394 = vmatmul.mubr.bf16.gmra.mrb[0].mxu0 %v814
  %v3395 = vpop.f32.mrb[0].mxu0
  %v3396 = vadd.f32 %v3295, %v3395
  %v3397 = vpop.f32.mrb[0].mxu0
  %v3398 = vadd.f32 %v3297, %v3397
  %v3399 = vpop.f32.mrb[0].mxu0
  %v3400 = vadd.f32 %v3299, %v3399
  %v3401 = vpop.f32.mrb[0].mxu0
  %v3402 = vadd.f32 %v3301, %v3401
  %3403 = vmatprep.mubr.bf16.mxu0 %v828
  %3404 = vmatmul.mubr.bf16.gmra.mrb[0].mxu0 %v827
  %v3405 = vpop.f32.mrb[0].mxu0
  %v3406 = vadd.f32 %v3305, %v3405
  %v3407 = vpop.f32.mrb[0].mxu0
  %v3408 = vadd.f32 %v3307, %v3407
  %v3409 = vpop.f32.mrb[0].mxu0
  %v3410 = vadd.f32 %v3309, %v3409
  %v3411 = vpop.f32.mrb[0].mxu0
  %v3412 = vadd.f32 %v3311, %v3411
  %3413 = vmatprep.mubr.bf16.mxu0 %v841
  %3414 = vmatmul.mubr.bf16.gmra.mrb[0].mxu0 %v840
  %v3415 = vpop.f32.mrb[0].mxu0
  %v3416 = vadd.f32 %v3315, %v3415
  %v3417 = vpop.f32.mrb[0].mxu0
  %v3418 = vadd.f32 %v3317, %v3417
  %v3419 = vpop.f32.mrb[0].mxu0
  %v3420 = vadd.f32 %v3319, %v3419
  %v3421 = vpop.f32.mrb[0].mxu0
  %v3422 = vadd.f32 %v3321, %v3421
  %3423 = vmatprep.mubr.bf16.mxu0 %v854
  %3424 = vmatmul.mubr.bf16.gmra.mrb[0].mxu0 %v853
  %v3425 = vpop.f32.mrb[0].mxu0
  %v3426 = vadd.f32 %v3325, %v3425
  %v3427 = vpop.f32.mrb[0].mxu0
  %v3428 = vadd.f32 %v3327, %v3427
  %v3429 = vpop.f32.mrb[0].mxu0
  %v3430 = vadd.f32 %v3329, %v3429
  %v3431 = vpop.f32.mrb[0].mxu0
  %v3432 = vadd.f32 %v3331, %v3431
  %3433 = vmatprep.mubr.bf16.mxu0 %v867
  %3434 = vmatmul.mubr.bf16.gmra.mrb[0].mxu0 %v866
  %v3435 = vpop.f32.mrb[0].mxu0
  %v3436 = vadd.f32 %v3335, %v3435
  %v3437 = vpop.f32.mrb[0].mxu0
  %v3438 = vadd.f32 %v3337, %v3437
  %v3439 = vpop.f32.mrb[0].mxu0
  %v3440 = vpop.f32.mrb[0].mxu0
  %3441 = vdwg.mxu0
  %3442 = vmatprep.subr.bf16.mxu0 %v2452
  %3443 = vmatpush1.bf16.msra.mxu0 %v2451
  %3444 = vmatprep.subr.bf16.mxu0 %v2456
  %3445 = vmatpush1.bf16.msra.mxu0 %v2455
  %3446 = vmatprep.subr.bf16.mxu0 %v2460
  %3447 = vmatpush1.bf16.msra.mxu0 %v2459
  %3448 = vmatprep.subr.bf16.mxu0 %v2464
  %3449 = vmatpush1.bf16.msra.mxu0 %v2463
  %3450 = vmatprep.subr.bf16.mxu0 %v2468
  %3451 = vmatpush1.bf16.msra.mxu0 %v2467
  %3452 = vmatprep.subr.bf16.mxu0 %v2472
  %3453 = vmatpush1.bf16.msra.mxu0 %v2471
  %3454 = vmatprep.subr.bf16.mxu0 %v2476
  %3455 = vmatpush1.bf16.msra.mxu0 %v2475
  %3456 = vmatprep.subr.bf16.mxu0 %v2480
  %3457 = vmatpush1.bf16.msra.mxu0 %v2479
  %3458 = vmatprep.subr.bf16.mxu0 %v2484
  %3459 = vmatpush1.bf16.msra.mxu0 %v2483
  %3460 = vmatprep.subr.bf16.mxu0 %v2488
  %3461 = vmatpush1.bf16.msra.mxu0 %v2487
  %3462 = vmatprep.subr.bf16.mxu0 %v2492
  %3463 = vmatpush1.bf16.msra.mxu0 %v2491
  %3464 = vmatprep.subr.bf16.mxu0 %v2496
  %3465 = vmatpush1.bf16.msra.mxu0 %v2495
  %3466 = vmatprep.subr.bf16.mxu0 %v2500
  %3467 = vmatpush1.bf16.msra.mxu0 %v2499
  %3468 = vmatprep.subr.bf16.mxu0 %v2504
  %3469 = vmatpush1.bf16.msra.mxu0 %v2503
  %3470 = vmatprep.subr.bf16.mxu0 %v2508
  %3471 = vmatpush1.bf16.msra.mxu0 %v2507
  %3472 = vmatprep.subr.bf16.mxu0 %v2512
  %3473 = vmatpush1.bf16.msra.mxu0 %v2511
  %3474 = vmatprep.mubr.bf16.mxu0 %v791
  %3475 = vmatmul.mubr.bf16.gmra.mrb[0].mxu0 %v790
  %v3476 = vpop.f32.mrb[0].mxu0
  %v3477 = vadd.f32 %v3376, %v3476
  %v3478 = vpop.f32.mrb[0].mxu0
  %v3479 = vadd.f32 %v3378, %v3478
  %v3480 = vpop.f32.mrb[0].mxu0
  %v3481 = vadd.f32 %v3380, %v3480
  %v3482 = vpop.f32.mrb[0].mxu0
  %v3483 = vadd.f32 %v3382, %v3482
  %3484 = vmatprep.mubr.bf16.mxu0 %v804
  %3485 = vmatmul.mubr.bf16.gmra.mrb[0].mxu0 %v803
  %v3486 = vpop.f32.mrb[0].mxu0
  %v3487 = vadd.f32 %v3386, %v3486
  %v3488 = vpop.f32.mrb[0].mxu0
  %v3489 = vadd.f32 %v3388, %v3488
  %v3490 = vpop.f32.mrb[0].mxu0
  %v3491 = vadd.f32 %v3390, %v3490
  %v3492 = vpop.f32.mrb[0].mxu0
  %v3493 = vadd.f32 %v3392, %v3492
  %3494 = vmatprep.mubr.bf16.mxu0 %v817
  %3495 = vmatmul.mubr.bf16.gmra.mrb[0].mxu0 %v816
  %v3496 = vpop.f32.mrb[0].mxu0
  %v3497 = vadd.f32 %v3396, %v3496
  %v3498 = vpop.f32.mrb[0].mxu0
  %v3499 = vadd.f32 %v3398, %v3498
  %v3500 = vpop.f32.mrb[0].mxu0
  %v3501 = vadd.f32 %v3400, %v3500
  %v3502 = vpop.f32.mrb[0].mxu0
  %v3503 = vadd.f32 %v3402, %v3502
  %3504 = vmatprep.mubr.bf16.mxu0 %v830
  %3505 = vmatmul.mubr.bf16.gmra.mrb[0].mxu0 %v829
  %v3506 = vpop.f32.mrb[0].mxu0
  %v3507 = vadd.f32 %v3406, %v3506
  %v3508 = vpop.f32.mrb[0].mxu0
  %v3509 = vadd.f32 %v3408, %v3508
  %v3510 = vpop.f32.mrb[0].mxu0
  %v3511 = vadd.f32 %v3410, %v3510
  %v3512 = vpop.f32.mrb[0].mxu0
  %v3513 = vadd.f32 %v3412, %v3512
  %3514 = vmatprep.mubr.bf16.mxu0 %v843
  %3515 = vmatmul.mubr.bf16.gmra.mrb[0].mxu0 %v842
  %v3516 = vpop.f32.mrb[0].mxu0
  %v3517 = vadd.f32 %v3416, %v3516
  %v3518 = vpop.f32.mrb[0].mxu0
  %v3519 = vadd.f32 %v3418, %v3518
  %v3520 = vpop.f32.mrb[0].mxu0
  %v3521 = vadd.f32 %v3420, %v3520
  %v3522 = vpop.f32.mrb[0].mxu0
  %v3523 = vadd.f32 %v3422, %v3522
  %3524 = vmatprep.mubr.bf16.mxu0 %v856
  %3525 = vmatmul.mubr.bf16.gmra.mrb[0].mxu0 %v855
  %v3526 = vpop.f32.mrb[0].mxu0
  %v3527 = vadd.f32 %v3426, %v3526
  %v3528 = vpop.f32.mrb[0].mxu0
  %v3529 = vadd.f32 %v3428, %v3528
  %v3530 = vpop.f32.mrb[0].mxu0
  %v3531 = vadd.f32 %v3430, %v3530
  %v3532 = vpop.f32.mrb[0].mxu0
  %v3533 = vadd.f32 %v3432, %v3532
  %3534 = vmatprep.mubr.bf16.mxu0 %v869
  %3535 = vmatmul.mubr.bf16.gmra.mrb[0].mxu0 %v868
  %v3536 = vpop.f32.mrb[0].mxu0
  %v3537 = vadd.f32 %v3436, %v3536
  %v3538 = vpop.f32.mrb[0].mxu0
  %v3539 = vadd.f32 %v3438, %v3538
  %v3540 = vpop.f32.mrb[0].mxu0
  %v3541 = vpop.f32.mrb[0].mxu0
  %3542 = vdwg.mxu0
  %3543 = vmatprep.subr.bf16.mxu0 %v2516
  %3544 = vmatpush1.bf16.msra.mxu0 %v2515
  %3545 = vmatprep.subr.bf16.mxu0 %v2520
  %3546 = vmatpush1.bf16.msra.mxu0 %v2519
  %3547 = vmatprep.subr.bf16.mxu0 0
  %3548 = vmatpush1.bf16.msra.mxu0 0
  %3549 = vmatprep.subr.bf16.mxu0 0
  %3550 = vmatpush1.bf16.msra.mxu0 0
  %3551 = vmatprep.subr.bf16.mxu0 0
  %3552 = vmatpush1.bf16.msra.mxu0 0
  %3553 = vmatprep.subr.bf16.mxu0 0
  %3554 = vmatpush1.bf16.msra.mxu0 0
  %3555 = vmatprep.subr.bf16.mxu0 0
  %3556 = vmatpush1.bf16.msra.mxu0 0
  %3557 = vmatprep.subr.bf16.mxu0 0
  %3558 = vmatpush1.bf16.msra.mxu0 0
  %3559 = vmatprep.subr.bf16.mxu0 0
  %3560 = vmatpush1.bf16.msra.mxu0 0
  %3561 = vmatprep.subr.bf16.mxu0 0
  %3562 = vmatpush1.bf16.msra.mxu0 0
  %3563 = vmatprep.subr.bf16.mxu0 0
  %3564 = vmatpush1.bf16.msra.mxu0 0
  %3565 = vmatprep.subr.bf16.mxu0 0
  %3566 = vmatpush1.bf16.msra.mxu0 0
  %3567 = vmatprep.subr.bf16.mxu0 0
  %3568 = vmatpush1.bf16.msra.mxu0 0
  %3569 = vmatprep.subr.bf16.mxu0 0
  %3570 = vmatpush1.bf16.msra.mxu0 0
  %3571 = vmatprep.subr.bf16.mxu0 0
  %3572 = vmatpush1.bf16.msra.mxu0 0
  %3573 = vmatprep.subr.bf16.mxu0 0
  %3574 = vmatpush1.bf16.msra.mxu0 0
  %3575 = vmatprep.mubr.bf16.mxu0 0
  %3576 = vmatmul.mubr.bf16.gmra.mrb[0].mxu0 %v2917
  %v3577 = vpop.f32.mrb[0].mxu0
  %v3578 = vadd.f32 %v3477, %v3577
  %v3579 = vpop.f32.mrb[0].mxu0
  %v3580 = vadd.f32 %v3479, %v3579
  %v3581 = vpop.f32.mrb[0].mxu0
  %v3582 = vadd.f32 %v3481, %v3581
  %v3583 = vpop.f32.mrb[0].mxu0
  %v3584 = vadd.f32 %v3483, %v3583
  %3585 = vmatprep.mubr.bf16.mxu0 0
  %3586 = vmatmul.mubr.bf16.gmra.mrb[0].mxu0 %v2920
  %v3587 = vpop.f32.mrb[0].mxu0
  %v3588 = vadd.f32 %v3487, %v3587
  %v3589 = vpop.f32.mrb[0].mxu0
  %v3590 = vadd.f32 %v3489, %v3589
  %v3591 = vpop.f32.mrb[0].mxu0
  %v3592 = vadd.f32 %v3491, %v3591
  %v3593 = vpop.f32.mrb[0].mxu0
  %v3594 = vadd.f32 %v3493, %v3593
  %3595 = vmatprep.mubr.bf16.mxu0 0
  %3596 = vmatmul.mubr.bf16.gmra.mrb[0].mxu0 %v2923
  %v3597 = vpop.f32.mrb[0].mxu0
  %v3598 = vadd.f32 %v3497, %v3597
  %v3599 = vpop.f32.mrb[0].mxu0
  %v3600 = vadd.f32 %v3499, %v3599
  %v3601 = vpop.f32.mrb[0].mxu0
  %v3602 = vadd.f32 %v3501, %v3601
  %v3603 = vpop.f32.mrb[0].mxu0
  %v3604 = vadd.f32 %v3503, %v3603
  %3605 = vmatprep.mubr.bf16.mxu0 0
  %3606 = vmatmul.mubr.bf16.gmra.mrb[0].mxu0 %v2926
  %v3607 = vpop.f32.mrb[0].mxu0
  %v3608 = vadd.f32 %v3507, %v3607
  %v3609 = vpop.f32.mrb[0].mxu0
  %v3610 = vadd.f32 %v3509, %v3609
  %v3611 = vpop.f32.mrb[0].mxu0
  %v3612 = vadd.f32 %v3511, %v3611
  %v3613 = vpop.f32.mrb[0].mxu0
  %v3614 = vadd.f32 %v3513, %v3613
  %3615 = vmatprep.mubr.bf16.mxu0 0
  %3616 = vmatmul.mubr.bf16.gmra.mrb[0].mxu0 %v2929
  %v3617 = vpop.f32.mrb[0].mxu0
  %v3618 = vadd.f32 %v3517, %v3617
  %v3619 = vpop.f32.mrb[0].mxu0
  %v3620 = vadd.f32 %v3519, %v3619
  %v3621 = vpop.f32.mrb[0].mxu0
  %v3622 = vadd.f32 %v3521, %v3621
  %v3623 = vpop.f32.mrb[0].mxu0
  %v3624 = vadd.f32 %v3523, %v3623
  %3625 = vmatprep.mubr.bf16.mxu0 0
  %3626 = vmatmul.mubr.bf16.gmra.mrb[0].mxu0 %v2932
  %v3627 = vpop.f32.mrb[0].mxu0
  %v3628 = vadd.f32 %v3527, %v3627
  %v3629 = vpop.f32.mrb[0].mxu0
  %v3630 = vadd.f32 %v3529, %v3629
  %v3631 = vpop.f32.mrb[0].mxu0
  %v3632 = vadd.f32 %v3531, %v3631
  %v3633 = vpop.f32.mrb[0].mxu0
  %v3634 = vadd.f32 %v3533, %v3633
  %3635 = vmatprep.mubr.bf16.mxu0 0
  %3636 = vmatmul.mubr.bf16.gmra.mrb[0].mxu0 %v2935
  %v3637 = vpop.f32.mrb[0].mxu0
  %v3638 = vadd.f32 %v3537, %v3637
  %v3639 = vpop.f32.mrb[0].mxu0
  %v3640 = vadd.f32 %v3539, %v3639
  %v3641 = vpop.f32.mrb[0].mxu0
  %v3642 = vpop.f32.mrb[0].mxu0
  %3643 = vdwg.mxu0
  %3644 = vmatprep.subr.bf16.mxu0 %v2134
  %3645 = vmatpush1.bf16.msra.mxu0 %v2133
  %3646 = vmatprep.subr.bf16.mxu0 %v2138
  %3647 = vmatpush1.bf16.msra.mxu0 %v2137
  %3648 = vmatprep.subr.bf16.mxu0 %v2142
  %3649 = vmatpush1.bf16.msra.mxu0 %v2141
  %3650 = vmatprep.subr.bf16.mxu0 %v2146
  %3651 = vmatpush1.bf16.msra.mxu0 %v2145
  %3652 = vmatprep.subr.bf16.mxu0 %v2150
  %3653 = vmatpush1.bf16.msra.mxu0 %v2149
  %3654 = vmatprep.subr.bf16.mxu0 %v2154
  %3655 = vmatpush1.bf16.msra.mxu0 %v2153
  %3656 = vmatprep.subr.bf16.mxu0 %v2158
  %3657 = vmatpush1.bf16.msra.mxu0 %v2157
  %3658 = vmatprep.subr.bf16.mxu0 %v2162
  %3659 = vmatpush1.bf16.msra.mxu0 %v2161
  %3660 = vmatprep.subr.bf16.mxu0 %v2166
  %3661 = vmatpush1.bf16.msra.mxu0 %v2165
  %3662 = vmatprep.subr.bf16.mxu0 %v2170
  %3663 = vmatpush1.bf16.msra.mxu0 %v2169
  %3664 = vmatprep.subr.bf16.mxu0 %v2174
  %3665 = vmatpush1.bf16.msra.mxu0 %v2173
  %3666 = vmatprep.subr.bf16.mxu0 %v2178
  %3667 = vmatpush1.bf16.msra.mxu0 %v2177
  %3668 = vmatprep.subr.bf16.mxu0 %v2182
  %3669 = vmatpush1.bf16.msra.mxu0 %v2181
  %3670 = vmatprep.subr.bf16.mxu0 %v2186
  %3671 = vmatpush1.bf16.msra.mxu0 %v2185
  %3672 = vmatprep.subr.bf16.mxu0 %v2190
  %3673 = vmatpush1.bf16.msra.mxu0 %v2189
  %3674 = vmatprep.subr.bf16.mxu0 %v2194
  %3675 = vmatpush1.bf16.msra.mxu0 %v2193
  %3676 = vmatprep.mubr.bf16.mxu0 %v781
  %3677 = vmatmul.mubr.bf16.gmra.mrb[0].mxu0 %v780
  %v3678 = vpop.f32.mrb[0].mxu0
  %v3679 = vadd.f32 %v511, %v3678
  %v3680 = vpop.f32.mrb[0].mxu0
  %v3681 = vadd.f32 %v515, %v3680
  %v3682 = vpop.f32.mrb[0].mxu0
  %v3683 = vadd.f32 %v511, %v3682
  %v3684 = vpop.f32.mrb[0].mxu0
  %v3685 = vadd.f32 %v515, %v3684
  %3686 = vmatprep.mubr.bf16.mxu0 %v794
  %3687 = vmatmul.mubr.bf16.gmra.mrb[0].mxu0 %v793
  %v3688 = vpop.f32.mrb[0].mxu0
  %v3689 = vadd.f32 %v511, %v3688
  %v3690 = vpop.f32.mrb[0].mxu0
  %v3691 = vadd.f32 %v515, %v3690
  %v3692 = vpop.f32.mrb[0].mxu0
  %v3693 = vadd.f32 %v511, %v3692
  %v3694 = vpop.f32.mrb[0].mxu0
  %v3695 = vadd.f32 %v515, %v3694
  %3696 = vmatprep.mubr.bf16.mxu0 %v807
  %3697 = vmatmul.mubr.bf16.gmra.mrb[0].mxu0 %v806
  %v3698 = vpop.f32.mrb[0].mxu0
  %v3699 = vadd.f32 %v511, %v3698
  %v3700 = vpop.f32.mrb[0].mxu0
  %v3701 = vadd.f32 %v515, %v3700
  %v3702 = vpop.f32.mrb[0].mxu0
  %v3703 = vadd.f32 %v511, %v3702
  %v3704 = vpop.f32.mrb[0].mxu0
  %v3705 = vadd.f32 %v515, %v3704
  %3706 = vmatprep.mubr.bf16.mxu0 %v820
  %3707 = vmatmul.mubr.bf16.gmra.mrb[0].mxu0 %v819
  %v3708 = vpop.f32.mrb[0].mxu0
  %v3709 = vadd.f32 %v511, %v3708
  %v3710 = vpop.f32.mrb[0].mxu0
  %v3711 = vadd.f32 %v515, %v3710
  %v3712 = vpop.f32.mrb[0].mxu0
  %v3713 = vadd.f32 %v511, %v3712
  %v3714 = vpop.f32.mrb[0].mxu0
  %v3715 = vadd.f32 %v515, %v3714
  %3716 = vmatprep.mubr.bf16.mxu0 %v833
  %3717 = vmatmul.mubr.bf16.gmra.mrb[0].mxu0 %v832
  %v3718 = vpop.f32.mrb[0].mxu0
  %v3719 = vadd.f32 %v511, %v3718
  %v3720 = vpop.f32.mrb[0].mxu0
  %v3721 = vadd.f32 %v515, %v3720
  %v3722 = vpop.f32.mrb[0].mxu0
  %v3723 = vadd.f32 %v511, %v3722
  %v3724 = vpop.f32.mrb[0].mxu0
  %v3725 = vadd.f32 %v515, %v3724
  %3726 = vmatprep.mubr.bf16.mxu0 %v846
  %3727 = vmatmul.mubr.bf16.gmra.mrb[0].mxu0 %v845
  %v3728 = vpop.f32.mrb[0].mxu0
  %v3729 = vadd.f32 %v511, %v3728
  %v3730 = vpop.f32.mrb[0].mxu0
  %v3731 = vadd.f32 %v515, %v3730
  %v3732 = vpop.f32.mrb[0].mxu0
  %v3733 = vadd.f32 %v511, %v3732
  %v3734 = vpop.f32.mrb[0].mxu0
  %v3735 = vadd.f32 %v515, %v3734
  %3736 = vmatprep.mubr.bf16.mxu0 %v859
  %3737 = vmatmul.mubr.bf16.gmra.mrb[0].mxu0 %v858
  %v3738 = vpop.f32.mrb[0].mxu0
  %v3739 = vadd.f32 %v511, %v3738
  %v3740 = vpop.f32.mrb[0].mxu0
  %v3741 = vadd.f32 %v515, %v3740
  %v3742 = vpop.f32.mrb[0].mxu0
  %v3743 = vpop.f32.mrb[0].mxu0
  %3744 = vdwg.mxu0
  %3745 = vmatprep.subr.bf16.mxu0 %v2198
  %3746 = vmatpush1.bf16.msra.mxu0 %v2197
  %3747 = vmatprep.subr.bf16.mxu0 %v2202
  %3748 = vmatpush1.bf16.msra.mxu0 %v2201
  %3749 = vmatprep.subr.bf16.mxu0 %v2206
  %3750 = vmatpush1.bf16.msra.mxu0 %v2205
  %3751 = vmatprep.subr.bf16.mxu0 %v2210
  %3752 = vmatpush1.bf16.msra.mxu0 %v2209
  %3753 = vmatprep.subr.bf16.mxu0 %v2214
  %3754 = vmatpush1.bf16.msra.mxu0 %v2213
  %3755 = vmatprep.subr.bf16.mxu0 %v2218
  %3756 = vmatpush1.bf16.msra.mxu0 %v2217
  %3757 = vmatprep.subr.bf16.mxu0 %v2222
  %3758 = vmatpush1.bf16.msra.mxu0 %v2221
  %3759 = vmatprep.subr.bf16.mxu0 %v2226
  %3760 = vmatpush1.bf16.msra.mxu0 %v2225
  %3761 = vmatprep.subr.bf16.mxu0 %v2230
  %3762 = vmatpush1.bf16.msra.mxu0 %v2229
  %3763 = vmatprep.subr.bf16.mxu0 %v2234
  %3764 = vmatpush1.bf16.msra.mxu0 %v2233
  %3765 = vmatprep.subr.bf16.mxu0 %v2238
  %3766 = vmatpush1.bf16.msra.mxu0 %v2237
  %3767 = vmatprep.subr.bf16.mxu0 %v2242
  %3768 = vmatpush1.bf16.msra.mxu0 %v2241
  %3769 = vmatprep.subr.bf16.mxu0 %v2246
  %3770 = vmatpush1.bf16.msra.mxu0 %v2245
  %3771 = vmatprep.subr.bf16.mxu0 %v2250
  %3772 = vmatpush1.bf16.msra.mxu0 %v2249
  %3773 = vmatprep.subr.bf16.mxu0 %v2254
  %3774 = vmatpush1.bf16.msra.mxu0 %v2253
  %3775 = vmatprep.subr.bf16.mxu0 %v2258
  %3776 = vmatpush1.bf16.msra.mxu0 %v2257
  %3777 = vmatprep.mubr.bf16.mxu0 %v783
  %3778 = vmatmul.mubr.bf16.gmra.mrb[0].mxu0 %v782
  %v3779 = vpop.f32.mrb[0].mxu0
  %v3780 = vadd.f32 %v3679, %v3779
  %v3781 = vpop.f32.mrb[0].mxu0
  %v3782 = vadd.f32 %v3681, %v3781
  %v3783 = vpop.f32.mrb[0].mxu0
  %v3784 = vadd.f32 %v3683, %v3783
  %v3785 = vpop.f32.mrb[0].mxu0
  %v3786 = vadd.f32 %v3685, %v3785
  %3787 = vmatprep.mubr.bf16.mxu0 %v796
  %3788 = vmatmul.mubr.bf16.gmra.mrb[0].mxu0 %v795
  %v3789 = vpop.f32.mrb[0].mxu0
  %v3790 = vadd.f32 %v3689, %v3789
  %v3791 = vpop.f32.mrb[0].mxu0
  %v3792 = vadd.f32 %v3691, %v3791
  %v3793 = vpop.f32.mrb[0].mxu0
  %v3794 = vadd.f32 %v3693, %v3793
  %v3795 = vpop.f32.mrb[0].mxu0
  %v3796 = vadd.f32 %v3695, %v3795
  %3797 = vmatprep.mubr.bf16.mxu0 %v809
  %3798 = vmatmul.mubr.bf16.gmra.mrb[0].mxu0 %v808
  %v3799 = vpop.f32.mrb[0].mxu0
  %v3800 = vadd.f32 %v3699, %v3799
  %v3801 = vpop.f32.mrb[0].mxu0
  %v3802 = vadd.f32 %v3701, %v3801
  %v3803 = vpop.f32.mrb[0].mxu0
  %v3804 = vadd.f32 %v3703, %v3803
  %v3805 = vpop.f32.mrb[0].mxu0
  %v3806 = vadd.f32 %v3705, %v3805
  %3807 = vmatprep.mubr.bf16.mxu0 %v822
  %3808 = vmatmul.mubr.bf16.gmra.mrb[0].mxu0 %v821
  %v3809 = vpop.f32.mrb[0].mxu0
  %v3810 = vadd.f32 %v3709, %v3809
  %v3811 = vpop.f32.mrb[0].mxu0
  %v3812 = vadd.f32 %v3711, %v3811
  %v3813 = vpop.f32.mrb[0].mxu0
  %v3814 = vadd.f32 %v3713, %v3813
  %v3815 = vpop.f32.mrb[0].mxu0
  %v3816 = vadd.f32 %v3715, %v3815
  %3817 = vmatprep.mubr.bf16.mxu0 %v835
  %3818 = vmatmul.mubr.bf16.gmra.mrb[0].mxu0 %v834
  %v3819 = vpop.f32.mrb[0].mxu0
  %v3820 = vadd.f32 %v3719, %v3819
  %v3821 = vpop.f32.mrb[0].mxu0
  %v3822 = vadd.f32 %v3721, %v3821
  %v3823 = vpop.f32.mrb[0].mxu0
  %v3824 = vadd.f32 %v3723, %v3823
  %v3825 = vpop.f32.mrb[0].mxu0
  %v3826 = vadd.f32 %v3725, %v3825
  %3827 = vmatprep.mubr.bf16.mxu0 %v848
  %3828 = vmatmul.mubr.bf16.gmra.mrb[0].mxu0 %v847
  %v3829 = vpop.f32.mrb[0].mxu0
  %v3830 = vadd.f32 %v3729, %v3829
  %v3831 = vpop.f32.mrb[0].mxu0
  %v3832 = vadd.f32 %v3731, %v3831
  %v3833 = vpop.f32.mrb[0].mxu0
  %v3834 = vadd.f32 %v3733, %v3833
  %v3835 = vpop.f32.mrb[0].mxu0
  %v3836 = vadd.f32 %v3735, %v3835
  %3837 = vmatprep.mubr.bf16.mxu0 %v861
  %3838 = vmatmul.mubr.bf16.gmra.mrb[0].mxu0 %v860
  %v3839 = vpop.f32.mrb[0].mxu0
  %v3840 = vadd.f32 %v3739, %v3839
  %v3841 = vpop.f32.mrb[0].mxu0
  %v3842 = vadd.f32 %v3741, %v3841
  %v3843 = vpop.f32.mrb[0].mxu0
  %v3844 = vpop.f32.mrb[0].mxu0
  %3845 = vdwg.mxu0
  %3846 = vmatprep.subr.bf16.mxu0 %v2262
  %3847 = vmatpush1.bf16.msra.mxu0 %v2261
  %3848 = vmatprep.subr.bf16.mxu0 %v2266
  %3849 = vmatpush1.bf16.msra.mxu0 %v2265
  %3850 = vmatprep.subr.bf16.mxu0 %v2270
  %3851 = vmatpush1.bf16.msra.mxu0 %v2269
  %3852 = vmatprep.subr.bf16.mxu0 %v2274
  %3853 = vmatpush1.bf16.msra.mxu0 %v2273
  %3854 = vmatprep.subr.bf16.mxu0 %v2278
  %3855 = vmatpush1.bf16.msra.mxu0 %v2277
  %3856 = vmatprep.subr.bf16.mxu0 %v2282
  %3857 = vmatpush1.bf16.msra.mxu0 %v2281
  %3858 = vmatprep.subr.bf16.mxu0 %v2286
  %3859 = vmatpush1.bf16.msra.mxu0 %v2285
  %3860 = vmatprep.subr.bf16.mxu0 %v2290
  %3861 = vmatpush1.bf16.msra.mxu0 %v2289
  %3862 = vmatprep.subr.bf16.mxu0 %v2294
  %3863 = vmatpush1.bf16.msra.mxu0 %v2293
  %3864 = vmatprep.subr.bf16.mxu0 %v2298
  %3865 = vmatpush1.bf16.msra.mxu0 %v2297
  %3866 = vmatprep.subr.bf16.mxu0 %v2302
  %3867 = vmatpush1.bf16.msra.mxu0 %v2301
  %3868 = vmatprep.subr.bf16.mxu0 %v2306
  %3869 = vmatpush1.bf16.msra.mxu0 %v2305
  %3870 = vmatprep.subr.bf16.mxu0 %v2310
  %3871 = vmatpush1.bf16.msra.mxu0 %v2309
  %3872 = vmatprep.subr.bf16.mxu0 %v2314
  %3873 = vmatpush1.bf16.msra.mxu0 %v2313
  %3874 = vmatprep.subr.bf16.mxu0 %v2318
  %3875 = vmatpush1.bf16.msra.mxu0 %v2317
  %3876 = vmatprep.subr.bf16.mxu0 %v2322
  %3877 = vmatpush1.bf16.msra.mxu0 %v2321
  %3878 = vmatprep.mubr.bf16.mxu0 %v785
  %3879 = vmatmul.mubr.bf16.gmra.mrb[0].mxu0 %v784
  %v3880 = vpop.f32.mrb[0].mxu0
  %v3881 = vadd.f32 %v3780, %v3880
  %v3882 = vpop.f32.mrb[0].mxu0
  %v3883 = vadd.f32 %v3782, %v3882
  %v3884 = vpop.f32.mrb[0].mxu0
  %v3885 = vadd.f32 %v3784, %v3884
  %v3886 = vpop.f32.mrb[0].mxu0
  %v3887 = vadd.f32 %v3786, %v3886
  %3888 = vmatprep.mubr.bf16.mxu0 %v798
  %3889 = vmatmul.mubr.bf16.gmra.mrb[0].mxu0 %v797
  %v3890 = vpop.f32.mrb[0].mxu0
  %v3891 = vadd.f32 %v3790, %v3890
  %v3892 = vpop.f32.mrb[0].mxu0
  %v3893 = vadd.f32 %v3792, %v3892
  %v3894 = vpop.f32.mrb[0].mxu0
  %v3895 = vadd.f32 %v3794, %v3894
  %v3896 = vpop.f32.mrb[0].mxu0
  %v3897 = vadd.f32 %v3796, %v3896
  %3898 = vmatprep.mubr.bf16.mxu0 %v811
  %3899 = vmatmul.mubr.bf16.gmra.mrb[0].mxu0 %v810
  %v3900 = vpop.f32.mrb[0].mxu0
  %v3901 = vadd.f32 %v3800, %v3900
  %v3902 = vpop.f32.mrb[0].mxu0
  %v3903 = vadd.f32 %v3802, %v3902
  %v3904 = vpop.f32.mrb[0].mxu0
  %v3905 = vadd.f32 %v3804, %v3904
  %v3906 = vpop.f32.mrb[0].mxu0
  %v3907 = vadd.f32 %v3806, %v3906
  %3908 = vmatprep.mubr.bf16.mxu0 %v824
  %3909 = vmatmul.mubr.bf16.gmra.mrb[0].mxu0 %v823
  %v3910 = vpop.f32.mrb[0].mxu0
  %v3911 = vadd.f32 %v3810, %v3910
  %v3912 = vpop.f32.mrb[0].mxu0
  %v3913 = vadd.f32 %v3812, %v3912
  %v3914 = vpop.f32.mrb[0].mxu0
  %v3915 = vadd.f32 %v3814, %v3914
  %v3916 = vpop.f32.mrb[0].mxu0
  %v3917 = vadd.f32 %v3816, %v3916
  %3918 = vmatprep.mubr.bf16.mxu0 %v837
  %3919 = vmatmul.mubr.bf16.gmra.mrb[0].mxu0 %v836
  %v3920 = vpop.f32.mrb[0].mxu0
  %v3921 = vadd.f32 %v3820, %v3920
  %v3922 = vpop.f32.mrb[0].mxu0
  %v3923 = vadd.f32 %v3822, %v3922
  %v3924 = vpop.f32.mrb[0].mxu0
  %v3925 = vadd.f32 %v3824, %v3924
  %v3926 = vpop.f32.mrb[0].mxu0
  %v3927 = vadd.f32 %v3826, %v3926
  %3928 = vmatprep.mubr.bf16.mxu0 %v850
  %3929 = vmatmul.mubr.bf16.gmra.mrb[0].mxu0 %v849
  %v3930 = vpop.f32.mrb[0].mxu0
  %v3931 = vadd.f32 %v3830, %v3930
  %v3932 = vpop.f32.mrb[0].mxu0
  %v3933 = vadd.f32 %v3832, %v3932
  %v3934 = vpop.f32.mrb[0].mxu0
  %v3935 = vadd.f32 %v3834, %v3934
  %v3936 = vpop.f32.mrb[0].mxu0
  %v3937 = vadd.f32 %v3836, %v3936
  %3938 = vmatprep.mubr.bf16.mxu0 %v863
  %3939 = vmatmul.mubr.bf16.gmra.mrb[0].mxu0 %v862
  %v3940 = vpop.f32.mrb[0].mxu0
  %v3941 = vadd.f32 %v3840, %v3940
  %v3942 = vpop.f32.mrb[0].mxu0
  %v3943 = vadd.f32 %v3842, %v3942
  %v3944 = vpop.f32.mrb[0].mxu0
  %v3945 = vpop.f32.mrb[0].mxu0
  %3946 = vdwg.mxu0
  %3947 = vmatprep.subr.bf16.mxu0 %v2326
  %3948 = vmatpush1.bf16.msra.mxu0 %v2325
  %3949 = vmatprep.subr.bf16.mxu0 %v2330
  %3950 = vmatpush1.bf16.msra.mxu0 %v2329
  %3951 = vmatprep.subr.bf16.mxu0 %v2334
  %3952 = vmatpush1.bf16.msra.mxu0 %v2333
  %3953 = vmatprep.subr.bf16.mxu0 %v2338
  %3954 = vmatpush1.bf16.msra.mxu0 %v2337
  %3955 = vmatprep.subr.bf16.mxu0 %v2342
  %3956 = vmatpush1.bf16.msra.mxu0 %v2341
  %3957 = vmatprep.subr.bf16.mxu0 %v2346
  %3958 = vmatpush1.bf16.msra.mxu0 %v2345
  %3959 = vmatprep.subr.bf16.mxu0 %v2350
  %3960 = vmatpush1.bf16.msra.mxu0 %v2349
  %3961 = vmatprep.subr.bf16.mxu0 %v2354
  %3962 = vmatpush1.bf16.msra.mxu0 %v2353
  %3963 = vmatprep.subr.bf16.mxu0 %v2358
  %3964 = vmatpush1.bf16.msra.mxu0 %v2357
  %3965 = vmatprep.subr.bf16.mxu0 %v2362
  %3966 = vmatpush1.bf16.msra.mxu0 %v2361
  %3967 = vmatprep.subr.bf16.mxu0 %v2366
  %3968 = vmatpush1.bf16.msra.mxu0 %v2365
  %3969 = vmatprep.subr.bf16.mxu0 %v2370
  %3970 = vmatpush1.bf16.msra.mxu0 %v2369
  %3971 = vmatprep.subr.bf16.mxu0 %v2374
  %3972 = vmatpush1.bf16.msra.mxu0 %v2373
  %3973 = vmatprep.subr.bf16.mxu0 %v2378
  %3974 = vmatpush1.bf16.msra.mxu0 %v2377
  %3975 = vmatprep.subr.bf16.mxu0 %v2382
  %3976 = vmatpush1.bf16.msra.mxu0 %v2381
  %3977 = vmatprep.subr.bf16.mxu0 %v2386
  %3978 = vmatpush1.bf16.msra.mxu0 %v2385
  %3979 = vmatprep.mubr.bf16.mxu0 %v787
  %3980 = vmatmul.mubr.bf16.gmra.mrb[0].mxu0 %v786
  %v3981 = vpop.f32.mrb[0].mxu0
  %v3982 = vadd.f32 %v3881, %v3981
  %v3983 = vpop.f32.mrb[0].mxu0
  %v3984 = vadd.f32 %v3883, %v3983
  %v3985 = vpop.f32.mrb[0].mxu0
  %v3986 = vadd.f32 %v3885, %v3985
  %v3987 = vpop.f32.mrb[0].mxu0
  %v3988 = vadd.f32 %v3887, %v3987
  %3989 = vmatprep.mubr.bf16.mxu0 %v800
  %3990 = vmatmul.mubr.bf16.gmra.mrb[0].mxu0 %v799
  %v3991 = vpop.f32.mrb[0].mxu0
  %v3992 = vadd.f32 %v3891, %v3991
  %v3993 = vpop.f32.mrb[0].mxu0
  %v3994 = vadd.f32 %v3893, %v3993
  %v3995 = vpop.f32.mrb[0].mxu0
  %v3996 = vadd.f32 %v3895, %v3995
  %v3997 = vpop.f32.mrb[0].mxu0
  %v3998 = vadd.f32 %v3897, %v3997
  %3999 = vmatprep.mubr.bf16.mxu0 %v813
  %4000 = vmatmul.mubr.bf16.gmra.mrb[0].mxu0 %v812
  %v4001 = vpop.f32.mrb[0].mxu0
  %v4002 = vadd.f32 %v3901, %v4001
  %v4003 = vpop.f32.mrb[0].mxu0
  %v4004 = vadd.f32 %v3903, %v4003
  %v4005 = vpop.f32.mrb[0].mxu0
  %v4006 = vadd.f32 %v3905, %v4005
  %v4007 = vpop.f32.mrb[0].mxu0
  %v4008 = vadd.f32 %v3907, %v4007
  %4009 = vmatprep.mubr.bf16.mxu0 %v826
  %4010 = vmatmul.mubr.bf16.gmra.mrb[0].mxu0 %v825
  %v4011 = vpop.f32.mrb[0].mxu0
  %v4012 = vadd.f32 %v3911, %v4011
  %v4013 = vpop.f32.mrb[0].mxu0
  %v4014 = vadd.f32 %v3913, %v4013
  %v4015 = vpop.f32.mrb[0].mxu0
  %v4016 = vadd.f32 %v3915, %v4015
  %v4017 = vpop.f32.mrb[0].mxu0
  %v4018 = vadd.f32 %v3917, %v4017
  %4019 = vmatprep.mubr.bf16.mxu0 %v839
  %4020 = vmatmul.mubr.bf16.gmra.mrb[0].mxu0 %v838
  %v4021 = vpop.f32.mrb[0].mxu0
  %v4022 = vadd.f32 %v3921, %v4021
  %v4023 = vpop.f32.mrb[0].mxu0
  %v4024 = vadd.f32 %v3923, %v4023
  %v4025 = vpop.f32.mrb[0].mxu0
  %v4026 = vadd.f32 %v3925, %v4025
  %v4027 = vpop.f32.mrb[0].mxu0
  %v4028 = vadd.f32 %v3927, %v4027
  %4029 = vmatprep.mubr.bf16.mxu0 %v852
  %4030 = vmatmul.mubr.bf16.gmra.mrb[0].mxu0 %v851
  %v4031 = vpop.f32.mrb[0].mxu0
  %v4032 = vadd.f32 %v3931, %v4031
  %v4033 = vpop.f32.mrb[0].mxu0
  %v4034 = vadd.f32 %v3933, %v4033
  %v4035 = vpop.f32.mrb[0].mxu0
  %v4036 = vadd.f32 %v3935, %v4035
  %v4037 = vpop.f32.mrb[0].mxu0
  %v4038 = vadd.f32 %v3937, %v4037
  %4039 = vmatprep.mubr.bf16.mxu0 %v865
  %4040 = vmatmul.mubr.bf16.gmra.mrb[0].mxu0 %v864
  %v4041 = vpop.f32.mrb[0].mxu0
  %v4042 = vadd.f32 %v3941, %v4041
  %v4043 = vpop.f32.mrb[0].mxu0
  %v4044 = vadd.f32 %v3943, %v4043
  %v4045 = vpop.f32.mrb[0].mxu0
  %v4046 = vpop.f32.mrb[0].mxu0
  %4047 = vdwg.mxu0
  %4048 = vmatprep.subr.bf16.mxu0 %v2390
  %4049 = vmatpush1.bf16.msra.mxu0 %v2389
  %4050 = vmatprep.subr.bf16.mxu0 %v2394
  %4051 = vmatpush1.bf16.msra.mxu0 %v2393
  %4052 = vmatprep.subr.bf16.mxu0 %v2398
  %4053 = vmatpush1.bf16.msra.mxu0 %v2397
  %4054 = vmatprep.subr.bf16.mxu0 %v2402
  %4055 = vmatpush1.bf16.msra.mxu0 %v2401
  %4056 = vmatprep.subr.bf16.mxu0 %v2406
  %4057 = vmatpush1.bf16.msra.mxu0 %v2405
  %4058 = vmatprep.subr.bf16.mxu0 %v2410
  %4059 = vmatpush1.bf16.msra.mxu0 %v2409
  %4060 = vmatprep.subr.bf16.mxu0 %v2414
  %4061 = vmatpush1.bf16.msra.mxu0 %v2413
  %4062 = vmatprep.subr.bf16.mxu0 %v2418
  %4063 = vmatpush1.bf16.msra.mxu0 %v2417
  %4064 = vmatprep.subr.bf16.mxu0 %v2422
  %4065 = vmatpush1.bf16.msra.mxu0 %v2421
  %4066 = vmatprep.subr.bf16.mxu0 %v2426
  %4067 = vmatpush1.bf16.msra.mxu0 %v2425
  %4068 = vmatprep.subr.bf16.mxu0 %v2430
  %4069 = vmatpush1.bf16.msra.mxu0 %v2429
  %4070 = vmatprep.subr.bf16.mxu0 %v2434
  %4071 = vmatpush1.bf16.msra.mxu0 %v2433
  %4072 = vmatprep.subr.bf16.mxu0 %v2438
  %4073 = vmatpush1.bf16.msra.mxu0 %v2437
  %4074 = vmatprep.subr.bf16.mxu0 %v2442
  %4075 = vmatpush1.bf16.msra.mxu0 %v2441
  %4076 = vmatprep.subr.bf16.mxu0 %v2446
  %4077 = vmatpush1.bf16.msra.mxu0 %v2445
  %4078 = vmatprep.subr.bf16.mxu0 %v2450
  %4079 = vmatpush1.bf16.msra.mxu0 %v2449
  %4080 = vmatprep.mubr.bf16.mxu0 %v789
  %4081 = vmatmul.mubr.bf16.gmra.mrb[0].mxu0 %v788
  %v4082 = vpop.f32.mrb[0].mxu0
  %v4083 = vadd.f32 %v3982, %v4082
  %v4084 = vpop.f32.mrb[0].mxu0
  %v4085 = vadd.f32 %v3984, %v4084
  %v4086 = vpop.f32.mrb[0].mxu0
  %v4087 = vadd.f32 %v3986, %v4086
  %v4088 = vpop.f32.mrb[0].mxu0
  %v4089 = vadd.f32 %v3988, %v4088
  %4090 = vmatprep.mubr.bf16.mxu0 %v802
  %4091 = vmatmul.mubr.bf16.gmra.mrb[0].mxu0 %v801
  %v4092 = vpop.f32.mrb[0].mxu0
  %v4093 = vadd.f32 %v3992, %v4092
  %v4094 = vpop.f32.mrb[0].mxu0
  %v4095 = vadd.f32 %v3994, %v4094
  %v4096 = vpop.f32.mrb[0].mxu0
  %v4097 = vadd.f32 %v3996, %v4096
  %v4098 = vpop.f32.mrb[0].mxu0
  %v4099 = vadd.f32 %v3998, %v4098
  %4100 = vmatprep.mubr.bf16.mxu0 %v815
  %4101 = vmatmul.mubr.bf16.gmra.mrb[0].mxu0 %v814
  %v4102 = vpop.f32.mrb[0].mxu0
  %v4103 = vadd.f32 %v4002, %v4102
  %v4104 = vpop.f32.mrb[0].mxu0
  %v4105 = vadd.f32 %v4004, %v4104
  %v4106 = vpop.f32.mrb[0].mxu0
  %v4107 = vadd.f32 %v4006, %v4106
  %v4108 = vpop.f32.mrb[0].mxu0
  %v4109 = vadd.f32 %v4008, %v4108
  %4110 = vmatprep.mubr.bf16.mxu0 %v828
  %4111 = vmatmul.mubr.bf16.gmra.mrb[0].mxu0 %v827
  %v4112 = vpop.f32.mrb[0].mxu0
  %v4113 = vadd.f32 %v4012, %v4112
  %v4114 = vpop.f32.mrb[0].mxu0
  %v4115 = vadd.f32 %v4014, %v4114
  %v4116 = vpop.f32.mrb[0].mxu0
  %v4117 = vadd.f32 %v4016, %v4116
  %v4118 = vpop.f32.mrb[0].mxu0
  %v4119 = vadd.f32 %v4018, %v4118
  %4120 = vmatprep.mubr.bf16.mxu0 %v841
  %4121 = vmatmul.mubr.bf16.gmra.mrb[0].mxu0 %v840
  %v4122 = vpop.f32.mrb[0].mxu0
  %v4123 = vadd.f32 %v4022, %v4122
  %v4124 = vpop.f32.mrb[0].mxu0
  %v4125 = vadd.f32 %v4024, %v4124
  %v4126 = vpop.f32.mrb[0].mxu0
  %v4127 = vadd.f32 %v4026, %v4126
  %v4128 = vpop.f32.mrb[0].mxu0
  %v4129 = vadd.f32 %v4028, %v4128
  %4130 = vmatprep.mubr.bf16.mxu0 %v854
  %4131 = vmatmul.mubr.bf16.gmra.mrb[0].mxu0 %v853
  %v4132 = vpop.f32.mrb[0].mxu0
  %v4133 = vadd.f32 %v4032, %v4132
  %v4134 = vpop.f32.mrb[0].mxu0
  %v4135 = vadd.f32 %v4034, %v4134
  %v4136 = vpop.f32.mrb[0].mxu0
  %v4137 = vadd.f32 %v4036, %v4136
  %v4138 = vpop.f32.mrb[0].mxu0
  %v4139 = vadd.f32 %v4038, %v4138
  %4140 = vmatprep.mubr.bf16.mxu0 %v867
  %4141 = vmatmul.mubr.bf16.gmra.mrb[0].mxu0 %v866
  %v4142 = vpop.f32.mrb[0].mxu0
  %v4143 = vadd.f32 %v4042, %v4142
  %v4144 = vpop.f32.mrb[0].mxu0
  %v4145 = vadd.f32 %v4044, %v4144
  %v4146 = vpop.f32.mrb[0].mxu0
  %v4147 = vpop.f32.mrb[0].mxu0
  %4148 = vdwg.mxu0
  %4149 = vmatprep.subr.bf16.mxu0 %v2454
  %4150 = vmatpush1.bf16.msra.mxu0 %v2453
  %4151 = vmatprep.subr.bf16.mxu0 %v2458
  %4152 = vmatpush1.bf16.msra.mxu0 %v2457
  %4153 = vmatprep.subr.bf16.mxu0 %v2462
  %4154 = vmatpush1.bf16.msra.mxu0 %v2461
  %4155 = vmatprep.subr.bf16.mxu0 %v2466
  %4156 = vmatpush1.bf16.msra.mxu0 %v2465
  %4157 = vmatprep.subr.bf16.mxu0 %v2470
  %4158 = vmatpush1.bf16.msra.mxu0 %v2469
  %4159 = vmatprep.subr.bf16.mxu0 %v2474
  %4160 = vmatpush1.bf16.msra.mxu0 %v2473
  %4161 = vmatprep.subr.bf16.mxu0 %v2478
  %4162 = vmatpush1.bf16.msra.mxu0 %v2477
  %4163 = vmatprep.subr.bf16.mxu0 %v2482
  %4164 = vmatpush1.bf16.msra.mxu0 %v2481
  %4165 = vmatprep.subr.bf16.mxu0 %v2486
  %4166 = vmatpush1.bf16.msra.mxu0 %v2485
  %4167 = vmatprep.subr.bf16.mxu0 %v2490
  %4168 = vmatpush1.bf16.msra.mxu0 %v2489
  %4169 = vmatprep.subr.bf16.mxu0 %v2494
  %4170 = vmatpush1.bf16.msra.mxu0 %v2493
  %4171 = vmatprep.subr.bf16.mxu0 %v2498
  %4172 = vmatpush1.bf16.msra.mxu0 %v2497
  %4173 = vmatprep.subr.bf16.mxu0 %v2502
  %4174 = vmatpush1.bf16.msra.mxu0 %v2501
  %4175 = vmatprep.subr.bf16.mxu0 %v2506
  %4176 = vmatpush1.bf16.msra.mxu0 %v2505
  %4177 = vmatprep.subr.bf16.mxu0 %v2510
  %4178 = vmatpush1.bf16.msra.mxu0 %v2509
  %4179 = vmatprep.subr.bf16.mxu0 %v2514
  %4180 = vmatpush1.bf16.msra.mxu0 %v2513
  %4181 = vmatprep.mubr.bf16.mxu0 %v791
  %4182 = vmatmul.mubr.bf16.gmra.mrb[0].mxu0 %v790
  %v4183 = vpop.f32.mrb[0].mxu0
  %v4184 = vadd.f32 %v4083, %v4183
  %v4185 = vpop.f32.mrb[0].mxu0
  %v4186 = vadd.f32 %v4085, %v4185
  %v4187 = vpop.f32.mrb[0].mxu0
  %v4188 = vadd.f32 %v4087, %v4187
  %v4189 = vpop.f32.mrb[0].mxu0
  %v4190 = vadd.f32 %v4089, %v4189
  %4191 = vmatprep.mubr.bf16.mxu0 %v804
  %4192 = vmatmul.mubr.bf16.gmra.mrb[0].mxu0 %v803
  %v4193 = vpop.f32.mrb[0].mxu0
  %v4194 = vadd.f32 %v4093, %v4193
  %v4195 = vpop.f32.mrb[0].mxu0
  %v4196 = vadd.f32 %v4095, %v4195
  %v4197 = vpop.f32.mrb[0].mxu0
  %v4198 = vadd.f32 %v4097, %v4197
  %v4199 = vpop.f32.mrb[0].mxu0
  %v4200 = vadd.f32 %v4099, %v4199
  %4201 = vmatprep.mubr.bf16.mxu0 %v817
  %4202 = vmatmul.mubr.bf16.gmra.mrb[0].mxu0 %v816
  %v4203 = vpop.f32.mrb[0].mxu0
  %v4204 = vadd.f32 %v4103, %v4203
  %v4205 = vpop.f32.mrb[0].mxu0
  %v4206 = vadd.f32 %v4105, %v4205
  %v4207 = vpop.f32.mrb[0].mxu0
  %v4208 = vadd.f32 %v4107, %v4207
  %v4209 = vpop.f32.mrb[0].mxu0
  %v4210 = vadd.f32 %v4109, %v4209
  %4211 = vmatprep.mubr.bf16.mxu0 %v830
  %4212 = vmatmul.mubr.bf16.gmra.mrb[0].mxu0 %v829
  %v4213 = vpop.f32.mrb[0].mxu0
  %v4214 = vadd.f32 %v4113, %v4213
  %v4215 = vpop.f32.mrb[0].mxu0
  %v4216 = vadd.f32 %v4115, %v4215
  %v4217 = vpop.f32.mrb[0].mxu0
  %v4218 = vadd.f32 %v4117, %v4217
  %v4219 = vpop.f32.mrb[0].mxu0
  %v4220 = vadd.f32 %v4119, %v4219
  %4221 = vmatprep.mubr.bf16.mxu0 %v843
  %4222 = vmatmul.mubr.bf16.gmra.mrb[0].mxu0 %v842
  %v4223 = vpop.f32.mrb[0].mxu0
  %v4224 = vadd.f32 %v4123, %v4223
  %v4225 = vpop.f32.mrb[0].mxu0
  %v4226 = vadd.f32 %v4125, %v4225
  %v4227 = vpop.f32.mrb[0].mxu0
  %v4228 = vadd.f32 %v4127, %v4227
  %v4229 = vpop.f32.mrb[0].mxu0
  %v4230 = vadd.f32 %v4129, %v4229
  %4231 = vmatprep.mubr.bf16.mxu0 %v856
  %4232 = vmatmul.mubr.bf16.gmra.mrb[0].mxu0 %v855
  %v4233 = vpop.f32.mrb[0].mxu0
  %v4234 = vadd.f32 %v4133, %v4233
  %v4235 = vpop.f32.mrb[0].mxu0
  %v4236 = vadd.f32 %v4135, %v4235
  %v4237 = vpop.f32.mrb[0].mxu0
  %v4238 = vadd.f32 %v4137, %v4237
  %v4239 = vpop.f32.mrb[0].mxu0
  %v4240 = vadd.f32 %v4139, %v4239
  %4241 = vmatprep.mubr.bf16.mxu0 %v869
  %4242 = vmatmul.mubr.bf16.gmra.mrb[0].mxu0 %v868
  %v4243 = vpop.f32.mrb[0].mxu0
  %v4244 = vadd.f32 %v4143, %v4243
  %v4245 = vpop.f32.mrb[0].mxu0
  %v4246 = vadd.f32 %v4145, %v4245
  %v4247 = vpop.f32.mrb[0].mxu0
  %v4248 = vpop.f32.mrb[0].mxu0
  %4249 = vdwg.mxu0
  %4250 = vmatprep.subr.bf16.mxu0 %v2518
  %4251 = vmatpush1.bf16.msra.mxu0 %v2517
  %4252 = vmatprep.subr.bf16.mxu0 %v2522
  %4253 = vmatpush1.bf16.msra.mxu0 %v2521
  %4254 = vmatprep.subr.bf16.mxu0 0
  %4255 = vmatpush1.bf16.msra.mxu0 0
  %4256 = vmatprep.subr.bf16.mxu0 0
  %4257 = vmatpush1.bf16.msra.mxu0 0
  %4258 = vmatprep.subr.bf16.mxu0 0
  %4259 = vmatpush1.bf16.msra.mxu0 0
  %4260 = vmatprep.subr.bf16.mxu0 0
  %4261 = vmatpush1.bf16.msra.mxu0 0
  %4262 = vmatprep.subr.bf16.mxu0 0
  %4263 = vmatpush1.bf16.msra.mxu0 0
  %4264 = vmatprep.subr.bf16.mxu0 0
  %4265 = vmatpush1.bf16.msra.mxu0 0
  %4266 = vmatprep.subr.bf16.mxu0 0
  %4267 = vmatpush1.bf16.msra.mxu0 0
  %4268 = vmatprep.subr.bf16.mxu0 0
  %4269 = vmatpush1.bf16.msra.mxu0 0
  %4270 = vmatprep.subr.bf16.mxu0 0
  %4271 = vmatpush1.bf16.msra.mxu0 0
  %4272 = vmatprep.subr.bf16.mxu0 0
  %4273 = vmatpush1.bf16.msra.mxu0 0
  %4274 = vmatprep.subr.bf16.mxu0 0
  %4275 = vmatpush1.bf16.msra.mxu0 0
  %4276 = vmatprep.subr.bf16.mxu0 0
  %4277 = vmatpush1.bf16.msra.mxu0 0
  %4278 = vmatprep.subr.bf16.mxu0 0
  %4279 = vmatpush1.bf16.msra.mxu0 0
  %4280 = vmatprep.subr.bf16.mxu0 0
  %4281 = vmatpush1.bf16.msra.mxu0 0
  %4282 = vmatprep.mubr.bf16.mxu0 0
  %4283 = vmatmul.mubr.bf16.gmra.mrb[0].mxu0 %v2917
  %v4284 = vpop.f32.mrb[0].mxu0
  %v4285 = vadd.f32 %v4184, %v4284
  %v4286 = vpop.f32.mrb[0].mxu0
  %v4287 = vadd.f32 %v4186, %v4286
  %v4288 = vpop.f32.mrb[0].mxu0
  %v4289 = vadd.f32 %v4188, %v4288
  %v4290 = vpop.f32.mrb[0].mxu0
  %v4291 = vadd.f32 %v4190, %v4290
  %4292 = vmatprep.mubr.bf16.mxu0 0
  %4293 = vmatmul.mubr.bf16.gmra.mrb[0].mxu0 %v2920
  %v4294 = vpop.f32.mrb[0].mxu0
  %v4295 = vadd.f32 %v4194, %v4294
  %v4296 = vpop.f32.mrb[0].mxu0
  %v4297 = vadd.f32 %v4196, %v4296
  %v4298 = vpop.f32.mrb[0].mxu0
  %v4299 = vadd.f32 %v4198, %v4298
  %v4300 = vpop.f32.mrb[0].mxu0
  %v4301 = vadd.f32 %v4200, %v4300
  %4302 = vmatprep.mubr.bf16.mxu0 0
  %4303 = vmatmul.mubr.bf16.gmra.mrb[0].mxu0 %v2923
  %v4304 = vpop.f32.mrb[0].mxu0
  %v4305 = vadd.f32 %v4204, %v4304
  %v4306 = vpop.f32.mrb[0].mxu0
  %v4307 = vadd.f32 %v4206, %v4306
  %v4308 = vpop.f32.mrb[0].mxu0
  %v4309 = vadd.f32 %v4208, %v4308
  %v4310 = vpop.f32.mrb[0].mxu0
  %v4311 = vadd.f32 %v4210, %v4310
  %4312 = vmatprep.mubr.bf16.mxu0 0
  %4313 = vmatmul.mubr.bf16.gmra.mrb[0].mxu0 %v2926
  %v4314 = vpop.f32.mrb[0].mxu0
  %v4315 = vadd.f32 %v4214, %v4314
  %v4316 = vpop.f32.mrb[0].mxu0
  %v4317 = vadd.f32 %v4216, %v4316
  %v4318 = vpop.f32.mrb[0].mxu0
  %v4319 = vadd.f32 %v4218, %v4318
  %v4320 = vpop.f32.mrb[0].mxu0
  %v4321 = vadd.f32 %v4220, %v4320
  %4322 = vmatprep.mubr.bf16.mxu0 0
  %4323 = vmatmul.mubr.bf16.gmra.mrb[0].mxu0 %v2929
  %v4324 = vpop.f32.mrb[0].mxu0
  %v4325 = vadd.f32 %v4224, %v4324
  %v4326 = vpop.f32.mrb[0].mxu0
  %v4327 = vadd.f32 %v4226, %v4326
  %v4328 = vpop.f32.mrb[0].mxu0
  %v4329 = vadd.f32 %v4228, %v4328
  %v4330 = vpop.f32.mrb[0].mxu0
  %v4331 = vadd.f32 %v4230, %v4330
  %4332 = vmatprep.mubr.bf16.mxu0 0
  %4333 = vmatmul.mubr.bf16.gmra.mrb[0].mxu0 %v2932
  %v4334 = vpop.f32.mrb[0].mxu0
  %v4335 = vadd.f32 %v4234, %v4334
  %v4336 = vpop.f32.mrb[0].mxu0
  %v4337 = vadd.f32 %v4236, %v4336
  %v4338 = vpop.f32.mrb[0].mxu0
  %v4339 = vadd.f32 %v4238, %v4338
  %v4340 = vpop.f32.mrb[0].mxu0
  %v4341 = vadd.f32 %v4240, %v4340
  %4342 = vmatprep.mubr.bf16.mxu0 0
  %4343 = vmatmul.mubr.bf16.gmra.mrb[0].mxu0 %v2935
  %v4344 = vpop.f32.mrb[0].mxu0
  %v4345 = vadd.f32 %v4244, %v4344
  %v4346 = vpop.f32.mrb[0].mxu0
  %v4347 = vadd.f32 %v4246, %v4346
  %v4348 = vpop.f32.mrb[0].mxu0
  %v4349 = vpop.f32.mrb[0].mxu0
  %4350 = vdwg.mxu0
  %v4351 = vmax.f32 %v3578, 0.0
  %v4352 = vmax.f32 %v3580, 0.0
  %v4353 = vmax.f32 %v4285, 0.0
  %v4354 = vmax.f32 %v4287, 0.0
  %v4355 = vmax.f32 %v3582, 0.0
  %v4356 = vmax.f32 %v3584, 0.0
  %v4357 = vmax.f32 %v4289, 0.0
  %v4358 = vmax.f32 %v4291, 0.0
  %v4359 = vmax.f32 %v3588, 0.0
  %v4360 = vmax.f32 %v3590, 0.0
  %v4361 = vmax.f32 %v4295, 0.0
  %v4362 = vmax.f32 %v4297, 0.0
  %v4363 = vmax.f32 %v3592, 0.0
  %v4364 = vmax.f32 %v3594, 0.0
  %v4365 = vmax.f32 %v4299, 0.0
  %v4366 = vmax.f32 %v4301, 0.0
  %v4367 = vmax.f32 %v3598, 0.0
  %v4368 = vmax.f32 %v3600, 0.0
  %v4369 = vmax.f32 %v4305, 0.0
  %v4370 = vmax.f32 %v4307, 0.0
  %v4371 = vmax.f32 %v3602, 0.0
  %v4372 = vmax.f32 %v3604, 0.0
  %v4373 = vmax.f32 %v4309, 0.0
  %v4374 = vmax.f32 %v4311, 0.0
  %v4375 = vmax.f32 %v3608, 0.0
  %v4376 = vmax.f32 %v3610, 0.0
  %v4377 = vmax.f32 %v4315, 0.0
  %v4378 = vmax.f32 %v4317, 0.0
  %v4379 = vmax.f32 %v3612, 0.0
  %v4380 = vmax.f32 %v3614, 0.0
  %v4381 = vmax.f32 %v4319, 0.0
  %v4382 = vmax.f32 %v4321, 0.0
  %v4383 = vmax.f32 %v3618, 0.0
  %v4384 = vmax.f32 %v3620, 0.0
  %v4385 = vmax.f32 %v4325, 0.0
  %v4386 = vmax.f32 %v4327, 0.0
  %v4387 = vmax.f32 %v3622, 0.0
  %v4388 = vmax.f32 %v3624, 0.0
  %v4389 = vmax.f32 %v4329, 0.0
  %v4390 = vmax.f32 %v4331, 0.0
  %v4391 = vmax.f32 %v3628, 0.0
  %v4392 = vmax.f32 %v3630, 0.0
  %v4393 = vmax.f32 %v4335, 0.0
  %v4394 = vmax.f32 %v4337, 0.0
  %v4395 = vmax.f32 %v3632, 0.0
  %v4396 = vmax.f32 %v3634, 0.0
  %v4397 = vmax.f32 %v4339, 0.0
  %v4398 = vmax.f32 %v4341, 0.0
  %v4399 = vmax.f32 %v3638, 0.0
  %v4400 = vmax.f32 %v3640, 0.0
  %v4401 = vmax.f32 %v4345, 0.0
  %v4402 = vmax.f32 %v4347, 0.0
  %4416 = vrot.lane.b32.xlu0 %v4351, 96
  %v4417 = vpop.permute.xlu0 %4416
  %4418 = vrot.lane.b32.xlu0 %v4355, 96
  %v4419 = vpop.permute.xlu0 %4418
  %4420 = vrot.lane.b32.xlu0 %v4359, 96
  %v4421 = vpop.permute.xlu0 %4420
  %4422 = vrot.lane.b32.xlu0 %v4363, 96
  %v4423 = vpop.permute.xlu0 %4422
  %4424 = vrot.lane.b32.xlu0 %v4367, 96
  %v4425 = vpop.permute.xlu0 %4424
  %4426 = vrot.lane.b32.xlu0 %v4371, 96
  %v4427 = vpop.permute.xlu0 %4426
  %4428 = vrot.lane.b32.xlu0 %v4375, 96
  %v4429 = vpop.permute.xlu0 %4428
  %4430 = vrot.lane.b32.xlu0 %v4379, 96
  %v4431 = vpop.permute.xlu0 %4430
  %4432 = vrot.lane.b32.xlu0 %v4383, 96
  %v4433 = vpop.permute.xlu0 %4432
  %4434 = vrot.lane.b32.xlu0 %v4387, 96
  %v4435 = vpop.permute.xlu0 %4434
  %4436 = vrot.lane.b32.xlu0 %v4391, 96
  %v4437 = vpop.permute.xlu0 %4436
  %4438 = vrot.lane.b32.xlu0 %v4395, 96
  %v4439 = vpop.permute.xlu0 %4438
  %4440 = vrot.lane.b32.xlu0 %v4399, 96
  %v4441 = vpop.permute.xlu0 %4440
  %v4455 = vmax.f32 %v4351, %v4417
  %v4456 = vmax.f32 %v4355, %v4419
  %v4457 = vmax.f32 %v4359, %v4421
  %v4458 = vmax.f32 %v4363, %v4423
  %v4459 = vmax.f32 %v4367, %v4425
  %v4460 = vmax.f32 %v4371, %v4427
  %v4461 = vmax.f32 %v4375, %v4429
  %v4462 = vmax.f32 %v4379, %v4431
  %v4463 = vmax.f32 %v4383, %v4433
  %v4464 = vmax.f32 %v4387, %v4435
  %v4465 = vmax.f32 %v4391, %v4437
  %v4466 = vmax.f32 %v4395, %v4439
  %v4467 = vmax.f32 %v4399, %v4441
  %4468 = vrot.lane.b32.xlu0 %v4351, 64
  %v4469 = vpop.permute.xlu0 %4468
  %4470 = vrot.lane.b32.xlu0 %v4355, 64
  %v4471 = vpop.permute.xlu0 %4470
  %4472 = vrot.lane.b32.xlu0 %v4359, 64
  %v4473 = vpop.permute.xlu0 %4472
  %4474 = vrot.lane.b32.xlu0 %v4363, 64
  %v4475 = vpop.permute.xlu0 %4474
  %4476 = vrot.lane.b32.xlu0 %v4367, 64
  %v4477 = vpop.permute.xlu0 %4476
  %4478 = vrot.lane.b32.xlu0 %v4371, 64
  %v4479 = vpop.permute.xlu0 %4478
  %4480 = vrot.lane.b32.xlu0 %v4375, 64
  %v4481 = vpop.permute.xlu0 %4480
  %4482 = vrot.lane.b32.xlu0 %v4379, 64
  %v4483 = vpop.permute.xlu0 %4482
  %4484 = vrot.lane.b32.xlu0 %v4383, 64
  %v4485 = vpop.permute.xlu0 %4484
  %4486 = vrot.lane.b32.xlu0 %v4387, 64
  %v4487 = vpop.permute.xlu0 %4486
  %4488 = vrot.lane.b32.xlu0 %v4391, 64
  %v4489 = vpop.permute.xlu0 %4488
  %4490 = vrot.lane.b32.xlu0 %v4395, 64
  %v4491 = vpop.permute.xlu0 %4490
  %4492 = vrot.lane.b32.xlu0 %v4399, 64
  %v4493 = vpop.permute.xlu0 %4492
  %v4507 = vmax.f32 %v4455, %v4469
  %v4508 = vmax.f32 %v4456, %v4471
  %v4509 = vmax.f32 %v4457, %v4473
  %v4510 = vmax.f32 %v4458, %v4475
  %v4511 = vmax.f32 %v4459, %v4477
  %v4512 = vmax.f32 %v4460, %v4479
  %v4513 = vmax.f32 %v4461, %v4481
  %v4514 = vmax.f32 %v4462, %v4483
  %v4515 = vmax.f32 %v4463, %v4485
  %v4516 = vmax.f32 %v4464, %v4487
  %v4517 = vmax.f32 %v4465, %v4489
  %v4518 = vmax.f32 %v4466, %v4491
  %v4519 = vmax.f32 %v4467, %v4493
  %4520 = vrot.lane.b32.xlu0 %v4351, 32
  %v4521 = vpop.permute.xlu0 %4520
  %4522 = vrot.lane.b32.xlu0 %v4355, 32
  %v4523 = vpop.permute.xlu0 %4522
  %4524 = vrot.lane.b32.xlu0 %v4359, 32
  %v4525 = vpop.permute.xlu0 %4524
  %4526 = vrot.lane.b32.xlu0 %v4363, 32
  %v4527 = vpop.permute.xlu0 %4526
  %4528 = vrot.lane.b32.xlu0 %v4367, 32
  %v4529 = vpop.permute.xlu0 %4528
  %4530 = vrot.lane.b32.xlu0 %v4371, 32
  %v4531 = vpop.permute.xlu0 %4530
  %4532 = vrot.lane.b32.xlu0 %v4375, 32
  %v4533 = vpop.permute.xlu0 %4532
  %4534 = vrot.lane.b32.xlu0 %v4379, 32
  %v4535 = vpop.permute.xlu0 %4534
  %4536 = vrot.lane.b32.xlu0 %v4383, 32
  %v4537 = vpop.permute.xlu0 %4536
  %4538 = vrot.lane.b32.xlu0 %v4387, 32
  %v4539 = vpop.permute.xlu0 %4538
  %4540 = vrot.lane.b32.xlu0 %v4391, 32
  %v4541 = vpop.permute.xlu0 %4540
  %4542 = vrot.lane.b32.xlu0 %v4395, 32
  %v4543 = vpop.permute.xlu0 %4542
  %4544 = vrot.lane.b32.xlu0 %v4399, 32
  %v4545 = vpop.permute.xlu0 %4544
  %v4559 = vmax.f32 %v4507, %v4521
  %v4560 = vmax.f32 %v4508, %v4523
  %v4561 = vmax.f32 %v4509, %v4525
  %v4562 = vmax.f32 %v4510, %v4527
  %v4563 = vmax.f32 %v4511, %v4529
  %v4564 = vmax.f32 %v4512, %v4531
  %v4565 = vmax.f32 %v4513, %v4533
  %v4566 = vmax.f32 %v4514, %v4535
  %v4567 = vmax.f32 %v4515, %v4537
  %v4568 = vmax.f32 %v4516, %v4539
  %v4569 = vmax.f32 %v4517, %v4541
  %v4570 = vmax.f32 %v4518, %v4543
  %v4571 = vmax.f32 %v4519, %v4545
  %v4572 = vmax.f32 %v4559, %v4352
  %v4573 = vmax.f32 %v4560, %v4356
  %v4574 = vmax.f32 %v4561, %v4360
  %v4575 = vmax.f32 %v4562, %v4364
  %v4576 = vmax.f32 %v4563, %v4368
  %v4577 = vmax.f32 %v4564, %v4372
  %v4578 = vmax.f32 %v4565, %v4376
  %v4579 = vmax.f32 %v4566, %v4380
  %v4580 = vmax.f32 %v4567, %v4384
  %v4581 = vmax.f32 %v4568, %v4388
  %v4582 = vmax.f32 %v4569, %v4392
  %v4583 = vmax.f32 %v4570, %v4396
  %v4584 = vmax.f32 %v4571, %v4400
  %4598 = vrot.lane.b32.xlu0 %v4352, 96
  %v4599 = vpop.permute.xlu0 %4598
  %4600 = vrot.lane.b32.xlu0 %v4356, 96
  %v4601 = vpop.permute.xlu0 %4600
  %4602 = vrot.lane.b32.xlu0 %v4360, 96
  %v4603 = vpop.permute.xlu0 %4602
  %4604 = vrot.lane.b32.xlu0 %v4364, 96
  %v4605 = vpop.permute.xlu0 %4604
  %4606 = vrot.lane.b32.xlu0 %v4368, 96
  %v4607 = vpop.permute.xlu0 %4606
  %4608 = vrot.lane.b32.xlu0 %v4372, 96
  %v4609 = vpop.permute.xlu0 %4608
  %4610 = vrot.lane.b32.xlu0 %v4376, 96
  %v4611 = vpop.permute.xlu0 %4610
  %4612 = vrot.lane.b32.xlu0 %v4380, 96
  %v4613 = vpop.permute.xlu0 %4612
  %4614 = vrot.lane.b32.xlu0 %v4384, 96
  %v4615 = vpop.permute.xlu0 %4614
  %4616 = vrot.lane.b32.xlu0 %v4388, 96
  %v4617 = vpop.permute.xlu0 %4616
  %4618 = vrot.lane.b32.xlu0 %v4392, 96
  %v4619 = vpop.permute.xlu0 %4618
  %4620 = vrot.lane.b32.xlu0 %v4396, 96
  %v4621 = vpop.permute.xlu0 %4620
  %4622 = vrot.lane.b32.xlu0 %v4400, 96
  %v4623 = vpop.permute.xlu0 %4622
  %v4637 = vmax.f32 %v4572, %v4599
  %v4638 = vmax.f32 %v4573, %v4601
  %v4639 = vmax.f32 %v4574, %v4603
  %v4640 = vmax.f32 %v4575, %v4605
  %v4641 = vmax.f32 %v4576, %v4607
  %v4642 = vmax.f32 %v4577, %v4609
  %v4643 = vmax.f32 %v4578, %v4611
  %v4644 = vmax.f32 %v4579, %v4613
  %v4645 = vmax.f32 %v4580, %v4615
  %v4646 = vmax.f32 %v4581, %v4617
  %v4647 = vmax.f32 %v4582, %v4619
  %v4648 = vmax.f32 %v4583, %v4621
  %v4649 = vmax.f32 %v4584, %v4623
  %4650 = vrot.lane.b32.xlu0 %v4352, 64
  %v4651 = vpop.permute.xlu0 %4650
  %4652 = vrot.lane.b32.xlu0 %v4356, 64
  %v4653 = vpop.permute.xlu0 %4652
  %4654 = vrot.lane.b32.xlu0 %v4360, 64
  %v4655 = vpop.permute.xlu0 %4654
  %4656 = vrot.lane.b32.xlu0 %v4364, 64
  %v4657 = vpop.permute.xlu0 %4656
  %4658 = vrot.lane.b32.xlu0 %v4368, 64
  %v4659 = vpop.permute.xlu0 %4658
  %4660 = vrot.lane.b32.xlu0 %v4372, 64
  %v4661 = vpop.permute.xlu0 %4660
  %4662 = vrot.lane.b32.xlu0 %v4376, 64
  %v4663 = vpop.permute.xlu0 %4662
  %4664 = vrot.lane.b32.xlu0 %v4380, 64
  %v4665 = vpop.permute.xlu0 %4664
  %4666 = vrot.lane.b32.xlu0 %v4384, 64
  %v4667 = vpop.permute.xlu0 %4666
  %4668 = vrot.lane.b32.xlu0 %v4388, 64
  %v4669 = vpop.permute.xlu0 %4668
  %4670 = vrot.lane.b32.xlu0 %v4392, 64
  %v4671 = vpop.permute.xlu0 %4670
  %4672 = vrot.lane.b32.xlu0 %v4396, 64
  %v4673 = vpop.permute.xlu0 %4672
  %4674 = vrot.lane.b32.xlu0 %v4400, 64
  %v4675 = vpop.permute.xlu0 %4674
  %v4689 = vmax.f32 %v4637, %v4651
  %v4690 = vmax.f32 %v4638, %v4653
  %v4691 = vmax.f32 %v4639, %v4655
  %v4692 = vmax.f32 %v4640, %v4657
  %v4693 = vmax.f32 %v4641, %v4659
  %v4694 = vmax.f32 %v4642, %v4661
  %v4695 = vmax.f32 %v4643, %v4663
  %v4696 = vmax.f32 %v4644, %v4665
  %v4697 = vmax.f32 %v4645, %v4667
  %v4698 = vmax.f32 %v4646, %v4669
  %v4699 = vmax.f32 %v4647, %v4671
  %v4700 = vmax.f32 %v4648, %v4673
  %v4701 = vmax.f32 %v4649, %v4675
  %4702 = vrot.lane.b32.xlu0 %v4352, 32
  %v4703 = vpop.permute.xlu0 %4702
  %4704 = vrot.lane.b32.xlu0 %v4356, 32
  %v4705 = vpop.permute.xlu0 %4704
  %4706 = vrot.lane.b32.xlu0 %v4360, 32
  %v4707 = vpop.permute.xlu0 %4706
  %4708 = vrot.lane.b32.xlu0 %v4364, 32
  %v4709 = vpop.permute.xlu0 %4708
  %4710 = vrot.lane.b32.xlu0 %v4368, 32
  %v4711 = vpop.permute.xlu0 %4710
  %4712 = vrot.lane.b32.xlu0 %v4372, 32
  %v4713 = vpop.permute.xlu0 %4712
  %4714 = vrot.lane.b32.xlu0 %v4376, 32
  %v4715 = vpop.permute.xlu0 %4714
  %4716 = vrot.lane.b32.xlu0 %v4380, 32
  %v4717 = vpop.permute.xlu0 %4716
  %4718 = vrot.lane.b32.xlu0 %v4384, 32
  %v4719 = vpop.permute.xlu0 %4718
  %4720 = vrot.lane.b32.xlu0 %v4388, 32
  %v4721 = vpop.permute.xlu0 %4720
  %4722 = vrot.lane.b32.xlu0 %v4392, 32
  %v4723 = vpop.permute.xlu0 %4722
  %4724 = vrot.lane.b32.xlu0 %v4396, 32
  %v4725 = vpop.permute.xlu0 %4724
  %4726 = vrot.lane.b32.xlu0 %v4400, 32
  %v4727 = vpop.permute.xlu0 %4726
  %v4741 = vmax.f32 %v4689, %v4703
  %v4742 = vmax.f32 %v4690, %v4705
  %v4743 = vmax.f32 %v4691, %v4707
  %v4744 = vmax.f32 %v4692, %v4709
  %v4745 = vmax.f32 %v4693, %v4711
  %v4746 = vmax.f32 %v4694, %v4713
  %v4747 = vmax.f32 %v4695, %v4715
  %v4748 = vmax.f32 %v4696, %v4717
  %v4749 = vmax.f32 %v4697, %v4719
  %v4750 = vmax.f32 %v4698, %v4721
  %v4751 = vmax.f32 %v4699, %v4723
  %v4752 = vmax.f32 %v4700, %v4725
  %v4753 = vmax.f32 %v4701, %v4727
  %v4754 = vmax.f32 %v4741, %v4353
  %v4755 = vmax.f32 %v4742, %v4357
  %v4756 = vmax.f32 %v4743, %v4361
  %v4757 = vmax.f32 %v4744, %v4365
  %v4758 = vmax.f32 %v4745, %v4369
  %v4759 = vmax.f32 %v4746, %v4373
  %v4760 = vmax.f32 %v4747, %v4377
  %v4761 = vmax.f32 %v4748, %v4381
  %v4762 = vmax.f32 %v4749, %v4385
  %v4763 = vmax.f32 %v4750, %v4389
  %v4764 = vmax.f32 %v4751, %v4393
  %v4765 = vmax.f32 %v4752, %v4397
  %v4766 = vmax.f32 %v4753, %v4401
  %4780 = vrot.lane.b32.xlu0 %v4353, 96
  %v4781 = vpop.permute.xlu0 %4780
  %4782 = vrot.lane.b32.xlu0 %v4357, 96
  %v4783 = vpop.permute.xlu0 %4782
  %4784 = vrot.lane.b32.xlu0 %v4361, 96
  %v4785 = vpop.permute.xlu0 %4784
  %4786 = vrot.lane.b32.xlu0 %v4365, 96
  %v4787 = vpop.permute.xlu0 %4786
  %4788 = vrot.lane.b32.xlu0 %v4369, 96
  %v4789 = vpop.permute.xlu0 %4788
  %4790 = vrot.lane.b32.xlu0 %v4373, 96
  %v4791 = vpop.permute.xlu0 %4790
  %4792 = vrot.lane.b32.xlu0 %v4377, 96
  %v4793 = vpop.permute.xlu0 %4792
  %4794 = vrot.lane.b32.xlu0 %v4381, 96
  %v4795 = vpop.permute.xlu0 %4794
  %4796 = vrot.lane.b32.xlu0 %v4385, 96
  %v4797 = vpop.permute.xlu0 %4796
  %4798 = vrot.lane.b32.xlu0 %v4389, 96
  %v4799 = vpop.permute.xlu0 %4798
  %4800 = vrot.lane.b32.xlu0 %v4393, 96
  %v4801 = vpop.permute.xlu0 %4800
  %4802 = vrot.lane.b32.xlu0 %v4397, 96
  %v4803 = vpop.permute.xlu0 %4802
  %4804 = vrot.lane.b32.xlu0 %v4401, 96
  %v4805 = vpop.permute.xlu0 %4804
  %v4819 = vmax.f32 %v4754, %v4781
  %v4820 = vmax.f32 %v4755, %v4783
  %v4821 = vmax.f32 %v4756, %v4785
  %v4822 = vmax.f32 %v4757, %v4787
  %v4823 = vmax.f32 %v4758, %v4789
  %v4824 = vmax.f32 %v4759, %v4791
  %v4825 = vmax.f32 %v4760, %v4793
  %v4826 = vmax.f32 %v4761, %v4795
  %v4827 = vmax.f32 %v4762, %v4797
  %v4828 = vmax.f32 %v4763, %v4799
  %v4829 = vmax.f32 %v4764, %v4801
  %v4830 = vmax.f32 %v4765, %v4803
  %v4831 = vmax.f32 %v4766, %v4805
  %4832 = vrot.lane.b32.xlu0 %v4353, 64
  %v4833 = vpop.permute.xlu0 %4832
  %4834 = vrot.lane.b32.xlu0 %v4357, 64
  %v4835 = vpop.permute.xlu0 %4834
  %4836 = vrot.lane.b32.xlu0 %v4361, 64
  %v4837 = vpop.permute.xlu0 %4836
  %4838 = vrot.lane.b32.xlu0 %v4365, 64
  %v4839 = vpop.permute.xlu0 %4838
  %4840 = vrot.lane.b32.xlu0 %v4369, 64
  %v4841 = vpop.permute.xlu0 %4840
  %4842 = vrot.lane.b32.xlu0 %v4373, 64
  %v4843 = vpop.permute.xlu0 %4842
  %4844 = vrot.lane.b32.xlu0 %v4377, 64
  %v4845 = vpop.permute.xlu0 %4844
  %4846 = vrot.lane.b32.xlu0 %v4381, 64
  %v4847 = vpop.permute.xlu0 %4846
  %4848 = vrot.lane.b32.xlu0 %v4385, 64
  %v4849 = vpop.permute.xlu0 %4848
  %4850 = vrot.lane.b32.xlu0 %v4389, 64
  %v4851 = vpop.permute.xlu0 %4850
  %4852 = vrot.lane.b32.xlu0 %v4393, 64
  %v4853 = vpop.permute.xlu0 %4852
  %4854 = vrot.lane.b32.xlu0 %v4397, 64
  %v4855 = vpop.permute.xlu0 %4854
  %4856 = vrot.lane.b32.xlu0 %v4401, 64
  %v4857 = vpop.permute.xlu0 %4856
  %v4871 = vmax.f32 %v4819, %v4833
  %v4872 = vmax.f32 %v4820, %v4835
  %v4873 = vmax.f32 %v4821, %v4837
  %v4874 = vmax.f32 %v4822, %v4839
  %v4875 = vmax.f32 %v4823, %v4841
  %v4876 = vmax.f32 %v4824, %v4843
  %v4877 = vmax.f32 %v4825, %v4845
  %v4878 = vmax.f32 %v4826, %v4847
  %v4879 = vmax.f32 %v4827, %v4849
  %v4880 = vmax.f32 %v4828, %v4851
  %v4881 = vmax.f32 %v4829, %v4853
  %v4882 = vmax.f32 %v4830, %v4855
  %v4883 = vmax.f32 %v4831, %v4857
  %4884 = vrot.lane.b32.xlu0 %v4353, 32
  %v4885 = vpop.permute.xlu0 %4884
  %4886 = vrot.lane.b32.xlu0 %v4357, 32
  %v4887 = vpop.permute.xlu0 %4886
  %4888 = vrot.lane.b32.xlu0 %v4361, 32
  %v4889 = vpop.permute.xlu0 %4888
  %4890 = vrot.lane.b32.xlu0 %v4365, 32
  %v4891 = vpop.permute.xlu0 %4890
  %4892 = vrot.lane.b32.xlu0 %v4369, 32
  %v4893 = vpop.permute.xlu0 %4892
  %4894 = vrot.lane.b32.xlu0 %v4373, 32
  %v4895 = vpop.permute.xlu0 %4894
  %4896 = vrot.lane.b32.xlu0 %v4377, 32
  %v4897 = vpop.permute.xlu0 %4896
  %4898 = vrot.lane.b32.xlu0 %v4381, 32
  %v4899 = vpop.permute.xlu0 %4898
  %4900 = vrot.lane.b32.xlu0 %v4385, 32
  %v4901 = vpop.permute.xlu0 %4900
  %4902 = vrot.lane.b32.xlu0 %v4389, 32
  %v4903 = vpop.permute.xlu0 %4902
  %4904 = vrot.lane.b32.xlu0 %v4393, 32
  %v4905 = vpop.permute.xlu0 %4904
  %4906 = vrot.lane.b32.xlu0 %v4397, 32
  %v4907 = vpop.permute.xlu0 %4906
  %4908 = vrot.lane.b32.xlu0 %v4401, 32
  %v4909 = vpop.permute.xlu0 %4908
  %v4923 = vmax.f32 %v4871, %v4885
  %v4924 = vmax.f32 %v4872, %v4887
  %v4925 = vmax.f32 %v4873, %v4889
  %v4926 = vmax.f32 %v4874, %v4891
  %v4927 = vmax.f32 %v4875, %v4893
  %v4928 = vmax.f32 %v4876, %v4895
  %v4929 = vmax.f32 %v4877, %v4897
  %v4930 = vmax.f32 %v4878, %v4899
  %v4931 = vmax.f32 %v4879, %v4901
  %v4932 = vmax.f32 %v4880, %v4903
  %v4933 = vmax.f32 %v4881, %v4905
  %v4934 = vmax.f32 %v4882, %v4907
  %v4935 = vmax.f32 %v4883, %v4909
  %v4936 = vmax.f32 %v4923, %v4354
  %v4937 = vmax.f32 %v4924, %v4358
  %v4938 = vmax.f32 %v4925, %v4362
  %v4939 = vmax.f32 %v4926, %v4366
  %v4940 = vmax.f32 %v4927, %v4370
  %v4941 = vmax.f32 %v4928, %v4374
  %v4942 = vmax.f32 %v4929, %v4378
  %v4943 = vmax.f32 %v4930, %v4382
  %v4944 = vmax.f32 %v4931, %v4386
  %v4945 = vmax.f32 %v4932, %v4390
  %v4946 = vmax.f32 %v4933, %v4394
  %v4947 = vmax.f32 %v4934, %v4398
  %v4948 = vmax.f32 %v4935, %v4402
  %4962 = vrot.lane.b32.xlu0 %v4354, 96
  %v4963 = vpop.permute.xlu0 %4962
  %4964 = vrot.lane.b32.xlu0 %v4358, 96
  %v4965 = vpop.permute.xlu0 %4964
  %4966 = vrot.lane.b32.xlu0 %v4362, 96
  %v4967 = vpop.permute.xlu0 %4966
  %4968 = vrot.lane.b32.xlu0 %v4366, 96
  %v4969 = vpop.permute.xlu0 %4968
  %4970 = vrot.lane.b32.xlu0 %v4370, 96
  %v4971 = vpop.permute.xlu0 %4970
  %4972 = vrot.lane.b32.xlu0 %v4374, 96
  %v4973 = vpop.permute.xlu0 %4972
  %4974 = vrot.lane.b32.xlu0 %v4378, 96
  %v4975 = vpop.permute.xlu0 %4974
  %4976 = vrot.lane.b32.xlu0 %v4382, 96
  %v4977 = vpop.permute.xlu0 %4976
  %4978 = vrot.lane.b32.xlu0 %v4386, 96
  %v4979 = vpop.permute.xlu0 %4978
  %4980 = vrot.lane.b32.xlu0 %v4390, 96
  %v4981 = vpop.permute.xlu0 %4980
  %4982 = vrot.lane.b32.xlu0 %v4394, 96
  %v4983 = vpop.permute.xlu0 %4982
  %4984 = vrot.lane.b32.xlu0 %v4398, 96
  %v4985 = vpop.permute.xlu0 %4984
  %4986 = vrot.lane.b32.xlu0 %v4402, 96
  %v4987 = vpop.permute.xlu0 %4986
  %v5001 = vmax.f32 %v4936, %v4963
  %v5002 = vmax.f32 %v4937, %v4965
  %v5003 = vmax.f32 %v4938, %v4967
  %v5004 = vmax.f32 %v4939, %v4969
  %v5005 = vmax.f32 %v4940, %v4971
  %v5006 = vmax.f32 %v4941, %v4973
  %v5007 = vmax.f32 %v4942, %v4975
  %v5008 = vmax.f32 %v4943, %v4977
  %v5009 = vmax.f32 %v4944, %v4979
  %v5010 = vmax.f32 %v4945, %v4981
  %v5011 = vmax.f32 %v4946, %v4983
  %v5012 = vmax.f32 %v4947, %v4985
  %v5013 = vmax.f32 %v4948, %v4987
  %5014 = vrot.lane.b32.xlu0 %v4354, 64
  %v5015 = vpop.permute.xlu0 %5014
  %5016 = vrot.lane.b32.xlu0 %v4358, 64
  %v5017 = vpop.permute.xlu0 %5016
  %5018 = vrot.lane.b32.xlu0 %v4362, 64
  %v5019 = vpop.permute.xlu0 %5018
  %5020 = vrot.lane.b32.xlu0 %v4366, 64
  %v5021 = vpop.permute.xlu0 %5020
  %5022 = vrot.lane.b32.xlu0 %v4370, 64
  %v5023 = vpop.permute.xlu0 %5022
  %5024 = vrot.lane.b32.xlu0 %v4374, 64
  %v5025 = vpop.permute.xlu0 %5024
  %5026 = vrot.lane.b32.xlu0 %v4378, 64
  %v5027 = vpop.permute.xlu0 %5026
  %5028 = vrot.lane.b32.xlu0 %v4382, 64
  %v5029 = vpop.permute.xlu0 %5028
  %5030 = vrot.lane.b32.xlu0 %v4386, 64
  %v5031 = vpop.permute.xlu0 %5030
  %5032 = vrot.lane.b32.xlu0 %v4390, 64
  %v5033 = vpop.permute.xlu0 %5032
  %5034 = vrot.lane.b32.xlu0 %v4394, 64
  %v5035 = vpop.permute.xlu0 %5034
  %5036 = vrot.lane.b32.xlu0 %v4398, 64
  %v5037 = vpop.permute.xlu0 %5036
  %5038 = vrot.lane.b32.xlu0 %v4402, 64
  %v5039 = vpop.permute.xlu0 %5038
  %v5053 = vmax.f32 %v5001, %v5015
  %v5054 = vmax.f32 %v5002, %v5017
  %v5055 = vmax.f32 %v5003, %v5019
  %v5056 = vmax.f32 %v5004, %v5021
  %v5057 = vmax.f32 %v5005, %v5023
  %v5058 = vmax.f32 %v5006, %v5025
  %v5059 = vmax.f32 %v5007, %v5027
  %v5060 = vmax.f32 %v5008, %v5029
  %v5061 = vmax.f32 %v5009, %v5031
  %v5062 = vmax.f32 %v5010, %v5033
  %v5063 = vmax.f32 %v5011, %v5035
  %v5064 = vmax.f32 %v5012, %v5037
  %v5065 = vmax.f32 %v5013, %v5039
  %5066 = vrot.lane.b32.xlu0 %v4354, 32
  %v5067 = vpop.permute.xlu0 %5066
  %5068 = vrot.lane.b32.xlu0 %v4358, 32
  %v5069 = vpop.permute.xlu0 %5068
  %5070 = vrot.lane.b32.xlu0 %v4362, 32
  %v5071 = vpop.permute.xlu0 %5070
  %5072 = vrot.lane.b32.xlu0 %v4366, 32
  %v5073 = vpop.permute.xlu0 %5072
  %5074 = vrot.lane.b32.xlu0 %v4370, 32
  %v5075 = vpop.permute.xlu0 %5074
  %5076 = vrot.lane.b32.xlu0 %v4374, 32
  %v5077 = vpop.permute.xlu0 %5076
  %5078 = vrot.lane.b32.xlu0 %v4378, 32
  %v5079 = vpop.permute.xlu0 %5078
  %5080 = vrot.lane.b32.xlu0 %v4382, 32
  %v5081 = vpop.permute.xlu0 %5080
  %5082 = vrot.lane.b32.xlu0 %v4386, 32
  %v5083 = vpop.permute.xlu0 %5082
  %5084 = vrot.lane.b32.xlu0 %v4390, 32
  %v5085 = vpop.permute.xlu0 %5084
  %5086 = vrot.lane.b32.xlu0 %v4394, 32
  %v5087 = vpop.permute.xlu0 %5086
  %5088 = vrot.lane.b32.xlu0 %v4398, 32
  %v5089 = vpop.permute.xlu0 %5088
  %5090 = vrot.lane.b32.xlu0 %v4402, 32
  %v5091 = vpop.permute.xlu0 %5090
  %v5105 = vmax.f32 %v5053, %v5067
  %v5106 = vmax.f32 %v5054, %v5069
  %v5107 = vmax.f32 %v5055, %v5071
  %v5108 = vmax.f32 %v5056, %v5073
  %v5109 = vmax.f32 %v5057, %v5075
  %v5110 = vmax.f32 %v5058, %v5077
  %v5111 = vmax.f32 %v5059, %v5079
  %v5112 = vmax.f32 %v5060, %v5081
  %v5113 = vmax.f32 %v5061, %v5083
  %v5114 = vmax.f32 %v5062, %v5085
  %v5115 = vmax.f32 %v5063, %v5087
  %v5116 = vmax.f32 %v5064, %v5089
  %v5117 = vmax.f32 %v5065, %v5091
  %v5118 = vpack.c.bf16 %v5106, %v5105
  %v5119 = vpack.c.bf16 %v5108, %v5107
  %v5120 = vpack.c.bf16 %v5110, %v5109
  %v5121 = vpack.c.bf16 %v5112, %v5111
  %v5122 = vpack.c.bf16 %v5114, %v5113
  %v5123 = vpack.c.bf16 %v5116, %v5115
  %v5124 = vpack.c.bf16 %v5117, %v5117
  %v5132 = vunpack.c.l.b16 %v5118
  %v5133 = vunpack.c.h.b16 %v5118
  %v5134 = vunpack.c.l.b16 %v5119
  %v5135 = vunpack.c.h.b16 %v5119
  %v5136 = vunpack.c.l.b16 %v5120
  %v5137 = vunpack.c.h.b16 %v5120
  %v5138 = vunpack.c.l.b16 %v5121
  %v5139 = vunpack.c.h.b16 %v5121
  %v5140 = vunpack.c.l.b16 %v5122
  %v5141 = vunpack.c.h.b16 %v5122
  %v5142 = vunpack.c.l.b16 %v5123
  %v5143 = vunpack.c.h.b16 %v5123
  %v5144 = vunpack.c.l.b16 %v5124
  %v5145 = vpack.c.b16 %v5132, %v5132
  %v5146 = vpack.c.b16 %v5133, %v5133
  %v5147 = vpack.c.b16 %v5134, %v5134
  %v5148 = vpack.c.b16 %v5135, %v5135
  %v5149 = vpack.c.b16 %v5136, %v5136
  %v5150 = vpack.c.b16 %v5137, %v5137
  %v5151 = vpack.c.b16 %v5138, %v5138
  %v5152 = vpack.c.b16 %v5139, %v5139
  %v5153 = vpack.c.b16 %v5140, %v5140
  %v5154 = vpack.c.b16 %v5141, %v5141
  %v5155 = vpack.c.b16 %v5142, %v5142
  %v5156 = vpack.c.b16 %v5143, %v5143
  %v5157 = vpack.c.b16 %v5144, %v5144
  %vm5171 = vcmask 257024
  %5172 = vst.msk [vmem:[%s3] sm:$0xf] %vm5171, %v5145
  %5173 = vst.msk [vmem:[%s3 + $0x4] sm:$0xf] %vm5171, %v5146
  %5174 = vst.msk [vmem:[%s3 + $0x8] sm:$0xf] %vm5171, %v5147
  %5175 = vst.msk [vmem:[%s3 + $0xc] sm:$0xf] %vm5171, %v5148
  %5176 = vst.msk [vmem:[%s3 + $0x10] sm:$0xf] %vm5171, %v5149
  %5177 = vst.msk [vmem:[%s3 + $0x14] sm:$0xf] %vm5171, %v5150
  %5178 = vst.msk [vmem:[%s3 + $0x18] sm:$0xf] %vm5171, %v5151
  %5179 = vst.msk [vmem:[%s3 + $0x1c] sm:$0xf] %vm5171, %v5152
  %5180 = vst.msk [vmem:[%s3 + $0x20] sm:$0xf] %vm5171, %v5153
  %5181 = vst.msk [vmem:[%s3 + $0x24] sm:$0xf] %vm5171, %v5154
  %5182 = vst.msk [vmem:[%s3 + $0x28] sm:$0xf] %vm5171, %v5155
  %5183 = vst.msk [vmem:[%s3 + $0x2c] sm:$0xf] %vm5171, %v5156
  %5184 = vst.msk [vmem:[%s3 + $0x30] sm:$0xf] %vm5171, %v5157
  // Predicated region
  $region14: #{_lambda_.5} parent=0 // pred_check
    _
  $region15: #{_lambda_.5} parent=0 // pred_check_branch
    %5186 = sbr.rel (0) target = $region17
  $region16: #{_lambda_.5} parent=0 // pred_region
    _
  $region17: #{_lambda_.5} parent=0 // pred_fallthru
    _
  // Predicated region
  $region18: #{_lambda_.5} parent=0 // pred_check
    _
  $region19: #{_lambda_.5} parent=0 // pred_check_branch
    %5188 = sbr.rel (0) target = $region21
  $region20: #{_lambda_.5} parent=0 // pred_region
    _
  $region21: #{_lambda_.5} parent=0 // pred_fallthru
    _

// kernel: _lambda_.6
$region0: #{_lambda_.6}
  #allocation0 [shape = 'u32[]', space=smem, size = 0x4, offset = 0x4, fixed_abs, tag = 'smem constant byte address 0x4 - core index']
  #allocation1 [shape = 'u32[144,128]{1,0:T(1,128)}', space=vmem, size = 0x12000, scoped, tag = 'internal scratch']
  %s0 = inlined_call_operand.vmem [shape: bf16[8,1568], index: 0, kind: input, shape index: {}]
  %s1 = inlined_call_operand.vmem [shape: bf16[1568,512], index: 1, kind: input, shape index: {}]
  %s2 = inlined_call_operand.vmem [shape: f32[1,512], index: 2, kind: input, shape index: {}]
  %s3 = inlined_call_operand.vmem [shape: bf16[8,32], index: 3, kind: output, shape index: {}]
  %s4 = sld [smem:[#allocation0]]
  $region22: #{_lambda_.6} parent=0
    _
  %s6 = ssub.s32 1, %s4
  %s7 = scalar_select 0, %s6, %s4
  // Predicated region
  $region2: #{_lambda_.6} parent=0 // pred_check
    _
  $region3: #{_lambda_.6} parent=0 // pred_check_branch
    %9 = sbr.rel (0) target = $region5
  $region4: #{_lambda_.6} parent=0 // pred_region
    _
  $region5: #{_lambda_.6} parent=0 // pred_fallthru
    _
  // Predicated region
  $region6: #{_lambda_.6} parent=0 // pred_check
    _
  $region7: #{_lambda_.6} parent=0 // pred_check_branch
    %11 = sbr.rel (0) target = $region9
  $region8: #{_lambda_.6} parent=0 // pred_region
    _
  $region9: #{_lambda_.6} parent=0 // pred_fallthru
    _
  // Predicated region
  $region10: #{_lambda_.6} parent=0 // pred_check
    _
  $region11: #{_lambda_.6} parent=0 // pred_check_branch
    %13 = sbr.rel (0) target = $region13
  $region12: #{_lambda_.6} parent=0 // pred_region
    _
  $region13: #{_lambda_.6} parent=0 // pred_fallthru
    _
  %v15 = vld [vmem:[%s0] sm:$0xff]
  %v16 = vld [vmem:[%s0 + $0x8] sm:$0xff]
  %v17 = vld [vmem:[%s0 + $0x10] sm:$0xff]
  %v18 = vld [vmem:[%s0 + $0x18] sm:$0xff]
  %v19 = vld [vmem:[%s0 + $0x20] sm:$0xff]
  %v20 = vld [vmem:[%s0 + $0x28] sm:$0xff]
  %v21 = vld [vmem:[%s0 + $0x30] sm:$0xf]
  %v22 = vld [vmem:[%s1] sm:$0xff]
  %v23 = vld [vmem:[%s1 + $0x8] sm:$0xff]
  %v24 = vld [vmem:[%s1 + $0x10] sm:$0xff]
  %v25 = vld [vmem:[%s1 + $0x18] sm:$0xff]
  %v26 = vld [vmem:[%s1 + $0x20] sm:$0xff]
  %v27 = vld [vmem:[%s1 + $0x28] sm:$0xff]
  %v28 = vld [vmem:[%s1 + $0x30] sm:$0xff]
  %v29 = vld [vmem:[%s1 + $0x38] sm:$0xff]
  %v30 = vld [vmem:[%s1 + $0x40] sm:$0xff]
  %v31 = vld [vmem:[%s1 + $0x48] sm:$0xff]
  %v32 = vld [vmem:[%s1 + $0x50] sm:$0xff]
  %v33 = vld [vmem:[%s1 + $0x58] sm:$0xff]
  %v34 = vld [vmem:[%s1 + $0x60] sm:$0xff]
  %v35 = vld [vmem:[%s1 + $0x68] sm:$0xff]
  %v36 = vld [vmem:[%s1 + $0x70] sm:$0xff]
  %v37 = vld [vmem:[%s1 + $0x78] sm:$0xff]
  %v38 = vld [vmem:[%s1 + $0x80] sm:$0xff]
  %v39 = vld [vmem:[%s1 + $0x88] sm:$0xff]
  %v40 = vld [vmem:[%s1 + $0x90] sm:$0xff]
  %v41 = vld [vmem:[%s1 + $0x98] sm:$0xff]
  %v42 = vld [vmem:[%s1 + $0xa0] sm:$0xff]
  %v43 = vld [vmem:[%s1 + $0xa8] sm:$0xff]
  %v44 = vld [vmem:[%s1 + $0xb0] sm:$0xff]
  %v45 = vld [vmem:[%s1 + $0xb8] sm:$0xff]
  %v46 = vld [vmem:[%s1 + $0xc0] sm:$0xff]
  %v47 = vld [vmem:[%s1 + $0xc8] sm:$0xff]
  %v48 = vld [vmem:[%s1 + $0xd0] sm:$0xff]
  %v49 = vld [vmem:[%s1 + $0xd8] sm:$0xff]
  %v50 = vld [vmem:[%s1 + $0xe0] sm:$0xff]
  %v51 = vld [vmem:[%s1 + $0xe8] sm:$0xff]
  %v52 = vld [vmem:[%s1 + $0xf0] sm:$0xff]
  %v53 = vld [vmem:[%s1 + $0xf8] sm:$0xff]
  %v54 = vld [vmem:[%s1 + $0x100] sm:$0xff]
  %v55 = vld [vmem:[%s1 + $0x108] sm:$0xff]
  %v56 = vld [vmem:[%s1 + $0x110] sm:$0xff]
  %v57 = vld [vmem:[%s1 + $0x118] sm:$0xff]
  %v58 = vld [vmem:[%s1 + $0x120] sm:$0xff]
  %v59 = vld [vmem:[%s1 + $0x128] sm:$0xff]
  %v60 = vld [vmem:[%s1 + $0x130] sm:$0xff]
  %v61 = vld [vmem:[%s1 + $0x138] sm:$0xff]
  %v62 = vld [vmem:[%s1 + $0x140] sm:$0xff]
  %v63 = vld [vmem:[%s1 + $0x148] sm:$0xff]
  %v64 = vld [vmem:[%s1 + $0x150] sm:$0xff]
  %v65 = vld [vmem:[%s1 + $0x158] sm:$0xff]
  %v66 = vld [vmem:[%s1 + $0x160] sm:$0xff]
  %v67 = vld [vmem:[%s1 + $0x168] sm:$0xff]
  %v68 = vld [vmem:[%s1 + $0x170] sm:$0xff]
  %v69 = vld [vmem:[%s1 + $0x178] sm:$0xff]
  %v70 = vld [vmem:[%s1 + $0x180] sm:$0xff]
  %v71 = vld [vmem:[%s1 + $0x188] sm:$0xff]
  %v72 = vld [vmem:[%s1 + $0x190] sm:$0xff]
  %v73 = vld [vmem:[%s1 + $0x198] sm:$0xff]
  %v74 = vld [vmem:[%s1 + $0x1a0] sm:$0xff]
  %v75 = vld [vmem:[%s1 + $0x1a8] sm:$0xff]
  %v76 = vld [vmem:[%s1 + $0x1b0] sm:$0xff]
  %v77 = vld [vmem:[%s1 + $0x1b8] sm:$0xff]
  %v78 = vld [vmem:[%s1 + $0x1c0] sm:$0xff]
  %v79 = vld [vmem:[%s1 + $0x1c8] sm:$0xff]
  %v80 = vld [vmem:[%s1 + $0x1d0] sm:$0xff]
  %v81 = vld [vmem:[%s1 + $0x1d8] sm:$0xff]
  %v82 = vld [vmem:[%s1 + $0x1e0] sm:$0xff]
  %v83 = vld [vmem:[%s1 + $0x1e8] sm:$0xff]
  %v84 = vld [vmem:[%s1 + $0x1f0] sm:$0xff]
  %v85 = vld [vmem:[%s1 + $0x1f8] sm:$0xff]
  %v86 = vld [vmem:[%s1 + $0x200] sm:$0xff]
  %v87 = vld [vmem:[%s1 + $0x208] sm:$0xff]
  %v88 = vld [vmem:[%s1 + $0x210] sm:$0xff]
  %v89 = vld [vmem:[%s1 + $0x218] sm:$0xff]
  %v90 = vld [vmem:[%s1 + $0x220] sm:$0xff]
  %v91 = vld [vmem:[%s1 + $0x228] sm:$0xff]
  %v92 = vld [vmem:[%s1 + $0x230] sm:$0xff]
  %v93 = vld [vmem:[%s1 + $0x238] sm:$0xff]
  %v94 = vld [vmem:[%s1 + $0x240] sm:$0xff]
  %v95 = vld [vmem:[%s1 + $0x248] sm:$0xff]
  %v96 = vld [vmem:[%s1 + $0x250] sm:$0xff]
  %v97 = vld [vmem:[%s1 + $0x258] sm:$0xff]
  %v98 = vld [vmem:[%s1 + $0x260] sm:$0xff]
  %v99 = vld [vmem:[%s1 + $0x268] sm:$0xff]
  %v100 = vld [vmem:[%s1 + $0x270] sm:$0xff]
  %v101 = vld [vmem:[%s1 + $0x278] sm:$0xff]
  %v102 = vld [vmem:[%s1 + $0x280] sm:$0xff]
  %v103 = vld [vmem:[%s1 + $0x288] sm:$0xff]
  %v104 = vld [vmem:[%s1 + $0x290] sm:$0xff]
  %v105 = vld [vmem:[%s1 + $0x298] sm:$0xff]
  %v106 = vld [vmem:[%s1 + $0x2a0] sm:$0xff]
  %v107 = vld [vmem:[%s1 + $0x2a8] sm:$0xff]
  %v108 = vld [vmem:[%s1 + $0x2b0] sm:$0xff]
  %v109 = vld [vmem:[%s1 + $0x2b8] sm:$0xff]
  %v110 = vld [vmem:[%s1 + $0x2c0] sm:$0xff]
  %v111 = vld [vmem:[%s1 + $0x2c8] sm:$0xff]
  %v112 = vld [vmem:[%s1 + $0x2d0] sm:$0xff]
  %v113 = vld [vmem:[%s1 + $0x2d8] sm:$0xff]
  %v114 = vld [vmem:[%s1 + $0x2e0] sm:$0xff]
  %v115 = vld [vmem:[%s1 + $0x2e8] sm:$0xff]
  %v116 = vld [vmem:[%s1 + $0x2f0] sm:$0xff]
  %v117 = vld [vmem:[%s1 + $0x2f8] sm:$0xff]
  %v118 = vld [vmem:[%s1 + $0x300] sm:$0xff]
  %v119 = vld [vmem:[%s1 + $0x308] sm:$0xff]
  %v120 = vld [vmem:[%s1 + $0x310] sm:$0xff]
  %v121 = vld [vmem:[%s1 + $0x318] sm:$0xff]
  %v122 = vld [vmem:[%s1 + $0x320] sm:$0xff]
  %v123 = vld [vmem:[%s1 + $0x328] sm:$0xff]
  %v124 = vld [vmem:[%s1 + $0x330] sm:$0xff]
  %v125 = vld [vmem:[%s1 + $0x338] sm:$0xff]
  %v126 = vld [vmem:[%s1 + $0x340] sm:$0xff]
  %v127 = vld [vmem:[%s1 + $0x348] sm:$0xff]
  %v128 = vld [vmem:[%s1 + $0x350] sm:$0xff]
  %v129 = vld [vmem:[%s1 + $0x358] sm:$0xff]
  %v130 = vld [vmem:[%s1 + $0x360] sm:$0xff]
  %v131 = vld [vmem:[%s1 + $0x368] sm:$0xff]
  %v132 = vld [vmem:[%s1 + $0x370] sm:$0xff]
  %v133 = vld [vmem:[%s1 + $0x378] sm:$0xff]
  %v134 = vld [vmem:[%s1 + $0x380] sm:$0xff]
  %v135 = vld [vmem:[%s1 + $0x388] sm:$0xff]
  %v136 = vld [vmem:[%s1 + $0x390] sm:$0xff]
  %v137 = vld [vmem:[%s1 + $0x398] sm:$0xff]
  %v138 = vld [vmem:[%s1 + $0x3a0] sm:$0xff]
  %v139 = vld [vmem:[%s1 + $0x3a8] sm:$0xff]
  %v140 = vld [vmem:[%s1 + $0x3b0] sm:$0xff]
  %v141 = vld [vmem:[%s1 + $0x3b8] sm:$0xff]
  %v142 = vld [vmem:[%s1 + $0x3c0] sm:$0xff]
  %v143 = vld [vmem:[%s1 + $0x3c8] sm:$0xff]
  %v144 = vld [vmem:[%s1 + $0x3d0] sm:$0xff]
  %v145 = vld [vmem:[%s1 + $0x3d8] sm:$0xff]
  %v146 = vld [vmem:[%s1 + $0x3e0] sm:$0xff]
  %v147 = vld [vmem:[%s1 + $0x3e8] sm:$0xff]
  %v148 = vld [vmem:[%s1 + $0x3f0] sm:$0xff]
  %v149 = vld [vmem:[%s1 + $0x3f8] sm:$0xff]
  %v150 = vld [vmem:[%s1 + $0x400] sm:$0xff]
  %v151 = vld [vmem:[%s1 + $0x408] sm:$0xff]
  %v152 = vld [vmem:[%s1 + $0x410] sm:$0xff]
  %v153 = vld [vmem:[%s1 + $0x418] sm:$0xff]
  %v154 = vld [vmem:[%s1 + $0x420] sm:$0xff]
  %v155 = vld [vmem:[%s1 + $0x428] sm:$0xff]
  %v156 = vld [vmem:[%s1 + $0x430] sm:$0xff]
  %v157 = vld [vmem:[%s1 + $0x438] sm:$0xff]
  %v158 = vld [vmem:[%s1 + $0x440] sm:$0xff]
  %v159 = vld [vmem:[%s1 + $0x448] sm:$0xff]
  %v160 = vld [vmem:[%s1 + $0x450] sm:$0xff]
  %v161 = vld [vmem:[%s1 + $0x458] sm:$0xff]
  %v162 = vld [vmem:[%s1 + $0x460] sm:$0xff]
  %v163 = vld [vmem:[%s1 + $0x468] sm:$0xff]
  %v164 = vld [vmem:[%s1 + $0x470] sm:$0xff]
  %v165 = vld [vmem:[%s1 + $0x478] sm:$0xff]
  %v166 = vld [vmem:[%s1 + $0x480] sm:$0xff]
  %v167 = vld [vmem:[%s1 + $0x488] sm:$0xff]
  %v168 = vld [vmem:[%s1 + $0x490] sm:$0xff]
  %v169 = vld [vmem:[%s1 + $0x498] sm:$0xff]
  %v170 = vld [vmem:[%s1 + $0x4a0] sm:$0xff]
  %v171 = vld [vmem:[%s1 + $0x4a8] sm:$0xff]
  %v172 = vld [vmem:[%s1 + $0x4b0] sm:$0xff]
  %v173 = vld [vmem:[%s1 + $0x4b8] sm:$0xff]
  %v174 = vld [vmem:[%s1 + $0x4c0] sm:$0xff]
  %v175 = vld [vmem:[%s1 + $0x4c8] sm:$0xff]
  %v176 = vld [vmem:[%s1 + $0x4d0] sm:$0xff]
  %v177 = vld [vmem:[%s1 + $0x4d8] sm:$0xff]
  %v178 = vld [vmem:[%s1 + $0x4e0] sm:$0xff]
  %v179 = vld [vmem:[%s1 + $0x4e8] sm:$0xff]
  %v180 = vld [vmem:[%s1 + $0x4f0] sm:$0xff]
  %v181 = vld [vmem:[%s1 + $0x4f8] sm:$0xff]
  %v182 = vld [vmem:[%s1 + $0x500] sm:$0xff]
  %v183 = vld [vmem:[%s1 + $0x508] sm:$0xff]
  %v184 = vld [vmem:[%s1 + $0x510] sm:$0xff]
  %v185 = vld [vmem:[%s1 + $0x518] sm:$0xff]
  %v186 = vld [vmem:[%s1 + $0x520] sm:$0xff]
  %v187 = vld [vmem:[%s1 + $0x528] sm:$0xff]
  %v188 = vld [vmem:[%s1 + $0x530] sm:$0xff]
  %v189 = vld [vmem:[%s1 + $0x538] sm:$0xff]
  %v190 = vld [vmem:[%s1 + $0x540] sm:$0xff]
  %v191 = vld [vmem:[%s1 + $0x548] sm:$0xff]
  %v192 = vld [vmem:[%s1 + $0x550] sm:$0xff]
  %v193 = vld [vmem:[%s1 + $0x558] sm:$0xff]
  %v194 = vld [vmem:[%s1 + $0x560] sm:$0xff]
  %v195 = vld [vmem:[%s1 + $0x568] sm:$0xff]
  %v196 = vld [vmem:[%s1 + $0x570] sm:$0xff]
  %v197 = vld [vmem:[%s1 + $0x578] sm:$0xff]
  %v198 = vld [vmem:[%s1 + $0x580] sm:$0xff]
  %v199 = vld [vmem:[%s1 + $0x588] sm:$0xff]
  %v200 = vld [vmem:[%s1 + $0x590] sm:$0xff]
  %v201 = vld [vmem:[%s1 + $0x598] sm:$0xff]
  %v202 = vld [vmem:[%s1 + $0x5a0] sm:$0xff]
  %v203 = vld [vmem:[%s1 + $0x5a8] sm:$0xff]
  %v204 = vld [vmem:[%s1 + $0x5b0] sm:$0xff]
  %v205 = vld [vmem:[%s1 + $0x5b8] sm:$0xff]
  %v206 = vld [vmem:[%s1 + $0x5c0] sm:$0xff]
  %v207 = vld [vmem:[%s1 + $0x5c8] sm:$0xff]
  %v208 = vld [vmem:[%s1 + $0x5d0] sm:$0xff]
  %v209 = vld [vmem:[%s1 + $0x5d8] sm:$0xff]
  %v210 = vld [vmem:[%s1 + $0x5e0] sm:$0xff]
  %v211 = vld [vmem:[%s1 + $0x5e8] sm:$0xff]
  %v212 = vld [vmem:[%s1 + $0x5f0] sm:$0xff]
  %v213 = vld [vmem:[%s1 + $0x5f8] sm:$0xff]
  %v214 = vld [vmem:[%s1 + $0x600] sm:$0xff]
  %v215 = vld [vmem:[%s1 + $0x608] sm:$0xff]
  %v216 = vld [vmem:[%s1 + $0x610] sm:$0xff]
  %v217 = vld [vmem:[%s1 + $0x618] sm:$0xff]
  %v218 = vld [vmem:[%s1 + $0x620] sm:$0xff]
  %v219 = vld [vmem:[%s1 + $0x628] sm:$0xff]
  %v220 = vld [vmem:[%s1 + $0x630] sm:$0xff]
  %v221 = vld [vmem:[%s1 + $0x638] sm:$0xff]
  %v222 = vld [vmem:[%s1 + $0x640] sm:$0xff]
  %v223 = vld [vmem:[%s1 + $0x648] sm:$0xff]
  %v224 = vld [vmem:[%s1 + $0x650] sm:$0xff]
  %v225 = vld [vmem:[%s1 + $0x658] sm:$0xff]
  %v226 = vld [vmem:[%s1 + $0x660] sm:$0xff]
  %v227 = vld [vmem:[%s1 + $0x668] sm:$0xff]
  %v228 = vld [vmem:[%s1 + $0x670] sm:$0xff]
  %v229 = vld [vmem:[%s1 + $0x678] sm:$0xff]
  %v230 = vld [vmem:[%s1 + $0x680] sm:$0xff]
  %v231 = vld [vmem:[%s1 + $0x688] sm:$0xff]
  %v232 = vld [vmem:[%s1 + $0x690] sm:$0xff]
  %v233 = vld [vmem:[%s1 + $0x698] sm:$0xff]
  %v234 = vld [vmem:[%s1 + $0x6a0] sm:$0xff]
  %v235 = vld [vmem:[%s1 + $0x6a8] sm:$0xff]
  %v236 = vld [vmem:[%s1 + $0x6b0] sm:$0xff]
  %v237 = vld [vmem:[%s1 + $0x6b8] sm:$0xff]
  %v238 = vld [vmem:[%s1 + $0x6c0] sm:$0xff]
  %v239 = vld [vmem:[%s1 + $0x6c8] sm:$0xff]
  %v240 = vld [vmem:[%s1 + $0x6d0] sm:$0xff]
  %v241 = vld [vmem:[%s1 + $0x6d8] sm:$0xff]
  %v242 = vld [vmem:[%s1 + $0x6e0] sm:$0xff]
  %v243 = vld [vmem:[%s1 + $0x6e8] sm:$0xff]
  %v244 = vld [vmem:[%s1 + $0x6f0] sm:$0xff]
  %v245 = vld [vmem:[%s1 + $0x6f8] sm:$0xff]
  %v246 = vld [vmem:[%s1 + $0x700] sm:$0xff]
  %v247 = vld [vmem:[%s1 + $0x708] sm:$0xff]
  %v248 = vld [vmem:[%s1 + $0x710] sm:$0xff]
  %v249 = vld [vmem:[%s1 + $0x718] sm:$0xff]
  %v250 = vld [vmem:[%s1 + $0x720] sm:$0xff]
  %v251 = vld [vmem:[%s1 + $0x728] sm:$0xff]
  %v252 = vld [vmem:[%s1 + $0x730] sm:$0xff]
  %v253 = vld [vmem:[%s1 + $0x738] sm:$0xff]
  %v254 = vld [vmem:[%s1 + $0x740] sm:$0xff]
  %v255 = vld [vmem:[%s1 + $0x748] sm:$0xff]
  %v256 = vld [vmem:[%s1 + $0x750] sm:$0xff]
  %v257 = vld [vmem:[%s1 + $0x758] sm:$0xff]
  %v258 = vld [vmem:[%s1 + $0x760] sm:$0xff]
  %v259 = vld [vmem:[%s1 + $0x768] sm:$0xff]
  %v260 = vld [vmem:[%s1 + $0x770] sm:$0xff]
  %v261 = vld [vmem:[%s1 + $0x778] sm:$0xff]
  %v262 = vld [vmem:[%s1 + $0x780] sm:$0xff]
  %v263 = vld [vmem:[%s1 + $0x788] sm:$0xff]
  %v264 = vld [vmem:[%s1 + $0x790] sm:$0xff]
  %v265 = vld [vmem:[%s1 + $0x798] sm:$0xff]
  %v266 = vld [vmem:[%s1 + $0x7a0] sm:$0xff]
  %v267 = vld [vmem:[%s1 + $0x7a8] sm:$0xff]
  %v268 = vld [vmem:[%s1 + $0x7b0] sm:$0xff]
  %v269 = vld [vmem:[%s1 + $0x7b8] sm:$0xff]
  %v270 = vld [vmem:[%s1 + $0x7c0] sm:$0xff]
  %v271 = vld [vmem:[%s1 + $0x7c8] sm:$0xff]
  %v272 = vld [vmem:[%s1 + $0x7d0] sm:$0xff]
  %v273 = vld [vmem:[%s1 + $0x7d8] sm:$0xff]
  %v274 = vld [vmem:[%s1 + $0x7e0] sm:$0xff]
  %v275 = vld [vmem:[%s1 + $0x7e8] sm:$0xff]
  %v276 = vld [vmem:[%s1 + $0x7f0] sm:$0xff]
  %v277 = vld [vmem:[%s1 + $0x7f8] sm:$0xff]
  %v278 = vld [vmem:[%s1 + $0x800] sm:$0xff]
  %v279 = vld [vmem:[%s1 + $0x808] sm:$0xff]
  %v280 = vld [vmem:[%s1 + $0x810] sm:$0xff]
  %v281 = vld [vmem:[%s1 + $0x818] sm:$0xff]
  %v282 = vld [vmem:[%s1 + $0x820] sm:$0xff]
  %v283 = vld [vmem:[%s1 + $0x828] sm:$0xff]
  %v284 = vld [vmem:[%s1 + $0x830] sm:$0xff]
  %v285 = vld [vmem:[%s1 + $0x838] sm:$0xff]
  %v286 = vld [vmem:[%s1 + $0x840] sm:$0xff]
  %v287 = vld [vmem:[%s1 + $0x848] sm:$0xff]
  %v288 = vld [vmem:[%s1 + $0x850] sm:$0xff]
  %v289 = vld [vmem:[%s1 + $0x858] sm:$0xff]
  %v290 = vld [vmem:[%s1 + $0x860] sm:$0xff]
  %v291 = vld [vmem:[%s1 + $0x868] sm:$0xff]
  %v292 = vld [vmem:[%s1 + $0x870] sm:$0xff]
  %v293 = vld [vmem:[%s1 + $0x878] sm:$0xff]
  %v294 = vld [vmem:[%s1 + $0x880] sm:$0xff]
  %v295 = vld [vmem:[%s1 + $0x888] sm:$0xff]
  %v296 = vld [vmem:[%s1 + $0x890] sm:$0xff]
  %v297 = vld [vmem:[%s1 + $0x898] sm:$0xff]
  %v298 = vld [vmem:[%s1 + $0x8a0] sm:$0xff]
  %v299 = vld [vmem:[%s1 + $0x8a8] sm:$0xff]
  %v300 = vld [vmem:[%s1 + $0x8b0] sm:$0xff]
  %v301 = vld [vmem:[%s1 + $0x8b8] sm:$0xff]
  %v302 = vld [vmem:[%s1 + $0x8c0] sm:$0xff]
  %v303 = vld [vmem:[%s1 + $0x8c8] sm:$0xff]
  %v304 = vld [vmem:[%s1 + $0x8d0] sm:$0xff]
  %v305 = vld [vmem:[%s1 + $0x8d8] sm:$0xff]
  %v306 = vld [vmem:[%s1 + $0x8e0] sm:$0xff]
  %v307 = vld [vmem:[%s1 + $0x8e8] sm:$0xff]
  %v308 = vld [vmem:[%s1 + $0x8f0] sm:$0xff]
  %v309 = vld [vmem:[%s1 + $0x8f8] sm:$0xff]
  %v310 = vld [vmem:[%s1 + $0x900] sm:$0xff]
  %v311 = vld [vmem:[%s1 + $0x908] sm:$0xff]
  %v312 = vld [vmem:[%s1 + $0x910] sm:$0xff]
  %v313 = vld [vmem:[%s1 + $0x918] sm:$0xff]
  %v314 = vld [vmem:[%s1 + $0x920] sm:$0xff]
  %v315 = vld [vmem:[%s1 + $0x928] sm:$0xff]
  %v316 = vld [vmem:[%s1 + $0x930] sm:$0xff]
  %v317 = vld [vmem:[%s1 + $0x938] sm:$0xff]
  %v318 = vld [vmem:[%s1 + $0x940] sm:$0xff]
  %v319 = vld [vmem:[%s1 + $0x948] sm:$0xff]
  %v320 = vld [vmem:[%s1 + $0x950] sm:$0xff]
  %v321 = vld [vmem:[%s1 + $0x958] sm:$0xff]
  %v322 = vld [vmem:[%s1 + $0x960] sm:$0xff]
  %v323 = vld [vmem:[%s1 + $0x968] sm:$0xff]
  %v324 = vld [vmem:[%s1 + $0x970] sm:$0xff]
  %v325 = vld [vmem:[%s1 + $0x978] sm:$0xff]
  %v326 = vld [vmem:[%s1 + $0x980] sm:$0xff]
  %v327 = vld [vmem:[%s1 + $0x988] sm:$0xff]
  %v328 = vld [vmem:[%s1 + $0x990] sm:$0xff]
  %v329 = vld [vmem:[%s1 + $0x998] sm:$0xff]
  %v330 = vld [vmem:[%s1 + $0x9a0] sm:$0xff]
  %v331 = vld [vmem:[%s1 + $0x9a8] sm:$0xff]
  %v332 = vld [vmem:[%s1 + $0x9b0] sm:$0xff]
  %v333 = vld [vmem:[%s1 + $0x9b8] sm:$0xff]
  %v334 = vld [vmem:[%s1 + $0x9c0] sm:$0xff]
  %v335 = vld [vmem:[%s1 + $0x9c8] sm:$0xff]
  %v336 = vld [vmem:[%s1 + $0x9d0] sm:$0xff]
  %v337 = vld [vmem:[%s1 + $0x9d8] sm:$0xff]
  %v338 = vld [vmem:[%s1 + $0x9e0] sm:$0xff]
  %v339 = vld [vmem:[%s1 + $0x9e8] sm:$0xff]
  %v340 = vld [vmem:[%s1 + $0x9f0] sm:$0xff]
  %v341 = vld [vmem:[%s1 + $0x9f8] sm:$0xff]
  %v342 = vld [vmem:[%s1 + $0xa00] sm:$0xff]
  %v343 = vld [vmem:[%s1 + $0xa08] sm:$0xff]
  %v344 = vld [vmem:[%s1 + $0xa10] sm:$0xff]
  %v345 = vld [vmem:[%s1 + $0xa18] sm:$0xff]
  %v346 = vld [vmem:[%s1 + $0xa20] sm:$0xff]
  %v347 = vld [vmem:[%s1 + $0xa28] sm:$0xff]
  %v348 = vld [vmem:[%s1 + $0xa30] sm:$0xff]
  %v349 = vld [vmem:[%s1 + $0xa38] sm:$0xff]
  %v350 = vld [vmem:[%s1 + $0xa40] sm:$0xff]
  %v351 = vld [vmem:[%s1 + $0xa48] sm:$0xff]
  %v352 = vld [vmem:[%s1 + $0xa50] sm:$0xff]
  %v353 = vld [vmem:[%s1 + $0xa58] sm:$0xff]
  %v354 = vld [vmem:[%s1 + $0xa60] sm:$0xff]
  %v355 = vld [vmem:[%s1 + $0xa68] sm:$0xff]
  %v356 = vld [vmem:[%s1 + $0xa70] sm:$0xff]
  %v357 = vld [vmem:[%s1 + $0xa78] sm:$0xff]
  %v358 = vld [vmem:[%s1 + $0xa80] sm:$0xff]
  %v359 = vld [vmem:[%s1 + $0xa88] sm:$0xff]
  %v360 = vld [vmem:[%s1 + $0xa90] sm:$0xff]
  %v361 = vld [vmem:[%s1 + $0xa98] sm:$0xff]
  %v362 = vld [vmem:[%s1 + $0xaa0] sm:$0xff]
  %v363 = vld [vmem:[%s1 + $0xaa8] sm:$0xff]
  %v364 = vld [vmem:[%s1 + $0xab0] sm:$0xff]
  %v365 = vld [vmem:[%s1 + $0xab8] sm:$0xff]
  %v366 = vld [vmem:[%s1 + $0xac0] sm:$0xff]
  %v367 = vld [vmem:[%s1 + $0xac8] sm:$0xff]
  %v368 = vld [vmem:[%s1 + $0xad0] sm:$0xff]
  %v369 = vld [vmem:[%s1 + $0xad8] sm:$0xff]
  %v370 = vld [vmem:[%s1 + $0xae0] sm:$0xff]
  %v371 = vld [vmem:[%s1 + $0xae8] sm:$0xff]
  %v372 = vld [vmem:[%s1 + $0xaf0] sm:$0xff]
  %v373 = vld [vmem:[%s1 + $0xaf8] sm:$0xff]
  %v374 = vld [vmem:[%s1 + $0xb00] sm:$0xff]
  %v375 = vld [vmem:[%s1 + $0xb08] sm:$0xff]
  %v376 = vld [vmem:[%s1 + $0xb10] sm:$0xff]
  %v377 = vld [vmem:[%s1 + $0xb18] sm:$0xff]
  %v378 = vld [vmem:[%s1 + $0xb20] sm:$0xff]
  %v379 = vld [vmem:[%s1 + $0xb28] sm:$0xff]
  %v380 = vld [vmem:[%s1 + $0xb30] sm:$0xff]
  %v381 = vld [vmem:[%s1 + $0xb38] sm:$0xff]
  %v382 = vld [vmem:[%s1 + $0xb40] sm:$0xff]
  %v383 = vld [vmem:[%s1 + $0xb48] sm:$0xff]
  %v384 = vld [vmem:[%s1 + $0xb50] sm:$0xff]
  %v385 = vld [vmem:[%s1 + $0xb58] sm:$0xff]
  %v386 = vld [vmem:[%s1 + $0xb60] sm:$0xff]
  %v387 = vld [vmem:[%s1 + $0xb68] sm:$0xff]
  %v388 = vld [vmem:[%s1 + $0xb70] sm:$0xff]
  %v389 = vld [vmem:[%s1 + $0xb78] sm:$0xff]
  %v390 = vld [vmem:[%s1 + $0xb80] sm:$0xff]
  %v391 = vld [vmem:[%s1 + $0xb88] sm:$0xff]
  %v392 = vld [vmem:[%s1 + $0xb90] sm:$0xff]
  %v393 = vld [vmem:[%s1 + $0xb98] sm:$0xff]
  %v394 = vld [vmem:[%s1 + $0xba0] sm:$0xff]
  %v395 = vld [vmem:[%s1 + $0xba8] sm:$0xff]
  %v396 = vld [vmem:[%s1 + $0xbb0] sm:$0xff]
  %v397 = vld [vmem:[%s1 + $0xbb8] sm:$0xff]
  %v398 = vld [vmem:[%s1 + $0xbc0] sm:$0xff]
  %v399 = vld [vmem:[%s1 + $0xbc8] sm:$0xff]
  %v400 = vld [vmem:[%s1 + $0xbd0] sm:$0xff]
  %v401 = vld [vmem:[%s1 + $0xbd8] sm:$0xff]
  %v402 = vld [vmem:[%s1 + $0xbe0] sm:$0xff]
  %v403 = vld [vmem:[%s1 + $0xbe8] sm:$0xff]
  %v404 = vld [vmem:[%s1 + $0xbf0] sm:$0xff]
  %v405 = vld [vmem:[%s1 + $0xbf8] sm:$0xff]
  %v406 = vld [vmem:[%s1 + $0xc00] sm:$0xff]
  %v407 = vld [vmem:[%s1 + $0xc08] sm:$0xff]
  %v408 = vld [vmem:[%s1 + $0xc10] sm:$0xff]
  %v409 = vld [vmem:[%s1 + $0xc18] sm:$0xff]
  %v410 = vld [vmem:[%s1 + $0xc20] sm:$0xff]
  %v411 = vld [vmem:[%s1 + $0xc28] sm:$0xff]
  %v412 = vld [vmem:[%s1 + $0xc30] sm:$0xff]
  %v413 = vld [vmem:[%s1 + $0xc38] sm:$0xff]
  %v414 = vld [vmem:[%s2] sm:$0xf]
  %v416 = vlaneseq
  %v417 = vshrl.u32 %v416, 7
  %v418 = vsub.s32 0, %v417
  %v419 = vrot.slane %v414, %v418
  %v420 = vlaneseq
  %v421 = vshrl.u32 %v420, 7
  %v422 = vsub.s32 1, %v421
  %v423 = vrot.slane %v414, %v422
  %v424 = vlaneseq
  %v425 = vshrl.u32 %v424, 7
  %v426 = vsub.s32 2, %v425
  %v427 = vrot.slane %v414, %v426
  %v428 = vlaneseq
  %v429 = vshrl.u32 %v428, 7
  %v430 = vsub.s32 3, %v429
  %v431 = vrot.slane %v414, %v430
  %v443 = vunpack.c.l.b16 %v15
  %v444 = vunpack.c.h.b16 %v15
  %v445 = vunpack.c.l.b16 %v16
  %v446 = vunpack.c.h.b16 %v16
  %v447 = vunpack.c.l.b16 %v17
  %v448 = vunpack.c.h.b16 %v17
  %v449 = vunpack.c.l.b16 %v18
  %v450 = vunpack.c.h.b16 %v18
  %v451 = vunpack.c.l.b16 %v19
  %v452 = vunpack.c.h.b16 %v19
  %v453 = vunpack.c.l.b16 %v20
  %v454 = vunpack.c.h.b16 %v20
  %v455 = vunpack.c.l.b16 %v21
  %v456 = vpack.c.b16 %v443, %v443
  %v457 = vpack.c.b16 %v444, %v444
  %v458 = vpack.c.b16 %v445, %v445
  %v459 = vpack.c.b16 %v446, %v446
  %v460 = vpack.c.b16 %v447, %v447
  %v461 = vpack.c.b16 %v448, %v448
  %v462 = vpack.c.b16 %v449, %v449
  %v463 = vpack.c.b16 %v450, %v450
  %v464 = vpack.c.b16 %v451, %v451
  %v465 = vpack.c.b16 %v452, %v452
  %v466 = vpack.c.b16 %v453, %v453
  %v467 = vpack.c.b16 %v454, %v454
  %v468 = vpack.c.b16 %v455, %v455
  %v873 = vunpack.c.l.b16 %v22
  %v874 = vunpack.c.h.b16 %v22
  %v875 = vunpack.c.l.b16 %v23
  %v876 = vunpack.c.h.b16 %v23
  %v877 = vunpack.c.l.b16 %v24
  %v878 = vunpack.c.h.b16 %v24
  %v879 = vunpack.c.l.b16 %v25
  %v880 = vunpack.c.h.b16 %v25
  %v881 = vunpack.c.l.b16 %v26
  %v882 = vunpack.c.h.b16 %v26
  %v883 = vunpack.c.l.b16 %v27
  %v884 = vunpack.c.h.b16 %v27
  %v885 = vunpack.c.l.b16 %v28
  %v886 = vunpack.c.h.b16 %v28
  %v887 = vunpack.c.l.b16 %v29
  %v888 = vunpack.c.h.b16 %v29
  %v889 = vunpack.c.l.b16 %v30
  %v890 = vunpack.c.h.b16 %v30
  %v891 = vunpack.c.l.b16 %v31
  %v892 = vunpack.c.h.b16 %v31
  %v893 = vunpack.c.l.b16 %v32
  %v894 = vunpack.c.h.b16 %v32
  %v895 = vunpack.c.l.b16 %v33
  %v896 = vunpack.c.h.b16 %v33
  %v897 = vunpack.c.l.b16 %v34
  %v898 = vunpack.c.h.b16 %v34
  %v899 = vunpack.c.l.b16 %v35
  %v900 = vunpack.c.h.b16 %v35
  %v901 = vunpack.c.l.b16 %v36
  %v902 = vunpack.c.h.b16 %v36
  %v903 = vunpack.c.l.b16 %v37
  %v904 = vunpack.c.h.b16 %v37
  %v905 = vunpack.c.l.b16 %v38
  %v906 = vunpack.c.h.b16 %v38
  %v907 = vunpack.c.l.b16 %v39
  %v908 = vunpack.c.h.b16 %v39
  %v909 = vunpack.c.l.b16 %v40
  %v910 = vunpack.c.h.b16 %v40
  %v911 = vunpack.c.l.b16 %v41
  %v912 = vunpack.c.h.b16 %v41
  %v913 = vunpack.c.l.b16 %v42
  %v914 = vunpack.c.h.b16 %v42
  %v915 = vunpack.c.l.b16 %v43
  %v916 = vunpack.c.h.b16 %v43
  %v917 = vunpack.c.l.b16 %v44
  %v918 = vunpack.c.h.b16 %v44
  %v919 = vunpack.c.l.b16 %v45
  %v920 = vunpack.c.h.b16 %v45
  %v921 = vunpack.c.l.b16 %v46
  %v922 = vunpack.c.h.b16 %v46
  %v923 = vunpack.c.l.b16 %v47
  %v924 = vunpack.c.h.b16 %v47
  %v925 = vunpack.c.l.b16 %v48
  %v926 = vunpack.c.h.b16 %v48
  %v927 = vunpack.c.l.b16 %v49
  %v928 = vunpack.c.h.b16 %v49
  %v929 = vunpack.c.l.b16 %v50
  %v930 = vunpack.c.h.b16 %v50
  %v931 = vunpack.c.l.b16 %v51
  %v932 = vunpack.c.h.b16 %v51
  %v933 = vunpack.c.l.b16 %v52
  %v934 = vunpack.c.h.b16 %v52
  %v935 = vunpack.c.l.b16 %v53
  %v936 = vunpack.c.h.b16 %v53
  %v937 = vunpack.c.l.b16 %v54
  %v938 = vunpack.c.h.b16 %v54
  %v939 = vunpack.c.l.b16 %v55
  %v940 = vunpack.c.h.b16 %v55
  %v941 = vunpack.c.l.b16 %v56
  %v942 = vunpack.c.h.b16 %v56
  %v943 = vunpack.c.l.b16 %v57
  %v944 = vunpack.c.h.b16 %v57
  %v945 = vunpack.c.l.b16 %v58
  %v946 = vunpack.c.h.b16 %v58
  %v947 = vunpack.c.l.b16 %v59
  %v948 = vunpack.c.h.b16 %v59
  %v949 = vunpack.c.l.b16 %v60
  %v950 = vunpack.c.h.b16 %v60
  %v951 = vunpack.c.l.b16 %v61
  %v952 = vunpack.c.h.b16 %v61
  %v953 = vunpack.c.l.b16 %v62
  %v954 = vunpack.c.h.b16 %v62
  %v955 = vunpack.c.l.b16 %v63
  %v956 = vunpack.c.h.b16 %v63
  %v957 = vunpack.c.l.b16 %v64
  %v958 = vunpack.c.h.b16 %v64
  %v959 = vunpack.c.l.b16 %v65
  %v960 = vunpack.c.h.b16 %v65
  %v961 = vunpack.c.l.b16 %v66
  %v962 = vunpack.c.h.b16 %v66
  %v963 = vunpack.c.l.b16 %v67
  %v964 = vunpack.c.h.b16 %v67
  %v965 = vunpack.c.l.b16 %v68
  %v966 = vunpack.c.h.b16 %v68
  %v967 = vunpack.c.l.b16 %v69
  %v968 = vunpack.c.h.b16 %v69
  %v969 = vunpack.c.l.b16 %v70
  %v970 = vunpack.c.h.b16 %v70
  %v971 = vunpack.c.l.b16 %v71
  %v972 = vunpack.c.h.b16 %v71
  %v973 = vunpack.c.l.b16 %v72
  %v974 = vunpack.c.h.b16 %v72
  %v975 = vunpack.c.l.b16 %v73
  %v976 = vunpack.c.h.b16 %v73
  %v977 = vunpack.c.l.b16 %v74
  %v978 = vunpack.c.h.b16 %v74
  %v979 = vunpack.c.l.b16 %v75
  %v980 = vunpack.c.h.b16 %v75
  %v981 = vunpack.c.l.b16 %v76
  %v982 = vunpack.c.h.b16 %v76
  %v983 = vunpack.c.l.b16 %v77
  %v984 = vunpack.c.h.b16 %v77
  %v985 = vunpack.c.l.b16 %v78
  %v986 = vunpack.c.h.b16 %v78
  %v987 = vunpack.c.l.b16 %v79
  %v988 = vunpack.c.h.b16 %v79
  %v989 = vunpack.c.l.b16 %v80
  %v990 = vunpack.c.h.b16 %v80
  %v991 = vunpack.c.l.b16 %v81
  %v992 = vunpack.c.h.b16 %v81
  %v993 = vunpack.c.l.b16 %v82
  %v994 = vunpack.c.h.b16 %v82
  %v995 = vunpack.c.l.b16 %v83
  %v996 = vunpack.c.h.b16 %v83
  %v997 = vunpack.c.l.b16 %v84
  %v998 = vunpack.c.h.b16 %v84
  %v999 = vunpack.c.l.b16 %v85
  %v1000 = vunpack.c.h.b16 %v85
  %v1001 = vunpack.c.l.b16 %v86
  %v1002 = vunpack.c.h.b16 %v86
  %v1003 = vunpack.c.l.b16 %v87
  %v1004 = vunpack.c.h.b16 %v87
  %v1005 = vunpack.c.l.b16 %v88
  %v1006 = vunpack.c.h.b16 %v88
  %v1007 = vunpack.c.l.b16 %v89
  %v1008 = vunpack.c.h.b16 %v89
  %v1009 = vunpack.c.l.b16 %v90
  %v1010 = vunpack.c.h.b16 %v90
  %v1011 = vunpack.c.l.b16 %v91
  %v1012 = vunpack.c.h.b16 %v91
  %v1013 = vunpack.c.l.b16 %v92
  %v1014 = vunpack.c.h.b16 %v92
  %v1015 = vunpack.c.l.b16 %v93
  %v1016 = vunpack.c.h.b16 %v93
  %v1017 = vunpack.c.l.b16 %v94
  %v1018 = vunpack.c.h.b16 %v94
  %v1019 = vunpack.c.l.b16 %v95
  %v1020 = vunpack.c.h.b16 %v95
  %v1021 = vunpack.c.l.b16 %v96
  %v1022 = vunpack.c.h.b16 %v96
  %v1023 = vunpack.c.l.b16 %v97
  %v1024 = vunpack.c.h.b16 %v97
  %v1025 = vunpack.c.l.b16 %v98
  %v1026 = vunpack.c.h.b16 %v98
  %v1027 = vunpack.c.l.b16 %v99
  %v1028 = vunpack.c.h.b16 %v99
  %v1029 = vunpack.c.l.b16 %v100
  %v1030 = vunpack.c.h.b16 %v100
  %v1031 = vunpack.c.l.b16 %v101
  %v1032 = vunpack.c.h.b16 %v101
  %v1033 = vunpack.c.l.b16 %v102
  %v1034 = vunpack.c.h.b16 %v102
  %v1035 = vunpack.c.l.b16 %v103
  %v1036 = vunpack.c.h.b16 %v103
  %v1037 = vunpack.c.l.b16 %v104
  %v1038 = vunpack.c.h.b16 %v104
  %v1039 = vunpack.c.l.b16 %v105
  %v1040 = vunpack.c.h.b16 %v105
  %v1041 = vunpack.c.l.b16 %v106
  %v1042 = vunpack.c.h.b16 %v106
  %v1043 = vunpack.c.l.b16 %v107
  %v1044 = vunpack.c.h.b16 %v107
  %v1045 = vunpack.c.l.b16 %v108
  %v1046 = vunpack.c.h.b16 %v108
  %v1047 = vunpack.c.l.b16 %v109
  %v1048 = vunpack.c.h.b16 %v109
  %v1049 = vunpack.c.l.b16 %v110
  %v1050 = vunpack.c.h.b16 %v110
  %v1051 = vunpack.c.l.b16 %v111
  %v1052 = vunpack.c.h.b16 %v111
  %v1053 = vunpack.c.l.b16 %v112
  %v1054 = vunpack.c.h.b16 %v112
  %v1055 = vunpack.c.l.b16 %v113
  %v1056 = vunpack.c.h.b16 %v113
  %v1057 = vunpack.c.l.b16 %v114
  %v1058 = vunpack.c.h.b16 %v114
  %v1059 = vunpack.c.l.b16 %v115
  %v1060 = vunpack.c.h.b16 %v115
  %v1061 = vunpack.c.l.b16 %v116
  %v1062 = vunpack.c.h.b16 %v116
  %v1063 = vunpack.c.l.b16 %v117
  %v1064 = vunpack.c.h.b16 %v117
  %v1065 = vunpack.c.l.b16 %v118
  %v1066 = vunpack.c.h.b16 %v118
  %v1067 = vunpack.c.l.b16 %v119
  %v1068 = vunpack.c.h.b16 %v119
  %v1069 = vunpack.c.l.b16 %v120
  %v1070 = vunpack.c.h.b16 %v120
  %v1071 = vunpack.c.l.b16 %v121
  %v1072 = vunpack.c.h.b16 %v121
  %v1073 = vunpack.c.l.b16 %v122
  %v1074 = vunpack.c.h.b16 %v122
  %v1075 = vunpack.c.l.b16 %v123
  %v1076 = vunpack.c.h.b16 %v123
  %v1077 = vunpack.c.l.b16 %v124
  %v1078 = vunpack.c.h.b16 %v124
  %v1079 = vunpack.c.l.b16 %v125
  %v1080 = vunpack.c.h.b16 %v125
  %v1081 = vunpack.c.l.b16 %v126
  %v1082 = vunpack.c.h.b16 %v126
  %v1083 = vunpack.c.l.b16 %v127
  %v1084 = vunpack.c.h.b16 %v127
  %v1085 = vunpack.c.l.b16 %v128
  %v1086 = vunpack.c.h.b16 %v128
  %v1087 = vunpack.c.l.b16 %v129
  %v1088 = vunpack.c.h.b16 %v129
  %v1089 = vunpack.c.l.b16 %v130
  %v1090 = vunpack.c.h.b16 %v130
  %v1091 = vunpack.c.l.b16 %v131
  %v1092 = vunpack.c.h.b16 %v131
  %v1093 = vunpack.c.l.b16 %v132
  %v1094 = vunpack.c.h.b16 %v132
  %v1095 = vunpack.c.l.b16 %v133
  %v1096 = vunpack.c.h.b16 %v133
  %v1097 = vunpack.c.l.b16 %v134
  %v1098 = vunpack.c.h.b16 %v134
  %v1099 = vunpack.c.l.b16 %v135
  %v1100 = vunpack.c.h.b16 %v135
  %v1101 = vunpack.c.l.b16 %v136
  %v1102 = vunpack.c.h.b16 %v136
  %v1103 = vunpack.c.l.b16 %v137
  %v1104 = vunpack.c.h.b16 %v137
  %v1105 = vunpack.c.l.b16 %v138
  %v1106 = vunpack.c.h.b16 %v138
  %v1107 = vunpack.c.l.b16 %v139
  %v1108 = vunpack.c.h.b16 %v139
  %v1109 = vunpack.c.l.b16 %v140
  %v1110 = vunpack.c.h.b16 %v140
  %v1111 = vunpack.c.l.b16 %v141
  %v1112 = vunpack.c.h.b16 %v141
  %v1113 = vunpack.c.l.b16 %v142
  %v1114 = vunpack.c.h.b16 %v142
  %v1115 = vunpack.c.l.b16 %v143
  %v1116 = vunpack.c.h.b16 %v143
  %v1117 = vunpack.c.l.b16 %v144
  %v1118 = vunpack.c.h.b16 %v144
  %v1119 = vunpack.c.l.b16 %v145
  %v1120 = vunpack.c.h.b16 %v145
  %v1121 = vunpack.c.l.b16 %v146
  %v1122 = vunpack.c.h.b16 %v146
  %v1123 = vunpack.c.l.b16 %v147
  %v1124 = vunpack.c.h.b16 %v147
  %v1125 = vunpack.c.l.b16 %v148
  %v1126 = vunpack.c.h.b16 %v148
  %v1127 = vunpack.c.l.b16 %v149
  %v1128 = vunpack.c.h.b16 %v149
  %v1129 = vunpack.c.l.b16 %v150
  %v1130 = vunpack.c.h.b16 %v150
  %v1131 = vunpack.c.l.b16 %v151
  %v1132 = vunpack.c.h.b16 %v151
  %v1133 = vunpack.c.l.b16 %v152
  %v1134 = vunpack.c.h.b16 %v152
  %v1135 = vunpack.c.l.b16 %v153
  %v1136 = vunpack.c.h.b16 %v153
  %v1137 = vunpack.c.l.b16 %v154
  %v1138 = vunpack.c.h.b16 %v154
  %v1139 = vunpack.c.l.b16 %v155
  %v1140 = vunpack.c.h.b16 %v155
  %v1141 = vunpack.c.l.b16 %v156
  %v1142 = vunpack.c.h.b16 %v156
  %v1143 = vunpack.c.l.b16 %v157
  %v1144 = vunpack.c.h.b16 %v157
  %v1145 = vunpack.c.l.b16 %v158
  %v1146 = vunpack.c.h.b16 %v158
  %v1147 = vunpack.c.l.b16 %v159
  %v1148 = vunpack.c.h.b16 %v159
  %v1149 = vunpack.c.l.b16 %v160
  %v1150 = vunpack.c.h.b16 %v160
  %v1151 = vunpack.c.l.b16 %v161
  %v1152 = vunpack.c.h.b16 %v161
  %v1153 = vunpack.c.l.b16 %v162
  %v1154 = vunpack.c.h.b16 %v162
  %v1155 = vunpack.c.l.b16 %v163
  %v1156 = vunpack.c.h.b16 %v163
  %v1157 = vunpack.c.l.b16 %v164
  %v1158 = vunpack.c.h.b16 %v164
  %v1159 = vunpack.c.l.b16 %v165
  %v1160 = vunpack.c.h.b16 %v165
  %v1161 = vunpack.c.l.b16 %v166
  %v1162 = vunpack.c.h.b16 %v166
  %v1163 = vunpack.c.l.b16 %v167
  %v1164 = vunpack.c.h.b16 %v167
  %v1165 = vunpack.c.l.b16 %v168
  %v1166 = vunpack.c.h.b16 %v168
  %v1167 = vunpack.c.l.b16 %v169
  %v1168 = vunpack.c.h.b16 %v169
  %v1169 = vunpack.c.l.b16 %v170
  %v1170 = vunpack.c.h.b16 %v170
  %v1171 = vunpack.c.l.b16 %v171
  %v1172 = vunpack.c.h.b16 %v171
  %v1173 = vunpack.c.l.b16 %v172
  %v1174 = vunpack.c.h.b16 %v172
  %v1175 = vunpack.c.l.b16 %v173
  %v1176 = vunpack.c.h.b16 %v173
  %v1177 = vunpack.c.l.b16 %v174
  %v1178 = vunpack.c.h.b16 %v174
  %v1179 = vunpack.c.l.b16 %v175
  %v1180 = vunpack.c.h.b16 %v175
  %v1181 = vunpack.c.l.b16 %v176
  %v1182 = vunpack.c.h.b16 %v176
  %v1183 = vunpack.c.l.b16 %v177
  %v1184 = vunpack.c.h.b16 %v177
  %v1185 = vunpack.c.l.b16 %v178
  %v1186 = vunpack.c.h.b16 %v178
  %v1187 = vunpack.c.l.b16 %v179
  %v1188 = vunpack.c.h.b16 %v179
  %v1189 = vunpack.c.l.b16 %v180
  %v1190 = vunpack.c.h.b16 %v180
  %v1191 = vunpack.c.l.b16 %v181
  %v1192 = vunpack.c.h.b16 %v181
  %v1193 = vunpack.c.l.b16 %v182
  %v1194 = vunpack.c.h.b16 %v182
  %v1195 = vunpack.c.l.b16 %v183
  %v1196 = vunpack.c.h.b16 %v183
  %v1197 = vunpack.c.l.b16 %v184
  %v1198 = vunpack.c.h.b16 %v184
  %v1199 = vunpack.c.l.b16 %v185
  %v1200 = vunpack.c.h.b16 %v185
  %v1201 = vunpack.c.l.b16 %v186
  %v1202 = vunpack.c.h.b16 %v186
  %v1203 = vunpack.c.l.b16 %v187
  %v1204 = vunpack.c.h.b16 %v187
  %v1205 = vunpack.c.l.b16 %v188
  %v1206 = vunpack.c.h.b16 %v188
  %v1207 = vunpack.c.l.b16 %v189
  %v1208 = vunpack.c.h.b16 %v189
  %v1209 = vunpack.c.l.b16 %v190
  %v1210 = vunpack.c.h.b16 %v190
  %v1211 = vunpack.c.l.b16 %v191
  %v1212 = vunpack.c.h.b16 %v191
  %v1213 = vunpack.c.l.b16 %v192
  %v1214 = vunpack.c.h.b16 %v192
  %v1215 = vunpack.c.l.b16 %v193
  %v1216 = vunpack.c.h.b16 %v193
  %v1217 = vunpack.c.l.b16 %v194
  %v1218 = vunpack.c.h.b16 %v194
  %v1219 = vunpack.c.l.b16 %v195
  %v1220 = vunpack.c.h.b16 %v195
  %v1221 = vunpack.c.l.b16 %v196
  %v1222 = vunpack.c.h.b16 %v196
  %v1223 = vunpack.c.l.b16 %v197
  %v1224 = vunpack.c.h.b16 %v197
  %v1225 = vunpack.c.l.b16 %v198
  %v1226 = vunpack.c.h.b16 %v198
  %v1227 = vunpack.c.l.b16 %v199
  %v1228 = vunpack.c.h.b16 %v199
  %v1229 = vunpack.c.l.b16 %v200
  %v1230 = vunpack.c.h.b16 %v200
  %v1231 = vunpack.c.l.b16 %v201
  %v1232 = vunpack.c.h.b16 %v201
  %v1233 = vunpack.c.l.b16 %v202
  %v1234 = vunpack.c.h.b16 %v202
  %v1235 = vunpack.c.l.b16 %v203
  %v1236 = vunpack.c.h.b16 %v203
  %v1237 = vunpack.c.l.b16 %v204
  %v1238 = vunpack.c.h.b16 %v204
  %v1239 = vunpack.c.l.b16 %v205
  %v1240 = vunpack.c.h.b16 %v205
  %v1241 = vunpack.c.l.b16 %v206
  %v1242 = vunpack.c.h.b16 %v206
  %v1243 = vunpack.c.l.b16 %v207
  %v1244 = vunpack.c.h.b16 %v207
  %v1245 = vunpack.c.l.b16 %v208
  %v1246 = vunpack.c.h.b16 %v208
  %v1247 = vunpack.c.l.b16 %v209
  %v1248 = vunpack.c.h.b16 %v209
  %v1249 = vunpack.c.l.b16 %v210
  %v1250 = vunpack.c.h.b16 %v210
  %v1251 = vunpack.c.l.b16 %v211
  %v1252 = vunpack.c.h.b16 %v211
  %v1253 = vunpack.c.l.b16 %v212
  %v1254 = vunpack.c.h.b16 %v212
  %v1255 = vunpack.c.l.b16 %v213
  %v1256 = vunpack.c.h.b16 %v213
  %v1257 = vunpack.c.l.b16 %v214
  %v1258 = vunpack.c.h.b16 %v214
  %v1259 = vunpack.c.l.b16 %v215
  %v1260 = vunpack.c.h.b16 %v215
  %v1261 = vunpack.c.l.b16 %v216
  %v1262 = vunpack.c.h.b16 %v216
  %v1263 = vunpack.c.l.b16 %v217
  %v1264 = vunpack.c.h.b16 %v217
  %v1265 = vunpack.c.l.b16 %v218
  %v1266 = vunpack.c.h.b16 %v218
  %v1267 = vunpack.c.l.b16 %v219
  %v1268 = vunpack.c.h.b16 %v219
  %v1269 = vunpack.c.l.b16 %v220
  %v1270 = vunpack.c.h.b16 %v220
  %v1271 = vunpack.c.l.b16 %v221
  %v1272 = vunpack.c.h.b16 %v221
  %v1273 = vunpack.c.l.b16 %v222
  %v1274 = vunpack.c.h.b16 %v222
  %v1275 = vunpack.c.l.b16 %v223
  %v1276 = vunpack.c.h.b16 %v223
  %v1277 = vunpack.c.l.b16 %v224
  %v1278 = vunpack.c.h.b16 %v224
  %v1279 = vunpack.c.l.b16 %v225
  %v1280 = vunpack.c.h.b16 %v225
  %v1281 = vunpack.c.l.b16 %v226
  %v1282 = vunpack.c.h.b16 %v226
  %v1283 = vunpack.c.l.b16 %v227
  %v1284 = vunpack.c.h.b16 %v227
  %v1285 = vunpack.c.l.b16 %v228
  %v1286 = vunpack.c.h.b16 %v228
  %v1287 = vunpack.c.l.b16 %v229
  %v1288 = vunpack.c.h.b16 %v229
  %v1289 = vunpack.c.l.b16 %v230
  %v1290 = vunpack.c.h.b16 %v230
  %v1291 = vunpack.c.l.b16 %v231
  %v1292 = vunpack.c.h.b16 %v231
  %v1293 = vunpack.c.l.b16 %v232
  %v1294 = vunpack.c.h.b16 %v232
  %v1295 = vunpack.c.l.b16 %v233
  %v1296 = vunpack.c.h.b16 %v233
  %v1297 = vunpack.c.l.b16 %v234
  %v1298 = vunpack.c.h.b16 %v234
  %v1299 = vunpack.c.l.b16 %v235
  %v1300 = vunpack.c.h.b16 %v235
  %v1301 = vunpack.c.l.b16 %v236
  %v1302 = vunpack.c.h.b16 %v236
  %v1303 = vunpack.c.l.b16 %v237
  %v1304 = vunpack.c.h.b16 %v237
  %v1305 = vunpack.c.l.b16 %v238
  %v1306 = vunpack.c.h.b16 %v238
  %v1307 = vunpack.c.l.b16 %v239
  %v1308 = vunpack.c.h.b16 %v239
  %v1309 = vunpack.c.l.b16 %v240
  %v1310 = vunpack.c.h.b16 %v240
  %v1311 = vunpack.c.l.b16 %v241
  %v1312 = vunpack.c.h.b16 %v241
  %v1313 = vunpack.c.l.b16 %v242
  %v1314 = vunpack.c.h.b16 %v242
  %v1315 = vunpack.c.l.b16 %v243
  %v1316 = vunpack.c.h.b16 %v243
  %v1317 = vunpack.c.l.b16 %v244
  %v1318 = vunpack.c.h.b16 %v244
  %v1319 = vunpack.c.l.b16 %v245
  %v1320 = vunpack.c.h.b16 %v245
  %v1321 = vunpack.c.l.b16 %v246
  %v1322 = vunpack.c.h.b16 %v246
  %v1323 = vunpack.c.l.b16 %v247
  %v1324 = vunpack.c.h.b16 %v247
  %v1325 = vunpack.c.l.b16 %v248
  %v1326 = vunpack.c.h.b16 %v248
  %v1327 = vunpack.c.l.b16 %v249
  %v1328 = vunpack.c.h.b16 %v249
  %v1329 = vunpack.c.l.b16 %v250
  %v1330 = vunpack.c.h.b16 %v250
  %v1331 = vunpack.c.l.b16 %v251
  %v1332 = vunpack.c.h.b16 %v251
  %v1333 = vunpack.c.l.b16 %v252
  %v1334 = vunpack.c.h.b16 %v252
  %v1335 = vunpack.c.l.b16 %v253
  %v1336 = vunpack.c.h.b16 %v253
  %v1337 = vunpack.c.l.b16 %v254
  %v1338 = vunpack.c.h.b16 %v254
  %v1339 = vunpack.c.l.b16 %v255
  %v1340 = vunpack.c.h.b16 %v255
  %v1341 = vunpack.c.l.b16 %v256
  %v1342 = vunpack.c.h.b16 %v256
  %v1343 = vunpack.c.l.b16 %v257
  %v1344 = vunpack.c.h.b16 %v257
  %v1345 = vunpack.c.l.b16 %v258
  %v1346 = vunpack.c.h.b16 %v258
  %v1347 = vunpack.c.l.b16 %v259
  %v1348 = vunpack.c.h.b16 %v259
  %v1349 = vunpack.c.l.b16 %v260
  %v1350 = vunpack.c.h.b16 %v260
  %v1351 = vunpack.c.l.b16 %v261
  %v1352 = vunpack.c.h.b16 %v261
  %v1353 = vunpack.c.l.b16 %v262
  %v1354 = vunpack.c.h.b16 %v262
  %v1355 = vunpack.c.l.b16 %v263
  %v1356 = vunpack.c.h.b16 %v263
  %v1357 = vunpack.c.l.b16 %v264
  %v1358 = vunpack.c.h.b16 %v264
  %v1359 = vunpack.c.l.b16 %v265
  %v1360 = vunpack.c.h.b16 %v265
  %v1361 = vunpack.c.l.b16 %v266
  %v1362 = vunpack.c.h.b16 %v266
  %v1363 = vunpack.c.l.b16 %v267
  %v1364 = vunpack.c.h.b16 %v267
  %v1365 = vunpack.c.l.b16 %v268
  %v1366 = vunpack.c.h.b16 %v268
  %v1367 = vunpack.c.l.b16 %v269
  %v1368 = vunpack.c.h.b16 %v269
  %v1369 = vunpack.c.l.b16 %v270
  %v1370 = vunpack.c.h.b16 %v270
  %v1371 = vunpack.c.l.b16 %v271
  %v1372 = vunpack.c.h.b16 %v271
  %v1373 = vunpack.c.l.b16 %v272
  %v1374 = vunpack.c.h.b16 %v272
  %v1375 = vunpack.c.l.b16 %v273
  %v1376 = vunpack.c.h.b16 %v273
  %v1377 = vunpack.c.l.b16 %v274
  %v1378 = vunpack.c.h.b16 %v274
  %v1379 = vunpack.c.l.b16 %v275
  %v1380 = vunpack.c.h.b16 %v275
  %v1381 = vunpack.c.l.b16 %v276
  %v1382 = vunpack.c.h.b16 %v276
  %v1383 = vunpack.c.l.b16 %v277
  %v1384 = vunpack.c.h.b16 %v277
  %v1385 = vunpack.c.l.b16 %v278
  %v1386 = vunpack.c.h.b16 %v278
  %v1387 = vunpack.c.l.b16 %v279
  %v1388 = vunpack.c.h.b16 %v279
  %v1389 = vunpack.c.l.b16 %v280
  %v1390 = vunpack.c.h.b16 %v280
  %v1391 = vunpack.c.l.b16 %v281
  %v1392 = vunpack.c.h.b16 %v281
  %v1393 = vunpack.c.l.b16 %v282
  %v1394 = vunpack.c.h.b16 %v282
  %v1395 = vunpack.c.l.b16 %v283
  %v1396 = vunpack.c.h.b16 %v283
  %v1397 = vunpack.c.l.b16 %v284
  %v1398 = vunpack.c.h.b16 %v284
  %v1399 = vunpack.c.l.b16 %v285
  %v1400 = vunpack.c.h.b16 %v285
  %v1401 = vunpack.c.l.b16 %v286
  %v1402 = vunpack.c.h.b16 %v286
  %v1403 = vunpack.c.l.b16 %v287
  %v1404 = vunpack.c.h.b16 %v287
  %v1405 = vunpack.c.l.b16 %v288
  %v1406 = vunpack.c.h.b16 %v288
  %v1407 = vunpack.c.l.b16 %v289
  %v1408 = vunpack.c.h.b16 %v289
  %v1409 = vunpack.c.l.b16 %v290
  %v1410 = vunpack.c.h.b16 %v290
  %v1411 = vunpack.c.l.b16 %v291
  %v1412 = vunpack.c.h.b16 %v291
  %v1413 = vunpack.c.l.b16 %v292
  %v1414 = vunpack.c.h.b16 %v292
  %v1415 = vunpack.c.l.b16 %v293
  %v1416 = vunpack.c.h.b16 %v293
  %v1417 = vunpack.c.l.b16 %v294
  %v1418 = vunpack.c.h.b16 %v294
  %v1419 = vunpack.c.l.b16 %v295
  %v1420 = vunpack.c.h.b16 %v295
  %v1421 = vunpack.c.l.b16 %v296
  %v1422 = vunpack.c.h.b16 %v296
  %v1423 = vunpack.c.l.b16 %v297
  %v1424 = vunpack.c.h.b16 %v297
  %v1425 = vunpack.c.l.b16 %v298
  %v1426 = vunpack.c.h.b16 %v298
  %v1427 = vunpack.c.l.b16 %v299
  %v1428 = vunpack.c.h.b16 %v299
  %v1429 = vunpack.c.l.b16 %v300
  %v1430 = vunpack.c.h.b16 %v300
  %v1431 = vunpack.c.l.b16 %v301
  %v1432 = vunpack.c.h.b16 %v301
  %v1433 = vunpack.c.l.b16 %v302
  %v1434 = vunpack.c.h.b16 %v302
  %v1435 = vunpack.c.l.b16 %v303
  %v1436 = vunpack.c.h.b16 %v303
  %v1437 = vunpack.c.l.b16 %v304
  %v1438 = vunpack.c.h.b16 %v304
  %v1439 = vunpack.c.l.b16 %v305
  %v1440 = vunpack.c.h.b16 %v305
  %v1441 = vunpack.c.l.b16 %v306
  %v1442 = vunpack.c.h.b16 %v306
  %v1443 = vunpack.c.l.b16 %v307
  %v1444 = vunpack.c.h.b16 %v307
  %v1445 = vunpack.c.l.b16 %v308
  %v1446 = vunpack.c.h.b16 %v308
  %v1447 = vunpack.c.l.b16 %v309
  %v1448 = vunpack.c.h.b16 %v309
  %v1449 = vunpack.c.l.b16 %v310
  %v1450 = vunpack.c.h.b16 %v310
  %v1451 = vunpack.c.l.b16 %v311
  %v1452 = vunpack.c.h.b16 %v311
  %v1453 = vunpack.c.l.b16 %v312
  %v1454 = vunpack.c.h.b16 %v312
  %v1455 = vunpack.c.l.b16 %v313
  %v1456 = vunpack.c.h.b16 %v313
  %v1457 = vunpack.c.l.b16 %v314
  %v1458 = vunpack.c.h.b16 %v314
  %v1459 = vunpack.c.l.b16 %v315
  %v1460 = vunpack.c.h.b16 %v315
  %v1461 = vunpack.c.l.b16 %v316
  %v1462 = vunpack.c.h.b16 %v316
  %v1463 = vunpack.c.l.b16 %v317
  %v1464 = vunpack.c.h.b16 %v317
  %v1465 = vunpack.c.l.b16 %v318
  %v1466 = vunpack.c.h.b16 %v318
  %v1467 = vunpack.c.l.b16 %v319
  %v1468 = vunpack.c.h.b16 %v319
  %v1469 = vunpack.c.l.b16 %v320
  %v1470 = vunpack.c.h.b16 %v320
  %v1471 = vunpack.c.l.b16 %v321
  %v1472 = vunpack.c.h.b16 %v321
  %v1473 = vunpack.c.l.b16 %v322
  %v1474 = vunpack.c.h.b16 %v322
  %v1475 = vunpack.c.l.b16 %v323
  %v1476 = vunpack.c.h.b16 %v323
  %v1477 = vunpack.c.l.b16 %v324
  %v1478 = vunpack.c.h.b16 %v324
  %v1479 = vunpack.c.l.b16 %v325
  %v1480 = vunpack.c.h.b16 %v325
  %v1481 = vunpack.c.l.b16 %v326
  %v1482 = vunpack.c.h.b16 %v326
  %v1483 = vunpack.c.l.b16 %v327
  %v1484 = vunpack.c.h.b16 %v327
  %v1485 = vunpack.c.l.b16 %v328
  %v1486 = vunpack.c.h.b16 %v328
  %v1487 = vunpack.c.l.b16 %v329
  %v1488 = vunpack.c.h.b16 %v329
  %v1489 = vunpack.c.l.b16 %v330
  %v1490 = vunpack.c.h.b16 %v330
  %v1491 = vunpack.c.l.b16 %v331
  %v1492 = vunpack.c.h.b16 %v331
  %v1493 = vunpack.c.l.b16 %v332
  %v1494 = vunpack.c.h.b16 %v332
  %v1495 = vunpack.c.l.b16 %v333
  %v1496 = vunpack.c.h.b16 %v333
  %v1497 = vunpack.c.l.b16 %v334
  %v1498 = vunpack.c.h.b16 %v334
  %v1499 = vunpack.c.l.b16 %v335
  %v1500 = vunpack.c.h.b16 %v335
  %v1501 = vunpack.c.l.b16 %v336
  %v1502 = vunpack.c.h.b16 %v336
  %v1503 = vunpack.c.l.b16 %v337
  %v1504 = vunpack.c.h.b16 %v337
  %v1505 = vunpack.c.l.b16 %v338
  %v1506 = vunpack.c.h.b16 %v338
  %v1507 = vunpack.c.l.b16 %v339
  %v1508 = vunpack.c.h.b16 %v339
  %v1509 = vunpack.c.l.b16 %v340
  %v1510 = vunpack.c.h.b16 %v340
  %v1511 = vunpack.c.l.b16 %v341
  %v1512 = vunpack.c.h.b16 %v341
  %v1513 = vunpack.c.l.b16 %v342
  %v1514 = vunpack.c.h.b16 %v342
  %v1515 = vunpack.c.l.b16 %v343
  %v1516 = vunpack.c.h.b16 %v343
  %v1517 = vunpack.c.l.b16 %v344
  %v1518 = vunpack.c.h.b16 %v344
  %v1519 = vunpack.c.l.b16 %v345
  %v1520 = vunpack.c.h.b16 %v345
  %v1521 = vunpack.c.l.b16 %v346
  %v1522 = vunpack.c.h.b16 %v346
  %v1523 = vunpack.c.l.b16 %v347
  %v1524 = vunpack.c.h.b16 %v347
  %v1525 = vunpack.c.l.b16 %v348
  %v1526 = vunpack.c.h.b16 %v348
  %v1527 = vunpack.c.l.b16 %v349
  %v1528 = vunpack.c.h.b16 %v349
  %v1529 = vunpack.c.l.b16 %v350
  %v1530 = vunpack.c.h.b16 %v350
  %v1531 = vunpack.c.l.b16 %v351
  %v1532 = vunpack.c.h.b16 %v351
  %v1533 = vunpack.c.l.b16 %v352
  %v1534 = vunpack.c.h.b16 %v352
  %v1535 = vunpack.c.l.b16 %v353
  %v1536 = vunpack.c.h.b16 %v353
  %v1537 = vunpack.c.l.b16 %v354
  %v1538 = vunpack.c.h.b16 %v354
  %v1539 = vunpack.c.l.b16 %v355
  %v1540 = vunpack.c.h.b16 %v355
  %v1541 = vunpack.c.l.b16 %v356
  %v1542 = vunpack.c.h.b16 %v356
  %v1543 = vunpack.c.l.b16 %v357
  %v1544 = vunpack.c.h.b16 %v357
  %v1545 = vunpack.c.l.b16 %v358
  %v1546 = vunpack.c.h.b16 %v358
  %v1547 = vunpack.c.l.b16 %v359
  %v1548 = vunpack.c.h.b16 %v359
  %v1549 = vunpack.c.l.b16 %v360
  %v1550 = vunpack.c.h.b16 %v360
  %v1551 = vunpack.c.l.b16 %v361
  %v1552 = vunpack.c.h.b16 %v361
  %v1553 = vunpack.c.l.b16 %v362
  %v1554 = vunpack.c.h.b16 %v362
  %v1555 = vunpack.c.l.b16 %v363
  %v1556 = vunpack.c.h.b16 %v363
  %v1557 = vunpack.c.l.b16 %v364
  %v1558 = vunpack.c.h.b16 %v364
  %v1559 = vunpack.c.l.b16 %v365
  %v1560 = vunpack.c.h.b16 %v365
  %v1561 = vunpack.c.l.b16 %v366
  %v1562 = vunpack.c.h.b16 %v366
  %v1563 = vunpack.c.l.b16 %v367
  %v1564 = vunpack.c.h.b16 %v367
  %v1565 = vunpack.c.l.b16 %v368
  %v1566 = vunpack.c.h.b16 %v368
  %v1567 = vunpack.c.l.b16 %v369
  %v1568 = vunpack.c.h.b16 %v369
  %v1569 = vunpack.c.l.b16 %v370
  %v1570 = vunpack.c.h.b16 %v370
  %v1571 = vunpack.c.l.b16 %v371
  %v1572 = vunpack.c.h.b16 %v371
  %v1573 = vunpack.c.l.b16 %v372
  %v1574 = vunpack.c.h.b16 %v372
  %v1575 = vunpack.c.l.b16 %v373
  %v1576 = vunpack.c.h.b16 %v373
  %v1577 = vunpack.c.l.b16 %v374
  %v1578 = vunpack.c.h.b16 %v374
  %v1579 = vunpack.c.l.b16 %v375
  %v1580 = vunpack.c.h.b16 %v375
  %v1581 = vunpack.c.l.b16 %v376
  %v1582 = vunpack.c.h.b16 %v376
  %v1583 = vunpack.c.l.b16 %v377
  %v1584 = vunpack.c.h.b16 %v377
  %v1585 = vunpack.c.l.b16 %v378
  %v1586 = vunpack.c.h.b16 %v378
  %v1587 = vunpack.c.l.b16 %v379
  %v1588 = vunpack.c.h.b16 %v379
  %v1589 = vunpack.c.l.b16 %v380
  %v1590 = vunpack.c.h.b16 %v380
  %v1591 = vunpack.c.l.b16 %v381
  %v1592 = vunpack.c.h.b16 %v381
  %v1593 = vunpack.c.l.b16 %v382
  %v1594 = vunpack.c.h.b16 %v382
  %v1595 = vunpack.c.l.b16 %v383
  %v1596 = vunpack.c.h.b16 %v383
  %v1597 = vunpack.c.l.b16 %v384
  %v1598 = vunpack.c.h.b16 %v384
  %v1599 = vunpack.c.l.b16 %v385
  %v1600 = vunpack.c.h.b16 %v385
  %v1601 = vunpack.c.l.b16 %v386
  %v1602 = vunpack.c.h.b16 %v386
  %v1603 = vunpack.c.l.b16 %v387
  %v1604 = vunpack.c.h.b16 %v387
  %v1605 = vunpack.c.l.b16 %v388
  %v1606 = vunpack.c.h.b16 %v388
  %v1607 = vunpack.c.l.b16 %v389
  %v1608 = vunpack.c.h.b16 %v389
  %v1609 = vunpack.c.l.b16 %v390
  %v1610 = vunpack.c.h.b16 %v390
  %v1611 = vunpack.c.l.b16 %v391
  %v1612 = vunpack.c.h.b16 %v391
  %v1613 = vunpack.c.l.b16 %v392
  %v1614 = vunpack.c.h.b16 %v392
  %v1615 = vunpack.c.l.b16 %v393
  %v1616 = vunpack.c.h.b16 %v393
  %v1617 = vunpack.c.l.b16 %v394
  %v1618 = vunpack.c.h.b16 %v394
  %v1619 = vunpack.c.l.b16 %v395
  %v1620 = vunpack.c.h.b16 %v395
  %v1621 = vunpack.c.l.b16 %v396
  %v1622 = vunpack.c.h.b16 %v396
  %v1623 = vunpack.c.l.b16 %v397
  %v1624 = vunpack.c.h.b16 %v397
  %v1625 = vunpack.c.l.b16 %v398
  %v1626 = vunpack.c.h.b16 %v398
  %v1627 = vunpack.c.l.b16 %v399
  %v1628 = vunpack.c.h.b16 %v399
  %v1629 = vunpack.c.l.b16 %v400
  %v1630 = vunpack.c.h.b16 %v400
  %v1631 = vunpack.c.l.b16 %v401
  %v1632 = vunpack.c.h.b16 %v401
  %v1633 = vunpack.c.l.b16 %v402
  %v1634 = vunpack.c.h.b16 %v402
  %v1635 = vunpack.c.l.b16 %v403
  %v1636 = vunpack.c.h.b16 %v403
  %v1637 = vunpack.c.l.b16 %v404
  %v1638 = vunpack.c.h.b16 %v404
  %v1639 = vunpack.c.l.b16 %v405
  %v1640 = vunpack.c.h.b16 %v405
  %v1641 = vunpack.c.l.b16 %v406
  %v1642 = vunpack.c.h.b16 %v406
  %v1643 = vunpack.c.l.b16 %v407
  %v1644 = vunpack.c.h.b16 %v407
  %v1645 = vunpack.c.l.b16 %v408
  %v1646 = vunpack.c.h.b16 %v408
  %v1647 = vunpack.c.l.b16 %v409
  %v1648 = vunpack.c.h.b16 %v409
  %v1649 = vunpack.c.l.b16 %v410
  %v1650 = vunpack.c.h.b16 %v410
  %v1651 = vunpack.c.l.b16 %v411
  %v1652 = vunpack.c.h.b16 %v411
  %v1653 = vunpack.c.l.b16 %v412
  %v1654 = vunpack.c.h.b16 %v412
  %v1655 = vunpack.c.l.b16 %v413
  %v1656 = vunpack.c.h.b16 %v413
  %v1657 = vpack.c.b16 %v877, %v873
  %v1658 = vpack.c.b16 %v878, %v874
  %v1659 = vpack.c.b16 %v879, %v875
  %v1660 = vpack.c.b16 %v880, %v876
  %v1661 = vpack.c.b16 %v885, %v881
  %v1662 = vpack.c.b16 %v886, %v882
  %v1663 = vpack.c.b16 %v887, %v883
  %v1664 = vpack.c.b16 %v888, %v884
  %v1665 = vpack.c.b16 %v893, %v889
  %v1666 = vpack.c.b16 %v894, %v890
  %v1667 = vpack.c.b16 %v895, %v891
  %v1668 = vpack.c.b16 %v896, %v892
  %v1669 = vpack.c.b16 %v901, %v897
  %v1670 = vpack.c.b16 %v902, %v898
  %v1671 = vpack.c.b16 %v903, %v899
  %v1672 = vpack.c.b16 %v904, %v900
  %v1673 = vpack.c.b16 %v909, %v905
  %v1674 = vpack.c.b16 %v910, %v906
  %v1675 = vpack.c.b16 %v911, %v907
  %v1676 = vpack.c.b16 %v912, %v908
  %v1677 = vpack.c.b16 %v917, %v913
  %v1678 = vpack.c.b16 %v918, %v914
  %v1679 = vpack.c.b16 %v919, %v915
  %v1680 = vpack.c.b16 %v920, %v916
  %v1681 = vpack.c.b16 %v925, %v921
  %v1682 = vpack.c.b16 %v926, %v922
  %v1683 = vpack.c.b16 %v927, %v923
  %v1684 = vpack.c.b16 %v928, %v924
  %v1685 = vpack.c.b16 %v933, %v929
  %v1686 = vpack.c.b16 %v934, %v930
  %v1687 = vpack.c.b16 %v935, %v931
  %v1688 = vpack.c.b16 %v936, %v932
  %v1689 = vpack.c.b16 %v941, %v937
  %v1690 = vpack.c.b16 %v942, %v938
  %v1691 = vpack.c.b16 %v943, %v939
  %v1692 = vpack.c.b16 %v944, %v940
  %v1693 = vpack.c.b16 %v949, %v945
  %v1694 = vpack.c.b16 %v950, %v946
  %v1695 = vpack.c.b16 %v951, %v947
  %v1696 = vpack.c.b16 %v952, %v948
  %v1697 = vpack.c.b16 %v957, %v953
  %v1698 = vpack.c.b16 %v958, %v954
  %v1699 = vpack.c.b16 %v959, %v955
  %v1700 = vpack.c.b16 %v960, %v956
  %v1701 = vpack.c.b16 %v965, %v961
  %v1702 = vpack.c.b16 %v966, %v962
  %v1703 = vpack.c.b16 %v967, %v963
  %v1704 = vpack.c.b16 %v968, %v964
  %v1705 = vpack.c.b16 %v973, %v969
  %v1706 = vpack.c.b16 %v974, %v970
  %v1707 = vpack.c.b16 %v975, %v971
  %v1708 = vpack.c.b16 %v976, %v972
  %v1709 = vpack.c.b16 %v981, %v977
  %v1710 = vpack.c.b16 %v982, %v978
  %v1711 = vpack.c.b16 %v983, %v979
  %v1712 = vpack.c.b16 %v984, %v980
  %v1713 = vpack.c.b16 %v989, %v985
  %v1714 = vpack.c.b16 %v990, %v986
  %v1715 = vpack.c.b16 %v991, %v987
  %v1716 = vpack.c.b16 %v992, %v988
  %v1717 = vpack.c.b16 %v997, %v993
  %v1718 = vpack.c.b16 %v998, %v994
  %v1719 = vpack.c.b16 %v999, %v995
  %v1720 = vpack.c.b16 %v1000, %v996
  %v1721 = vpack.c.b16 %v1005, %v1001
  %v1722 = vpack.c.b16 %v1006, %v1002
  %v1723 = vpack.c.b16 %v1007, %v1003
  %v1724 = vpack.c.b16 %v1008, %v1004
  %v1725 = vpack.c.b16 %v1013, %v1009
  %v1726 = vpack.c.b16 %v1014, %v1010
  %v1727 = vpack.c.b16 %v1015, %v1011
  %v1728 = vpack.c.b16 %v1016, %v1012
  %v1729 = vpack.c.b16 %v1021, %v1017
  %v1730 = vpack.c.b16 %v1022, %v1018
  %v1731 = vpack.c.b16 %v1023, %v1019
  %v1732 = vpack.c.b16 %v1024, %v1020
  %v1733 = vpack.c.b16 %v1029, %v1025
  %v1734 = vpack.c.b16 %v1030, %v1026
  %v1735 = vpack.c.b16 %v1031, %v1027
  %v1736 = vpack.c.b16 %v1032, %v1028
  %v1737 = vpack.c.b16 %v1037, %v1033
  %v1738 = vpack.c.b16 %v1038, %v1034
  %v1739 = vpack.c.b16 %v1039, %v1035
  %v1740 = vpack.c.b16 %v1040, %v1036
  %v1741 = vpack.c.b16 %v1045, %v1041
  %v1742 = vpack.c.b16 %v1046, %v1042
  %v1743 = vpack.c.b16 %v1047, %v1043
  %v1744 = vpack.c.b16 %v1048, %v1044
  %v1745 = vpack.c.b16 %v1053, %v1049
  %v1746 = vpack.c.b16 %v1054, %v1050
  %v1747 = vpack.c.b16 %v1055, %v1051
  %v1748 = vpack.c.b16 %v1056, %v1052
  %v1749 = vpack.c.b16 %v1061, %v1057
  %v1750 = vpack.c.b16 %v1062, %v1058
  %v1751 = vpack.c.b16 %v1063, %v1059
  %v1752 = vpack.c.b16 %v1064, %v1060
  %v1753 = vpack.c.b16 %v1069, %v1065
  %v1754 = vpack.c.b16 %v1070, %v1066
  %v1755 = vpack.c.b16 %v1071, %v1067
  %v1756 = vpack.c.b16 %v1072, %v1068
  %v1757 = vpack.c.b16 %v1077, %v1073
  %v1758 = vpack.c.b16 %v1078, %v1074
  %v1759 = vpack.c.b16 %v1079, %v1075
  %v1760 = vpack.c.b16 %v1080, %v1076
  %v1761 = vpack.c.b16 %v1085, %v1081
  %v1762 = vpack.c.b16 %v1086, %v1082
  %v1763 = vpack.c.b16 %v1087, %v1083
  %v1764 = vpack.c.b16 %v1088, %v1084
  %v1765 = vpack.c.b16 %v1093, %v1089
  %v1766 = vpack.c.b16 %v1094, %v1090
  %v1767 = vpack.c.b16 %v1095, %v1091
  %v1768 = vpack.c.b16 %v1096, %v1092
  %v1769 = vpack.c.b16 %v1101, %v1097
  %v1770 = vpack.c.b16 %v1102, %v1098
  %v1771 = vpack.c.b16 %v1103, %v1099
  %v1772 = vpack.c.b16 %v1104, %v1100
  %v1773 = vpack.c.b16 %v1109, %v1105
  %v1774 = vpack.c.b16 %v1110, %v1106
  %v1775 = vpack.c.b16 %v1111, %v1107
  %v1776 = vpack.c.b16 %v1112, %v1108
  %v1777 = vpack.c.b16 %v1117, %v1113
  %v1778 = vpack.c.b16 %v1118, %v1114
  %v1779 = vpack.c.b16 %v1119, %v1115
  %v1780 = vpack.c.b16 %v1120, %v1116
  %v1781 = vpack.c.b16 %v1125, %v1121
  %v1782 = vpack.c.b16 %v1126, %v1122
  %v1783 = vpack.c.b16 %v1127, %v1123
  %v1784 = vpack.c.b16 %v1128, %v1124
  %v1785 = vpack.c.b16 %v1133, %v1129
  %v1786 = vpack.c.b16 %v1134, %v1130
  %v1787 = vpack.c.b16 %v1135, %v1131
  %v1788 = vpack.c.b16 %v1136, %v1132
  %v1789 = vpack.c.b16 %v1141, %v1137
  %v1790 = vpack.c.b16 %v1142, %v1138
  %v1791 = vpack.c.b16 %v1143, %v1139
  %v1792 = vpack.c.b16 %v1144, %v1140
  %v1793 = vpack.c.b16 %v1149, %v1145
  %v1794 = vpack.c.b16 %v1150, %v1146
  %v1795 = vpack.c.b16 %v1151, %v1147
  %v1796 = vpack.c.b16 %v1152, %v1148
  %v1797 = vpack.c.b16 %v1157, %v1153
  %v1798 = vpack.c.b16 %v1158, %v1154
  %v1799 = vpack.c.b16 %v1159, %v1155
  %v1800 = vpack.c.b16 %v1160, %v1156
  %v1801 = vpack.c.b16 %v1165, %v1161
  %v1802 = vpack.c.b16 %v1166, %v1162
  %v1803 = vpack.c.b16 %v1167, %v1163
  %v1804 = vpack.c.b16 %v1168, %v1164
  %v1805 = vpack.c.b16 %v1173, %v1169
  %v1806 = vpack.c.b16 %v1174, %v1170
  %v1807 = vpack.c.b16 %v1175, %v1171
  %v1808 = vpack.c.b16 %v1176, %v1172
  %v1809 = vpack.c.b16 %v1181, %v1177
  %v1810 = vpack.c.b16 %v1182, %v1178
  %v1811 = vpack.c.b16 %v1183, %v1179
  %v1812 = vpack.c.b16 %v1184, %v1180
  %v1813 = vpack.c.b16 %v1189, %v1185
  %v1814 = vpack.c.b16 %v1190, %v1186
  %v1815 = vpack.c.b16 %v1191, %v1187
  %v1816 = vpack.c.b16 %v1192, %v1188
  %v1817 = vpack.c.b16 %v1197, %v1193
  %v1818 = vpack.c.b16 %v1198, %v1194
  %v1819 = vpack.c.b16 %v1199, %v1195
  %v1820 = vpack.c.b16 %v1200, %v1196
  %v1821 = vpack.c.b16 %v1205, %v1201
  %v1822 = vpack.c.b16 %v1206, %v1202
  %v1823 = vpack.c.b16 %v1207, %v1203
  %v1824 = vpack.c.b16 %v1208, %v1204
  %v1825 = vpack.c.b16 %v1213, %v1209
  %v1826 = vpack.c.b16 %v1214, %v1210
  %v1827 = vpack.c.b16 %v1215, %v1211
  %v1828 = vpack.c.b16 %v1216, %v1212
  %v1829 = vpack.c.b16 %v1221, %v1217
  %v1830 = vpack.c.b16 %v1222, %v1218
  %v1831 = vpack.c.b16 %v1223, %v1219
  %v1832 = vpack.c.b16 %v1224, %v1220
  %v1833 = vpack.c.b16 %v1229, %v1225
  %v1834 = vpack.c.b16 %v1230, %v1226
  %v1835 = vpack.c.b16 %v1231, %v1227
  %v1836 = vpack.c.b16 %v1232, %v1228
  %v1837 = vpack.c.b16 %v1237, %v1233
  %v1838 = vpack.c.b16 %v1238, %v1234
  %v1839 = vpack.c.b16 %v1239, %v1235
  %v1840 = vpack.c.b16 %v1240, %v1236
  %v1841 = vpack.c.b16 %v1245, %v1241
  %v1842 = vpack.c.b16 %v1246, %v1242
  %v1843 = vpack.c.b16 %v1247, %v1243
  %v1844 = vpack.c.b16 %v1248, %v1244
  %v1845 = vpack.c.b16 %v1253, %v1249
  %v1846 = vpack.c.b16 %v1254, %v1250
  %v1847 = vpack.c.b16 %v1255, %v1251
  %v1848 = vpack.c.b16 %v1256, %v1252
  %v1849 = vpack.c.b16 %v1261, %v1257
  %v1850 = vpack.c.b16 %v1262, %v1258
  %v1851 = vpack.c.b16 %v1263, %v1259
  %v1852 = vpack.c.b16 %v1264, %v1260
  %v1853 = vpack.c.b16 %v1269, %v1265
  %v1854 = vpack.c.b16 %v1270, %v1266
  %v1855 = vpack.c.b16 %v1271, %v1267
  %v1856 = vpack.c.b16 %v1272, %v1268
  %v1857 = vpack.c.b16 %v1277, %v1273
  %v1858 = vpack.c.b16 %v1278, %v1274
  %v1859 = vpack.c.b16 %v1279, %v1275
  %v1860 = vpack.c.b16 %v1280, %v1276
  %v1861 = vpack.c.b16 %v1285, %v1281
  %v1862 = vpack.c.b16 %v1286, %v1282
  %v1863 = vpack.c.b16 %v1287, %v1283
  %v1864 = vpack.c.b16 %v1288, %v1284
  %v1865 = vpack.c.b16 %v1293, %v1289
  %v1866 = vpack.c.b16 %v1294, %v1290
  %v1867 = vpack.c.b16 %v1295, %v1291
  %v1868 = vpack.c.b16 %v1296, %v1292
  %v1869 = vpack.c.b16 %v1301, %v1297
  %v1870 = vpack.c.b16 %v1302, %v1298
  %v1871 = vpack.c.b16 %v1303, %v1299
  %v1872 = vpack.c.b16 %v1304, %v1300
  %v1873 = vpack.c.b16 %v1309, %v1305
  %v1874 = vpack.c.b16 %v1310, %v1306
  %v1875 = vpack.c.b16 %v1311, %v1307
  %v1876 = vpack.c.b16 %v1312, %v1308
  %v1877 = vpack.c.b16 %v1317, %v1313
  %v1878 = vpack.c.b16 %v1318, %v1314
  %v1879 = vpack.c.b16 %v1319, %v1315
  %v1880 = vpack.c.b16 %v1320, %v1316
  %v1881 = vpack.c.b16 %v1325, %v1321
  %v1882 = vpack.c.b16 %v1326, %v1322
  %v1883 = vpack.c.b16 %v1327, %v1323
  %v1884 = vpack.c.b16 %v1328, %v1324
  %v1885 = vpack.c.b16 %v1333, %v1329
  %v1886 = vpack.c.b16 %v1334, %v1330
  %v1887 = vpack.c.b16 %v1335, %v1331
  %v1888 = vpack.c.b16 %v1336, %v1332
  %v1889 = vpack.c.b16 %v1341, %v1337
  %v1890 = vpack.c.b16 %v1342, %v1338
  %v1891 = vpack.c.b16 %v1343, %v1339
  %v1892 = vpack.c.b16 %v1344, %v1340
  %v1893 = vpack.c.b16 %v1349, %v1345
  %v1894 = vpack.c.b16 %v1350, %v1346
  %v1895 = vpack.c.b16 %v1351, %v1347
  %v1896 = vpack.c.b16 %v1352, %v1348
  %v1897 = vpack.c.b16 %v1357, %v1353
  %v1898 = vpack.c.b16 %v1358, %v1354
  %v1899 = vpack.c.b16 %v1359, %v1355
  %v1900 = vpack.c.b16 %v1360, %v1356
  %v1901 = vpack.c.b16 %v1365, %v1361
  %v1902 = vpack.c.b16 %v1366, %v1362
  %v1903 = vpack.c.b16 %v1367, %v1363
  %v1904 = vpack.c.b16 %v1368, %v1364
  %v1905 = vpack.c.b16 %v1373, %v1369
  %v1906 = vpack.c.b16 %v1374, %v1370
  %v1907 = vpack.c.b16 %v1375, %v1371
  %v1908 = vpack.c.b16 %v1376, %v1372
  %v1909 = vpack.c.b16 %v1381, %v1377
  %v1910 = vpack.c.b16 %v1382, %v1378
  %v1911 = vpack.c.b16 %v1383, %v1379
  %v1912 = vpack.c.b16 %v1384, %v1380
  %v1913 = vpack.c.b16 %v1389, %v1385
  %v1914 = vpack.c.b16 %v1390, %v1386
  %v1915 = vpack.c.b16 %v1391, %v1387
  %v1916 = vpack.c.b16 %v1392, %v1388
  %v1917 = vpack.c.b16 %v1397, %v1393
  %v1918 = vpack.c.b16 %v1398, %v1394
  %v1919 = vpack.c.b16 %v1399, %v1395
  %v1920 = vpack.c.b16 %v1400, %v1396
  %v1921 = vpack.c.b16 %v1405, %v1401
  %v1922 = vpack.c.b16 %v1406, %v1402
  %v1923 = vpack.c.b16 %v1407, %v1403
  %v1924 = vpack.c.b16 %v1408, %v1404
  %v1925 = vpack.c.b16 %v1413, %v1409
  %v1926 = vpack.c.b16 %v1414, %v1410
  %v1927 = vpack.c.b16 %v1415, %v1411
  %v1928 = vpack.c.b16 %v1416, %v1412
  %v1929 = vpack.c.b16 %v1421, %v1417
  %v1930 = vpack.c.b16 %v1422, %v1418
  %v1931 = vpack.c.b16 %v1423, %v1419
  %v1932 = vpack.c.b16 %v1424, %v1420
  %v1933 = vpack.c.b16 %v1429, %v1425
  %v1934 = vpack.c.b16 %v1430, %v1426
  %v1935 = vpack.c.b16 %v1431, %v1427
  %v1936 = vpack.c.b16 %v1432, %v1428
  %v1937 = vpack.c.b16 %v1437, %v1433
  %v1938 = vpack.c.b16 %v1438, %v1434
  %v1939 = vpack.c.b16 %v1439, %v1435
  %v1940 = vpack.c.b16 %v1440, %v1436
  %v1941 = vpack.c.b16 %v1445, %v1441
  %v1942 = vpack.c.b16 %v1446, %v1442
  %v1943 = vpack.c.b16 %v1447, %v1443
  %v1944 = vpack.c.b16 %v1448, %v1444
  %v1945 = vpack.c.b16 %v1453, %v1449
  %v1946 = vpack.c.b16 %v1454, %v1450
  %v1947 = vpack.c.b16 %v1455, %v1451
  %v1948 = vpack.c.b16 %v1456, %v1452
  %v1949 = vpack.c.b16 %v1461, %v1457
  %v1950 = vpack.c.b16 %v1462, %v1458
  %v1951 = vpack.c.b16 %v1463, %v1459
  %v1952 = vpack.c.b16 %v1464, %v1460
  %v1953 = vpack.c.b16 %v1469, %v1465
  %v1954 = vpack.c.b16 %v1470, %v1466
  %v1955 = vpack.c.b16 %v1471, %v1467
  %v1956 = vpack.c.b16 %v1472, %v1468
  %v1957 = vpack.c.b16 %v1477, %v1473
  %v1958 = vpack.c.b16 %v1478, %v1474
  %v1959 = vpack.c.b16 %v1479, %v1475
  %v1960 = vpack.c.b16 %v1480, %v1476
  %v1961 = vpack.c.b16 %v1485, %v1481
  %v1962 = vpack.c.b16 %v1486, %v1482
  %v1963 = vpack.c.b16 %v1487, %v1483
  %v1964 = vpack.c.b16 %v1488, %v1484
  %v1965 = vpack.c.b16 %v1493, %v1489
  %v1966 = vpack.c.b16 %v1494, %v1490
  %v1967 = vpack.c.b16 %v1495, %v1491
  %v1968 = vpack.c.b16 %v1496, %v1492
  %v1969 = vpack.c.b16 %v1501, %v1497
  %v1970 = vpack.c.b16 %v1502, %v1498
  %v1971 = vpack.c.b16 %v1503, %v1499
  %v1972 = vpack.c.b16 %v1504, %v1500
  %v1973 = vpack.c.b16 %v1509, %v1505
  %v1974 = vpack.c.b16 %v1510, %v1506
  %v1975 = vpack.c.b16 %v1511, %v1507
  %v1976 = vpack.c.b16 %v1512, %v1508
  %v1977 = vpack.c.b16 %v1517, %v1513
  %v1978 = vpack.c.b16 %v1518, %v1514
  %v1979 = vpack.c.b16 %v1519, %v1515
  %v1980 = vpack.c.b16 %v1520, %v1516
  %v1981 = vpack.c.b16 %v1525, %v1521
  %v1982 = vpack.c.b16 %v1526, %v1522
  %v1983 = vpack.c.b16 %v1527, %v1523
  %v1984 = vpack.c.b16 %v1528, %v1524
  %v1985 = vpack.c.b16 %v1533, %v1529
  %v1986 = vpack.c.b16 %v1534, %v1530
  %v1987 = vpack.c.b16 %v1535, %v1531
  %v1988 = vpack.c.b16 %v1536, %v1532
  %v1989 = vpack.c.b16 %v1541, %v1537
  %v1990 = vpack.c.b16 %v1542, %v1538
  %v1991 = vpack.c.b16 %v1543, %v1539
  %v1992 = vpack.c.b16 %v1544, %v1540
  %v1993 = vpack.c.b16 %v1549, %v1545
  %v1994 = vpack.c.b16 %v1550, %v1546
  %v1995 = vpack.c.b16 %v1551, %v1547
  %v1996 = vpack.c.b16 %v1552, %v1548
  %v1997 = vpack.c.b16 %v1557, %v1553
  %v1998 = vpack.c.b16 %v1558, %v1554
  %v1999 = vpack.c.b16 %v1559, %v1555
  %v2000 = vpack.c.b16 %v1560, %v1556
  %v2001 = vpack.c.b16 %v1565, %v1561
  %v2002 = vpack.c.b16 %v1566, %v1562
  %v2003 = vpack.c.b16 %v1567, %v1563
  %v2004 = vpack.c.b16 %v1568, %v1564
  %v2005 = vpack.c.b16 %v1573, %v1569
  %v2006 = vpack.c.b16 %v1574, %v1570
  %v2007 = vpack.c.b16 %v1575, %v1571
  %v2008 = vpack.c.b16 %v1576, %v1572
  %v2009 = vpack.c.b16 %v1581, %v1577
  %v2010 = vpack.c.b16 %v1582, %v1578
  %v2011 = vpack.c.b16 %v1583, %v1579
  %v2012 = vpack.c.b16 %v1584, %v1580
  %v2013 = vpack.c.b16 %v1589, %v1585
  %v2014 = vpack.c.b16 %v1590, %v1586
  %v2015 = vpack.c.b16 %v1591, %v1587
  %v2016 = vpack.c.b16 %v1592, %v1588
  %v2017 = vpack.c.b16 %v1597, %v1593
  %v2018 = vpack.c.b16 %v1598, %v1594
  %v2019 = vpack.c.b16 %v1599, %v1595
  %v2020 = vpack.c.b16 %v1600, %v1596
  %v2021 = vpack.c.b16 %v1605, %v1601
  %v2022 = vpack.c.b16 %v1606, %v1602
  %v2023 = vpack.c.b16 %v1607, %v1603
  %v2024 = vpack.c.b16 %v1608, %v1604
  %v2025 = vpack.c.b16 %v1613, %v1609
  %v2026 = vpack.c.b16 %v1614, %v1610
  %v2027 = vpack.c.b16 %v1615, %v1611
  %v2028 = vpack.c.b16 %v1616, %v1612
  %v2029 = vpack.c.b16 %v1621, %v1617
  %v2030 = vpack.c.b16 %v1622, %v1618
  %v2031 = vpack.c.b16 %v1623, %v1619
  %v2032 = vpack.c.b16 %v1624, %v1620
  %v2033 = vpack.c.b16 %v1629, %v1625
  %v2034 = vpack.c.b16 %v1630, %v1626
  %v2035 = vpack.c.b16 %v1631, %v1627
  %v2036 = vpack.c.b16 %v1632, %v1628
  %v2037 = vpack.c.b16 %v1637, %v1633
  %v2038 = vpack.c.b16 %v1638, %v1634
  %v2039 = vpack.c.b16 %v1639, %v1635
  %v2040 = vpack.c.b16 %v1640, %v1636
  %v2041 = vpack.c.b16 %v1645, %v1641
  %v2042 = vpack.c.b16 %v1646, %v1642
  %v2043 = vpack.c.b16 %v1647, %v1643
  %v2044 = vpack.c.b16 %v1648, %v1644
  %v2045 = vpack.c.b16 %v1653, %v1649
  %v2046 = vpack.c.b16 %v1654, %v1650
  %v2047 = vpack.c.b16 %v1655, %v1651
  %v2048 = vpack.c.b16 %v1656, %v1652
  %vm2441 = vcmask 261120
  %v2443 = vsel %vm2441, %v468, 0
  %2445 = vmatprep.subr.bf16.mxu0 %v1658
  %2446 = vmatpush1.bf16.msra.mxu0 %v1657
  %2447 = vmatprep.subr.bf16.mxu0 %v1662
  %2448 = vmatpush1.bf16.msra.mxu0 %v1661
  %2449 = vmatprep.subr.bf16.mxu0 %v1666
  %2450 = vmatpush1.bf16.msra.mxu0 %v1665
  %2451 = vmatprep.subr.bf16.mxu0 %v1670
  %2452 = vmatpush1.bf16.msra.mxu0 %v1669
  %2453 = vmatprep.subr.bf16.mxu0 %v1674
  %2454 = vmatpush1.bf16.msra.mxu0 %v1673
  %2455 = vmatprep.subr.bf16.mxu0 %v1678
  %2456 = vmatpush1.bf16.msra.mxu0 %v1677
  %2457 = vmatprep.subr.bf16.mxu0 %v1682
  %2458 = vmatpush1.bf16.msra.mxu0 %v1681
  %2459 = vmatprep.subr.bf16.mxu0 %v1686
  %2460 = vmatpush1.bf16.msra.mxu0 %v1685
  %2461 = vmatprep.subr.bf16.mxu0 %v1690
  %2462 = vmatpush1.bf16.msra.mxu0 %v1689
  %2463 = vmatprep.subr.bf16.mxu0 %v1694
  %2464 = vmatpush1.bf16.msra.mxu0 %v1693
  %2465 = vmatprep.subr.bf16.mxu0 %v1698
  %2466 = vmatpush1.bf16.msra.mxu0 %v1697
  %2467 = vmatprep.subr.bf16.mxu0 %v1702
  %2468 = vmatpush1.bf16.msra.mxu0 %v1701
  %2469 = vmatprep.subr.bf16.mxu0 %v1706
  %2470 = vmatpush1.bf16.msra.mxu0 %v1705
  %2471 = vmatprep.subr.bf16.mxu0 %v1710
  %2472 = vmatpush1.bf16.msra.mxu0 %v1709
  %2473 = vmatprep.subr.bf16.mxu0 %v1714
  %2474 = vmatpush1.bf16.msra.mxu0 %v1713
  %2475 = vmatprep.subr.bf16.mxu0 %v1718
  %2476 = vmatpush1.bf16.msra.mxu0 %v1717
  %2477 = vmatprep.mubr.bf16.mxu0 %v457
  %2478 = vmatmul.mubr.bf16.gmra.mrb[0].mxu0 %v456
  %v2479 = vpop.f32.mrb[0].mxu0
  %v2480 = vadd.f32 %v419, %v2479
  %v2481 = vpop.f32.mrb[0].mxu0
  %v2482 = vadd.f32 %v423, %v2481
  %v2483 = vpop.f32.mrb[0].mxu0
  %v2484 = vpop.f32.mrb[0].mxu0
  %2485 = vdwg.mxu0
  %2486 = vmatprep.subr.bf16.mxu0 %v1722
  %2487 = vmatpush1.bf16.msra.mxu0 %v1721
  %2488 = vmatprep.subr.bf16.mxu0 %v1726
  %2489 = vmatpush1.bf16.msra.mxu0 %v1725
  %2490 = vmatprep.subr.bf16.mxu0 %v1730
  %2491 = vmatpush1.bf16.msra.mxu0 %v1729
  %2492 = vmatprep.subr.bf16.mxu0 %v1734
  %2493 = vmatpush1.bf16.msra.mxu0 %v1733
  %2494 = vmatprep.subr.bf16.mxu0 %v1738
  %2495 = vmatpush1.bf16.msra.mxu0 %v1737
  %2496 = vmatprep.subr.bf16.mxu0 %v1742
  %2497 = vmatpush1.bf16.msra.mxu0 %v1741
  %2498 = vmatprep.subr.bf16.mxu0 %v1746
  %2499 = vmatpush1.bf16.msra.mxu0 %v1745
  %2500 = vmatprep.subr.bf16.mxu0 %v1750
  %2501 = vmatpush1.bf16.msra.mxu0 %v1749
  %2502 = vmatprep.subr.bf16.mxu0 %v1754
  %2503 = vmatpush1.bf16.msra.mxu0 %v1753
  %2504 = vmatprep.subr.bf16.mxu0 %v1758
  %2505 = vmatpush1.bf16.msra.mxu0 %v1757
  %2506 = vmatprep.subr.bf16.mxu0 %v1762
  %2507 = vmatpush1.bf16.msra.mxu0 %v1761
  %2508 = vmatprep.subr.bf16.mxu0 %v1766
  %2509 = vmatpush1.bf16.msra.mxu0 %v1765
  %2510 = vmatprep.subr.bf16.mxu0 %v1770
  %2511 = vmatpush1.bf16.msra.mxu0 %v1769
  %2512 = vmatprep.subr.bf16.mxu0 %v1774
  %2513 = vmatpush1.bf16.msra.mxu0 %v1773
  %2514 = vmatprep.subr.bf16.mxu0 %v1778
  %2515 = vmatpush1.bf16.msra.mxu0 %v1777
  %2516 = vmatprep.subr.bf16.mxu0 %v1782
  %2517 = vmatpush1.bf16.msra.mxu0 %v1781
  %2518 = vmatprep.mubr.bf16.mxu0 %v459
  %2519 = vmatmul.mubr.bf16.gmra.mrb[0].mxu0 %v458
  %v2520 = vpop.f32.mrb[0].mxu0
  %v2521 = vadd.f32 %v2480, %v2520
  %v2522 = vpop.f32.mrb[0].mxu0
  %v2523 = vadd.f32 %v2482, %v2522
  %v2524 = vpop.f32.mrb[0].mxu0
  %v2525 = vpop.f32.mrb[0].mxu0
  %2526 = vdwg.mxu0
  %2527 = vmatprep.subr.bf16.mxu0 %v1786
  %2528 = vmatpush1.bf16.msra.mxu0 %v1785
  %2529 = vmatprep.subr.bf16.mxu0 %v1790
  %2530 = vmatpush1.bf16.msra.mxu0 %v1789
  %2531 = vmatprep.subr.bf16.mxu0 %v1794
  %2532 = vmatpush1.bf16.msra.mxu0 %v1793
  %2533 = vmatprep.subr.bf16.mxu0 %v1798
  %2534 = vmatpush1.bf16.msra.mxu0 %v1797
  %2535 = vmatprep.subr.bf16.mxu0 %v1802
  %2536 = vmatpush1.bf16.msra.mxu0 %v1801
  %2537 = vmatprep.subr.bf16.mxu0 %v1806
  %2538 = vmatpush1.bf16.msra.mxu0 %v1805
  %2539 = vmatprep.subr.bf16.mxu0 %v1810
  %2540 = vmatpush1.bf16.msra.mxu0 %v1809
  %2541 = vmatprep.subr.bf16.mxu0 %v1814
  %2542 = vmatpush1.bf16.msra.mxu0 %v1813
  %2543 = vmatprep.subr.bf16.mxu0 %v1818
  %2544 = vmatpush1.bf16.msra.mxu0 %v1817
  %2545 = vmatprep.subr.bf16.mxu0 %v1822
  %2546 = vmatpush1.bf16.msra.mxu0 %v1821
  %2547 = vmatprep.subr.bf16.mxu0 %v1826
  %2548 = vmatpush1.bf16.msra.mxu0 %v1825
  %2549 = vmatprep.subr.bf16.mxu0 %v1830
  %2550 = vmatpush1.bf16.msra.mxu0 %v1829
  %2551 = vmatprep.subr.bf16.mxu0 %v1834
  %2552 = vmatpush1.bf16.msra.mxu0 %v1833
  %2553 = vmatprep.subr.bf16.mxu0 %v1838
  %2554 = vmatpush1.bf16.msra.mxu0 %v1837
  %2555 = vmatprep.subr.bf16.mxu0 %v1842
  %2556 = vmatpush1.bf16.msra.mxu0 %v1841
  %2557 = vmatprep.subr.bf16.mxu0 %v1846
  %2558 = vmatpush1.bf16.msra.mxu0 %v1845
  %2559 = vmatprep.mubr.bf16.mxu0 %v461
  %2560 = vmatmul.mubr.bf16.gmra.mrb[0].mxu0 %v460
  %v2561 = vpop.f32.mrb[0].mxu0
  %v2562 = vadd.f32 %v2521, %v2561
  %v2563 = vpop.f32.mrb[0].mxu0
  %v2564 = vadd.f32 %v2523, %v2563
  %v2565 = vpop.f32.mrb[0].mxu0
  %v2566 = vpop.f32.mrb[0].mxu0
  %2567 = vdwg.mxu0
  %2568 = vmatprep.subr.bf16.mxu0 %v1850
  %2569 = vmatpush1.bf16.msra.mxu0 %v1849
  %2570 = vmatprep.subr.bf16.mxu0 %v1854
  %2571 = vmatpush1.bf16.msra.mxu0 %v1853
  %2572 = vmatprep.subr.bf16.mxu0 %v1858
  %2573 = vmatpush1.bf16.msra.mxu0 %v1857
  %2574 = vmatprep.subr.bf16.mxu0 %v1862
  %2575 = vmatpush1.bf16.msra.mxu0 %v1861
  %2576 = vmatprep.subr.bf16.mxu0 %v1866
  %2577 = vmatpush1.bf16.msra.mxu0 %v1865
  %2578 = vmatprep.subr.bf16.mxu0 %v1870
  %2579 = vmatpush1.bf16.msra.mxu0 %v1869
  %2580 = vmatprep.subr.bf16.mxu0 %v1874
  %2581 = vmatpush1.bf16.msra.mxu0 %v1873
  %2582 = vmatprep.subr.bf16.mxu0 %v1878
  %2583 = vmatpush1.bf16.msra.mxu0 %v1877
  %2584 = vmatprep.subr.bf16.mxu0 %v1882
  %2585 = vmatpush1.bf16.msra.mxu0 %v1881
  %2586 = vmatprep.subr.bf16.mxu0 %v1886
  %2587 = vmatpush1.bf16.msra.mxu0 %v1885
  %2588 = vmatprep.subr.bf16.mxu0 %v1890
  %2589 = vmatpush1.bf16.msra.mxu0 %v1889
  %2590 = vmatprep.subr.bf16.mxu0 %v1894
  %2591 = vmatpush1.bf16.msra.mxu0 %v1893
  %2592 = vmatprep.subr.bf16.mxu0 %v1898
  %2593 = vmatpush1.bf16.msra.mxu0 %v1897
  %2594 = vmatprep.subr.bf16.mxu0 %v1902
  %2595 = vmatpush1.bf16.msra.mxu0 %v1901
  %2596 = vmatprep.subr.bf16.mxu0 %v1906
  %2597 = vmatpush1.bf16.msra.mxu0 %v1905
  %2598 = vmatprep.subr.bf16.mxu0 %v1910
  %2599 = vmatpush1.bf16.msra.mxu0 %v1909
  %2600 = vmatprep.mubr.bf16.mxu0 %v463
  %2601 = vmatmul.mubr.bf16.gmra.mrb[0].mxu0 %v462
  %v2602 = vpop.f32.mrb[0].mxu0
  %v2603 = vadd.f32 %v2562, %v2602
  %v2604 = vpop.f32.mrb[0].mxu0
  %v2605 = vadd.f32 %v2564, %v2604
  %v2606 = vpop.f32.mrb[0].mxu0
  %v2607 = vpop.f32.mrb[0].mxu0
  %2608 = vdwg.mxu0
  %2609 = vmatprep.subr.bf16.mxu0 %v1914
  %2610 = vmatpush1.bf16.msra.mxu0 %v1913
  %2611 = vmatprep.subr.bf16.mxu0 %v1918
  %2612 = vmatpush1.bf16.msra.mxu0 %v1917
  %2613 = vmatprep.subr.bf16.mxu0 %v1922
  %2614 = vmatpush1.bf16.msra.mxu0 %v1921
  %2615 = vmatprep.subr.bf16.mxu0 %v1926
  %2616 = vmatpush1.bf16.msra.mxu0 %v1925
  %2617 = vmatprep.subr.bf16.mxu0 %v1930
  %2618 = vmatpush1.bf16.msra.mxu0 %v1929
  %2619 = vmatprep.subr.bf16.mxu0 %v1934
  %2620 = vmatpush1.bf16.msra.mxu0 %v1933
  %2621 = vmatprep.subr.bf16.mxu0 %v1938
  %2622 = vmatpush1.bf16.msra.mxu0 %v1937
  %2623 = vmatprep.subr.bf16.mxu0 %v1942
  %2624 = vmatpush1.bf16.msra.mxu0 %v1941
  %2625 = vmatprep.subr.bf16.mxu0 %v1946
  %2626 = vmatpush1.bf16.msra.mxu0 %v1945
  %2627 = vmatprep.subr.bf16.mxu0 %v1950
  %2628 = vmatpush1.bf16.msra.mxu0 %v1949
  %2629 = vmatprep.subr.bf16.mxu0 %v1954
  %2630 = vmatpush1.bf16.msra.mxu0 %v1953
  %2631 = vmatprep.subr.bf16.mxu0 %v1958
  %2632 = vmatpush1.bf16.msra.mxu0 %v1957
  %2633 = vmatprep.subr.bf16.mxu0 %v1962
  %2634 = vmatpush1.bf16.msra.mxu0 %v1961
  %2635 = vmatprep.subr.bf16.mxu0 %v1966
  %2636 = vmatpush1.bf16.msra.mxu0 %v1965
  %2637 = vmatprep.subr.bf16.mxu0 %v1970
  %2638 = vmatpush1.bf16.msra.mxu0 %v1969
  %2639 = vmatprep.subr.bf16.mxu0 %v1974
  %2640 = vmatpush1.bf16.msra.mxu0 %v1973
  %2641 = vmatprep.mubr.bf16.mxu0 %v465
  %2642 = vmatmul.mubr.bf16.gmra.mrb[0].mxu0 %v464
  %v2643 = vpop.f32.mrb[0].mxu0
  %v2644 = vadd.f32 %v2603, %v2643
  %v2645 = vpop.f32.mrb[0].mxu0
  %v2646 = vadd.f32 %v2605, %v2645
  %v2647 = vpop.f32.mrb[0].mxu0
  %v2648 = vpop.f32.mrb[0].mxu0
  %2649 = vdwg.mxu0
  %2650 = vmatprep.subr.bf16.mxu0 %v1978
  %2651 = vmatpush1.bf16.msra.mxu0 %v1977
  %2652 = vmatprep.subr.bf16.mxu0 %v1982
  %2653 = vmatpush1.bf16.msra.mxu0 %v1981
  %2654 = vmatprep.subr.bf16.mxu0 %v1986
  %2655 = vmatpush1.bf16.msra.mxu0 %v1985
  %2656 = vmatprep.subr.bf16.mxu0 %v1990
  %2657 = vmatpush1.bf16.msra.mxu0 %v1989
  %2658 = vmatprep.subr.bf16.mxu0 %v1994
  %2659 = vmatpush1.bf16.msra.mxu0 %v1993
  %2660 = vmatprep.subr.bf16.mxu0 %v1998
  %2661 = vmatpush1.bf16.msra.mxu0 %v1997
  %2662 = vmatprep.subr.bf16.mxu0 %v2002
  %2663 = vmatpush1.bf16.msra.mxu0 %v2001
  %2664 = vmatprep.subr.bf16.mxu0 %v2006
  %2665 = vmatpush1.bf16.msra.mxu0 %v2005
  %2666 = vmatprep.subr.bf16.mxu0 %v2010
  %2667 = vmatpush1.bf16.msra.mxu0 %v2009
  %2668 = vmatprep.subr.bf16.mxu0 %v2014
  %2669 = vmatpush1.bf16.msra.mxu0 %v2013
  %2670 = vmatprep.subr.bf16.mxu0 %v2018
  %2671 = vmatpush1.bf16.msra.mxu0 %v2017
  %2672 = vmatprep.subr.bf16.mxu0 %v2022
  %2673 = vmatpush1.bf16.msra.mxu0 %v2021
  %2674 = vmatprep.subr.bf16.mxu0 %v2026
  %2675 = vmatpush1.bf16.msra.mxu0 %v2025
  %2676 = vmatprep.subr.bf16.mxu0 %v2030
  %2677 = vmatpush1.bf16.msra.mxu0 %v2029
  %2678 = vmatprep.subr.bf16.mxu0 %v2034
  %2679 = vmatpush1.bf16.msra.mxu0 %v2033
  %2680 = vmatprep.subr.bf16.mxu0 %v2038
  %2681 = vmatpush1.bf16.msra.mxu0 %v2037
  %2682 = vmatprep.mubr.bf16.mxu0 %v467
  %2683 = vmatmul.mubr.bf16.gmra.mrb[0].mxu0 %v466
  %v2684 = vpop.f32.mrb[0].mxu0
  %v2685 = vadd.f32 %v2644, %v2684
  %v2686 = vpop.f32.mrb[0].mxu0
  %v2687 = vadd.f32 %v2646, %v2686
  %v2688 = vpop.f32.mrb[0].mxu0
  %v2689 = vpop.f32.mrb[0].mxu0
  %2690 = vdwg.mxu0
  %2691 = vmatprep.subr.bf16.mxu0 %v2042
  %2692 = vmatpush1.bf16.msra.mxu0 %v2041
  %2693 = vmatprep.subr.bf16.mxu0 %v2046
  %2694 = vmatpush1.bf16.msra.mxu0 %v2045
  %2695 = vmatprep.subr.bf16.mxu0 0
  %2696 = vmatpush1.bf16.msra.mxu0 0
  %2697 = vmatprep.subr.bf16.mxu0 0
  %2698 = vmatpush1.bf16.msra.mxu0 0
  %2699 = vmatprep.subr.bf16.mxu0 0
  %2700 = vmatpush1.bf16.msra.mxu0 0
  %2701 = vmatprep.subr.bf16.mxu0 0
  %2702 = vmatpush1.bf16.msra.mxu0 0
  %2703 = vmatprep.subr.bf16.mxu0 0
  %2704 = vmatpush1.bf16.msra.mxu0 0
  %2705 = vmatprep.subr.bf16.mxu0 0
  %2706 = vmatpush1.bf16.msra.mxu0 0
  %2707 = vmatprep.subr.bf16.mxu0 0
  %2708 = vmatpush1.bf16.msra.mxu0 0
  %2709 = vmatprep.subr.bf16.mxu0 0
  %2710 = vmatpush1.bf16.msra.mxu0 0
  %2711 = vmatprep.subr.bf16.mxu0 0
  %2712 = vmatpush1.bf16.msra.mxu0 0
  %2713 = vmatprep.subr.bf16.mxu0 0
  %2714 = vmatpush1.bf16.msra.mxu0 0
  %2715 = vmatprep.subr.bf16.mxu0 0
  %2716 = vmatpush1.bf16.msra.mxu0 0
  %2717 = vmatprep.subr.bf16.mxu0 0
  %2718 = vmatpush1.bf16.msra.mxu0 0
  %2719 = vmatprep.subr.bf16.mxu0 0
  %2720 = vmatpush1.bf16.msra.mxu0 0
  %2721 = vmatprep.subr.bf16.mxu0 0
  %2722 = vmatpush1.bf16.msra.mxu0 0
  %2723 = vmatprep.mubr.bf16.mxu0 0
  %2724 = vmatmul.mubr.bf16.gmra.mrb[0].mxu0 %v2443
  %v2725 = vpop.f32.mrb[0].mxu0
  %v2726 = vadd.f32 %v2685, %v2725
  %v2727 = vpop.f32.mrb[0].mxu0
  %v2728 = vadd.f32 %v2687, %v2727
  %v2729 = vpop.f32.mrb[0].mxu0
  %v2730 = vpop.f32.mrb[0].mxu0
  %2731 = vdwg.mxu0
  %2732 = vmatprep.subr.bf16.mxu0 %v1660
  %2733 = vmatpush1.bf16.msra.mxu0 %v1659
  %2734 = vmatprep.subr.bf16.mxu0 %v1664
  %2735 = vmatpush1.bf16.msra.mxu0 %v1663
  %2736 = vmatprep.subr.bf16.mxu0 %v1668
  %2737 = vmatpush1.bf16.msra.mxu0 %v1667
  %2738 = vmatprep.subr.bf16.mxu0 %v1672
  %2739 = vmatpush1.bf16.msra.mxu0 %v1671
  %2740 = vmatprep.subr.bf16.mxu0 %v1676
  %2741 = vmatpush1.bf16.msra.mxu0 %v1675
  %2742 = vmatprep.subr.bf16.mxu0 %v1680
  %2743 = vmatpush1.bf16.msra.mxu0 %v1679
  %2744 = vmatprep.subr.bf16.mxu0 %v1684
  %2745 = vmatpush1.bf16.msra.mxu0 %v1683
  %2746 = vmatprep.subr.bf16.mxu0 %v1688
  %2747 = vmatpush1.bf16.msra.mxu0 %v1687
  %2748 = vmatprep.subr.bf16.mxu0 %v1692
  %2749 = vmatpush1.bf16.msra.mxu0 %v1691
  %2750 = vmatprep.subr.bf16.mxu0 %v1696
  %2751 = vmatpush1.bf16.msra.mxu0 %v1695
  %2752 = vmatprep.subr.bf16.mxu0 %v1700
  %2753 = vmatpush1.bf16.msra.mxu0 %v1699
  %2754 = vmatprep.subr.bf16.mxu0 %v1704
  %2755 = vmatpush1.bf16.msra.mxu0 %v1703
  %2756 = vmatprep.subr.bf16.mxu0 %v1708
  %2757 = vmatpush1.bf16.msra.mxu0 %v1707
  %2758 = vmatprep.subr.bf16.mxu0 %v1712
  %2759 = vmatpush1.bf16.msra.mxu0 %v1711
  %2760 = vmatprep.subr.bf16.mxu0 %v1716
  %2761 = vmatpush1.bf16.msra.mxu0 %v1715
  %2762 = vmatprep.subr.bf16.mxu0 %v1720
  %2763 = vmatpush1.bf16.msra.mxu0 %v1719
  %2764 = vmatprep.mubr.bf16.mxu0 %v457
  %2765 = vmatmul.mubr.bf16.gmra.mrb[0].mxu0 %v456
  %v2766 = vpop.f32.mrb[0].mxu0
  %v2767 = vadd.f32 %v427, %v2766
  %v2768 = vpop.f32.mrb[0].mxu0
  %v2769 = vadd.f32 %v431, %v2768
  %v2770 = vpop.f32.mrb[0].mxu0
  %v2771 = vpop.f32.mrb[0].mxu0
  %2772 = vdwg.mxu0
  %2773 = vmatprep.subr.bf16.mxu0 %v1724
  %2774 = vmatpush1.bf16.msra.mxu0 %v1723
  %2775 = vmatprep.subr.bf16.mxu0 %v1728
  %2776 = vmatpush1.bf16.msra.mxu0 %v1727
  %2777 = vmatprep.subr.bf16.mxu0 %v1732
  %2778 = vmatpush1.bf16.msra.mxu0 %v1731
  %2779 = vmatprep.subr.bf16.mxu0 %v1736
  %2780 = vmatpush1.bf16.msra.mxu0 %v1735
  %2781 = vmatprep.subr.bf16.mxu0 %v1740
  %2782 = vmatpush1.bf16.msra.mxu0 %v1739
  %2783 = vmatprep.subr.bf16.mxu0 %v1744
  %2784 = vmatpush1.bf16.msra.mxu0 %v1743
  %2785 = vmatprep.subr.bf16.mxu0 %v1748
  %2786 = vmatpush1.bf16.msra.mxu0 %v1747
  %2787 = vmatprep.subr.bf16.mxu0 %v1752
  %2788 = vmatpush1.bf16.msra.mxu0 %v1751
  %2789 = vmatprep.subr.bf16.mxu0 %v1756
  %2790 = vmatpush1.bf16.msra.mxu0 %v1755
  %2791 = vmatprep.subr.bf16.mxu0 %v1760
  %2792 = vmatpush1.bf16.msra.mxu0 %v1759
  %2793 = vmatprep.subr.bf16.mxu0 %v1764
  %2794 = vmatpush1.bf16.msra.mxu0 %v1763
  %2795 = vmatprep.subr.bf16.mxu0 %v1768
  %2796 = vmatpush1.bf16.msra.mxu0 %v1767
  %2797 = vmatprep.subr.bf16.mxu0 %v1772
  %2798 = vmatpush1.bf16.msra.mxu0 %v1771
  %2799 = vmatprep.subr.bf16.mxu0 %v1776
  %2800 = vmatpush1.bf16.msra.mxu0 %v1775
  %2801 = vmatprep.subr.bf16.mxu0 %v1780
  %2802 = vmatpush1.bf16.msra.mxu0 %v1779
  %2803 = vmatprep.subr.bf16.mxu0 %v1784
  %2804 = vmatpush1.bf16.msra.mxu0 %v1783
  %2805 = vmatprep.mubr.bf16.mxu0 %v459
  %2806 = vmatmul.mubr.bf16.gmra.mrb[0].mxu0 %v458
  %v2807 = vpop.f32.mrb[0].mxu0
  %v2808 = vadd.f32 %v2767, %v2807
  %v2809 = vpop.f32.mrb[0].mxu0
  %v2810 = vadd.f32 %v2769, %v2809
  %v2811 = vpop.f32.mrb[0].mxu0
  %v2812 = vpop.f32.mrb[0].mxu0
  %2813 = vdwg.mxu0
  %2814 = vmatprep.subr.bf16.mxu0 %v1788
  %2815 = vmatpush1.bf16.msra.mxu0 %v1787
  %2816 = vmatprep.subr.bf16.mxu0 %v1792
  %2817 = vmatpush1.bf16.msra.mxu0 %v1791
  %2818 = vmatprep.subr.bf16.mxu0 %v1796
  %2819 = vmatpush1.bf16.msra.mxu0 %v1795
  %2820 = vmatprep.subr.bf16.mxu0 %v1800
  %2821 = vmatpush1.bf16.msra.mxu0 %v1799
  %2822 = vmatprep.subr.bf16.mxu0 %v1804
  %2823 = vmatpush1.bf16.msra.mxu0 %v1803
  %2824 = vmatprep.subr.bf16.mxu0 %v1808
  %2825 = vmatpush1.bf16.msra.mxu0 %v1807
  %2826 = vmatprep.subr.bf16.mxu0 %v1812
  %2827 = vmatpush1.bf16.msra.mxu0 %v1811
  %2828 = vmatprep.subr.bf16.mxu0 %v1816
  %2829 = vmatpush1.bf16.msra.mxu0 %v1815
  %2830 = vmatprep.subr.bf16.mxu0 %v1820
  %2831 = vmatpush1.bf16.msra.mxu0 %v1819
  %2832 = vmatprep.subr.bf16.mxu0 %v1824
  %2833 = vmatpush1.bf16.msra.mxu0 %v1823
  %2834 = vmatprep.subr.bf16.mxu0 %v1828
  %2835 = vmatpush1.bf16.msra.mxu0 %v1827
  %2836 = vmatprep.subr.bf16.mxu0 %v1832
  %2837 = vmatpush1.bf16.msra.mxu0 %v1831
  %2838 = vmatprep.subr.bf16.mxu0 %v1836
  %2839 = vmatpush1.bf16.msra.mxu0 %v1835
  %2840 = vmatprep.subr.bf16.mxu0 %v1840
  %2841 = vmatpush1.bf16.msra.mxu0 %v1839
  %2842 = vmatprep.subr.bf16.mxu0 %v1844
  %2843 = vmatpush1.bf16.msra.mxu0 %v1843
  %2844 = vmatprep.subr.bf16.mxu0 %v1848
  %2845 = vmatpush1.bf16.msra.mxu0 %v1847
  %2846 = vmatprep.mubr.bf16.mxu0 %v461
  %2847 = vmatmul.mubr.bf16.gmra.mrb[0].mxu0 %v460
  %v2848 = vpop.f32.mrb[0].mxu0
  %v2849 = vadd.f32 %v2808, %v2848
  %v2850 = vpop.f32.mrb[0].mxu0
  %v2851 = vadd.f32 %v2810, %v2850
  %v2852 = vpop.f32.mrb[0].mxu0
  %v2853 = vpop.f32.mrb[0].mxu0
  %2854 = vdwg.mxu0
  %2855 = vmatprep.subr.bf16.mxu0 %v1852
  %2856 = vmatpush1.bf16.msra.mxu0 %v1851
  %2857 = vmatprep.subr.bf16.mxu0 %v1856
  %2858 = vmatpush1.bf16.msra.mxu0 %v1855
  %2859 = vmatprep.subr.bf16.mxu0 %v1860
  %2860 = vmatpush1.bf16.msra.mxu0 %v1859
  %2861 = vmatprep.subr.bf16.mxu0 %v1864
  %2862 = vmatpush1.bf16.msra.mxu0 %v1863
  %2863 = vmatprep.subr.bf16.mxu0 %v1868
  %2864 = vmatpush1.bf16.msra.mxu0 %v1867
  %2865 = vmatprep.subr.bf16.mxu0 %v1872
  %2866 = vmatpush1.bf16.msra.mxu0 %v1871
  %2867 = vmatprep.subr.bf16.mxu0 %v1876
  %2868 = vmatpush1.bf16.msra.mxu0 %v1875
  %2869 = vmatprep.subr.bf16.mxu0 %v1880
  %2870 = vmatpush1.bf16.msra.mxu0 %v1879
  %2871 = vmatprep.subr.bf16.mxu0 %v1884
  %2872 = vmatpush1.bf16.msra.mxu0 %v1883
  %2873 = vmatprep.subr.bf16.mxu0 %v1888
  %2874 = vmatpush1.bf16.msra.mxu0 %v1887
  %2875 = vmatprep.subr.bf16.mxu0 %v1892
  %2876 = vmatpush1.bf16.msra.mxu0 %v1891
  %2877 = vmatprep.subr.bf16.mxu0 %v1896
  %2878 = vmatpush1.bf16.msra.mxu0 %v1895
  %2879 = vmatprep.subr.bf16.mxu0 %v1900
  %2880 = vmatpush1.bf16.msra.mxu0 %v1899
  %2881 = vmatprep.subr.bf16.mxu0 %v1904
  %2882 = vmatpush1.bf16.msra.mxu0 %v1903
  %2883 = vmatprep.subr.bf16.mxu0 %v1908
  %2884 = vmatpush1.bf16.msra.mxu0 %v1907
  %2885 = vmatprep.subr.bf16.mxu0 %v1912
  %2886 = vmatpush1.bf16.msra.mxu0 %v1911
  %2887 = vmatprep.mubr.bf16.mxu0 %v463
  %2888 = vmatmul.mubr.bf16.gmra.mrb[0].mxu0 %v462
  %v2889 = vpop.f32.mrb[0].mxu0
  %v2890 = vadd.f32 %v2849, %v2889
  %v2891 = vpop.f32.mrb[0].mxu0
  %v2892 = vadd.f32 %v2851, %v2891
  %v2893 = vpop.f32.mrb[0].mxu0
  %v2894 = vpop.f32.mrb[0].mxu0
  %2895 = vdwg.mxu0
  %2896 = vmatprep.subr.bf16.mxu0 %v1916
  %2897 = vmatpush1.bf16.msra.mxu0 %v1915
  %2898 = vmatprep.subr.bf16.mxu0 %v1920
  %2899 = vmatpush1.bf16.msra.mxu0 %v1919
  %2900 = vmatprep.subr.bf16.mxu0 %v1924
  %2901 = vmatpush1.bf16.msra.mxu0 %v1923
  %2902 = vmatprep.subr.bf16.mxu0 %v1928
  %2903 = vmatpush1.bf16.msra.mxu0 %v1927
  %2904 = vmatprep.subr.bf16.mxu0 %v1932
  %2905 = vmatpush1.bf16.msra.mxu0 %v1931
  %2906 = vmatprep.subr.bf16.mxu0 %v1936
  %2907 = vmatpush1.bf16.msra.mxu0 %v1935
  %2908 = vmatprep.subr.bf16.mxu0 %v1940
  %2909 = vmatpush1.bf16.msra.mxu0 %v1939
  %2910 = vmatprep.subr.bf16.mxu0 %v1944
  %2911 = vmatpush1.bf16.msra.mxu0 %v1943
  %2912 = vmatprep.subr.bf16.mxu0 %v1948
  %2913 = vmatpush1.bf16.msra.mxu0 %v1947
  %2914 = vmatprep.subr.bf16.mxu0 %v1952
  %2915 = vmatpush1.bf16.msra.mxu0 %v1951
  %2916 = vmatprep.subr.bf16.mxu0 %v1956
  %2917 = vmatpush1.bf16.msra.mxu0 %v1955
  %2918 = vmatprep.subr.bf16.mxu0 %v1960
  %2919 = vmatpush1.bf16.msra.mxu0 %v1959
  %2920 = vmatprep.subr.bf16.mxu0 %v1964
  %2921 = vmatpush1.bf16.msra.mxu0 %v1963
  %2922 = vmatprep.subr.bf16.mxu0 %v1968
  %2923 = vmatpush1.bf16.msra.mxu0 %v1967
  %2924 = vmatprep.subr.bf16.mxu0 %v1972
  %2925 = vmatpush1.bf16.msra.mxu0 %v1971
  %2926 = vmatprep.subr.bf16.mxu0 %v1976
  %2927 = vmatpush1.bf16.msra.mxu0 %v1975
  %2928 = vmatprep.mubr.bf16.mxu0 %v465
  %2929 = vmatmul.mubr.bf16.gmra.mrb[0].mxu0 %v464
  %v2930 = vpop.f32.mrb[0].mxu0
  %v2931 = vadd.f32 %v2890, %v2930
  %v2932 = vpop.f32.mrb[0].mxu0
  %v2933 = vadd.f32 %v2892, %v2932
  %v2934 = vpop.f32.mrb[0].mxu0
  %v2935 = vpop.f32.mrb[0].mxu0
  %2936 = vdwg.mxu0
  %2937 = vmatprep.subr.bf16.mxu0 %v1980
  %2938 = vmatpush1.bf16.msra.mxu0 %v1979
  %2939 = vmatprep.subr.bf16.mxu0 %v1984
  %2940 = vmatpush1.bf16.msra.mxu0 %v1983
  %2941 = vmatprep.subr.bf16.mxu0 %v1988
  %2942 = vmatpush1.bf16.msra.mxu0 %v1987
  %2943 = vmatprep.subr.bf16.mxu0 %v1992
  %2944 = vmatpush1.bf16.msra.mxu0 %v1991
  %2945 = vmatprep.subr.bf16.mxu0 %v1996
  %2946 = vmatpush1.bf16.msra.mxu0 %v1995
  %2947 = vmatprep.subr.bf16.mxu0 %v2000
  %2948 = vmatpush1.bf16.msra.mxu0 %v1999
  %2949 = vmatprep.subr.bf16.mxu0 %v2004
  %2950 = vmatpush1.bf16.msra.mxu0 %v2003
  %2951 = vmatprep.subr.bf16.mxu0 %v2008
  %2952 = vmatpush1.bf16.msra.mxu0 %v2007
  %2953 = vmatprep.subr.bf16.mxu0 %v2012
  %2954 = vmatpush1.bf16.msra.mxu0 %v2011
  %2955 = vmatprep.subr.bf16.mxu0 %v2016
  %2956 = vmatpush1.bf16.msra.mxu0 %v2015
  %2957 = vmatprep.subr.bf16.mxu0 %v2020
  %2958 = vmatpush1.bf16.msra.mxu0 %v2019
  %2959 = vmatprep.subr.bf16.mxu0 %v2024
  %2960 = vmatpush1.bf16.msra.mxu0 %v2023
  %2961 = vmatprep.subr.bf16.mxu0 %v2028
  %2962 = vmatpush1.bf16.msra.mxu0 %v2027
  %2963 = vmatprep.subr.bf16.mxu0 %v2032
  %2964 = vmatpush1.bf16.msra.mxu0 %v2031
  %2965 = vmatprep.subr.bf16.mxu0 %v2036
  %2966 = vmatpush1.bf16.msra.mxu0 %v2035
  %2967 = vmatprep.subr.bf16.mxu0 %v2040
  %2968 = vmatpush1.bf16.msra.mxu0 %v2039
  %2969 = vmatprep.mubr.bf16.mxu0 %v467
  %2970 = vmatmul.mubr.bf16.gmra.mrb[0].mxu0 %v466
  %v2971 = vpop.f32.mrb[0].mxu0
  %v2972 = vadd.f32 %v2931, %v2971
  %v2973 = vpop.f32.mrb[0].mxu0
  %v2974 = vadd.f32 %v2933, %v2973
  %v2975 = vpop.f32.mrb[0].mxu0
  %v2976 = vpop.f32.mrb[0].mxu0
  %2977 = vdwg.mxu0
  %2978 = vmatprep.subr.bf16.mxu0 %v2044
  %2979 = vmatpush1.bf16.msra.mxu0 %v2043
  %2980 = vmatprep.subr.bf16.mxu0 %v2048
  %2981 = vmatpush1.bf16.msra.mxu0 %v2047
  %2982 = vmatprep.subr.bf16.mxu0 0
  %2983 = vmatpush1.bf16.msra.mxu0 0
  %2984 = vmatprep.subr.bf16.mxu0 0
  %2985 = vmatpush1.bf16.msra.mxu0 0
  %2986 = vmatprep.subr.bf16.mxu0 0
  %2987 = vmatpush1.bf16.msra.mxu0 0
  %2988 = vmatprep.subr.bf16.mxu0 0
  %2989 = vmatpush1.bf16.msra.mxu0 0
  %2990 = vmatprep.subr.bf16.mxu0 0
  %2991 = vmatpush1.bf16.msra.mxu0 0
  %2992 = vmatprep.subr.bf16.mxu0 0
  %2993 = vmatpush1.bf16.msra.mxu0 0
  %2994 = vmatprep.subr.bf16.mxu0 0
  %2995 = vmatpush1.bf16.msra.mxu0 0
  %2996 = vmatprep.subr.bf16.mxu0 0
  %2997 = vmatpush1.bf16.msra.mxu0 0
  %2998 = vmatprep.subr.bf16.mxu0 0
  %2999 = vmatpush1.bf16.msra.mxu0 0
  %3000 = vmatprep.subr.bf16.mxu0 0
  %3001 = vmatpush1.bf16.msra.mxu0 0
  %3002 = vmatprep.subr.bf16.mxu0 0
  %3003 = vmatpush1.bf16.msra.mxu0 0
  %3004 = vmatprep.subr.bf16.mxu0 0
  %3005 = vmatpush1.bf16.msra.mxu0 0
  %3006 = vmatprep.subr.bf16.mxu0 0
  %3007 = vmatpush1.bf16.msra.mxu0 0
  %3008 = vmatprep.subr.bf16.mxu0 0
  %3009 = vmatpush1.bf16.msra.mxu0 0
  %3010 = vmatprep.mubr.bf16.mxu0 0
  %3011 = vmatmul.mubr.bf16.gmra.mrb[0].mxu0 %v2443
  %v3012 = vpop.f32.mrb[0].mxu0
  %v3013 = vadd.f32 %v2972, %v3012
  %v3014 = vpop.f32.mrb[0].mxu0
  %v3015 = vadd.f32 %v2974, %v3014
  %v3016 = vpop.f32.mrb[0].mxu0
  %v3017 = vpop.f32.mrb[0].mxu0
  %3018 = vdwg.mxu0
  %v3019 = vmax.f32 %v2726, 0.0
  %v3020 = vmax.f32 %v2728, 0.0
  %v3021 = vmax.f32 %v3013, 0.0
  %v3022 = vmax.f32 %v3015, 0.0
  %3024 = vrot.lane.b32.xlu0 %v3019, 96
  %v3025 = vpop.permute.xlu0 %3024
  %v3027 = vmax.f32 %v3019, %v3025
  %3028 = vrot.lane.b32.xlu0 %v3019, 64
  %v3029 = vpop.permute.xlu0 %3028
  %v3031 = vmax.f32 %v3027, %v3029
  %3032 = vrot.lane.b32.xlu0 %v3019, 32
  %v3033 = vpop.permute.xlu0 %3032
  %v3035 = vmax.f32 %v3031, %v3033
  %v3036 = vmax.f32 %v3035, %v3020
  %3038 = vrot.lane.b32.xlu0 %v3020, 96
  %v3039 = vpop.permute.xlu0 %3038
  %v3041 = vmax.f32 %v3036, %v3039
  %3042 = vrot.lane.b32.xlu0 %v3020, 64
  %v3043 = vpop.permute.xlu0 %3042
  %v3045 = vmax.f32 %v3041, %v3043
  %3046 = vrot.lane.b32.xlu0 %v3020, 32
  %v3047 = vpop.permute.xlu0 %3046
  %v3049 = vmax.f32 %v3045, %v3047
  %v3050 = vmax.f32 %v3049, %v3021
  %3052 = vrot.lane.b32.xlu0 %v3021, 96
  %v3053 = vpop.permute.xlu0 %3052
  %v3055 = vmax.f32 %v3050, %v3053
  %3056 = vrot.lane.b32.xlu0 %v3021, 64
  %v3057 = vpop.permute.xlu0 %3056
  %v3059 = vmax.f32 %v3055, %v3057
  %3060 = vrot.lane.b32.xlu0 %v3021, 32
  %v3061 = vpop.permute.xlu0 %3060
  %v3063 = vmax.f32 %v3059, %v3061
  %v3064 = vmax.f32 %v3063, %v3022
  %3066 = vrot.lane.b32.xlu0 %v3022, 96
  %v3067 = vpop.permute.xlu0 %3066
  %v3069 = vmax.f32 %v3064, %v3067
  %3070 = vrot.lane.b32.xlu0 %v3022, 64
  %v3071 = vpop.permute.xlu0 %3070
  %v3073 = vmax.f32 %v3069, %v3071
  %3074 = vrot.lane.b32.xlu0 %v3022, 32
  %v3075 = vpop.permute.xlu0 %3074
  %v3077 = vmax.f32 %v3073, %v3075
  %v3078 = vpack.c.bf16 %v3077, %v3077
  %vm3079 = vcmask 257024
  %3080 = vst.msk [vmem:[%s3] sm:$0xf] %vm3079, %v3078
  // Predicated region
  $region14: #{_lambda_.6} parent=0 // pred_check
    _
  $region15: #{_lambda_.6} parent=0 // pred_check_branch
    %3082 = sbr.rel (0) target = $region17
  $region16: #{_lambda_.6} parent=0 // pred_region
    _
  $region17: #{_lambda_.6} parent=0 // pred_fallthru
    _
  // Predicated region
  $region18: #{_lambda_.6} parent=0 // pred_check
    _
  $region19: #{_lambda_.6} parent=0 // pred_check_branch
    %3084 = sbr.rel (0) target = $region21
  $region20: #{_lambda_.6} parent=0 // pred_region
    _
  $region21: #{_lambda_.6} parent=0 // pred_fallthru
    _

// kernel: _lambda_.7
$region0: #{_lambda_.7}
  #allocation0 [shape = 'u32[]', space=smem, size = 0x4, offset = 0x4, fixed_abs, tag = 'smem constant byte address 0x4 - core index']
  #allocation1 [shape = 'u32[144,128]{1,0:T(1,128)}', space=vmem, size = 0x12000, scoped, tag = 'internal scratch']
  %s0 = inlined_call_operand.vmem [shape: bf16[2,32], index: 0, kind: input, shape index: {}]
  %s1 = inlined_call_operand.vmem [shape: bf16[32,800], index: 1, kind: input, shape index: {}]
  %s2 = inlined_call_operand.vmem [shape: f32[1,800], index: 2, kind: input, shape index: {}]
  %s3 = inlined_call_operand.vmem [shape: bf16[32,512], index: 3, kind: input, shape index: {}]
  %s4 = inlined_call_operand.vmem [shape: f32[1,512], index: 4, kind: input, shape index: {}]
  %s5 = inlined_call_operand.vmem [shape: bf16[32,512], index: 5, kind: input, shape index: {}]
  %s6 = inlined_call_operand.vmem [shape: f32[1,512], index: 6, kind: input, shape index: {}]
  %s7 = inlined_call_operand.hbm [shape: f32[2,32], index: 7, kind: output, shape index: {}]
  %s8 = sld [smem:[#allocation0]]
  $region38: #{_lambda_.7} parent=0
    _
  %s10 = ssub.s32 1, %s8
  %s11 = scalar_select 0, %s10, %s8
  $region1: #{_lambda_.7} parent=0
    #allocation2 [shape = 'u8[1024]{0}', space=vmem, size = 0x400, scoped, tag = 'output window, operand 0, single buffered']
    #allocation3 [shape = 's32[1]{0}', space=sflag, size = 0x4, scoped, tag = 'scoped memory for _lambda_.7']
    %12 = vsyncpa [#allocation3], 0
    // Predicated region
    $region2: #{_lambda_.7} parent=1 // pred_check
      _
    $region3: #{_lambda_.7} parent=1 // pred_check_branch
      %14 = sbr.rel (0) target = $region5
    $region4: #{_lambda_.7} parent=1 // pred_region
      _
    $region5: #{_lambda_.7} parent=1 // pred_fallthru
      _
    // Predicated region
    $region6: #{_lambda_.7} parent=1 // pred_check
      _
    $region7: #{_lambda_.7} parent=1 // pred_check_branch
      %16 = sbr.rel (0) target = $region9
    $region8: #{_lambda_.7} parent=1 // pred_region
      _
    $region9: #{_lambda_.7} parent=1 // pred_fallthru
      _
    // Predicated region
    $region10: #{_lambda_.7} parent=1 // pred_check
      _
    $region11: #{_lambda_.7} parent=1 // pred_check_branch
      %18 = sbr.rel (0) target = $region13
    $region12: #{_lambda_.7} parent=1 // pred_region
      _
    $region13: #{_lambda_.7} parent=1 // pred_fallthru
      _
    // Predicated region
    $region14: #{_lambda_.7} parent=1 // pred_check
      _
    $region15: #{_lambda_.7} parent=1 // pred_check_branch
      %20 = sbr.rel (0) target = $region17
    $region16: #{_lambda_.7} parent=1 // pred_region
      _
    $region17: #{_lambda_.7} parent=1 // pred_fallthru
      _
    // Predicated region
    $region18: #{_lambda_.7} parent=1 // pred_check
      _
    $region19: #{_lambda_.7} parent=1 // pred_check_branch
      %22 = sbr.rel (0) target = $region21
    $region20: #{_lambda_.7} parent=1 // pred_region
      _
    $region21: #{_lambda_.7} parent=1 // pred_fallthru
      _
    // Predicated region
    $region22: #{_lambda_.7} parent=1 // pred_check
      _
    $region23: #{_lambda_.7} parent=1 // pred_check_branch
      %24 = sbr.rel (0) target = $region25
    $region24: #{_lambda_.7} parent=1 // pred_region
      _
    $region25: #{_lambda_.7} parent=1 // pred_fallthru
      _
    // Predicated region
    $region26: #{_lambda_.7} parent=1 // pred_check
      _
    $region27: #{_lambda_.7} parent=1 // pred_check_branch
      %26 = sbr.rel (0) target = $region29
    $region28: #{_lambda_.7} parent=1 // pred_region
      _
    $region29: #{_lambda_.7} parent=1 // pred_fallthru
      _
    %v28 = vld [vmem:[%s0] sm:$0x1]
    %v29 = vld [vmem:[%s1] sm:$0xff]
    %v30 = vld [vmem:[%s1 + $0x8] sm:$0xff]
    %v31 = vld [vmem:[%s1 + $0x10] sm:$0xff]
    %v32 = vld [vmem:[%s1 + $0x18] sm:$0xf]
    %v33 = vld [vmem:[%s1 + $0x1c] sm:$0xff]
    %v34 = vld [vmem:[%s1 + $0x24] sm:$0xff]
    %v35 = vld [vmem:[%s1 + $0x2c] sm:$0xff]
    %v36 = vld [vmem:[%s1 + $0x34] sm:$0xf]
    %v37 = vld [vmem:[%s1 + $0x38] sm:$0xff]
    %v38 = vld [vmem:[%s1 + $0x40] sm:$0xff]
    %v39 = vld [vmem:[%s1 + $0x48] sm:$0xff]
    %v40 = vld [vmem:[%s1 + $0x50] sm:$0xf]
    %v41 = vld [vmem:[%s1 + $0x54] sm:$0xff]
    %v42 = vld [vmem:[%s1 + $0x5c] sm:$0xff]
    %v43 = vld [vmem:[%s1 + $0x64] sm:$0xff]
    %v44 = vld [vmem:[%s1 + $0x6c] sm:$0xf]
    %v45 = vld [vmem:[%s2] sm:$0x7f]
    %v47 = vlaneseq
    %v48 = vshrl.u32 %v47, 7
    %v49 = vsub.s32 0, %v48
    %v50 = vrot.slane %v45, %v49
    %v51 = vlaneseq
    %v52 = vshrl.u32 %v51, 7
    %v53 = vsub.s32 1, %v52
    %v54 = vrot.slane %v45, %v53
    %v55 = vlaneseq
    %v56 = vshrl.u32 %v55, 7
    %v57 = vsub.s32 2, %v56
    %v58 = vrot.slane %v45, %v57
    %v59 = vlaneseq
    %v60 = vshrl.u32 %v59, 7
    %v61 = vsub.s32 3, %v60
    %v62 = vrot.slane %v45, %v61
    %v63 = vlaneseq
    %v64 = vshrl.u32 %v63, 7
    %v65 = vsub.s32 4, %v64
    %v66 = vrot.slane %v45, %v65
    %v67 = vlaneseq
    %v68 = vshrl.u32 %v67, 7
    %v69 = vsub.s32 5, %v68
    %v70 = vrot.slane %v45, %v69
    %v71 = vlaneseq
    %v72 = vshrl.u32 %v71, 7
    %v73 = vsub.s32 6, %v72
    %v74 = vrot.slane %v45, %v73
    %v98 = vunpack.c.l.b16 %v29
    %v99 = vunpack.c.h.b16 %v29
    %v100 = vunpack.c.l.b16 %v30
    %v101 = vunpack.c.h.b16 %v30
    %v102 = vunpack.c.l.b16 %v31
    %v103 = vunpack.c.h.b16 %v31
    %v104 = vunpack.c.l.b16 %v32
    %v105 = vunpack.c.l.b16 %v33
    %v106 = vunpack.c.h.b16 %v33
    %v107 = vunpack.c.l.b16 %v34
    %v108 = vunpack.c.h.b16 %v34
    %v109 = vunpack.c.l.b16 %v35
    %v110 = vunpack.c.h.b16 %v35
    %v111 = vunpack.c.l.b16 %v36
    %v112 = vunpack.c.l.b16 %v37
    %v113 = vunpack.c.h.b16 %v37
    %v114 = vunpack.c.l.b16 %v38
    %v115 = vunpack.c.h.b16 %v38
    %v116 = vunpack.c.l.b16 %v39
    %v117 = vunpack.c.h.b16 %v39
    %v118 = vunpack.c.l.b16 %v40
    %v119 = vunpack.c.l.b16 %v41
    %v120 = vunpack.c.h.b16 %v41
    %v121 = vunpack.c.l.b16 %v42
    %v122 = vunpack.c.h.b16 %v42
    %v123 = vunpack.c.l.b16 %v43
    %v124 = vunpack.c.h.b16 %v43
    %v125 = vunpack.c.l.b16 %v44
    %v126 = vpack.c.b16 %v105, %v98
    %v127 = vpack.c.b16 %v106, %v99
    %v128 = vpack.c.b16 %v107, %v100
    %v129 = vpack.c.b16 %v108, %v101
    %v130 = vpack.c.b16 %v109, %v102
    %v131 = vpack.c.b16 %v110, %v103
    %v132 = vpack.c.b16 %v111, %v104
    %v133 = vpack.c.b16 %v119, %v112
    %v134 = vpack.c.b16 %v120, %v113
    %v135 = vpack.c.b16 %v121, %v114
    %v136 = vpack.c.b16 %v122, %v115
    %v137 = vpack.c.b16 %v123, %v116
    %v138 = vpack.c.b16 %v124, %v117
    %v139 = vpack.c.b16 %v125, %v118
    %vm154 = vcmask 261120
    %v156 = vsel %vm154, %v28, 0
    %158 = vmatprep.subr.bf16.mxu0 %v127
    %159 = vmatpush1.bf16.msra.mxu0 %v126
    %160 = vmatprep.subr.bf16.mxu0 %v134
    %161 = vmatpush1.bf16.msra.mxu0 %v133
    %162 = vmatprep.subr.bf16.mxu0 0
    %163 = vmatpush1.bf16.msra.mxu0 0
    %164 = vmatprep.subr.bf16.mxu0 0
    %165 = vmatpush1.bf16.msra.mxu0 0
    %166 = vmatprep.subr.bf16.mxu0 0
    %167 = vmatpush1.bf16.msra.mxu0 0
    %168 = vmatprep.subr.bf16.mxu0 0
    %169 = vmatpush1.bf16.msra.mxu0 0
    %170 = vmatprep.subr.bf16.mxu0 0
    %171 = vmatpush1.bf16.msra.mxu0 0
    %172 = vmatprep.subr.bf16.mxu0 0
    %173 = vmatpush1.bf16.msra.mxu0 0
    %174 = vmatprep.subr.bf16.mxu0 0
    %175 = vmatpush1.bf16.msra.mxu0 0
    %176 = vmatprep.subr.bf16.mxu0 0
    %177 = vmatpush1.bf16.msra.mxu0 0
    %178 = vmatprep.subr.bf16.mxu0 0
    %179 = vmatpush1.bf16.msra.mxu0 0
    %180 = vmatprep.subr.bf16.mxu0 0
    %181 = vmatpush1.bf16.msra.mxu0 0
    %182 = vmatprep.subr.bf16.mxu0 0
    %183 = vmatpush1.bf16.msra.mxu0 0
    %184 = vmatprep.subr.bf16.mxu0 0
    %185 = vmatpush1.bf16.msra.mxu0 0
    %186 = vmatprep.subr.bf16.mxu0 0
    %187 = vmatpush1.bf16.msra.mxu0 0
    %188 = vmatprep.subr.bf16.mxu0 0
    %189 = vmatpush1.bf16.msra.mxu0 0
    %190 = vmatprep.mubr.bf16.mxu0 0
    %191 = vmatmul.mubr.bf16.gmra.mrb[0].mxu0 %v156
    %v192 = vpop.f32.mrb[0].mxu0
    %v193 = vadd.f32 %v50, %v192
    %v194 = vpop.f32.mrb[0].mxu0
    %v195 = vadd.f32 %v54, %v194
    %v196 = vpop.f32.mrb[0].mxu0
    %v197 = vpop.f32.mrb[0].mxu0
    %198 = vdwg.mxu0
    %199 = vmatprep.subr.bf16.mxu0 %v129
    %200 = vmatpush1.bf16.msra.mxu0 %v128
    %201 = vmatprep.subr.bf16.mxu0 %v136
    %202 = vmatpush1.bf16.msra.mxu0 %v135
    %203 = vmatprep.subr.bf16.mxu0 0
    %204 = vmatpush1.bf16.msra.mxu0 0
    %205 = vmatprep.subr.bf16.mxu0 0
    %206 = vmatpush1.bf16.msra.mxu0 0
    %207 = vmatprep.subr.bf16.mxu0 0
    %208 = vmatpush1.bf16.msra.mxu0 0
    %209 = vmatprep.subr.bf16.mxu0 0
    %210 = vmatpush1.bf16.msra.mxu0 0
    %211 = vmatprep.subr.bf16.mxu0 0
    %212 = vmatpush1.bf16.msra.mxu0 0
    %213 = vmatprep.subr.bf16.mxu0 0
    %214 = vmatpush1.bf16.msra.mxu0 0
    %215 = vmatprep.subr.bf16.mxu0 0
    %216 = vmatpush1.bf16.msra.mxu0 0
    %217 = vmatprep.subr.bf16.mxu0 0
    %218 = vmatpush1.bf16.msra.mxu0 0
    %219 = vmatprep.subr.bf16.mxu0 0
    %220 = vmatpush1.bf16.msra.mxu0 0
    %221 = vmatprep.subr.bf16.mxu0 0
    %222 = vmatpush1.bf16.msra.mxu0 0
    %223 = vmatprep.subr.bf16.mxu0 0
    %224 = vmatpush1.bf16.msra.mxu0 0
    %225 = vmatprep.subr.bf16.mxu0 0
    %226 = vmatpush1.bf16.msra.mxu0 0
    %227 = vmatprep.subr.bf16.mxu0 0
    %228 = vmatpush1.bf16.msra.mxu0 0
    %229 = vmatprep.subr.bf16.mxu0 0
    %230 = vmatpush1.bf16.msra.mxu0 0
    %231 = vmatprep.mubr.bf16.mxu0 0
    %232 = vmatmul.mubr.bf16.gmra.mrb[0].mxu0 %v156
    %v233 = vpop.f32.mrb[0].mxu0
    %v234 = vadd.f32 %v58, %v233
    %v235 = vpop.f32.mrb[0].mxu0
    %v236 = vadd.f32 %v62, %v235
    %v237 = vpop.f32.mrb[0].mxu0
    %v238 = vpop.f32.mrb[0].mxu0
    %239 = vdwg.mxu0
    %240 = vmatprep.subr.bf16.mxu0 %v131
    %241 = vmatpush1.bf16.msra.mxu0 %v130
    %242 = vmatprep.subr.bf16.mxu0 %v138
    %243 = vmatpush1.bf16.msra.mxu0 %v137
    %244 = vmatprep.subr.bf16.mxu0 0
    %245 = vmatpush1.bf16.msra.mxu0 0
    %246 = vmatprep.subr.bf16.mxu0 0
    %247 = vmatpush1.bf16.msra.mxu0 0
    %248 = vmatprep.subr.bf16.mxu0 0
    %249 = vmatpush1.bf16.msra.mxu0 0
    %250 = vmatprep.subr.bf16.mxu0 0
    %251 = vmatpush1.bf16.msra.mxu0 0
    %252 = vmatprep.subr.bf16.mxu0 0
    %253 = vmatpush1.bf16.msra.mxu0 0
    %254 = vmatprep.subr.bf16.mxu0 0
    %255 = vmatpush1.bf16.msra.mxu0 0
    %256 = vmatprep.subr.bf16.mxu0 0
    %257 = vmatpush1.bf16.msra.mxu0 0
    %258 = vmatprep.subr.bf16.mxu0 0
    %259 = vmatpush1.bf16.msra.mxu0 0
    %260 = vmatprep.subr.bf16.mxu0 0
    %261 = vmatpush1.bf16.msra.mxu0 0
    %262 = vmatprep.subr.bf16.mxu0 0
    %263 = vmatpush1.bf16.msra.mxu0 0
    %264 = vmatprep.subr.bf16.mxu0 0
    %265 = vmatpush1.bf16.msra.mxu0 0
    %266 = vmatprep.subr.bf16.mxu0 0
    %267 = vmatpush1.bf16.msra.mxu0 0
    %268 = vmatprep.subr.bf16.mxu0 0
    %269 = vmatpush1.bf16.msra.mxu0 0
    %270 = vmatprep.subr.bf16.mxu0 0
    %271 = vmatpush1.bf16.msra.mxu0 0
    %272 = vmatprep.mubr.bf16.mxu0 0
    %273 = vmatmul.mubr.bf16.gmra.mrb[0].mxu0 %v156
    %v274 = vpop.f32.mrb[0].mxu0
    %v275 = vadd.f32 %v66, %v274
    %v276 = vpop.f32.mrb[0].mxu0
    %v277 = vadd.f32 %v70, %v276
    %v278 = vpop.f32.mrb[0].mxu0
    %v279 = vpop.f32.mrb[0].mxu0
    %280 = vdwg.mxu0
    %281 = vmatprep.subr.bf16.mxu0 0
    %282 = vmatpush1.bf16.msra.mxu0 %v132
    %283 = vmatprep.subr.bf16.mxu0 0
    %284 = vmatpush1.bf16.msra.mxu0 %v139
    %285 = vmatprep.subr.bf16.mxu0 0
    %286 = vmatpush1.bf16.msra.mxu0 0
    %287 = vmatprep.subr.bf16.mxu0 0
    %288 = vmatpush1.bf16.msra.mxu0 0
    %289 = vmatprep.subr.bf16.mxu0 0
    %290 = vmatpush1.bf16.msra.mxu0 0
    %291 = vmatprep.subr.bf16.mxu0 0
    %292 = vmatpush1.bf16.msra.mxu0 0
    %293 = vmatprep.subr.bf16.mxu0 0
    %294 = vmatpush1.bf16.msra.mxu0 0
    %295 = vmatprep.subr.bf16.mxu0 0
    %296 = vmatpush1.bf16.msra.mxu0 0
    %297 = vmatprep.subr.bf16.mxu0 0
    %298 = vmatpush1.bf16.msra.mxu0 0
    %299 = vmatprep.subr.bf16.mxu0 0
    %300 = vmatpush1.bf16.msra.mxu0 0
    %301 = vmatprep.subr.bf16.mxu0 0
    %302 = vmatpush1.bf16.msra.mxu0 0
    %303 = vmatprep.subr.bf16.mxu0 0
    %304 = vmatpush1.bf16.msra.mxu0 0
    %305 = vmatprep.subr.bf16.mxu0 0
    %306 = vmatpush1.bf16.msra.mxu0 0
    %307 = vmatprep.subr.bf16.mxu0 0
    %308 = vmatpush1.bf16.msra.mxu0 0
    %309 = vmatprep.subr.bf16.mxu0 0
    %310 = vmatpush1.bf16.msra.mxu0 0
    %311 = vmatprep.subr.bf16.mxu0 0
    %312 = vmatpush1.bf16.msra.mxu0 0
    %313 = vmatprep.mubr.bf16.mxu0 0
    %314 = vmatmul.mubr.bf16.gmra.mrb[0].mxu0 %v156
    %v315 = vpop.f32.mrb[0].mxu0
    %v316 = vadd.f32 %v74, %v315
    %v317 = vpop.f32.mrb[0].mxu0
    %v318 = vpop.f32.mrb[0].mxu0
    %v319 = vpop.f32.mrb[0].mxu0
    %320 = vdwg.mxu0
    %v321 = vmax.f32 %v193, 0.0
    %v322 = vmax.f32 %v195, 0.0
    %v323 = vmax.f32 %v234, 0.0
    %v324 = vmax.f32 %v236, 0.0
    %v325 = vmax.f32 %v275, 0.0
    %v326 = vmax.f32 %v277, 0.0
    %v327 = vmax.f32 %v316, 0.0
    %329 = vrot.lane.b32.xlu0 %v321, 96
    %v330 = vpop.permute.xlu0 %329
    %v332 = vmax.f32 %v321, %v330
    %333 = vrot.lane.b32.xlu0 %v321, 64
    %v334 = vpop.permute.xlu0 %333
    %v336 = vmax.f32 %v332, %v334
    %337 = vrot.lane.b32.xlu0 %v321, 32
    %v338 = vpop.permute.xlu0 %337
    %v340 = vmax.f32 %v336, %v338
    %v341 = vmax.f32 %v340, %v322
    %343 = vrot.lane.b32.xlu0 %v322, 96
    %v344 = vpop.permute.xlu0 %343
    %v346 = vmax.f32 %v341, %v344
    %347 = vrot.lane.b32.xlu0 %v322, 64
    %v348 = vpop.permute.xlu0 %347
    %v350 = vmax.f32 %v346, %v348
    %351 = vrot.lane.b32.xlu0 %v322, 32
    %v352 = vpop.permute.xlu0 %351
    %v354 = vmax.f32 %v350, %v352
    %v355 = vmax.f32 %v354, %v323
    %357 = vrot.lane.b32.xlu0 %v323, 96
    %v358 = vpop.permute.xlu0 %357
    %v360 = vmax.f32 %v355, %v358
    %361 = vrot.lane.b32.xlu0 %v323, 64
    %v362 = vpop.permute.xlu0 %361
    %v364 = vmax.f32 %v360, %v362
    %365 = vrot.lane.b32.xlu0 %v323, 32
    %v366 = vpop.permute.xlu0 %365
    %v368 = vmax.f32 %v364, %v366
    %v369 = vmax.f32 %v368, %v324
    %371 = vrot.lane.b32.xlu0 %v324, 96
    %v372 = vpop.permute.xlu0 %371
    %v374 = vmax.f32 %v369, %v372
    %375 = vrot.lane.b32.xlu0 %v324, 64
    %v376 = vpop.permute.xlu0 %375
    %v378 = vmax.f32 %v374, %v376
    %379 = vrot.lane.b32.xlu0 %v324, 32
    %v380 = vpop.permute.xlu0 %379
    %v382 = vmax.f32 %v378, %v380
    %v383 = vmax.f32 %v382, %v325
    %385 = vrot.lane.b32.xlu0 %v325, 96
    %v386 = vpop.permute.xlu0 %385
    %v388 = vmax.f32 %v383, %v386
    %389 = vrot.lane.b32.xlu0 %v325, 64
    %v390 = vpop.permute.xlu0 %389
    %v392 = vmax.f32 %v388, %v390
    %393 = vrot.lane.b32.xlu0 %v325, 32
    %v394 = vpop.permute.xlu0 %393
    %v396 = vmax.f32 %v392, %v394
    %v397 = vmax.f32 %v396, %v326
    %399 = vrot.lane.b32.xlu0 %v326, 96
    %v400 = vpop.permute.xlu0 %399
    %v402 = vmax.f32 %v397, %v400
    %403 = vrot.lane.b32.xlu0 %v326, 64
    %v404 = vpop.permute.xlu0 %403
    %v406 = vmax.f32 %v402, %v404
    %407 = vrot.lane.b32.xlu0 %v326, 32
    %v408 = vpop.permute.xlu0 %407
    %v410 = vmax.f32 %v406, %v408
    %v411 = vmax.f32 %v410, %v327
    %v412 = vpack.c.bf16 %v411, %v411
    %v413 = vld [vmem:[%s3] sm:$0xff]
    %v414 = vld [vmem:[%s3 + $0x8] sm:$0xff]
    %v415 = vld [vmem:[%s3 + $0x10] sm:$0xff]
    %v416 = vld [vmem:[%s3 + $0x18] sm:$0xff]
    %v417 = vld [vmem:[%s3 + $0x20] sm:$0xff]
    %v418 = vld [vmem:[%s3 + $0x28] sm:$0xff]
    %v419 = vld [vmem:[%s3 + $0x30] sm:$0xff]
    %v420 = vld [vmem:[%s3 + $0x38] sm:$0xff]
    %v421 = vld [vmem:[%s4] sm:$0xf]
    %v423 = vlaneseq
    %v424 = vshrl.u32 %v423, 7
    %v425 = vsub.s32 0, %v424
    %v426 = vrot.slane %v421, %v425
    %v427 = vlaneseq
    %v428 = vshrl.u32 %v427, 7
    %v429 = vsub.s32 1, %v428
    %v430 = vrot.slane %v421, %v429
    %v431 = vlaneseq
    %v432 = vshrl.u32 %v431, 7
    %v433 = vsub.s32 2, %v432
    %v434 = vrot.slane %v421, %v433
    %v435 = vlaneseq
    %v436 = vshrl.u32 %v435, 7
    %v437 = vsub.s32 3, %v436
    %v438 = vrot.slane %v421, %v437
    %v451 = vunpack.c.l.b16 %v413
    %v452 = vunpack.c.h.b16 %v413
    %v453 = vunpack.c.l.b16 %v414
    %v454 = vunpack.c.h.b16 %v414
    %v455 = vunpack.c.l.b16 %v415
    %v456 = vunpack.c.h.b16 %v415
    %v457 = vunpack.c.l.b16 %v416
    %v458 = vunpack.c.h.b16 %v416
    %v459 = vunpack.c.l.b16 %v417
    %v460 = vunpack.c.h.b16 %v417
    %v461 = vunpack.c.l.b16 %v418
    %v462 = vunpack.c.h.b16 %v418
    %v463 = vunpack.c.l.b16 %v419
    %v464 = vunpack.c.h.b16 %v419
    %v465 = vunpack.c.l.b16 %v420
    %v466 = vunpack.c.h.b16 %v420
    %v467 = vpack.c.b16 %v455, %v451
    %v468 = vpack.c.b16 %v456, %v452
    %v469 = vpack.c.b16 %v457, %v453
    %v470 = vpack.c.b16 %v458, %v454
    %v471 = vpack.c.b16 %v463, %v459
    %v472 = vpack.c.b16 %v464, %v460
    %v473 = vpack.c.b16 %v465, %v461
    %v474 = vpack.c.b16 %v466, %v462
    %v484 = vsel %vm154, %v412, 0
    %486 = vmatprep.subr.bf16.mxu0 %v468
    %487 = vmatpush1.bf16.msra.mxu0 %v467
    %488 = vmatprep.subr.bf16.mxu0 %v472
    %489 = vmatpush1.bf16.msra.mxu0 %v471
    %490 = vmatprep.subr.bf16.mxu0 0
    %491 = vmatpush1.bf16.msra.mxu0 0
    %492 = vmatprep.subr.bf16.mxu0 0
    %493 = vmatpush1.bf16.msra.mxu0 0
    %494 = vmatprep.subr.bf16.mxu0 0
    %495 = vmatpush1.bf16.msra.mxu0 0
    %496 = vmatprep.subr.bf16.mxu0 0
    %497 = vmatpush1.bf16.msra.mxu0 0
    %498 = vmatprep.subr.bf16.mxu0 0
    %499 = vmatpush1.bf16.msra.mxu0 0
    %500 = vmatprep.subr.bf16.mxu0 0
    %501 = vmatpush1.bf16.msra.mxu0 0
    %502 = vmatprep.subr.bf16.mxu0 0
    %503 = vmatpush1.bf16.msra.mxu0 0
    %504 = vmatprep.subr.bf16.mxu0 0
    %505 = vmatpush1.bf16.msra.mxu0 0
    %506 = vmatprep.subr.bf16.mxu0 0
    %507 = vmatpush1.bf16.msra.mxu0 0
    %508 = vmatprep.subr.bf16.mxu0 0
    %509 = vmatpush1.bf16.msra.mxu0 0
    %510 = vmatprep.subr.bf16.mxu0 0
    %511 = vmatpush1.bf16.msra.mxu0 0
    %512 = vmatprep.subr.bf16.mxu0 0
    %513 = vmatpush1.bf16.msra.mxu0 0
    %514 = vmatprep.subr.bf16.mxu0 0
    %515 = vmatpush1.bf16.msra.mxu0 0
    %516 = vmatprep.subr.bf16.mxu0 0
    %517 = vmatpush1.bf16.msra.mxu0 0
    %518 = vmatprep.mubr.bf16.mxu0 0
    %519 = vmatmul.mubr.bf16.gmra.mrb[0].mxu0 %v484
    %v520 = vpop.f32.mrb[0].mxu0
    %v521 = vadd.f32 %v426, %v520
    %v522 = vpop.f32.mrb[0].mxu0
    %v523 = vadd.f32 %v430, %v522
    %v524 = vpop.f32.mrb[0].mxu0
    %v525 = vpop.f32.mrb[0].mxu0
    %526 = vdwg.mxu0
    %527 = vmatprep.subr.bf16.mxu0 %v470
    %528 = vmatpush1.bf16.msra.mxu0 %v469
    %529 = vmatprep.subr.bf16.mxu0 %v474
    %530 = vmatpush1.bf16.msra.mxu0 %v473
    %531 = vmatprep.subr.bf16.mxu0 0
    %532 = vmatpush1.bf16.msra.mxu0 0
    %533 = vmatprep.subr.bf16.mxu0 0
    %534 = vmatpush1.bf16.msra.mxu0 0
    %535 = vmatprep.subr.bf16.mxu0 0
    %536 = vmatpush1.bf16.msra.mxu0 0
    %537 = vmatprep.subr.bf16.mxu0 0
    %538 = vmatpush1.bf16.msra.mxu0 0
    %539 = vmatprep.subr.bf16.mxu0 0
    %540 = vmatpush1.bf16.msra.mxu0 0
    %541 = vmatprep.subr.bf16.mxu0 0
    %542 = vmatpush1.bf16.msra.mxu0 0
    %543 = vmatprep.subr.bf16.mxu0 0
    %544 = vmatpush1.bf16.msra.mxu0 0
    %545 = vmatprep.subr.bf16.mxu0 0
    %546 = vmatpush1.bf16.msra.mxu0 0
    %547 = vmatprep.subr.bf16.mxu0 0
    %548 = vmatpush1.bf16.msra.mxu0 0
    %549 = vmatprep.subr.bf16.mxu0 0
    %550 = vmatpush1.bf16.msra.mxu0 0
    %551 = vmatprep.subr.bf16.mxu0 0
    %552 = vmatpush1.bf16.msra.mxu0 0
    %553 = vmatprep.subr.bf16.mxu0 0
    %554 = vmatpush1.bf16.msra.mxu0 0
    %555 = vmatprep.subr.bf16.mxu0 0
    %556 = vmatpush1.bf16.msra.mxu0 0
    %557 = vmatprep.subr.bf16.mxu0 0
    %558 = vmatpush1.bf16.msra.mxu0 0
    %559 = vmatprep.mubr.bf16.mxu0 0
    %560 = vmatmul.mubr.bf16.gmra.mrb[0].mxu0 %v484
    %v561 = vpop.f32.mrb[0].mxu0
    %v562 = vadd.f32 %v434, %v561
    %v563 = vpop.f32.mrb[0].mxu0
    %v564 = vadd.f32 %v438, %v563
    %v565 = vpop.f32.mrb[0].mxu0
    %v566 = vpop.f32.mrb[0].mxu0
    %567 = vdwg.mxu0
    %v568 = vmax.f32 %v521, 0.0
    %v569 = vmax.f32 %v523, 0.0
    %v570 = vmax.f32 %v562, 0.0
    %v571 = vmax.f32 %v564, 0.0
    %573 = vrot.lane.b32.xlu0 %v568, 96
    %v574 = vpop.permute.xlu0 %573
    %v576 = vmax.f32 %v568, %v574
    %577 = vrot.lane.b32.xlu0 %v568, 64
    %v578 = vpop.permute.xlu0 %577
    %v580 = vmax.f32 %v576, %v578
    %581 = vrot.lane.b32.xlu0 %v568, 32
    %v582 = vpop.permute.xlu0 %581
    %v584 = vmax.f32 %v580, %v582
    %v585 = vmax.f32 %v584, %v569
    %587 = vrot.lane.b32.xlu0 %v569, 96
    %v588 = vpop.permute.xlu0 %587
    %v590 = vmax.f32 %v585, %v588
    %591 = vrot.lane.b32.xlu0 %v569, 64
    %v592 = vpop.permute.xlu0 %591
    %v594 = vmax.f32 %v590, %v592
    %595 = vrot.lane.b32.xlu0 %v569, 32
    %v596 = vpop.permute.xlu0 %595
    %v598 = vmax.f32 %v594, %v596
    %v599 = vmax.f32 %v598, %v570
    %601 = vrot.lane.b32.xlu0 %v570, 96
    %v602 = vpop.permute.xlu0 %601
    %v604 = vmax.f32 %v599, %v602
    %605 = vrot.lane.b32.xlu0 %v570, 64
    %v606 = vpop.permute.xlu0 %605
    %v608 = vmax.f32 %v604, %v606
    %609 = vrot.lane.b32.xlu0 %v570, 32
    %v610 = vpop.permute.xlu0 %609
    %v612 = vmax.f32 %v608, %v610
    %v613 = vmax.f32 %v612, %v571
    %615 = vrot.lane.b32.xlu0 %v571, 96
    %v616 = vpop.permute.xlu0 %615
    %v618 = vmax.f32 %v613, %v616
    %619 = vrot.lane.b32.xlu0 %v571, 64
    %v620 = vpop.permute.xlu0 %619
    %v622 = vmax.f32 %v618, %v620
    %623 = vrot.lane.b32.xlu0 %v571, 32
    %v624 = vpop.permute.xlu0 %623
    %v626 = vmax.f32 %v622, %v624
    %v627 = vpack.c.bf16 %v626, %v626
    %v628 = vld [vmem:[%s5] sm:$0xff]
    %v629 = vld [vmem:[%s5 + $0x8] sm:$0xff]
    %v630 = vld [vmem:[%s5 + $0x10] sm:$0xff]
    %v631 = vld [vmem:[%s5 + $0x18] sm:$0xff]
    %v632 = vld [vmem:[%s5 + $0x20] sm:$0xff]
    %v633 = vld [vmem:[%s5 + $0x28] sm:$0xff]
    %v634 = vld [vmem:[%s5 + $0x30] sm:$0xff]
    %v635 = vld [vmem:[%s5 + $0x38] sm:$0xff]
    %v636 = vld [vmem:[%s6] sm:$0xf]
    %v638 = vlaneseq
    %v639 = vshrl.u32 %v638, 7
    %v640 = vsub.s32 0, %v639
    %v641 = vrot.slane %v636, %v640
    %v642 = vlaneseq
    %v643 = vshrl.u32 %v642, 7
    %v644 = vsub.s32 1, %v643
    %v645 = vrot.slane %v636, %v644
    %v646 = vlaneseq
    %v647 = vshrl.u32 %v646, 7
    %v648 = vsub.s32 2, %v647
    %v649 = vrot.slane %v636, %v648
    %v650 = vlaneseq
    %v651 = vshrl.u32 %v650, 7
    %v652 = vsub.s32 3, %v651
    %v653 = vrot.slane %v636, %v652
    %v666 = vunpack.c.l.b16 %v628
    %v667 = vunpack.c.h.b16 %v628
    %v668 = vunpack.c.l.b16 %v629
    %v669 = vunpack.c.h.b16 %v629
    %v670 = vunpack.c.l.b16 %v630
    %v671 = vunpack.c.h.b16 %v630
    %v672 = vunpack.c.l.b16 %v631
    %v673 = vunpack.c.h.b16 %v631
    %v674 = vunpack.c.l.b16 %v632
    %v675 = vunpack.c.h.b16 %v632
    %v676 = vunpack.c.l.b16 %v633
    %v677 = vunpack.c.h.b16 %v633
    %v678 = vunpack.c.l.b16 %v634
    %v679 = vunpack.c.h.b16 %v634
    %v680 = vunpack.c.l.b16 %v635
    %v681 = vunpack.c.h.b16 %v635
    %v682 = vpack.c.b16 %v670, %v666
    %v683 = vpack.c.b16 %v671, %v667
    %v684 = vpack.c.b16 %v672, %v668
    %v685 = vpack.c.b16 %v673, %v669
    %v686 = vpack.c.b16 %v678, %v674
    %v687 = vpack.c.b16 %v679, %v675
    %v688 = vpack.c.b16 %v680, %v676
    %v689 = vpack.c.b16 %v681, %v677
    %v699 = vsel %vm154, %v627, 0
    %701 = vmatprep.subr.bf16.mxu0 %v683
    %702 = vmatpush1.bf16.msra.mxu0 %v682
    %703 = vmatprep.subr.bf16.mxu0 %v687
    %704 = vmatpush1.bf16.msra.mxu0 %v686
    %705 = vmatprep.subr.bf16.mxu0 0
    %706 = vmatpush1.bf16.msra.mxu0 0
    %707 = vmatprep.subr.bf16.mxu0 0
    %708 = vmatpush1.bf16.msra.mxu0 0
    %709 = vmatprep.subr.bf16.mxu0 0
    %710 = vmatpush1.bf16.msra.mxu0 0
    %711 = vmatprep.subr.bf16.mxu0 0
    %712 = vmatpush1.bf16.msra.mxu0 0
    %713 = vmatprep.subr.bf16.mxu0 0
    %714 = vmatpush1.bf16.msra.mxu0 0
    %715 = vmatprep.subr.bf16.mxu0 0
    %716 = vmatpush1.bf16.msra.mxu0 0
    %717 = vmatprep.subr.bf16.mxu0 0
    %718 = vmatpush1.bf16.msra.mxu0 0
    %719 = vmatprep.subr.bf16.mxu0 0
    %720 = vmatpush1.bf16.msra.mxu0 0
    %721 = vmatprep.subr.bf16.mxu0 0
    %722 = vmatpush1.bf16.msra.mxu0 0
    %723 = vmatprep.subr.bf16.mxu0 0
    %724 = vmatpush1.bf16.msra.mxu0 0
    %725 = vmatprep.subr.bf16.mxu0 0
    %726 = vmatpush1.bf16.msra.mxu0 0
    %727 = vmatprep.subr.bf16.mxu0 0
    %728 = vmatpush1.bf16.msra.mxu0 0
    %729 = vmatprep.subr.bf16.mxu0 0
    %730 = vmatpush1.bf16.msra.mxu0 0
    %731 = vmatprep.subr.bf16.mxu0 0
    %732 = vmatpush1.bf16.msra.mxu0 0
    %733 = vmatprep.mubr.bf16.mxu0 0
    %734 = vmatmul.mubr.bf16.gmra.mrb[0].mxu0 %v699
    %v735 = vpop.f32.mrb[0].mxu0
    %v736 = vadd.f32 %v641, %v735
    %v737 = vpop.f32.mrb[0].mxu0
    %v738 = vadd.f32 %v645, %v737
    %v739 = vpop.f32.mrb[0].mxu0
    %v740 = vpop.f32.mrb[0].mxu0
    %741 = vdwg.mxu0
    %742 = vmatprep.subr.bf16.mxu0 %v685
    %743 = vmatpush1.bf16.msra.mxu0 %v684
    %744 = vmatprep.subr.bf16.mxu0 %v689
    %745 = vmatpush1.bf16.msra.mxu0 %v688
    %746 = vmatprep.subr.bf16.mxu0 0
    %747 = vmatpush1.bf16.msra.mxu0 0
    %748 = vmatprep.subr.bf16.mxu0 0
    %749 = vmatpush1.bf16.msra.mxu0 0
    %750 = vmatprep.subr.bf16.mxu0 0
    %751 = vmatpush1.bf16.msra.mxu0 0
    %752 = vmatprep.subr.bf16.mxu0 0
    %753 = vmatpush1.bf16.msra.mxu0 0
    %754 = vmatprep.subr.bf16.mxu0 0
    %755 = vmatpush1.bf16.msra.mxu0 0
    %756 = vmatprep.subr.bf16.mxu0 0
    %757 = vmatpush1.bf16.msra.mxu0 0
    %758 = vmatprep.subr.bf16.mxu0 0
    %759 = vmatpush1.bf16.msra.mxu0 0
    %760 = vmatprep.subr.bf16.mxu0 0
    %761 = vmatpush1.bf16.msra.mxu0 0
    %762 = vmatprep.subr.bf16.mxu0 0
    %763 = vmatpush1.bf16.msra.mxu0 0
    %764 = vmatprep.subr.bf16.mxu0 0
    %765 = vmatpush1.bf16.msra.mxu0 0
    %766 = vmatprep.subr.bf16.mxu0 0
    %767 = vmatpush1.bf16.msra.mxu0 0
    %768 = vmatprep.subr.bf16.mxu0 0
    %769 = vmatpush1.bf16.msra.mxu0 0
    %770 = vmatprep.subr.bf16.mxu0 0
    %771 = vmatpush1.bf16.msra.mxu0 0
    %772 = vmatprep.subr.bf16.mxu0 0
    %773 = vmatpush1.bf16.msra.mxu0 0
    %774 = vmatprep.mubr.bf16.mxu0 0
    %775 = vmatmul.mubr.bf16.gmra.mrb[0].mxu0 %v699
    %v776 = vpop.f32.mrb[0].mxu0
    %v777 = vadd.f32 %v649, %v776
    %v778 = vpop.f32.mrb[0].mxu0
    %v779 = vadd.f32 %v653, %v778
    %v780 = vpop.f32.mrb[0].mxu0
    %v781 = vpop.f32.mrb[0].mxu0
    %782 = vdwg.mxu0
    %v783 = vmax.f32 %v736, 0.0
    %v784 = vmax.f32 %v738, 0.0
    %v785 = vmax.f32 %v777, 0.0
    %v786 = vmax.f32 %v779, 0.0
    %788 = vrot.lane.b32.xlu0 %v783, 96
    %v789 = vpop.permute.xlu0 %788
    %v791 = vmax.f32 %v783, %v789
    %792 = vrot.lane.b32.xlu0 %v783, 64
    %v793 = vpop.permute.xlu0 %792
    %v795 = vmax.f32 %v791, %v793
    %796 = vrot.lane.b32.xlu0 %v783, 32
    %v797 = vpop.permute.xlu0 %796
    %v799 = vmax.f32 %v795, %v797
    %v800 = vmax.f32 %v799, %v784
    %802 = vrot.lane.b32.xlu0 %v784, 96
    %v803 = vpop.permute.xlu0 %802
    %v805 = vmax.f32 %v800, %v803
    %806 = vrot.lane.b32.xlu0 %v784, 64
    %v807 = vpop.permute.xlu0 %806
    %v809 = vmax.f32 %v805, %v807
    %810 = vrot.lane.b32.xlu0 %v784, 32
    %v811 = vpop.permute.xlu0 %810
    %v813 = vmax.f32 %v809, %v811
    %v814 = vmax.f32 %v813, %v785
    %816 = vrot.lane.b32.xlu0 %v785, 96
    %v817 = vpop.permute.xlu0 %816
    %v819 = vmax.f32 %v814, %v817
    %820 = vrot.lane.b32.xlu0 %v785, 64
    %v821 = vpop.permute.xlu0 %820
    %v823 = vmax.f32 %v819, %v821
    %824 = vrot.lane.b32.xlu0 %v785, 32
    %v825 = vpop.permute.xlu0 %824
    %v827 = vmax.f32 %v823, %v825
    %v828 = vmax.f32 %v827, %v786
    %830 = vrot.lane.b32.xlu0 %v786, 96
    %v831 = vpop.permute.xlu0 %830
    %v833 = vmax.f32 %v828, %v831
    %834 = vrot.lane.b32.xlu0 %v786, 64
    %v835 = vpop.permute.xlu0 %834
    %v837 = vmax.f32 %v833, %v835
    %838 = vrot.lane.b32.xlu0 %v786, 32
    %v839 = vpop.permute.xlu0 %838
    %v841 = vmax.f32 %v837, %v839
    %vm842 = vcmask 254976
    %843 = vst.msk [vmem:[#allocation2] sm:$0x3] %vm842, %v841
    // Predicated region
    $region30: #{_lambda_.7} parent=1 // pred_check
      _
    $region31: #{_lambda_.7} parent=1 // pred_check_branch
      %845 = sbr.rel (0) target = $region33
    $region32: #{_lambda_.7} parent=1 // pred_region
      %s847 = ssub.s32 32, 32
      %848 = vsyncadd [#allocation3], %s847
      %s850 = sshll.u32 [#allocation2], 4
      %s851 = int_to_ptr.vmem [resolvable:$true] %s850
      %853 = dma.vmem_to_hbm [thread:$0]  %s851, 32, %s7, [#allocation3]
    $region33: #{_lambda_.7} parent=1 // pred_fallthru
      _
    // Predicated region
    $region34: #{_lambda_.7} parent=1 // pred_check
      _
    $region35: #{_lambda_.7} parent=1 // pred_check_branch
      %855 = sbr.rel (0) target = $region37
    $region36: #{_lambda_.7} parent=1 // pred_region
      %856 = dma.done [#allocation3], 32
    $region37: #{_lambda_.7} parent=1 // pred_fallthru
      _
    %857 = vsyncpa [#allocation3], 1

</llo_original>
